<compile_context>
chip_gen: v7x
topology: tpu7x:2x2x1
jax: 0.10.0
libtpu: 0.0.40
codegen_flags: <defaults>
</compile_context>

<pallas_src>
import functools

import jax
import jax.numpy as jnp
from jax.experimental import pallas as pl
from jax.experimental.pallas import tpu as pltpu

D = 8
W = 256
INPUT_CH = 3
INPUT_CH_VIEW = 3
SKIPS = (4,)

PAD_IN = 8          # packed input lanes: pts 0..2, viewdirs 3..5, rest zero
PAD_OUT = 128       # lane-dense output: rgb lanes 0..2, sigma lane 3
SIGMA_LANE = 3      # sigma position inside the output / head's 2nd 128-block
SUBCHUNKS = 2       # row-tile sub-chunks interleaved inside the kernel


# ----------------------------------------------------------------------------
# Pallas kernel: full MLPNet forward for one tile of `tm` rows.
# ----------------------------------------------------------------------------
def mlpnet_kernel(
    x_ref,        # (tm, 8)      f32   packed [pts | viewdirs | 0 0]
    w_in_ref,     # (8, 640)     bf16  fused [w0_pad | w5a_pad | wr1b_pad]
    w_stk_ref,    # (7, 256, 256) bf16 [w1..w4, w5b, w6, w7]
    w_hd_ref,     # (256, 384)   bf16  [wrm | wsig @ col 256+SIGMA_LANE]
    w_r1a_ref,    # (256, 128)   bf16  rgb hidden (remap part)
    w_r2_ref,     # (128, 128)   bf16  rgb out, padded to 128 lanes
    b_main_ref,   # (8, 1, 256)  ep    b0..b7 (ep = epilogue dtype)
    b_hd_ref,     # (1, 384)     f32   [brm | bsig @ lane 256+SIGMA_LANE]
    b_r_ref,      # (2, 1, 128)  f32   [br1 ; br2_pad]
    out_ref,      # (tm, 128)    bf16  rgb lanes 0..2, sigma lane 3
):
    f32 = jnp.float32
    bf16 = jnp.bfloat16
    ep = b_main_ref.dtype          # f32 on v5e, bf16 on v6e/v7x

    def mxu(a, b):
        # bf16 operands, f32 accumulation on the MXU (astype is a no-op when
        # `a` is already bf16, i.e. in bf16-epilogue mode).
        return jnp.dot(a.astype(bf16), b, preferred_element_type=f32)

    def lay(acc, b):
        # per-layer epilogue: cast accumulator to the epilogue dtype, add the
        # (already epilogue-dtype) bias, ReLU.
        return jnp.maximum(acc.astype(ep) + b, 0.0)

    tm = x_ref.shape[0]
    csz = tm // SUBCHUNKS
    lane = jax.lax.broadcasted_iota(jnp.int32, (csz, PAD_OUT), 1)  # hoisted

    # Two independent sub-chunks: the scheduler can overlap chunk B's matmuls
    # with chunk A's bias/ReLU/cast epilogues.
    for c in range(SUBCHUNKS):
        rows = pl.ds(c * csz, csz)
        x = x_ref[rows, :]                                   # (csz, 8) f32

        # One fused K=8 matmul: [layer-0 | skip | viewdir] contributions.
        inp = mxu(x, w_in_ref[...])                          # (csz, 640) f32
        in0 = inp[:, 0:256]
        in5 = inp[:, 256:512]
        invd = inp[:, 512:640]                               # (csz, 128)

        # base layer 0
        h = lay(in0, b_main_ref[0])
        # base layers 1..4
        for i in range(4):
            h = lay(mxu(h, w_stk_ref[i]), b_main_ref[i + 1])
        # skip layer 5: cat(pts, base) @ W5 == pts @ W5a + base @ W5b
        h = lay(in5 + mxu(h, w_stk_ref[4]), b_main_ref[5])
        # base layers 6, 7
        h = lay(mxu(h, w_stk_ref[5]), b_main_ref[6])
        h = lay(mxu(h, w_stk_ref[6]), b_main_ref[7])

        # fused heads: one (256,384) dot -> [ base_remap (256) | sigma block ]
        heads = mxu(h, w_hd_ref[...]) + b_hd_ref[...]        # (csz, 384) f32
        remap = heads[:, :256]
        sig_blk = jnp.maximum(heads[:, 256:], 0.0)           # sigma at lane 3

        # rgb hidden: cat(remap, viewdirs) @ Wr1 == remap @ Wr1a + view @ Wr1b
        r1 = jnp.maximum(mxu(remap, w_r1a_ref[...]) + invd + b_r_ref[0], 0.0)
        # rgb output: Linear(128, 3) + Sigmoid (padded to 128 lanes)
        rgb = jax.nn.sigmoid(mxu(r1, w_r2_ref[...]) + b_r_ref[1])

        # lanes 0..2 rgb, lane 3 sigma, lanes 4..127 zero
        out_ref[rows, :] = jnp.where(lane < 3, rgb, sig_blk).astype(out_ref.dtype)


# ----------------------------------------------------------------------------
# Parameter init (deterministic, PyTorch-Linear-like uniform bounds).
# ----------------------------------------------------------------------------
def init_params(key):
    def linear(key, fan_in, fan_out):
        kw, kb = jax.random.split(key)
        bound = 1.0 / jnp.sqrt(jnp.float32(fan_in))
        w = jax.random.uniform(kw, (fan_in, fan_out), jnp.float32, -bound, bound)
        b = jax.random.uniform(kb, (fan_out,), jnp.float32, -bound, bound)
        return w, b

    keys = jax.random.split(key, 16)
    p = {}
    dims_in = [INPUT_CH, W, W, W, W, W + INPUT_CH, W, W]   # skip after layer 4
    for i in range(D):
        p[f"w{i}"], p[f"b{i}"] = linear(keys[i], dims_in[i], W)
    p["wsig"], p["bsig"] = linear(keys[8], W, 1)           # sigma head
    p["wrm"], p["brm"] = linear(keys[9], W, 256)           # base remap
    p["wr1"], p["br1"] = linear(keys[10], 256 + INPUT_CH_VIEW, W // 2)
    p["wr2"], p["br2"] = linear(keys[11], W // 2, 3)
    return p


def default_epilogue_dtype():
    """bf16 elementwise epilogue only where the VPU has a bf16 datapath."""
    try:
        kind = jax.devices()[0].device_kind.lower()
    except Exception:  # pragma: no cover - defensive
        return jnp.float32
    return jnp.bfloat16 if ("v6" in kind or "v7" in kind) else jnp.float32


# ----------------------------------------------------------------------------
# One-time packing of the raw parameters into the kernel's operand layout.
# (Hoisted out of the per-call wrapper per the performance review.)
# ----------------------------------------------------------------------------
def pack_params(p, epilogue_dtype=None):
    if epilogue_dtype is None:
        epilogue_dtype = default_epilogue_dtype()
    f32, bf16 = jnp.float32, jnp.bfloat16

    # fused K=8 input-side weight: [w0 | w5a | wr1b] -> (8, 640)
    w_in = jnp.zeros((PAD_IN, 640), f32)
    w_in = w_in.at[0:3, 0:256].set(p["w0"])
    w_in = w_in.at[0:3, 256:512].set(p["w5"][:INPUT_CH])
    w_in = w_in.at[3:6, 512:640].set(p["wr1"][256:])
    w_in = w_in.astype(bf16)

    # 256-wide base weights stacked
    w_stk = jnp.stack([p["w1"], p["w2"], p["w3"], p["w4"],
                       p["w5"][INPUT_CH:], p["w6"], p["w7"]]).astype(bf16)

    # fused [base_remap | sigma] head: sigma weight at column 256+SIGMA_LANE
    w_hd = (jnp.zeros((W, 384), f32)
            .at[:, :256].set(p["wrm"])
            .at[:, 256 + SIGMA_LANE:257 + SIGMA_LANE].set(p["wsig"])).astype(bf16)
    b_hd = (jnp.zeros((1, 384), f32)
            .at[0, :256].set(p["brm"])
            .at[0, 256 + SIGMA_LANE].set(p["bsig"][0]))

    # rgb weights
    w_r1a = p["wr1"][:256].astype(bf16)                              # (256,128)
    w_r2 = jnp.zeros((128, 128), f32).at[:, :3].set(p["wr2"]).astype(bf16)

    # bias packs: per-layer biases carry the epilogue dtype; head/rgb stay f32
    b_main = jnp.stack([p[f"b{i}"] for i in range(D)])[:, None, :].astype(epilogue_dtype)
    b_r = (jnp.zeros((2, 1, 128), f32)
           .at[0, 0, :].set(p["br1"])
           .at[1, 0, :3].set(p["br2"]))

    return (w_in, w_stk, w_hd, w_r1a, w_r2, b_main, b_hd, b_r)


def _choose_row_tile(n):
    # v7x has 2 TensorCores: keep >=4 grid steps when rows allow so each core
    # gets >=2 steps of DMA/compute overlap; grow the tile for large N to
    # amortize the ~0.35 us per-grid-step overhead.
    if n <= 1024:
        return 256
    if n <= 4096:
        return 512
    return 1024


# ----------------------------------------------------------------------------
# Forward wrapper: pad/pack rows, launch the kernel, unpack rgb/sigma.
# ----------------------------------------------------------------------------
@functools.partial(jax.jit, static_argnames=("tm",))
def mlpnet_forward(x, packed, tm=None):
    f32 = jnp.float32
    (w_in, w_stk, w_hd, w_r1a, w_r2, b_main, b_hd, b_r) = packed

    lead = x.shape[:-1]
    xf = x.reshape(-1, x.shape[-1]).astype(f32)
    n = xf.shape[0]
    if tm is None:
        tm = _choose_row_tile(n)
    assert tm % (8 * SUBCHUNKS) == 0, "row tile must be a multiple of 16"

    n_pad = pl.cdiv(n, tm) * tm
    grid = n_pad // tm

    # packed input rows: pts -> lanes 0..2, viewdirs -> lanes 3..5, rest zero
    x_pk = jnp.zeros((n_pad, PAD_IN), f32).at[:n, :xf.shape[1]].set(xf)

    consts = (w_in, w_stk, w_hd, w_r1a, w_r2, b_main, b_hd, b_r)

    def full_spec(a):
        # constant index_map -> Pallas fetches the block once and re-uses the
        # buffer across grid steps (weights stay resident in VMEM).
        return pl.BlockSpec(a.shape, lambda i, _n=a.ndim: (0,) * _n)

    # ~16 MiB base + 16 KiB per tile row; capped at v7x's 64 MiB physical VMEM.
    vmem_limit = min((16 << 20) + tm * 16 * 1024, 64 << 20)

    out = pl.pallas_call(
        mlpnet_kernel,
        out_shape=jax.ShapeDtypeStruct((n_pad, PAD_OUT), jnp.bfloat16),
        grid_spec=pltpu.PrefetchScalarGridSpec(
            num_scalar_prefetch=0,
            grid=(grid,),
            in_specs=[pl.BlockSpec((tm, PAD_IN), lambda i: (i, 0))]
                     + [full_spec(c) for c in consts],
            out_specs=pl.BlockSpec((tm, PAD_OUT), lambda i: (i, 0)),
        ),
        compiler_params=pltpu.CompilerParams(
            dimension_semantics=("parallel",),
            vmem_limit_bytes=int(vmem_limit),
        ),
    )(x_pk, *consts)

    rgb = out[:n, :3].astype(f32).reshape(*lead, 3)
    sigma = out[:n, SIGMA_LANE].astype(f32).reshape(lead)
    return {"rgb": rgb, "sigma": sigma}


# ----------------------------------------------------------------------------
# Pure-JAX references.
# ----------------------------------------------------------------------------
def mlpnet_matched_reference(x, p, epilogue_dtype=jnp.bfloat16):
    """Mirror of the kernel's exact arithmetic: bf16 MXU operands, f32
    accumulation, `epilogue_dtype` bias+ReLU in the base chain, f32 heads,
    bf16 output cast."""
    f32, bf16 = jnp.float32, jnp.bfloat16
    ep = epilogue_dtype

    def mxu(a, b):
        return jnp.dot(a.astype(bf16), b.astype(bf16), preferred_element_type=f32)

    def lay(acc, b):
        return jnp.maximum(acc.astype(ep) + b.astype(ep), 0.0)

    pts = x[..., :INPUT_CH]
    view = x[..., -INPUT_CH_VIEW:]

    in5 = mxu(pts, p["w5"][:INPUT_CH])
    invd = mxu(view, p["wr1"][256:])

    h = lay(mxu(pts, p["w0"]), p["b0"])
    for i in range(1, 5):
        h = lay(mxu(h, p[f"w{i}"]), p[f"b{i}"])
    h = lay(in5 + mxu(h, p["w5"][INPUT_CH:]), p["b5"])
    h = lay(mxu(h, p["w6"]), p["b6"])
    h = lay(mxu(h, p["w7"]), p["b7"])

    remap = mxu(h, p["wrm"]) + p["brm"]
    sigma = jnp.maximum(mxu(h, p["wsig"]) + p["bsig"], 0.0)
    r1 = jnp.maximum(mxu(remap, p["wr1"][:256]) + invd + p["br1"], 0.0)
    rgb = jax.nn.sigmoid(mxu(r1, p["wr2"]) + p["br2"])
    return {"rgb": rgb.astype(bf16).astype(f32),
            "sigma": sigma[..., 0].astype(bf16).astype(f32)}


def mlpnet_reference(x, p):
    """Plain-f32 mirror of the PyTorch forward (loose semantic check)."""
    pts = x[..., :INPUT_CH]
    view = x[..., -INPUT_CH_VIEW:]
    relu = lambda v: jnp.maximum(v, 0.0)

    base = relu(pts @ p["w0"] + p["b0"])
    for i in range(D - 1):
        if i in SKIPS:
            base = jnp.concatenate([pts, base], axis=-1)
        base = relu(base @ p[f"w{i + 1}"] + p[f"b{i + 1}"])
    sigma = relu(base @ p["wsig"] + p["bsig"])
    remap = base @ p["wrm"] + p["brm"]
    h = relu(jnp.concatenate([remap, view], axis=-1) @ p["wr1"] + p["br1"])
    rgb = jax.nn.sigmoid(h @ p["wr2"] + p["br2"])
    return {"rgb": rgb, "sigma": sigma[..., 0]}


if __name__ == "__main__":
    key = jax.random.PRNGKey(0)
    kp, kx = jax.random.split(key)

    params = init_params(kp)
    ep_dtype = default_epilogue_dtype()         # bf16 on v6e/v7x, f32 on v5e
    packed = pack_params(params, ep_dtype)      # one-time packing (hoisted)

    N = 1000   # not a multiple of the tile: exercises the pad/slice path
    x = jax.random.normal(kx, (N, INPUT_CH + INPUT_CH_VIEW), jnp.float32)

    out = mlpnet_forward(x, packed)
    jax.block_until_ready(out)

    assert out["rgb"].shape == (N, 3) and out["rgb"].dtype == jnp.float32
    assert out["sigma"].shape == (N,) and out["sigma"].dtype == jnp.float32

    # matched-precision check (same bf16 matmul / epilogue / output arithmetic)
    ref_m = mlpnet_matched_reference(x, params, epilogue_dtype=ep_dtype)
    assert jnp.allclose(out["rgb"], ref_m["rgb"], atol=1e-2, rtol=1e-2)
    assert jnp.allclose(out["sigma"], ref_m["sigma"], atol=1e-2, rtol=1e-2)

    # semantic check against the full-f32 reference (loose: bf16 matmuls)
    ref32 = mlpnet_reference(x, params)
    assert jnp.allclose(out["rgb"], ref32["rgb"], atol=5e-2, rtol=5e-2)
    assert jnp.allclose(out["sigma"], ref32["sigma"], atol=5e-2, rtol=5e-2)

    print("KERNEL_OK")
</pallas_src>

<mosaic_0001>
module attributes {stable_mosaic.version = 11 : i64} {
  func.func @mlpnet_kernel(%arg0: i32, %arg1: memref<256x8xf32, #tpu.memory_space<vmem>>, %arg2: memref<8x640xbf16, #tpu.memory_space<vmem>>, %arg3: memref<7x256x256xbf16, #tpu.memory_space<vmem>>, %arg4: memref<256x384xbf16, #tpu.memory_space<vmem>>, %arg5: memref<256x128xbf16, #tpu.memory_space<vmem>>, %arg6: memref<128x128xbf16, #tpu.memory_space<vmem>>, %arg7: memref<8x1x256xf32, #tpu.memory_space<vmem>>, %arg8: memref<1x384xf32, #tpu.memory_space<vmem>>, %arg9: memref<2x1x128xf32, #tpu.memory_space<vmem>>, %arg10: memref<256x128xbf16, #tpu.memory_space<vmem>>) attributes {dimension_semantics = [#tpu.dimension_semantics<parallel>], iteration_bounds = array<i64: 4>, scalar_prefetch = 0 : i64, scratch_operands = 0 : i64, tpu.core_type = #tpu.core_type<tc>, window_params = [{transform_indices = @transform_0, window_bounds = array<i64: 256, 8>}, {pipeline_mode = #tpu.pipeline_mode<synchronous>, transform_indices = @transform_1, window_bounds = array<i64: 8, 640>}, {pipeline_mode = #tpu.pipeline_mode<synchronous>, transform_indices = @transform_2, window_bounds = array<i64: 7, 256, 256>}, {pipeline_mode = #tpu.pipeline_mode<synchronous>, transform_indices = @transform_3, window_bounds = array<i64: 256, 384>}, {pipeline_mode = #tpu.pipeline_mode<synchronous>, transform_indices = @transform_4, window_bounds = array<i64: 256, 128>}, {pipeline_mode = #tpu.pipeline_mode<synchronous>, transform_indices = @transform_5, window_bounds = array<i64: 128, 128>}, {pipeline_mode = #tpu.pipeline_mode<synchronous>, transform_indices = @transform_6, window_bounds = array<i64: 8, 1, 256>}, {pipeline_mode = #tpu.pipeline_mode<synchronous>, transform_indices = @transform_7, window_bounds = array<i64: 1, 384>}, {pipeline_mode = #tpu.pipeline_mode<synchronous>, transform_indices = @transform_8, window_bounds = array<i64: 2, 1, 128>}, {transform_indices = @transform_9, window_bounds = array<i64: 256, 128>}]} {
    %0 = tpu.iota {dimensions = array<i32: 1>} : vector<128x128xi32>
    %c0 = arith.constant 0 : index
    %c0_0 = arith.constant 0 : index
    %1 = vector.load %arg1[%c0, %c0_0] : memref<256x8xf32, #tpu.memory_space<vmem>>, vector<128x8xf32>
    %c0_1 = arith.constant 0 : index
    %c0_2 = arith.constant 0 : index
    %2 = vector.load %arg2[%c0_1, %c0_2] : memref<8x640xbf16, #tpu.memory_space<vmem>>, vector<8x640xbf16>
    %3 = arith.truncf %1 : vector<128x8xf32> to vector<128x8xbf16>
    %cst = arith.constant dense<0.000000e+00> : vector<128x640xf32>
    %4 = tpu.matmul %3, %2, %cst {dimension_numbers = #tpu.dot_dimension_numbers<[1], [0], [0], [1], [0, 0, 1, 1], [], []>} : vector<128x8xbf16>, vector<8x640xbf16>, vector<128x640xf32> -> vector<128x640xf32>
    %5 = vector.extract_strided_slice %4 {offsets = [0, 0], sizes = [128, 256], strides = [1, 1]} : vector<128x640xf32> to vector<128x256xf32>
    %6 = vector.extract_strided_slice %4 {offsets = [0, 256], sizes = [128, 256], strides = [1, 1]} : vector<128x640xf32> to vector<128x256xf32>
    %7 = vector.extract_strided_slice %4 {offsets = [0, 512], sizes = [128, 128], strides = [1, 1]} : vector<128x640xf32> to vector<128x128xf32>
    %c0_3 = arith.constant 0 : index
    %c0_4 = arith.constant 0 : index
    %c0_5 = arith.constant 0 : index
    %8 = vector.load %arg7[%c0_3, %c0_4, %c0_5] : memref<8x1x256xf32, #tpu.memory_space<vmem>>, vector<1x1x256xf32>
    %9 = vector.shape_cast %8 : vector<1x1x256xf32> to vector<1x256xf32>
    %10 = vector.broadcast %9 : vector<1x256xf32> to vector<128x256xf32>
    %11 = arith.addf %5, %10 : vector<128x256xf32>
    %cst_6 = arith.constant 0.000000e+00 : f32
    %12 = vector.broadcast %cst_6 : f32 to vector<128x256xf32>
    %13 = arith.maximumf %11, %12 : vector<128x256xf32>
    %c0_7 = arith.constant 0 : index
    %c0_8 = arith.constant 0 : index
    %c0_9 = arith.constant 0 : index
    %14 = vector.load %arg3[%c0_7, %c0_8, %c0_9] : memref<7x256x256xbf16, #tpu.memory_space<vmem>>, vector<1x256x256xbf16>
    %15 = vector.shape_cast %14 : vector<1x256x256xbf16> to vector<256x256xbf16>
    %16 = arith.truncf %13 : vector<128x256xf32> to vector<128x256xbf16>
    %cst_10 = arith.constant dense<0.000000e+00> : vector<128x256xf32>
    %17 = tpu.matmul %16, %15, %cst_10 {dimension_numbers = #tpu.dot_dimension_numbers<[1], [0], [0], [1], [0, 0, 1, 1], [], []>} : vector<128x256xbf16>, vector<256x256xbf16>, vector<128x256xf32> -> vector<128x256xf32>
    %c1 = arith.constant 1 : index
    %c0_11 = arith.constant 0 : index
    %c0_12 = arith.constant 0 : index
    %18 = vector.load %arg7[%c1, %c0_11, %c0_12] : memref<8x1x256xf32, #tpu.memory_space<vmem>>, vector<1x1x256xf32>
    %19 = vector.shape_cast %18 : vector<1x1x256xf32> to vector<1x256xf32>
    %20 = vector.broadcast %19 : vector<1x256xf32> to vector<128x256xf32>
    %21 = arith.addf %17, %20 : vector<128x256xf32>
    %cst_13 = arith.constant 0.000000e+00 : f32
    %22 = vector.broadcast %cst_13 : f32 to vector<128x256xf32>
    %23 = arith.maximumf %21, %22 : vector<128x256xf32>
    %c1_14 = arith.constant 1 : index
    %c0_15 = arith.constant 0 : index
    %c0_16 = arith.constant 0 : index
    %24 = vector.load %arg3[%c1_14, %c0_15, %c0_16] : memref<7x256x256xbf16, #tpu.memory_space<vmem>>, vector<1x256x256xbf16>
    %25 = vector.shape_cast %24 : vector<1x256x256xbf16> to vector<256x256xbf16>
    %26 = arith.truncf %23 : vector<128x256xf32> to vector<128x256xbf16>
    %cst_17 = arith.constant dense<0.000000e+00> : vector<128x256xf32>
    %27 = tpu.matmul %26, %25, %cst_17 {dimension_numbers = #tpu.dot_dimension_numbers<[1], [0], [0], [1], [0, 0, 1, 1], [], []>} : vector<128x256xbf16>, vector<256x256xbf16>, vector<128x256xf32> -> vector<128x256xf32>
    %c2 = arith.constant 2 : index
    %c0_18 = arith.constant 0 : index
    %c0_19 = arith.constant 0 : index
    %28 = vector.load %arg7[%c2, %c0_18, %c0_19] : memref<8x1x256xf32, #tpu.memory_space<vmem>>, vector<1x1x256xf32>
    %29 = vector.shape_cast %28 : vector<1x1x256xf32> to vector<1x256xf32>
    %30 = vector.broadcast %29 : vector<1x256xf32> to vector<128x256xf32>
    %31 = arith.addf %27, %30 : vector<128x256xf32>
    %cst_20 = arith.constant 0.000000e+00 : f32
    %32 = vector.broadcast %cst_20 : f32 to vector<128x256xf32>
    %33 = arith.maximumf %31, %32 : vector<128x256xf32>
    %c2_21 = arith.constant 2 : index
    %c0_22 = arith.constant 0 : index
    %c0_23 = arith.constant 0 : index
    %34 = vector.load %arg3[%c2_21, %c0_22, %c0_23] : memref<7x256x256xbf16, #tpu.memory_space<vmem>>, vector<1x256x256xbf16>
    %35 = vector.shape_cast %34 : vector<1x256x256xbf16> to vector<256x256xbf16>
    %36 = arith.truncf %33 : vector<128x256xf32> to vector<128x256xbf16>
    %cst_24 = arith.constant dense<0.000000e+00> : vector<128x256xf32>
    %37 = tpu.matmul %36, %35, %cst_24 {dimension_numbers = #tpu.dot_dimension_numbers<[1], [0], [0], [1], [0, 0, 1, 1], [], []>} : vector<128x256xbf16>, vector<256x256xbf16>, vector<128x256xf32> -> vector<128x256xf32>
    %c3 = arith.constant 3 : index
    %c0_25 = arith.constant 0 : index
    %c0_26 = arith.constant 0 : index
    %38 = vector.load %arg7[%c3, %c0_25, %c0_26] : memref<8x1x256xf32, #tpu.memory_space<vmem>>, vector<1x1x256xf32>
    %39 = vector.shape_cast %38 : vector<1x1x256xf32> to vector<1x256xf32>
    %40 = vector.broadcast %39 : vector<1x256xf32> to vector<128x256xf32>
    %41 = arith.addf %37, %40 : vector<128x256xf32>
    %cst_27 = arith.constant 0.000000e+00 : f32
    %42 = vector.broadcast %cst_27 : f32 to vector<128x256xf32>
    %43 = arith.maximumf %41, %42 : vector<128x256xf32>
    %c3_28 = arith.constant 3 : index
    %c0_29 = arith.constant 0 : index
    %c0_30 = arith.constant 0 : index
    %44 = vector.load %arg3[%c3_28, %c0_29, %c0_30] : memref<7x256x256xbf16, #tpu.memory_space<vmem>>, vector<1x256x256xbf16>
    %45 = vector.shape_cast %44 : vector<1x256x256xbf16> to vector<256x256xbf16>
    %46 = arith.truncf %43 : vector<128x256xf32> to vector<128x256xbf16>
    %cst_31 = arith.constant dense<0.000000e+00> : vector<128x256xf32>
    %47 = tpu.matmul %46, %45, %cst_31 {dimension_numbers = #tpu.dot_dimension_numbers<[1], [0], [0], [1], [0, 0, 1, 1], [], []>} : vector<128x256xbf16>, vector<256x256xbf16>, vector<128x256xf32> -> vector<128x256xf32>
    %c4 = arith.constant 4 : index
    %c0_32 = arith.constant 0 : index
    %c0_33 = arith.constant 0 : index
    %48 = vector.load %arg7[%c4, %c0_32, %c0_33] : memref<8x1x256xf32, #tpu.memory_space<vmem>>, vector<1x1x256xf32>
    %49 = vector.shape_cast %48 : vector<1x1x256xf32> to vector<1x256xf32>
    %50 = vector.broadcast %49 : vector<1x256xf32> to vector<128x256xf32>
    %51 = arith.addf %47, %50 : vector<128x256xf32>
    %cst_34 = arith.constant 0.000000e+00 : f32
    %52 = vector.broadcast %cst_34 : f32 to vector<128x256xf32>
    %53 = arith.maximumf %51, %52 : vector<128x256xf32>
    %c4_35 = arith.constant 4 : index
    %c0_36 = arith.constant 0 : index
    %c0_37 = arith.constant 0 : index
    %54 = vector.load %arg3[%c4_35, %c0_36, %c0_37] : memref<7x256x256xbf16, #tpu.memory_space<vmem>>, vector<1x256x256xbf16>
    %55 = vector.shape_cast %54 : vector<1x256x256xbf16> to vector<256x256xbf16>
    %56 = arith.truncf %53 : vector<128x256xf32> to vector<128x256xbf16>
    %cst_38 = arith.constant dense<0.000000e+00> : vector<128x256xf32>
    %57 = tpu.matmul %56, %55, %cst_38 {dimension_numbers = #tpu.dot_dimension_numbers<[1], [0], [0], [1], [0, 0, 1, 1], [], []>} : vector<128x256xbf16>, vector<256x256xbf16>, vector<128x256xf32> -> vector<128x256xf32>
    %58 = arith.addf %6, %57 : vector<128x256xf32>
    %c5 = arith.constant 5 : index
    %c0_39 = arith.constant 0 : index
    %c0_40 = arith.constant 0 : index
    %59 = vector.load %arg7[%c5, %c0_39, %c0_40] : memref<8x1x256xf32, #tpu.memory_space<vmem>>, vector<1x1x256xf32>
    %60 = vector.shape_cast %59 : vector<1x1x256xf32> to vector<1x256xf32>
    %61 = vector.broadcast %60 : vector<1x256xf32> to vector<128x256xf32>
    %62 = arith.addf %58, %61 : vector<128x256xf32>
    %cst_41 = arith.constant 0.000000e+00 : f32
    %63 = vector.broadcast %cst_41 : f32 to vector<128x256xf32>
    %64 = arith.maximumf %62, %63 : vector<128x256xf32>
    %c5_42 = arith.constant 5 : index
    %c0_43 = arith.constant 0 : index
    %c0_44 = arith.constant 0 : index
    %65 = vector.load %arg3[%c5_42, %c0_43, %c0_44] : memref<7x256x256xbf16, #tpu.memory_space<vmem>>, vector<1x256x256xbf16>
    %66 = vector.shape_cast %65 : vector<1x256x256xbf16> to vector<256x256xbf16>
    %67 = arith.truncf %64 : vector<128x256xf32> to vector<128x256xbf16>
    %cst_45 = arith.constant dense<0.000000e+00> : vector<128x256xf32>
    %68 = tpu.matmul %67, %66, %cst_45 {dimension_numbers = #tpu.dot_dimension_numbers<[1], [0], [0], [1], [0, 0, 1, 1], [], []>} : vector<128x256xbf16>, vector<256x256xbf16>, vector<128x256xf32> -> vector<128x256xf32>
    %c6 = arith.constant 6 : index
    %c0_46 = arith.constant 0 : index
    %c0_47 = arith.constant 0 : index
    %69 = vector.load %arg7[%c6, %c0_46, %c0_47] : memref<8x1x256xf32, #tpu.memory_space<vmem>>, vector<1x1x256xf32>
    %70 = vector.shape_cast %69 : vector<1x1x256xf32> to vector<1x256xf32>
    %71 = vector.broadcast %70 : vector<1x256xf32> to vector<128x256xf32>
    %72 = arith.addf %68, %71 : vector<128x256xf32>
    %cst_48 = arith.constant 0.000000e+00 : f32
    %73 = vector.broadcast %cst_48 : f32 to vector<128x256xf32>
    %74 = arith.maximumf %72, %73 : vector<128x256xf32>
    %c6_49 = arith.constant 6 : index
    %c0_50 = arith.constant 0 : index
    %c0_51 = arith.constant 0 : index
    %75 = vector.load %arg3[%c6_49, %c0_50, %c0_51] : memref<7x256x256xbf16, #tpu.memory_space<vmem>>, vector<1x256x256xbf16>
    %76 = vector.shape_cast %75 : vector<1x256x256xbf16> to vector<256x256xbf16>
    %77 = arith.truncf %74 : vector<128x256xf32> to vector<128x256xbf16>
    %cst_52 = arith.constant dense<0.000000e+00> : vector<128x256xf32>
    %78 = tpu.matmul %77, %76, %cst_52 {dimension_numbers = #tpu.dot_dimension_numbers<[1], [0], [0], [1], [0, 0, 1, 1], [], []>} : vector<128x256xbf16>, vector<256x256xbf16>, vector<128x256xf32> -> vector<128x256xf32>
    %c7 = arith.constant 7 : index
    %c0_53 = arith.constant 0 : index
    %c0_54 = arith.constant 0 : index
    %79 = vector.load %arg7[%c7, %c0_53, %c0_54] : memref<8x1x256xf32, #tpu.memory_space<vmem>>, vector<1x1x256xf32>
    %80 = vector.shape_cast %79 : vector<1x1x256xf32> to vector<1x256xf32>
    %81 = vector.broadcast %80 : vector<1x256xf32> to vector<128x256xf32>
    %82 = arith.addf %78, %81 : vector<128x256xf32>
    %cst_55 = arith.constant 0.000000e+00 : f32
    %83 = vector.broadcast %cst_55 : f32 to vector<128x256xf32>
    %84 = arith.maximumf %82, %83 : vector<128x256xf32>
    %c0_56 = arith.constant 0 : index
    %c0_57 = arith.constant 0 : index
    %85 = vector.load %arg4[%c0_56, %c0_57] : memref<256x384xbf16, #tpu.memory_space<vmem>>, vector<256x384xbf16>
    %86 = arith.truncf %84 : vector<128x256xf32> to vector<128x256xbf16>
    %cst_58 = arith.constant dense<0.000000e+00> : vector<128x384xf32>
    %87 = tpu.matmul %86, %85, %cst_58 {dimension_numbers = #tpu.dot_dimension_numbers<[1], [0], [0], [1], [0, 0, 1, 1], [], []>} : vector<128x256xbf16>, vector<256x384xbf16>, vector<128x384xf32> -> vector<128x384xf32>
    %c0_59 = arith.constant 0 : index
    %c0_60 = arith.constant 0 : index
    %88 = vector.load %arg8[%c0_59, %c0_60] : memref<1x384xf32, #tpu.memory_space<vmem>>, vector<1x384xf32>
    %89 = vector.broadcast %88 : vector<1x384xf32> to vector<128x384xf32>
    %90 = arith.addf %87, %89 : vector<128x384xf32>
    %91 = vector.extract_strided_slice %90 {offsets = [0, 0], sizes = [128, 256], strides = [1, 1]} : vector<128x384xf32> to vector<128x256xf32>
    %92 = vector.extract_strided_slice %90 {offsets = [0, 256], sizes = [128, 128], strides = [1, 1]} : vector<128x384xf32> to vector<128x128xf32>
    %cst_61 = arith.constant 0.000000e+00 : f32
    %93 = vector.broadcast %cst_61 : f32 to vector<128x128xf32>
    %94 = arith.maximumf %92, %93 : vector<128x128xf32>
    %c0_62 = arith.constant 0 : index
    %c0_63 = arith.constant 0 : index
    %95 = vector.load %arg5[%c0_62, %c0_63] : memref<256x128xbf16, #tpu.memory_space<vmem>>, vector<256x128xbf16>
    %96 = arith.truncf %91 : vector<128x256xf32> to vector<128x256xbf16>
    %cst_64 = arith.constant dense<0.000000e+00> : vector<128x128xf32>
    %97 = tpu.matmul %96, %95, %cst_64 {dimension_numbers = #tpu.dot_dimension_numbers<[1], [0], [0], [1], [0, 0, 1, 1], [], []>} : vector<128x256xbf16>, vector<256x128xbf16>, vector<128x128xf32> -> vector<128x128xf32>
    %98 = arith.addf %97, %7 : vector<128x128xf32>
    %c0_65 = arith.constant 0 : index
    %c0_66 = arith.constant 0 : index
    %c0_67 = arith.constant 0 : index
    %99 = vector.load %arg9[%c0_65, %c0_66, %c0_67] : memref<2x1x128xf32, #tpu.memory_space<vmem>>, vector<1x1x128xf32>
    %100 = vector.shape_cast %99 : vector<1x1x128xf32> to vector<1x128xf32>
    %101 = vector.broadcast %100 : vector<1x128xf32> to vector<128x128xf32>
    %102 = arith.addf %98, %101 : vector<128x128xf32>
    %cst_68 = arith.constant 0.000000e+00 : f32
    %103 = vector.broadcast %cst_68 : f32 to vector<128x128xf32>
    %104 = arith.maximumf %102, %103 : vector<128x128xf32>
    %c0_69 = arith.constant 0 : index
    %c0_70 = arith.constant 0 : index
    %105 = vector.load %arg6[%c0_69, %c0_70] : memref<128x128xbf16, #tpu.memory_space<vmem>>, vector<128x128xbf16>
    %106 = arith.truncf %104 : vector<128x128xf32> to vector<128x128xbf16>
    %cst_71 = arith.constant dense<0.000000e+00> : vector<128x128xf32>
    %107 = tpu.matmul %106, %105, %cst_71 {dimension_numbers = #tpu.dot_dimension_numbers<[1], [0], [0], [1], [0, 0, 1, 1], [], []>} : vector<128x128xbf16>, vector<128x128xbf16>, vector<128x128xf32> -> vector<128x128xf32>
    %c1_72 = arith.constant 1 : index
    %c0_73 = arith.constant 0 : index
    %c0_74 = arith.constant 0 : index
    %108 = vector.load %arg9[%c1_72, %c0_73, %c0_74] : memref<2x1x128xf32, #tpu.memory_space<vmem>>, vector<1x1x128xf32>
    %109 = vector.shape_cast %108 : vector<1x1x128xf32> to vector<1x128xf32>
    %110 = vector.broadcast %109 : vector<1x128xf32> to vector<128x128xf32>
    %111 = arith.addf %107, %110 : vector<128x128xf32>
    %112 = arith.negf %111 : vector<128x128xf32>
    %113 = math.exp %112 : vector<128x128xf32>
    %cst_75 = arith.constant 1.000000e+00 : f32
    %114 = vector.broadcast %cst_75 : f32 to vector<128x128xf32>
    %115 = arith.addf %114, %113 : vector<128x128xf32>
    %116 = arith.divf %114, %115 : vector<128x128xf32>
    %c3_i32 = arith.constant 3 : i32
    %117 = vector.broadcast %c3_i32 : i32 to vector<128x128xi32>
    %118 = arith.cmpi slt, %0, %117 : vector<128x128xi32>
    %119 = arith.select %118, %116, %94 : vector<128x128xi1>, vector<128x128xf32>
    %120 = arith.truncf %119 : vector<128x128xf32> to vector<128x128xbf16>
    %c0_76 = arith.constant 0 : index
    %c0_77 = arith.constant 0 : index
    %121 = vector.load %arg10[%c0_76, %c0_77] : memref<256x128xbf16, #tpu.memory_space<vmem>>, vector<128x128xbf16>
    tpu.vector_store %arg10[%c0_76, %c0_77], %120 {strides = array<i32>} : memref<256x128xbf16, #tpu.memory_space<vmem>>, vector<128x128xbf16>,
    %c128 = arith.constant 128 : index
    %c0_78 = arith.constant 0 : index
    %122 = vector.load %arg1[%c128, %c0_78] : memref<256x8xf32, #tpu.memory_space<vmem>>, vector<128x8xf32>
    %c0_79 = arith.constant 0 : index
    %c0_80 = arith.constant 0 : index
    %123 = vector.load %arg2[%c0_79, %c0_80] : memref<8x640xbf16, #tpu.memory_space<vmem>>, vector<8x640xbf16>
    %124 = arith.truncf %122 : vector<128x8xf32> to vector<128x8xbf16>
    %cst_81 = arith.constant dense<0.000000e+00> : vector<128x640xf32>
    %125 = tpu.matmul %124, %123, %cst_81 {dimension_numbers = #tpu.dot_dimension_numbers<[1], [0], [0], [1], [0, 0, 1, 1], [], []>} : vector<128x8xbf16>, vector<8x640xbf16>, vector<128x640xf32> -> vector<128x640xf32>
    %126 = vector.extract_strided_slice %125 {offsets = [0, 0], sizes = [128, 256], strides = [1, 1]} : vector<128x640xf32> to vector<128x256xf32>
    %127 = vector.extract_strided_slice %125 {offsets = [0, 256], sizes = [128, 256], strides = [1, 1]} : vector<128x640xf32> to vector<128x256xf32>
    %128 = vector.extract_strided_slice %125 {offsets = [0, 512], sizes = [128, 128], strides = [1, 1]} : vector<128x640xf32> to vector<128x128xf32>
    %c0_82 = arith.constant 0 : index
    %c0_83 = arith.constant 0 : index
    %c0_84 = arith.constant 0 : index
    %129 = vector.load %arg7[%c0_82, %c0_83, %c0_84] : memref<8x1x256xf32, #tpu.memory_space<vmem>>, vector<1x1x256xf32>
    %130 = vector.shape_cast %129 : vector<1x1x256xf32> to vector<1x256xf32>
    %131 = vector.broadcast %130 : vector<1x256xf32> to vector<128x256xf32>
    %132 = arith.addf %126, %131 : vector<128x256xf32>
    %cst_85 = arith.constant 0.000000e+00 : f32
    %133 = vector.broadcast %cst_85 : f32 to vector<128x256xf32>
    %134 = arith.maximumf %132, %133 : vector<128x256xf32>
    %c0_86 = arith.constant 0 : index
    %c0_87 = arith.constant 0 : index
    %c0_88 = arith.constant 0 : index
    %135 = vector.load %arg3[%c0_86, %c0_87, %c0_88] : memref<7x256x256xbf16, #tpu.memory_space<vmem>>, vector<1x256x256xbf16>
    %136 = vector.shape_cast %135 : vector<1x256x256xbf16> to vector<256x256xbf16>
    %137 = arith.truncf %134 : vector<128x256xf32> to vector<128x256xbf16>
    %cst_89 = arith.constant dense<0.000000e+00> : vector<128x256xf32>
    %138 = tpu.matmul %137, %136, %cst_89 {dimension_numbers = #tpu.dot_dimension_numbers<[1], [0], [0], [1], [0, 0, 1, 1], [], []>} : vector<128x256xbf16>, vector<256x256xbf16>, vector<128x256xf32> -> vector<128x256xf32>
    %c1_90 = arith.constant 1 : index
    %c0_91 = arith.constant 0 : index
    %c0_92 = arith.constant 0 : index
    %139 = vector.load %arg7[%c1_90, %c0_91, %c0_92] : memref<8x1x256xf32, #tpu.memory_space<vmem>>, vector<1x1x256xf32>
    %140 = vector.shape_cast %139 : vector<1x1x256xf32> to vector<1x256xf32>
    %141 = vector.broadcast %140 : vector<1x256xf32> to vector<128x256xf32>
    %142 = arith.addf %138, %141 : vector<128x256xf32>
    %cst_93 = arith.constant 0.000000e+00 : f32
    %143 = vector.broadcast %cst_93 : f32 to vector<128x256xf32>
    %144 = arith.maximumf %142, %143 : vector<128x256xf32>
    %c1_94 = arith.constant 1 : index
    %c0_95 = arith.constant 0 : index
    %c0_96 = arith.constant 0 : index
    %145 = vector.load %arg3[%c1_94, %c0_95, %c0_96] : memref<7x256x256xbf16, #tpu.memory_space<vmem>>, vector<1x256x256xbf16>
    %146 = vector.shape_cast %145 : vector<1x256x256xbf16> to vector<256x256xbf16>
    %147 = arith.truncf %144 : vector<128x256xf32> to vector<128x256xbf16>
    %cst_97 = arith.constant dense<0.000000e+00> : vector<128x256xf32>
    %148 = tpu.matmul %147, %146, %cst_97 {dimension_numbers = #tpu.dot_dimension_numbers<[1], [0], [0], [1], [0, 0, 1, 1], [], []>} : vector<128x256xbf16>, vector<256x256xbf16>, vector<128x256xf32> -> vector<128x256xf32>
    %c2_98 = arith.constant 2 : index
    %c0_99 = arith.constant 0 : index
    %c0_100 = arith.constant 0 : index
    %149 = vector.load %arg7[%c2_98, %c0_99, %c0_100] : memref<8x1x256xf32, #tpu.memory_space<vmem>>, vector<1x1x256xf32>
    %150 = vector.shape_cast %149 : vector<1x1x256xf32> to vector<1x256xf32>
    %151 = vector.broadcast %150 : vector<1x256xf32> to vector<128x256xf32>
    %152 = arith.addf %148, %151 : vector<128x256xf32>
    %cst_101 = arith.constant 0.000000e+00 : f32
    %153 = vector.broadcast %cst_101 : f32 to vector<128x256xf32>
    %154 = arith.maximumf %152, %153 : vector<128x256xf32>
    %c2_102 = arith.constant 2 : index
    %c0_103 = arith.constant 0 : index
    %c0_104 = arith.constant 0 : index
    %155 = vector.load %arg3[%c2_102, %c0_103, %c0_104] : memref<7x256x256xbf16, #tpu.memory_space<vmem>>, vector<1x256x256xbf16>
    %156 = vector.shape_cast %155 : vector<1x256x256xbf16> to vector<256x256xbf16>
    %157 = arith.truncf %154 : vector<128x256xf32> to vector<128x256xbf16>
    %cst_105 = arith.constant dense<0.000000e+00> : vector<128x256xf32>
    %158 = tpu.matmul %157, %156, %cst_105 {dimension_numbers = #tpu.dot_dimension_numbers<[1], [0], [0], [1], [0, 0, 1, 1], [], []>} : vector<128x256xbf16>, vector<256x256xbf16>, vector<128x256xf32> -> vector<128x256xf32>
    %c3_106 = arith.constant 3 : index
    %c0_107 = arith.constant 0 : index
    %c0_108 = arith.constant 0 : index
    %159 = vector.load %arg7[%c3_106, %c0_107, %c0_108] : memref<8x1x256xf32, #tpu.memory_space<vmem>>, vector<1x1x256xf32>
    %160 = vector.shape_cast %159 : vector<1x1x256xf32> to vector<1x256xf32>
    %161 = vector.broadcast %160 : vector<1x256xf32> to vector<128x256xf32>
    %162 = arith.addf %158, %161 : vector<128x256xf32>
    %cst_109 = arith.constant 0.000000e+00 : f32
    %163 = vector.broadcast %cst_109 : f32 to vector<128x256xf32>
    %164 = arith.maximumf %162, %163 : vector<128x256xf32>
    %c3_110 = arith.constant 3 : index
    %c0_111 = arith.constant 0 : index
    %c0_112 = arith.constant 0 : index
    %165 = vector.load %arg3[%c3_110, %c0_111, %c0_112] : memref<7x256x256xbf16, #tpu.memory_space<vmem>>, vector<1x256x256xbf16>
    %166 = vector.shape_cast %165 : vector<1x256x256xbf16> to vector<256x256xbf16>
    %167 = arith.truncf %164 : vector<128x256xf32> to vector<128x256xbf16>
    %cst_113 = arith.constant dense<0.000000e+00> : vector<128x256xf32>
    %168 = tpu.matmul %167, %166, %cst_113 {dimension_numbers = #tpu.dot_dimension_numbers<[1], [0], [0], [1], [0, 0, 1, 1], [], []>} : vector<128x256xbf16>, vector<256x256xbf16>, vector<128x256xf32> -> vector<128x256xf32>
    %c4_114 = arith.constant 4 : index
    %c0_115 = arith.constant 0 : index
    %c0_116 = arith.constant 0 : index
    %169 = vector.load %arg7[%c4_114, %c0_115, %c0_116] : memref<8x1x256xf32, #tpu.memory_space<vmem>>, vector<1x1x256xf32>
    %170 = vector.shape_cast %169 : vector<1x1x256xf32> to vector<1x256xf32>
    %171 = vector.broadcast %170 : vector<1x256xf32> to vector<128x256xf32>
    %172 = arith.addf %168, %171 : vector<128x256xf32>
    %cst_117 = arith.constant 0.000000e+00 : f32
    %173 = vector.broadcast %cst_117 : f32 to vector<128x256xf32>
    %174 = arith.maximumf %172, %173 : vector<128x256xf32>
    %c4_118 = arith.constant 4 : index
    %c0_119 = arith.constant 0 : index
    %c0_120 = arith.constant 0 : index
    %175 = vector.load %arg3[%c4_118, %c0_119, %c0_120] : memref<7x256x256xbf16, #tpu.memory_space<vmem>>, vector<1x256x256xbf16>
    %176 = vector.shape_cast %175 : vector<1x256x256xbf16> to vector<256x256xbf16>
    %177 = arith.truncf %174 : vector<128x256xf32> to vector<128x256xbf16>
    %cst_121 = arith.constant dense<0.000000e+00> : vector<128x256xf32>
    %178 = tpu.matmul %177, %176, %cst_121 {dimension_numbers = #tpu.dot_dimension_numbers<[1], [0], [0], [1], [0, 0, 1, 1], [], []>} : vector<128x256xbf16>, vector<256x256xbf16>, vector<128x256xf32> -> vector<128x256xf32>
    %179 = arith.addf %127, %178 : vector<128x256xf32>
    %c5_122 = arith.constant 5 : index
    %c0_123 = arith.constant 0 : index
    %c0_124 = arith.constant 0 : index
    %180 = vector.load %arg7[%c5_122, %c0_123, %c0_124] : memref<8x1x256xf32, #tpu.memory_space<vmem>>, vector<1x1x256xf32>
    %181 = vector.shape_cast %180 : vector<1x1x256xf32> to vector<1x256xf32>
    %182 = vector.broadcast %181 : vector<1x256xf32> to vector<128x256xf32>
    %183 = arith.addf %179, %182 : vector<128x256xf32>
    %cst_125 = arith.constant 0.000000e+00 : f32
    %184 = vector.broadcast %cst_125 : f32 to vector<128x256xf32>
    %185 = arith.maximumf %183, %184 : vector<128x256xf32>
    %c5_126 = arith.constant 5 : index
    %c0_127 = arith.constant 0 : index
    %c0_128 = arith.constant 0 : index
    %186 = vector.load %arg3[%c5_126, %c0_127, %c0_128] : memref<7x256x256xbf16, #tpu.memory_space<vmem>>, vector<1x256x256xbf16>
    %187 = vector.shape_cast %186 : vector<1x256x256xbf16> to vector<256x256xbf16>
    %188 = arith.truncf %185 : vector<128x256xf32> to vector<128x256xbf16>
    %cst_129 = arith.constant dense<0.000000e+00> : vector<128x256xf32>
    %189 = tpu.matmul %188, %187, %cst_129 {dimension_numbers = #tpu.dot_dimension_numbers<[1], [0], [0], [1], [0, 0, 1, 1], [], []>} : vector<128x256xbf16>, vector<256x256xbf16>, vector<128x256xf32> -> vector<128x256xf32>
    %c6_130 = arith.constant 6 : index
    %c0_131 = arith.constant 0 : index
    %c0_132 = arith.constant 0 : index
    %190 = vector.load %arg7[%c6_130, %c0_131, %c0_132] : memref<8x1x256xf32, #tpu.memory_space<vmem>>, vector<1x1x256xf32>
    %191 = vector.shape_cast %190 : vector<1x1x256xf32> to vector<1x256xf32>
    %192 = vector.broadcast %191 : vector<1x256xf32> to vector<128x256xf32>
    %193 = arith.addf %189, %192 : vector<128x256xf32>
    %cst_133 = arith.constant 0.000000e+00 : f32
    %194 = vector.broadcast %cst_133 : f32 to vector<128x256xf32>
    %195 = arith.maximumf %193, %194 : vector<128x256xf32>
    %c6_134 = arith.constant 6 : index
    %c0_135 = arith.constant 0 : index
    %c0_136 = arith.constant 0 : index
    %196 = vector.load %arg3[%c6_134, %c0_135, %c0_136] : memref<7x256x256xbf16, #tpu.memory_space<vmem>>, vector<1x256x256xbf16>
    %197 = vector.shape_cast %196 : vector<1x256x256xbf16> to vector<256x256xbf16>
    %198 = arith.truncf %195 : vector<128x256xf32> to vector<128x256xbf16>
    %cst_137 = arith.constant dense<0.000000e+00> : vector<128x256xf32>
    %199 = tpu.matmul %198, %197, %cst_137 {dimension_numbers = #tpu.dot_dimension_numbers<[1], [0], [0], [1], [0, 0, 1, 1], [], []>} : vector<128x256xbf16>, vector<256x256xbf16>, vector<128x256xf32> -> vector<128x256xf32>
    %c7_138 = arith.constant 7 : index
    %c0_139 = arith.constant 0 : index
    %c0_140 = arith.constant 0 : index
    %200 = vector.load %arg7[%c7_138, %c0_139, %c0_140] : memref<8x1x256xf32, #tpu.memory_space<vmem>>, vector<1x1x256xf32>
    %201 = vector.shape_cast %200 : vector<1x1x256xf32> to vector<1x256xf32>
    %202 = vector.broadcast %201 : vector<1x256xf32> to vector<128x256xf32>
    %203 = arith.addf %199, %202 : vector<128x256xf32>
    %cst_141 = arith.constant 0.000000e+00 : f32
    %204 = vector.broadcast %cst_141 : f32 to vector<128x256xf32>
    %205 = arith.maximumf %203, %204 : vector<128x256xf32>
    %c0_142 = arith.constant 0 : index
    %c0_143 = arith.constant 0 : index
    %206 = vector.load %arg4[%c0_142, %c0_143] : memref<256x384xbf16, #tpu.memory_space<vmem>>, vector<256x384xbf16>
    %207 = arith.truncf %205 : vector<128x256xf32> to vector<128x256xbf16>
    %cst_144 = arith.constant dense<0.000000e+00> : vector<128x384xf32>
    %208 = tpu.matmul %207, %206, %cst_144 {dimension_numbers = #tpu.dot_dimension_numbers<[1], [0], [0], [1], [0, 0, 1, 1], [], []>} : vector<128x256xbf16>, vector<256x384xbf16>, vector<128x384xf32> -> vector<128x384xf32>
    %c0_145 = arith.constant 0 : index
    %c0_146 = arith.constant 0 : index
    %209 = vector.load %arg8[%c0_145, %c0_146] : memref<1x384xf32, #tpu.memory_space<vmem>>, vector<1x384xf32>
    %210 = vector.broadcast %209 : vector<1x384xf32> to vector<128x384xf32>
    %211 = arith.addf %208, %210 : vector<128x384xf32>
    %212 = vector.extract_strided_slice %211 {offsets = [0, 0], sizes = [128, 256], strides = [1, 1]} : vector<128x384xf32> to vector<128x256xf32>
    %213 = vector.extract_strided_slice %211 {offsets = [0, 256], sizes = [128, 128], strides = [1, 1]} : vector<128x384xf32> to vector<128x128xf32>
    %cst_147 = arith.constant 0.000000e+00 : f32
    %214 = vector.broadcast %cst_147 : f32 to vector<128x128xf32>
    %215 = arith.maximumf %213, %214 : vector<128x128xf32>
    %c0_148 = arith.constant 0 : index
    %c0_149 = arith.constant 0 : index
    %216 = vector.load %arg5[%c0_148, %c0_149] : memref<256x128xbf16, #tpu.memory_space<vmem>>, vector<256x128xbf16>
    %217 = arith.truncf %212 : vector<128x256xf32> to vector<128x256xbf16>
    %cst_150 = arith.constant dense<0.000000e+00> : vector<128x128xf32>
    %218 = tpu.matmul %217, %216, %cst_150 {dimension_numbers = #tpu.dot_dimension_numbers<[1], [0], [0], [1], [0, 0, 1, 1], [], []>} : vector<128x256xbf16>, vector<256x128xbf16>, vector<128x128xf32> -> vector<128x128xf32>
    %219 = arith.addf %218, %128 : vector<128x128xf32>
    %c0_151 = arith.constant 0 : index
    %c0_152 = arith.constant 0 : index
    %c0_153 = arith.constant 0 : index
    %220 = vector.load %arg9[%c0_151, %c0_152, %c0_153] : memref<2x1x128xf32, #tpu.memory_space<vmem>>, vector<1x1x128xf32>
    %221 = vector.shape_cast %220 : vector<1x1x128xf32> to vector<1x128xf32>
    %222 = vector.broadcast %221 : vector<1x128xf32> to vector<128x128xf32>
    %223 = arith.addf %219, %222 : vector<128x128xf32>
    %cst_154 = arith.constant 0.000000e+00 : f32
    %224 = vector.broadcast %cst_154 : f32 to vector<128x128xf32>
    %225 = arith.maximumf %223, %224 : vector<128x128xf32>
    %c0_155 = arith.constant 0 : index
    %c0_156 = arith.constant 0 : index
    %226 = vector.load %arg6[%c0_155, %c0_156] : memref<128x128xbf16, #tpu.memory_space<vmem>>, vector<128x128xbf16>
    %227 = arith.truncf %225 : vector<128x128xf32> to vector<128x128xbf16>
    %cst_157 = arith.constant dense<0.000000e+00> : vector<128x128xf32>
    %228 = tpu.matmul %227, %226, %cst_157 {dimension_numbers = #tpu.dot_dimension_numbers<[1], [0], [0], [1], [0, 0, 1, 1], [], []>} : vector<128x128xbf16>, vector<128x128xbf16>, vector<128x128xf32> -> vector<128x128xf32>
    %c1_158 = arith.constant 1 : index
    %c0_159 = arith.constant 0 : index
    %c0_160 = arith.constant 0 : index
    %229 = vector.load %arg9[%c1_158, %c0_159, %c0_160] : memref<2x1x128xf32, #tpu.memory_space<vmem>>, vector<1x1x128xf32>
    %230 = vector.shape_cast %229 : vector<1x1x128xf32> to vector<1x128xf32>
    %231 = vector.broadcast %230 : vector<1x128xf32> to vector<128x128xf32>
    %232 = arith.addf %228, %231 : vector<128x128xf32>
    %233 = arith.negf %232 : vector<128x128xf32>
    %234 = math.exp %233 : vector<128x128xf32>
    %cst_161 = arith.constant 1.000000e+00 : f32
    %235 = vector.broadcast %cst_161 : f32 to vector<128x128xf32>
    %236 = arith.addf %235, %234 : vector<128x128xf32>
    %237 = arith.divf %235, %236 : vector<128x128xf32>
    %c3_i32_162 = arith.constant 3 : i32
    %238 = vector.broadcast %c3_i32_162 : i32 to vector<128x128xi32>
    %239 = arith.cmpi slt, %0, %238 : vector<128x128xi32>
    %240 = arith.select %239, %237, %215 : vector<128x128xi1>, vector<128x128xf32>
    %241 = arith.truncf %240 : vector<128x128xf32> to vector<128x128xbf16>
    %c128_163 = arith.constant 128 : index
    %c0_164 = arith.constant 0 : index
    %242 = vector.load %arg10[%c128_163, %c0_164] : memref<256x128xbf16, #tpu.memory_space<vmem>>, vector<128x128xbf16>
    tpu.vector_store %arg10[%c128_163, %c0_164], %241 {strides = array<i32>} : memref<256x128xbf16, #tpu.memory_space<vmem>>, vector<128x128xbf16>,
    return
  }
  func.func @transform_0(%arg0: i32) -> (i32, i32) {
    %c0_i32 = arith.constant 0 : i32
    %c0_i32_0 = arith.constant 0 : i32
    return %arg0, %c0_i32 : i32, i32
  }
  func.func @transform_1(%arg0: i32) -> (i32, i32) {
    %c0_i32 = arith.constant 0 : i32
    %c0_i32_0 = arith.constant 0 : i32
    %c0_i32_1 = arith.constant 0 : i32
    return %c0_i32, %c0_i32_0 : i32, i32
  }
  func.func @transform_2(%arg0: i32) -> (i32, i32, i32) {
    %c0_i32 = arith.constant 0 : i32
    %c0_i32_0 = arith.constant 0 : i32
    %c0_i32_1 = arith.constant 0 : i32
    %c0_i32_2 = arith.constant 0 : i32
    return %c0_i32, %c0_i32_0, %c0_i32_1 : i32, i32, i32
  }
  func.func @transform_3(%arg0: i32) -> (i32, i32) {
    %c0_i32 = arith.constant 0 : i32
    %c0_i32_0 = arith.constant 0 : i32
    %c0_i32_1 = arith.constant 0 : i32
    return %c0_i32, %c0_i32_0 : i32, i32
  }
  func.func @transform_4(%arg0: i32) -> (i32, i32) {
    %c0_i32 = arith.constant 0 : i32
    %c0_i32_0 = arith.constant 0 : i32
    %c0_i32_1 = arith.constant 0 : i32
    return %c0_i32, %c0_i32_0 : i32, i32
  }
  func.func @transform_5(%arg0: i32) -> (i32, i32) {
    %c0_i32 = arith.constant 0 : i32
    %c0_i32_0 = arith.constant 0 : i32
    %c0_i32_1 = arith.constant 0 : i32
    return %c0_i32, %c0_i32_0 : i32, i32
  }
  func.func @transform_6(%arg0: i32) -> (i32, i32, i32) {
    %c0_i32 = arith.constant 0 : i32
    %c0_i32_0 = arith.constant 0 : i32
    %c0_i32_1 = arith.constant 0 : i32
    %c0_i32_2 = arith.constant 0 : i32
    return %c0_i32, %c0_i32_0, %c0_i32_1 : i32, i32, i32
  }
  func.func @transform_7(%arg0: i32) -> (i32, i32) {
    %c0_i32 = arith.constant 0 : i32
    %c0_i32_0 = arith.constant 0 : i32
    %c0_i32_1 = arith.constant 0 : i32
    return %c0_i32, %c0_i32_0 : i32, i32
  }
  func.func @transform_8(%arg0: i32) -> (i32, i32, i32) {
    %c0_i32 = arith.constant 0 : i32
    %c0_i32_0 = arith.constant 0 : i32
    %c0_i32_1 = arith.constant 0 : i32
    %c0_i32_2 = arith.constant 0 : i32
    return %c0_i32, %c0_i32_0, %c0_i32_1 : i32, i32, i32
  }
  func.func @transform_9(%arg0: i32) -> (i32, i32) {
    %c0_i32 = arith.constant 0 : i32
    %c0_i32_0 = arith.constant 0 : i32
    return %arg0, %c0_i32 : i32, i32
  }
}

</mosaic_0001>

<llo_original>
// kernel: mlpnet_forward.1
$region0: #{mlpnet_forward.1}
  #allocation0 [shape = 'u32[]', space=smem, size = 0x4, offset = 0x4, fixed_abs, tag = 'smem constant byte address 0x4 - core index']
  #allocation1 [shape = 'u32[144,128]{1,0:T(1,128)}', space=vmem, size = 0x12000, scoped, tag = 'internal scratch']
  %s0 = inlined_call_operand.vmem [shape: f32[1024,8], index: 0, kind: input, shape index: {}]
  %s1 = inlined_call_operand.vmem [shape: bf16[8,640], index: 1, kind: input, shape index: {}]
  %s2 = inlined_call_operand.vmem [shape: bf16[7,256,256], index: 2, kind: input, shape index: {}]
  %s3 = inlined_call_operand.vmem [shape: bf16[256,384], index: 3, kind: input, shape index: {}]
  %s4 = inlined_call_operand.vmem [shape: bf16[256,128], index: 4, kind: input, shape index: {}]
  %s5 = inlined_call_operand.vmem [shape: bf16[128,128], index: 5, kind: input, shape index: {}]
  %s6 = inlined_call_operand.vmem [shape: f32[8,1,256], index: 6, kind: input, shape index: {}]
  %s7 = inlined_call_operand.vmem [shape: f32[1,384], index: 7, kind: input, shape index: {}]
  %s8 = inlined_call_operand.vmem [shape: f32[2,1,128], index: 8, kind: input, shape index: {}]
  %s9 = inlined_call_operand.vmem [shape: bf16[1024,128], index: 9, kind: output, shape index: {}]
  %s10 = sld [smem:[#allocation0]]
  $region69: #{mlpnet_forward.1} parent=0
    _
  %s12 = ssub.s32 1, %s10
  %s13 = scalar_select 0, %s12, %s10
  loop: start=0, step=1, limit=6
  $region2: #{mlpnet_forward.1} parent=0 // loop_pre_header
    _
  $region3: #{mlpnet_forward.1} parent=0 // loop_header
    %s15 = sphi 0, %s19
    %p16 = scmp.ge.s32.totalorder %s15, 6
    %s25 = sphi 0, %s27
    %s28 = sphi 0, %s25
    %s29 = sphi 0, %s28
    %s45 = sphi 0, %s29
    %s49 = sphi 0, %s49
    %s51 = sphi 0, %s49
    %s52 = sphi 0, %s51
    %s66 = sphi 0, %s52
    %s70 = sphi 0, %s70
    %s72 = sphi 0, %s70
    %s73 = sphi 0, %s72
    %s87 = sphi 0, %s73
    %s91 = sphi 0, %s91
    %s93 = sphi 0, %s91
    %s94 = sphi 0, %s93
    %s108 = sphi 0, %s94
    %s112 = sphi 0, %s112
    %s114 = sphi 0, %s112
    %s115 = sphi 0, %s114
    %s129 = sphi 0, %s115
    %s133 = sphi 0, %s133
    %s135 = sphi 0, %s133
    %s136 = sphi 0, %s135
    %s150 = sphi 0, %s136
    %s154 = sphi 0, %s154
    %s156 = sphi 0, %s154
    %s157 = sphi 0, %s156
    %s171 = sphi 0, %s157
    %s175 = sphi 0, %s175
    %s177 = sphi 0, %s175
    %s178 = sphi 0, %s177
    %s192 = sphi 0, %s178
    %s196 = sphi 0, %s196
    %s198 = sphi 0, %s196
    %s199 = sphi 0, %s198
    %s213 = sphi 0, %s199
    %s219 = sphi 0, %s221
    %s222 = sphi 0, %s219
    %s223 = sphi 0, %s222
    %s239 = sphi 0, %s223
  $region4: #{mlpnet_forward.1} parent=0 // loop_header_branch
    %18 = sbr.rel (%p16) target = $region8
  $region5: #{mlpnet_forward.1} parent=0 // loop_body
    %s20 = ssub.s32 %s15, 1
    %s21 = ssub.s32 %s15, 2
    %s22 = sadd.s32 %s15, 1
    %s23 = ssub.s32 %s15, %s22
    %p24 = scmp.eq.s32.totalorder %s23, 0
    %s26 = sadd.s32 %s25, 1
    %s27 = scalar_select %p24, %s25, %s26
    %p30 = pneg %p24
    %p31 = scmp.eq.s32.totalorder %s15, 3
    %p32 = por %p30, %p31
    %p33 = scmp.ne.s32.totalorder %s25, %s28
    %p34 = scmp.eq.s32.totalorder %s15, 0
    %p35 = por %p33, %p34
    %p36 = scmp.ne.s32.totalorder %s25, %s28
    %p37 = scmp.eq.s32.totalorder %s20, 3
    %p38 = por %p36, %p37
    %p39 = scmp.ne.s32.totalorder %s28, %s29
    %p40 = scmp.eq.s32.totalorder %s20, 0
    %p41 = por %p39, %p40
    %p42 = scmp.ne.s32.totalorder %s28, %s29
    %p43 = scmp.eq.s32.totalorder %s21, 3
    %p44 = por %p42, %p43
    %p46 = scmp.ne.s32.totalorder %s29, %s45
    %p47 = scmp.eq.s32.totalorder %s21, 0
    %p48 = por %p46, %p47
    %s50 = sadd.s32 %s49, 1
    %p53 = scmp.eq.s32.totalorder %s15, 3
    %p54 = scmp.ne.s32.totalorder %s49, %s51
    %p55 = scmp.eq.s32.totalorder %s15, 0
    %p56 = por %p54, %p55
    %p57 = scmp.ne.s32.totalorder %s49, %s51
    %p58 = scmp.eq.s32.totalorder %s20, 3
    %p59 = por %p57, %p58
    %p60 = scmp.ne.s32.totalorder %s51, %s52
    %p61 = scmp.eq.s32.totalorder %s20, 0
    %p62 = por %p60, %p61
    %p63 = scmp.ne.s32.totalorder %s51, %s52
    %p64 = scmp.eq.s32.totalorder %s21, 3
    %p65 = por %p63, %p64
    %p67 = scmp.ne.s32.totalorder %s52, %s66
    %p68 = scmp.eq.s32.totalorder %s21, 0
    %p69 = por %p67, %p68
    %s71 = sadd.s32 %s70, 1
    %p74 = scmp.eq.s32.totalorder %s15, 3
    %p75 = scmp.ne.s32.totalorder %s70, %s72
    %p76 = scmp.eq.s32.totalorder %s15, 0
    %p77 = por %p75, %p76
    %p78 = scmp.ne.s32.totalorder %s70, %s72
    %p79 = scmp.eq.s32.totalorder %s20, 3
    %p80 = por %p78, %p79
    %p81 = scmp.ne.s32.totalorder %s72, %s73
    %p82 = scmp.eq.s32.totalorder %s20, 0
    %p83 = por %p81, %p82
    %p84 = scmp.ne.s32.totalorder %s72, %s73
    %p85 = scmp.eq.s32.totalorder %s21, 3
    %p86 = por %p84, %p85
    %p88 = scmp.ne.s32.totalorder %s73, %s87
    %p89 = scmp.eq.s32.totalorder %s21, 0
    %p90 = por %p88, %p89
    %s92 = sadd.s32 %s91, 1
    %p95 = scmp.eq.s32.totalorder %s15, 3
    %p96 = scmp.ne.s32.totalorder %s91, %s93
    %p97 = scmp.eq.s32.totalorder %s15, 0
    %p98 = por %p96, %p97
    %p99 = scmp.ne.s32.totalorder %s91, %s93
    %p100 = scmp.eq.s32.totalorder %s20, 3
    %p101 = por %p99, %p100
    %p102 = scmp.ne.s32.totalorder %s93, %s94
    %p103 = scmp.eq.s32.totalorder %s20, 0
    %p104 = por %p102, %p103
    %p105 = scmp.ne.s32.totalorder %s93, %s94
    %p106 = scmp.eq.s32.totalorder %s21, 3
    %p107 = por %p105, %p106
    %p109 = scmp.ne.s32.totalorder %s94, %s108
    %p110 = scmp.eq.s32.totalorder %s21, 0
    %p111 = por %p109, %p110
    %s113 = sadd.s32 %s112, 1
    %p116 = scmp.eq.s32.totalorder %s15, 3
    %p117 = scmp.ne.s32.totalorder %s112, %s114
    %p118 = scmp.eq.s32.totalorder %s15, 0
    %p119 = por %p117, %p118
    %p120 = scmp.ne.s32.totalorder %s112, %s114
    %p121 = scmp.eq.s32.totalorder %s20, 3
    %p122 = por %p120, %p121
    %p123 = scmp.ne.s32.totalorder %s114, %s115
    %p124 = scmp.eq.s32.totalorder %s20, 0
    %p125 = por %p123, %p124
    %p126 = scmp.ne.s32.totalorder %s114, %s115
    %p127 = scmp.eq.s32.totalorder %s21, 3
    %p128 = por %p126, %p127
    %p130 = scmp.ne.s32.totalorder %s115, %s129
    %p131 = scmp.eq.s32.totalorder %s21, 0
    %p132 = por %p130, %p131
    %s134 = sadd.s32 %s133, 1
    %p137 = scmp.eq.s32.totalorder %s15, 3
    %p138 = scmp.ne.s32.totalorder %s133, %s135
    %p139 = scmp.eq.s32.totalorder %s15, 0
    %p140 = por %p138, %p139
    %p141 = scmp.ne.s32.totalorder %s133, %s135
    %p142 = scmp.eq.s32.totalorder %s20, 3
    %p143 = por %p141, %p142
    %p144 = scmp.ne.s32.totalorder %s135, %s136
    %p145 = scmp.eq.s32.totalorder %s20, 0
    %p146 = por %p144, %p145
    %p147 = scmp.ne.s32.totalorder %s135, %s136
    %p148 = scmp.eq.s32.totalorder %s21, 3
    %p149 = por %p147, %p148
    %p151 = scmp.ne.s32.totalorder %s136, %s150
    %p152 = scmp.eq.s32.totalorder %s21, 0
    %p153 = por %p151, %p152
    %s155 = sadd.s32 %s154, 1
    %p158 = scmp.eq.s32.totalorder %s15, 3
    %p159 = scmp.ne.s32.totalorder %s154, %s156
    %p160 = scmp.eq.s32.totalorder %s15, 0
    %p161 = por %p159, %p160
    %p162 = scmp.ne.s32.totalorder %s154, %s156
    %p163 = scmp.eq.s32.totalorder %s20, 3
    %p164 = por %p162, %p163
    %p165 = scmp.ne.s32.totalorder %s156, %s157
    %p166 = scmp.eq.s32.totalorder %s20, 0
    %p167 = por %p165, %p166
    %p168 = scmp.ne.s32.totalorder %s156, %s157
    %p169 = scmp.eq.s32.totalorder %s21, 3
    %p170 = por %p168, %p169
    %p172 = scmp.ne.s32.totalorder %s157, %s171
    %p173 = scmp.eq.s32.totalorder %s21, 0
    %p174 = por %p172, %p173
    %s176 = sadd.s32 %s175, 1
    %p179 = scmp.eq.s32.totalorder %s15, 3
    %p180 = scmp.ne.s32.totalorder %s175, %s177
    %p181 = scmp.eq.s32.totalorder %s15, 0
    %p182 = por %p180, %p181
    %p183 = scmp.ne.s32.totalorder %s175, %s177
    %p184 = scmp.eq.s32.totalorder %s20, 3
    %p185 = por %p183, %p184
    %p186 = scmp.ne.s32.totalorder %s177, %s178
    %p187 = scmp.eq.s32.totalorder %s20, 0
    %p188 = por %p186, %p187
    %p189 = scmp.ne.s32.totalorder %s177, %s178
    %p190 = scmp.eq.s32.totalorder %s21, 3
    %p191 = por %p189, %p190
    %p193 = scmp.ne.s32.totalorder %s178, %s192
    %p194 = scmp.eq.s32.totalorder %s21, 0
    %p195 = por %p193, %p194
    %s197 = sadd.s32 %s196, 1
    %p200 = scmp.eq.s32.totalorder %s15, 3
    %p201 = scmp.ne.s32.totalorder %s196, %s198
    %p202 = scmp.eq.s32.totalorder %s15, 0
    %p203 = por %p201, %p202
    %p204 = scmp.ne.s32.totalorder %s196, %s198
    %p205 = scmp.eq.s32.totalorder %s20, 3
    %p206 = por %p204, %p205
    %p207 = scmp.ne.s32.totalorder %s198, %s199
    %p208 = scmp.eq.s32.totalorder %s20, 0
    %p209 = por %p207, %p208
    %p210 = scmp.ne.s32.totalorder %s198, %s199
    %p211 = scmp.eq.s32.totalorder %s21, 3
    %p212 = por %p210, %p211
    %p214 = scmp.ne.s32.totalorder %s199, %s213
    %p215 = scmp.eq.s32.totalorder %s21, 0
    %p216 = por %p214, %p215
    %s217 = ssub.s32 %s15, %s22
    %p218 = scmp.eq.s32.totalorder %s217, 0
    %s220 = sadd.s32 %s219, 1
    %s221 = scalar_select %p218, %s219, %s220
    %p224 = pneg %p218
    %p225 = scmp.eq.s32.totalorder %s15, 3
    %p226 = por %p224, %p225
    %p227 = scmp.ne.s32.totalorder %s219, %s222
    %p228 = scmp.eq.s32.totalorder %s15, 0
    %p229 = por %p227, %p228
    %p230 = scmp.ne.s32.totalorder %s219, %s222
    %p231 = scmp.eq.s32.totalorder %s20, 3
    %p232 = por %p230, %p231
    %p233 = scmp.ne.s32.totalorder %s222, %s223
    %p234 = scmp.eq.s32.totalorder %s20, 0
    %p235 = por %p233, %p234
    %p236 = scmp.ne.s32.totalorder %s222, %s223
    %p237 = scmp.eq.s32.totalorder %s21, 3
    %p238 = por %p236, %p237
    %p240 = scmp.ne.s32.totalorder %s223, %s239
    %p241 = scmp.eq.s32.totalorder %s21, 0
    %p242 = por %p240, %p241
    %p243 = scmp.le.s32.totalorder 1, %s15
    %p244 = scmp.lt.s32.totalorder %s15, 5
    %p245 = pnand %p243, %p244
    %p246 = pneg %p245
    // Predicated region
    $region9: #{mlpnet_forward.1} parent=5 // pred_check
      _
    $region10: #{mlpnet_forward.1} parent=5 // pred_check_branch
      %248 = sbr.rel (%p245) target = $region12
    $region11: #{mlpnet_forward.1} parent=5 // pred_region
      %s249 = ssub.s32 %s15, 1
      // Predicated region
      $region13: #{mlpnet_forward.1} parent=11 // pred_check
        %p250 = pneg %p62
      $region14: #{mlpnet_forward.1} parent=11 // pred_check_branch
        %252 = sbr.rel (%p250) target = $region16
      $region15: #{mlpnet_forward.1} parent=11 // pred_region
        _
      $region16: #{mlpnet_forward.1} parent=11 // pred_fallthru
        _
      // Predicated region
      $region17: #{mlpnet_forward.1} parent=11 // pred_check
        %p253 = pneg %p83
      $region18: #{mlpnet_forward.1} parent=11 // pred_check_branch
        %255 = sbr.rel (%p253) target = $region20
      $region19: #{mlpnet_forward.1} parent=11 // pred_region
        _
      $region20: #{mlpnet_forward.1} parent=11 // pred_fallthru
        _
      // Predicated region
      $region21: #{mlpnet_forward.1} parent=11 // pred_check
        %p256 = pneg %p104
      $region22: #{mlpnet_forward.1} parent=11 // pred_check_branch
        %258 = sbr.rel (%p256) target = $region24
      $region23: #{mlpnet_forward.1} parent=11 // pred_region
        _
      $region24: #{mlpnet_forward.1} parent=11 // pred_fallthru
        _
      // Predicated region
      $region25: #{mlpnet_forward.1} parent=11 // pred_check
        %p259 = pneg %p125
      $region26: #{mlpnet_forward.1} parent=11 // pred_check_branch
        %261 = sbr.rel (%p259) target = $region28
      $region27: #{mlpnet_forward.1} parent=11 // pred_region
        _
      $region28: #{mlpnet_forward.1} parent=11 // pred_fallthru
        _
      // Predicated region
      $region29: #{mlpnet_forward.1} parent=11 // pred_check
        %p262 = pneg %p146
      $region30: #{mlpnet_forward.1} parent=11 // pred_check_branch
        %264 = sbr.rel (%p262) target = $region32
      $region31: #{mlpnet_forward.1} parent=11 // pred_region
        _
      $region32: #{mlpnet_forward.1} parent=11 // pred_fallthru
        _
      // Predicated region
      $region33: #{mlpnet_forward.1} parent=11 // pred_check
        %p265 = pneg %p167
      $region34: #{mlpnet_forward.1} parent=11 // pred_check_branch
        %267 = sbr.rel (%p265) target = $region36
      $region35: #{mlpnet_forward.1} parent=11 // pred_region
        _
      $region36: #{mlpnet_forward.1} parent=11 // pred_fallthru
        _
      // Predicated region
      $region37: #{mlpnet_forward.1} parent=11 // pred_check
        %p268 = pneg %p188
      $region38: #{mlpnet_forward.1} parent=11 // pred_check_branch
        %270 = sbr.rel (%p268) target = $region40
      $region39: #{mlpnet_forward.1} parent=11 // pred_region
        _
      $region40: #{mlpnet_forward.1} parent=11 // pred_fallthru
        _
      // Predicated region
      $region41: #{mlpnet_forward.1} parent=11 // pred_check
        %p271 = pneg %p209
      $region42: #{mlpnet_forward.1} parent=11 // pred_check_branch
        %273 = sbr.rel (%p271) target = $region44
      $region43: #{mlpnet_forward.1} parent=11 // pred_region
        _
      $region44: #{mlpnet_forward.1} parent=11 // pred_fallthru
        _
    $region12: #{mlpnet_forward.1} parent=5 // pred_fallthru
      _
    %p274 = scmp.lt.s32.totalorder %s15, 4
    // Predicated region
    $region45: #{mlpnet_forward.1} parent=5 // pred_check
      %p275 = pneg %p274
    $region46: #{mlpnet_forward.1} parent=5 // pred_check_branch
      %277 = sbr.rel (%p275) target = $region48
    $region47: #{mlpnet_forward.1} parent=5 // pred_region
      // Predicated region
      $region49: #{mlpnet_forward.1} parent=47 // pred_check
        %p278 = pneg %p35
      $region50: #{mlpnet_forward.1} parent=47 // pred_check_branch
        %280 = sbr.rel (%p278) target = $region52
      $region51: #{mlpnet_forward.1} parent=47 // pred_region
        %s281 = smul.u32 32, %s15
        %p282 = scmp.lt.s32.totalorder %s281, 127
        %s283 = scalar_select %p282, %s281, 127
        %s284 = smul.addr %s283, 8
        %s285 = scalar_lea.vmem %s0, %s284
        %s286 = smul.u32 32, %s15
      $region52: #{mlpnet_forward.1} parent=47 // pred_fallthru
        _
    $region48: #{mlpnet_forward.1} parent=5 // pred_fallthru
      _
    %p287 = scmp.le.s32.totalorder 1, %s15
    %p288 = scmp.lt.s32.totalorder %s15, 5
    %p289 = pnand %p287, %p288
    %p290 = pneg %p289
    // Predicated region
    $region53: #{mlpnet_forward.1} parent=5 // pred_check
      _
    $region54: #{mlpnet_forward.1} parent=5 // pred_check_branch
      %292 = sbr.rel (%p289) target = $region56
    $region55: #{mlpnet_forward.1} parent=5 // pred_region
      %s293 = ssub.s32 %s15, 1
      %s294 = smul.u32 32, %s20
      %p295 = scmp.lt.s32.totalorder %s294, 127
      %s296 = scalar_select %p295, %s294, 127
      %s297 = smul.addr %s296, 8
      %s298 = scalar_lea.vmem %s0, %s297
      %p299 = pneg %p41
      %p300 = pneg %p38
      %p301 = pneg %p62
      %p302 = pneg %p59
      %p303 = pneg %p83
      %p304 = pneg %p80
      %p305 = pneg %p104
      %p306 = pneg %p101
      %p307 = pneg %p125
      %p308 = pneg %p122
      %p309 = pneg %p146
      %p310 = pneg %p143
      %p311 = pneg %p167
      %p312 = pneg %p164
      %p313 = pneg %p188
      %p314 = pneg %p185
      %p315 = pneg %p209
      %p316 = pneg %p206
      %p317 = pneg %p235
      %p318 = pneg %p232
      %s319 = smul.u32 32, %s20
      %p320 = scmp.lt.s32.totalorder %s319, 127
      %s321 = scalar_select %p320, %s319, 127
      %s322 = smul.addr %s321, 4
      %s323 = scalar_lea.vmem %s9, %s322
      %s324 = smul.u32 32, %s20
      %p325 = scmp.lt.s32.totalorder %s324, 127
      %s326 = scalar_select %p325, %s324, 127
      %s327 = smul.addr %s326, 8
      %s328 = scalar_lea.vmem %s0, %s327
      %s329 = smul.u32 32, %s20
      %s330 = smul.u32 32, %s20
      %p331 = scmp.lt.s32.totalorder %s330, 127
      %s332 = scalar_select %p331, %s330, 127
      %s333 = smul.addr %s332, 4
      %s334 = scalar_lea.vmem %s9, %s333
      %s335 = smul.u32 32, %s20
      %v337 = vlaneseq
      %v338 = vand.u32 %v337, 127
      %v339 = vld [vmem:[%s328] sm:$0xff]
      %v340 = vld [vmem:[%s328 + $0x8] sm:$0xff]
      %v341 = vld [vmem:[%s328 + $0x10] sm:$0xff]
      %v342 = vld [vmem:[%s328 + $0x18] sm:$0xff]
      %v343 = vld [vmem:[%s328 + $0x20] sm:$0xff]
      %v344 = vld [vmem:[%s328 + $0x28] sm:$0xff]
      %v345 = vld [vmem:[%s328 + $0x30] sm:$0xff]
      %v346 = vld [vmem:[%s328 + $0x38] sm:$0xff]
      %v347 = vld [vmem:[%s328 + $0x40] sm:$0xff]
      %v348 = vld [vmem:[%s328 + $0x48] sm:$0xff]
      %v349 = vld [vmem:[%s328 + $0x50] sm:$0xff]
      %v350 = vld [vmem:[%s328 + $0x58] sm:$0xff]
      %v351 = vld [vmem:[%s328 + $0x60] sm:$0xff]
      %v352 = vld [vmem:[%s328 + $0x68] sm:$0xff]
      %v353 = vld [vmem:[%s328 + $0x70] sm:$0xff]
      %v354 = vld [vmem:[%s328 + $0x78] sm:$0xff]
      %v355 = vld [vmem:[%s1] sm:$0xff]
      %v356 = vld [vmem:[%s1 + $0x8] sm:$0xff]
      %v357 = vld [vmem:[%s1 + $0x10] sm:$0xf]
      %v358 = vpack.c.bf16 %v340, %v339
      %v359 = vpack.c.bf16 %v342, %v341
      %v360 = vpack.c.bf16 %v344, %v343
      %v361 = vpack.c.bf16 %v346, %v345
      %v362 = vpack.c.bf16 %v348, %v347
      %v363 = vpack.c.bf16 %v350, %v349
      %v364 = vpack.c.bf16 %v352, %v351
      %v365 = vpack.c.bf16 %v354, %v353
      %v369 = vunpack.c.l.b16 %v355
      %v370 = vunpack.c.h.b16 %v355
      %v371 = vunpack.c.l.b16 %v356
      %v372 = vunpack.c.h.b16 %v356
      %v373 = vunpack.c.l.b16 %v357
      %v374 = vpack.c.b16 %v369, %v369
      %v375 = vpack.c.b16 %v370, %v370
      %v376 = vpack.c.b16 %v371, %v371
      %v377 = vpack.c.b16 %v372, %v372
      %v378 = vpack.c.b16 %v373, %v373
      %vm379 = vcmask 64512
      %v381 = vsel %vm379, %v358, 0
      %v384 = vsel %vm379, %v359, 0
      %v387 = vsel %vm379, %v360, 0
      %v390 = vsel %vm379, %v361, 0
      %v393 = vsel %vm379, %v362, 0
      %v396 = vsel %vm379, %v363, 0
      %v399 = vsel %vm379, %v364, 0
      %v402 = vsel %vm379, %v365, 0
      %vm404 = vcmask 1043456
      %v406 = vsel %vm404, %v374, 0
      %v409 = vsel %vm404, %v375, 0
      %v412 = vsel %vm404, %v376, 0
      %v415 = vsel %vm404, %v377, 0
      %v418 = vsel %vm404, %v378, 0
      %420 = vmatprep.subr.bf16.mxu0 %v409
      %421 = vmatpush1.bf16.msra.mxu0 %v406
      %422 = vmatprep.subr.bf16.mxu0 0
      %423 = vmatpush1.bf16.msra.mxu0 0
      %424 = vmatprep.subr.bf16.mxu0 0
      %425 = vmatpush1.bf16.msra.mxu0 0
      %426 = vmatprep.subr.bf16.mxu0 0
      %427 = vmatpush1.bf16.msra.mxu0 0
      %428 = vmatprep.subr.bf16.mxu0 0
      %429 = vmatpush1.bf16.msra.mxu0 0
      %430 = vmatprep.subr.bf16.mxu0 0
      %431 = vmatpush1.bf16.msra.mxu0 0
      %432 = vmatprep.subr.bf16.mxu0 0
      %433 = vmatpush1.bf16.msra.mxu0 0
      %434 = vmatprep.subr.bf16.mxu0 0
      %435 = vmatpush1.bf16.msra.mxu0 0
      %436 = vmatprep.subr.bf16.mxu0 0
      %437 = vmatpush1.bf16.msra.mxu0 0
      %438 = vmatprep.subr.bf16.mxu0 0
      %439 = vmatpush1.bf16.msra.mxu0 0
      %440 = vmatprep.subr.bf16.mxu0 0
      %441 = vmatpush1.bf16.msra.mxu0 0
      %442 = vmatprep.subr.bf16.mxu0 0
      %443 = vmatpush1.bf16.msra.mxu0 0
      %444 = vmatprep.subr.bf16.mxu0 0
      %445 = vmatpush1.bf16.msra.mxu0 0
      %446 = vmatprep.subr.bf16.mxu0 0
      %447 = vmatpush1.bf16.msra.mxu0 0
      %448 = vmatprep.subr.bf16.mxu0 0
      %449 = vmatpush1.bf16.msra.mxu0 0
      %450 = vmatprep.subr.bf16.mxu0 0
      %451 = vmatpush1.bf16.msra.mxu0 0
      %452 = vmatprep.mubr.bf16.mxu0 0
      %453 = vmatmul.mubr.bf16.gmra.mrb[0].mxu0 %v381
      %v454 = vpop.f32.mrb[0].mxu0
      %v455 = vadd.f32 0.0, %v454
      %v456 = vpop.f32.mrb[0].mxu0
      %v457 = vadd.f32 0.0, %v456
      %v458 = vpop.f32.mrb[0].mxu0
      %v459 = vadd.f32 0.0, %v458
      %v460 = vpop.f32.mrb[0].mxu0
      %v461 = vadd.f32 0.0, %v460
      %462 = vmatprep.mubr.bf16.mxu0 0
      %463 = vmatmul.mubr.bf16.gmra.mrb[0].mxu0 %v384
      %v464 = vpop.f32.mrb[0].mxu0
      %v465 = vadd.f32 0.0, %v464
      %v466 = vpop.f32.mrb[0].mxu0
      %v467 = vadd.f32 0.0, %v466
      %v468 = vpop.f32.mrb[0].mxu0
      %v469 = vadd.f32 0.0, %v468
      %v470 = vpop.f32.mrb[0].mxu0
      %v471 = vadd.f32 0.0, %v470
      %472 = vmatprep.mubr.bf16.mxu0 0
      %473 = vmatmul.mubr.bf16.gmra.mrb[0].mxu0 %v387
      %v474 = vpop.f32.mrb[0].mxu0
      %v475 = vadd.f32 0.0, %v474
      %v476 = vpop.f32.mrb[0].mxu0
      %v477 = vadd.f32 0.0, %v476
      %v478 = vpop.f32.mrb[0].mxu0
      %v479 = vadd.f32 0.0, %v478
      %v480 = vpop.f32.mrb[0].mxu0
      %v481 = vadd.f32 0.0, %v480
      %482 = vmatprep.mubr.bf16.mxu0 0
      %483 = vmatmul.mubr.bf16.gmra.mrb[0].mxu0 %v390
      %v484 = vpop.f32.mrb[0].mxu0
      %v485 = vadd.f32 0.0, %v484
      %v486 = vpop.f32.mrb[0].mxu0
      %v487 = vadd.f32 0.0, %v486
      %v488 = vpop.f32.mrb[0].mxu0
      %v489 = vadd.f32 0.0, %v488
      %v490 = vpop.f32.mrb[0].mxu0
      %v491 = vadd.f32 0.0, %v490
      %492 = vmatprep.mubr.bf16.mxu0 0
      %493 = vmatmul.mubr.bf16.gmra.mrb[0].mxu0 %v393
      %v494 = vpop.f32.mrb[0].mxu0
      %v495 = vadd.f32 0.0, %v494
      %v496 = vpop.f32.mrb[0].mxu0
      %v497 = vadd.f32 0.0, %v496
      %v498 = vpop.f32.mrb[0].mxu0
      %v499 = vadd.f32 0.0, %v498
      %v500 = vpop.f32.mrb[0].mxu0
      %v501 = vadd.f32 0.0, %v500
      %502 = vmatprep.mubr.bf16.mxu0 0
      %503 = vmatmul.mubr.bf16.gmra.mrb[0].mxu0 %v396
      %v504 = vpop.f32.mrb[0].mxu0
      %v505 = vadd.f32 0.0, %v504
      %v506 = vpop.f32.mrb[0].mxu0
      %v507 = vadd.f32 0.0, %v506
      %v508 = vpop.f32.mrb[0].mxu0
      %v509 = vadd.f32 0.0, %v508
      %v510 = vpop.f32.mrb[0].mxu0
      %v511 = vadd.f32 0.0, %v510
      %512 = vmatprep.mubr.bf16.mxu0 0
      %513 = vmatmul.mubr.bf16.gmra.mrb[0].mxu0 %v399
      %v514 = vpop.f32.mrb[0].mxu0
      %v515 = vadd.f32 0.0, %v514
      %v516 = vpop.f32.mrb[0].mxu0
      %v517 = vadd.f32 0.0, %v516
      %v518 = vpop.f32.mrb[0].mxu0
      %v519 = vadd.f32 0.0, %v518
      %v520 = vpop.f32.mrb[0].mxu0
      %v521 = vadd.f32 0.0, %v520
      %522 = vmatprep.mubr.bf16.mxu0 0
      %523 = vmatmul.mubr.bf16.gmra.mrb[0].mxu0 %v402
      %v524 = vpop.f32.mrb[0].mxu0
      %v525 = vadd.f32 0.0, %v524
      %v526 = vpop.f32.mrb[0].mxu0
      %v527 = vadd.f32 0.0, %v526
      %v528 = vpop.f32.mrb[0].mxu0
      %v529 = vadd.f32 0.0, %v528
      %v530 = vpop.f32.mrb[0].mxu0
      %v531 = vadd.f32 0.0, %v530
      %532 = vdwg.mxu0
      %533 = vmatprep.subr.bf16.mxu0 %v415
      %534 = vmatpush1.bf16.msra.mxu0 %v412
      %535 = vmatprep.subr.bf16.mxu0 0
      %536 = vmatpush1.bf16.msra.mxu0 0
      %537 = vmatprep.subr.bf16.mxu0 0
      %538 = vmatpush1.bf16.msra.mxu0 0
      %539 = vmatprep.subr.bf16.mxu0 0
      %540 = vmatpush1.bf16.msra.mxu0 0
      %541 = vmatprep.subr.bf16.mxu0 0
      %542 = vmatpush1.bf16.msra.mxu0 0
      %543 = vmatprep.subr.bf16.mxu0 0
      %544 = vmatpush1.bf16.msra.mxu0 0
      %545 = vmatprep.subr.bf16.mxu0 0
      %546 = vmatpush1.bf16.msra.mxu0 0
      %547 = vmatprep.subr.bf16.mxu0 0
      %548 = vmatpush1.bf16.msra.mxu0 0
      %549 = vmatprep.subr.bf16.mxu0 0
      %550 = vmatpush1.bf16.msra.mxu0 0
      %551 = vmatprep.subr.bf16.mxu0 0
      %552 = vmatpush1.bf16.msra.mxu0 0
      %553 = vmatprep.subr.bf16.mxu0 0
      %554 = vmatpush1.bf16.msra.mxu0 0
      %555 = vmatprep.subr.bf16.mxu0 0
      %556 = vmatpush1.bf16.msra.mxu0 0
      %557 = vmatprep.subr.bf16.mxu0 0
      %558 = vmatpush1.bf16.msra.mxu0 0
      %559 = vmatprep.subr.bf16.mxu0 0
      %560 = vmatpush1.bf16.msra.mxu0 0
      %561 = vmatprep.subr.bf16.mxu0 0
      %562 = vmatpush1.bf16.msra.mxu0 0
      %563 = vmatprep.subr.bf16.mxu0 0
      %564 = vmatpush1.bf16.msra.mxu0 0
      %565 = vmatprep.mubr.bf16.mxu0 0
      %566 = vmatmul.mubr.bf16.gmra.mrb[0].mxu0 %v381
      %v567 = vpop.f32.mrb[0].mxu0
      %v568 = vadd.f32 0.0, %v567
      %v569 = vpop.f32.mrb[0].mxu0
      %v570 = vadd.f32 0.0, %v569
      %v571 = vpop.f32.mrb[0].mxu0
      %v572 = vadd.f32 0.0, %v571
      %v573 = vpop.f32.mrb[0].mxu0
      %v574 = vadd.f32 0.0, %v573
      %575 = vmatprep.mubr.bf16.mxu0 0
      %576 = vmatmul.mubr.bf16.gmra.mrb[0].mxu0 %v384
      %v577 = vpop.f32.mrb[0].mxu0
      %v578 = vadd.f32 0.0, %v577
      %v579 = vpop.f32.mrb[0].mxu0
      %v580 = vadd.f32 0.0, %v579
      %v581 = vpop.f32.mrb[0].mxu0
      %v582 = vadd.f32 0.0, %v581
      %v583 = vpop.f32.mrb[0].mxu0
      %v584 = vadd.f32 0.0, %v583
      %585 = vmatprep.mubr.bf16.mxu0 0
      %586 = vmatmul.mubr.bf16.gmra.mrb[0].mxu0 %v387
      %v587 = vpop.f32.mrb[0].mxu0
      %v588 = vadd.f32 0.0, %v587
      %v589 = vpop.f32.mrb[0].mxu0
      %v590 = vadd.f32 0.0, %v589
      %v591 = vpop.f32.mrb[0].mxu0
      %v592 = vadd.f32 0.0, %v591
      %v593 = vpop.f32.mrb[0].mxu0
      %v594 = vadd.f32 0.0, %v593
      %595 = vmatprep.mubr.bf16.mxu0 0
      %596 = vmatmul.mubr.bf16.gmra.mrb[0].mxu0 %v390
      %v597 = vpop.f32.mrb[0].mxu0
      %v598 = vadd.f32 0.0, %v597
      %v599 = vpop.f32.mrb[0].mxu0
      %v600 = vadd.f32 0.0, %v599
      %v601 = vpop.f32.mrb[0].mxu0
      %v602 = vadd.f32 0.0, %v601
      %v603 = vpop.f32.mrb[0].mxu0
      %v604 = vadd.f32 0.0, %v603
      %605 = vmatprep.mubr.bf16.mxu0 0
      %606 = vmatmul.mubr.bf16.gmra.mrb[0].mxu0 %v393
      %v607 = vpop.f32.mrb[0].mxu0
      %v608 = vadd.f32 0.0, %v607
      %v609 = vpop.f32.mrb[0].mxu0
      %v610 = vadd.f32 0.0, %v609
      %v611 = vpop.f32.mrb[0].mxu0
      %v612 = vadd.f32 0.0, %v611
      %v613 = vpop.f32.mrb[0].mxu0
      %v614 = vadd.f32 0.0, %v613
      %615 = vmatprep.mubr.bf16.mxu0 0
      %616 = vmatmul.mubr.bf16.gmra.mrb[0].mxu0 %v396
      %v617 = vpop.f32.mrb[0].mxu0
      %v618 = vadd.f32 0.0, %v617
      %v619 = vpop.f32.mrb[0].mxu0
      %v620 = vadd.f32 0.0, %v619
      %v621 = vpop.f32.mrb[0].mxu0
      %v622 = vadd.f32 0.0, %v621
      %v623 = vpop.f32.mrb[0].mxu0
      %v624 = vadd.f32 0.0, %v623
      %625 = vmatprep.mubr.bf16.mxu0 0
      %626 = vmatmul.mubr.bf16.gmra.mrb[0].mxu0 %v399
      %v627 = vpop.f32.mrb[0].mxu0
      %v628 = vadd.f32 0.0, %v627
      %v629 = vpop.f32.mrb[0].mxu0
      %v630 = vadd.f32 0.0, %v629
      %v631 = vpop.f32.mrb[0].mxu0
      %v632 = vadd.f32 0.0, %v631
      %v633 = vpop.f32.mrb[0].mxu0
      %v634 = vadd.f32 0.0, %v633
      %635 = vmatprep.mubr.bf16.mxu0 0
      %636 = vmatmul.mubr.bf16.gmra.mrb[0].mxu0 %v402
      %v637 = vpop.f32.mrb[0].mxu0
      %v638 = vadd.f32 0.0, %v637
      %v639 = vpop.f32.mrb[0].mxu0
      %v640 = vadd.f32 0.0, %v639
      %v641 = vpop.f32.mrb[0].mxu0
      %v642 = vadd.f32 0.0, %v641
      %v643 = vpop.f32.mrb[0].mxu0
      %v644 = vadd.f32 0.0, %v643
      %645 = vdwg.mxu0
      %646 = vmatprep.subr.bf16.mxu0 0
      %647 = vmatpush1.bf16.msra.mxu0 %v418
      %648 = vmatprep.subr.bf16.mxu0 0
      %649 = vmatpush1.bf16.msra.mxu0 0
      %650 = vmatprep.subr.bf16.mxu0 0
      %651 = vmatpush1.bf16.msra.mxu0 0
      %652 = vmatprep.subr.bf16.mxu0 0
      %653 = vmatpush1.bf16.msra.mxu0 0
      %654 = vmatprep.subr.bf16.mxu0 0
      %655 = vmatpush1.bf16.msra.mxu0 0
      %656 = vmatprep.subr.bf16.mxu0 0
      %657 = vmatpush1.bf16.msra.mxu0 0
      %658 = vmatprep.subr.bf16.mxu0 0
      %659 = vmatpush1.bf16.msra.mxu0 0
      %660 = vmatprep.subr.bf16.mxu0 0
      %661 = vmatpush1.bf16.msra.mxu0 0
      %662 = vmatprep.subr.bf16.mxu0 0
      %663 = vmatpush1.bf16.msra.mxu0 0
      %664 = vmatprep.subr.bf16.mxu0 0
      %665 = vmatpush1.bf16.msra.mxu0 0
      %666 = vmatprep.subr.bf16.mxu0 0
      %667 = vmatpush1.bf16.msra.mxu0 0
      %668 = vmatprep.subr.bf16.mxu0 0
      %669 = vmatpush1.bf16.msra.mxu0 0
      %670 = vmatprep.subr.bf16.mxu0 0
      %671 = vmatpush1.bf16.msra.mxu0 0
      %672 = vmatprep.subr.bf16.mxu0 0
      %673 = vmatpush1.bf16.msra.mxu0 0
      %674 = vmatprep.subr.bf16.mxu0 0
      %675 = vmatpush1.bf16.msra.mxu0 0
      %676 = vmatprep.subr.bf16.mxu0 0
      %677 = vmatpush1.bf16.msra.mxu0 0
      %678 = vmatprep.mubr.bf16.mxu0 0
      %679 = vmatmul.mubr.bf16.gmra.mrb[0].mxu0 %v381
      %v680 = vpop.f32.mrb[0].mxu0
      %v681 = vadd.f32 0.0, %v680
      %v682 = vpop.f32.mrb[0].mxu0
      %v683 = vpop.f32.mrb[0].mxu0
      %v684 = vadd.f32 0.0, %v683
      %v685 = vpop.f32.mrb[0].mxu0
      %686 = vmatprep.mubr.bf16.mxu0 0
      %687 = vmatmul.mubr.bf16.gmra.mrb[0].mxu0 %v384
      %v688 = vpop.f32.mrb[0].mxu0
      %v689 = vadd.f32 0.0, %v688
      %v690 = vpop.f32.mrb[0].mxu0
      %v691 = vpop.f32.mrb[0].mxu0
      %v692 = vadd.f32 0.0, %v691
      %v693 = vpop.f32.mrb[0].mxu0
      %694 = vmatprep.mubr.bf16.mxu0 0
      %695 = vmatmul.mubr.bf16.gmra.mrb[0].mxu0 %v387
      %v696 = vpop.f32.mrb[0].mxu0
      %v697 = vadd.f32 0.0, %v696
      %v698 = vpop.f32.mrb[0].mxu0
      %v699 = vpop.f32.mrb[0].mxu0
      %v700 = vadd.f32 0.0, %v699
      %v701 = vpop.f32.mrb[0].mxu0
      %702 = vmatprep.mubr.bf16.mxu0 0
      %703 = vmatmul.mubr.bf16.gmra.mrb[0].mxu0 %v390
      %v704 = vpop.f32.mrb[0].mxu0
      %v705 = vadd.f32 0.0, %v704
      %v706 = vpop.f32.mrb[0].mxu0
      %v707 = vpop.f32.mrb[0].mxu0
      %v708 = vadd.f32 0.0, %v707
      %v709 = vpop.f32.mrb[0].mxu0
      %710 = vmatprep.mubr.bf16.mxu0 0
      %711 = vmatmul.mubr.bf16.gmra.mrb[0].mxu0 %v393
      %v712 = vpop.f32.mrb[0].mxu0
      %v713 = vadd.f32 0.0, %v712
      %v714 = vpop.f32.mrb[0].mxu0
      %v715 = vpop.f32.mrb[0].mxu0
      %v716 = vadd.f32 0.0, %v715
      %v717 = vpop.f32.mrb[0].mxu0
      %718 = vmatprep.mubr.bf16.mxu0 0
      %719 = vmatmul.mubr.bf16.gmra.mrb[0].mxu0 %v396
      %v720 = vpop.f32.mrb[0].mxu0
      %v721 = vadd.f32 0.0, %v720
      %v722 = vpop.f32.mrb[0].mxu0
      %v723 = vpop.f32.mrb[0].mxu0
      %v724 = vadd.f32 0.0, %v723
      %v725 = vpop.f32.mrb[0].mxu0
      %726 = vmatprep.mubr.bf16.mxu0 0
      %727 = vmatmul.mubr.bf16.gmra.mrb[0].mxu0 %v399
      %v728 = vpop.f32.mrb[0].mxu0
      %v729 = vadd.f32 0.0, %v728
      %v730 = vpop.f32.mrb[0].mxu0
      %v731 = vpop.f32.mrb[0].mxu0
      %v732 = vadd.f32 0.0, %v731
      %v733 = vpop.f32.mrb[0].mxu0
      %734 = vmatprep.mubr.bf16.mxu0 0
      %735 = vmatmul.mubr.bf16.gmra.mrb[0].mxu0 %v402
      %v736 = vpop.f32.mrb[0].mxu0
      %v737 = vadd.f32 0.0, %v736
      %v738 = vpop.f32.mrb[0].mxu0
      %v739 = vpop.f32.mrb[0].mxu0
      %v740 = vadd.f32 0.0, %v739
      %v741 = vpop.f32.mrb[0].mxu0
      %742 = vdwg.mxu0
      %v743 = vld [vmem:[%s6] sm:$0x3]
      %v745 = vlaneseq
      %v746 = vshrl.u32 %v745, 7
      %v747 = vsub.s32 0, %v746
      %v748 = vrot.slane %v743, %v747
      %v749 = vlaneseq
      %v750 = vshrl.u32 %v749, 7
      %v751 = vsub.s32 1, %v750
      %v752 = vrot.slane %v743, %v751
      %v755 = vadd.f32 %v455, %v748
      %v756 = vadd.f32 %v457, %v752
      %v757 = vadd.f32 %v459, %v748
      %v758 = vadd.f32 %v461, %v752
      %v759 = vadd.f32 %v465, %v748
      %v760 = vadd.f32 %v467, %v752
      %v761 = vadd.f32 %v469, %v748
      %v762 = vadd.f32 %v471, %v752
      %v763 = vadd.f32 %v475, %v748
      %v764 = vadd.f32 %v477, %v752
      %v765 = vadd.f32 %v479, %v748
      %v766 = vadd.f32 %v481, %v752
      %v767 = vadd.f32 %v485, %v748
      %v768 = vadd.f32 %v487, %v752
      %v769 = vadd.f32 %v489, %v748
      %v770 = vadd.f32 %v491, %v752
      %v771 = vadd.f32 %v495, %v748
      %v772 = vadd.f32 %v497, %v752
      %v773 = vadd.f32 %v499, %v748
      %v774 = vadd.f32 %v501, %v752
      %v775 = vadd.f32 %v505, %v748
      %v776 = vadd.f32 %v507, %v752
      %v777 = vadd.f32 %v509, %v748
      %v778 = vadd.f32 %v511, %v752
      %v779 = vadd.f32 %v515, %v748
      %v780 = vadd.f32 %v517, %v752
      %v781 = vadd.f32 %v519, %v748
      %v782 = vadd.f32 %v521, %v752
      %v783 = vadd.f32 %v525, %v748
      %v784 = vadd.f32 %v527, %v752
      %v785 = vadd.f32 %v529, %v748
      %v786 = vadd.f32 %v531, %v752
      %v787 = vmax.f32 %v755, 0.0
      %v788 = vmax.f32 %v756, 0.0
      %v789 = vmax.f32 %v757, 0.0
      %v790 = vmax.f32 %v758, 0.0
      %v791 = vmax.f32 %v759, 0.0
      %v792 = vmax.f32 %v760, 0.0
      %v793 = vmax.f32 %v761, 0.0
      %v794 = vmax.f32 %v762, 0.0
      %v795 = vmax.f32 %v763, 0.0
      %v796 = vmax.f32 %v764, 0.0
      %v797 = vmax.f32 %v765, 0.0
      %v798 = vmax.f32 %v766, 0.0
      %v799 = vmax.f32 %v767, 0.0
      %v800 = vmax.f32 %v768, 0.0
      %v801 = vmax.f32 %v769, 0.0
      %v802 = vmax.f32 %v770, 0.0
      %v803 = vmax.f32 %v771, 0.0
      %v804 = vmax.f32 %v772, 0.0
      %v805 = vmax.f32 %v773, 0.0
      %v806 = vmax.f32 %v774, 0.0
      %v807 = vmax.f32 %v775, 0.0
      %v808 = vmax.f32 %v776, 0.0
      %v809 = vmax.f32 %v777, 0.0
      %v810 = vmax.f32 %v778, 0.0
      %v811 = vmax.f32 %v779, 0.0
      %v812 = vmax.f32 %v780, 0.0
      %v813 = vmax.f32 %v781, 0.0
      %v814 = vmax.f32 %v782, 0.0
      %v815 = vmax.f32 %v783, 0.0
      %v816 = vmax.f32 %v784, 0.0
      %v817 = vmax.f32 %v785, 0.0
      %v818 = vmax.f32 %v786, 0.0
      %v819 = vld [vmem:[%s2] sm:$0xff]
      %v820 = vld [vmem:[%s2 + $0x8] sm:$0xff]
      %v821 = vld [vmem:[%s2 + $0x10] sm:$0xff]
      %v822 = vld [vmem:[%s2 + $0x18] sm:$0xff]
      %v823 = vld [vmem:[%s2 + $0x20] sm:$0xff]
      %v824 = vld [vmem:[%s2 + $0x28] sm:$0xff]
      %v825 = vld [vmem:[%s2 + $0x30] sm:$0xff]
      %v826 = vld [vmem:[%s2 + $0x38] sm:$0xff]
      %v827 = vld [vmem:[%s2 + $0x40] sm:$0xff]
      %v828 = vld [vmem:[%s2 + $0x48] sm:$0xff]
      %v829 = vld [vmem:[%s2 + $0x50] sm:$0xff]
      %v830 = vld [vmem:[%s2 + $0x58] sm:$0xff]
      %v831 = vld [vmem:[%s2 + $0x60] sm:$0xff]
      %v832 = vld [vmem:[%s2 + $0x68] sm:$0xff]
      %v833 = vld [vmem:[%s2 + $0x70] sm:$0xff]
      %v834 = vld [vmem:[%s2 + $0x78] sm:$0xff]
      %v835 = vld [vmem:[%s2 + $0x80] sm:$0xff]
      %v836 = vld [vmem:[%s2 + $0x88] sm:$0xff]
      %v837 = vld [vmem:[%s2 + $0x90] sm:$0xff]
      %v838 = vld [vmem:[%s2 + $0x98] sm:$0xff]
      %v839 = vld [vmem:[%s2 + $0xa0] sm:$0xff]
      %v840 = vld [vmem:[%s2 + $0xa8] sm:$0xff]
      %v841 = vld [vmem:[%s2 + $0xb0] sm:$0xff]
      %v842 = vld [vmem:[%s2 + $0xb8] sm:$0xff]
      %v843 = vld [vmem:[%s2 + $0xc0] sm:$0xff]
      %v844 = vld [vmem:[%s2 + $0xc8] sm:$0xff]
      %v845 = vld [vmem:[%s2 + $0xd0] sm:$0xff]
      %v846 = vld [vmem:[%s2 + $0xd8] sm:$0xff]
      %v847 = vld [vmem:[%s2 + $0xe0] sm:$0xff]
      %v848 = vld [vmem:[%s2 + $0xe8] sm:$0xff]
      %v849 = vld [vmem:[%s2 + $0xf0] sm:$0xff]
      %v850 = vld [vmem:[%s2 + $0xf8] sm:$0xff]
      %v851 = vpack.c.bf16 %v789, %v787
      %v852 = vpack.c.bf16 %v790, %v788
      %v853 = vpack.c.bf16 %v793, %v791
      %v854 = vpack.c.bf16 %v794, %v792
      %v855 = vpack.c.bf16 %v797, %v795
      %v856 = vpack.c.bf16 %v798, %v796
      %v857 = vpack.c.bf16 %v801, %v799
      %v858 = vpack.c.bf16 %v802, %v800
      %v859 = vpack.c.bf16 %v805, %v803
      %v860 = vpack.c.bf16 %v806, %v804
      %v861 = vpack.c.bf16 %v809, %v807
      %v862 = vpack.c.bf16 %v810, %v808
      %v863 = vpack.c.bf16 %v813, %v811
      %v864 = vpack.c.bf16 %v814, %v812
      %v865 = vpack.c.bf16 %v817, %v815
      %v866 = vpack.c.bf16 %v818, %v816
      %s867 = scalar_lea.vmem %s6, 2
      %v868 = vld [vmem:[%s867] sm:$0x3]
      %v870 = vlaneseq
      %v871 = vshrl.u32 %v870, 7
      %v872 = vsub.s32 0, %v871
      %v873 = vrot.slane %v868, %v872
      %v874 = vlaneseq
      %v875 = vshrl.u32 %v874, 7
      %v876 = vsub.s32 1, %v875
      %v877 = vrot.slane %v868, %v876
      %v912 = vunpack.c.l.b16 %v819
      %v913 = vunpack.c.h.b16 %v819
      %v914 = vunpack.c.l.b16 %v820
      %v915 = vunpack.c.h.b16 %v820
      %v916 = vunpack.c.l.b16 %v821
      %v917 = vunpack.c.h.b16 %v821
      %v918 = vunpack.c.l.b16 %v822
      %v919 = vunpack.c.h.b16 %v822
      %v920 = vunpack.c.l.b16 %v823
      %v921 = vunpack.c.h.b16 %v823
      %v922 = vunpack.c.l.b16 %v824
      %v923 = vunpack.c.h.b16 %v824
      %v924 = vunpack.c.l.b16 %v825
      %v925 = vunpack.c.h.b16 %v825
      %v926 = vunpack.c.l.b16 %v826
      %v927 = vunpack.c.h.b16 %v826
      %v928 = vunpack.c.l.b16 %v827
      %v929 = vunpack.c.h.b16 %v827
      %v930 = vunpack.c.l.b16 %v828
      %v931 = vunpack.c.h.b16 %v828
      %v932 = vunpack.c.l.b16 %v829
      %v933 = vunpack.c.h.b16 %v829
      %v934 = vunpack.c.l.b16 %v830
      %v935 = vunpack.c.h.b16 %v830
      %v936 = vunpack.c.l.b16 %v831
      %v937 = vunpack.c.h.b16 %v831
      %v938 = vunpack.c.l.b16 %v832
      %v939 = vunpack.c.h.b16 %v832
      %v940 = vunpack.c.l.b16 %v833
      %v941 = vunpack.c.h.b16 %v833
      %v942 = vunpack.c.l.b16 %v834
      %v943 = vunpack.c.h.b16 %v834
      %v944 = vunpack.c.l.b16 %v835
      %v945 = vunpack.c.h.b16 %v835
      %v946 = vunpack.c.l.b16 %v836
      %v947 = vunpack.c.h.b16 %v836
      %v948 = vunpack.c.l.b16 %v837
      %v949 = vunpack.c.h.b16 %v837
      %v950 = vunpack.c.l.b16 %v838
      %v951 = vunpack.c.h.b16 %v838
      %v952 = vunpack.c.l.b16 %v839
      %v953 = vunpack.c.h.b16 %v839
      %v954 = vunpack.c.l.b16 %v840
      %v955 = vunpack.c.h.b16 %v840
      %v956 = vunpack.c.l.b16 %v841
      %v957 = vunpack.c.h.b16 %v841
      %v958 = vunpack.c.l.b16 %v842
      %v959 = vunpack.c.h.b16 %v842
      %v960 = vunpack.c.l.b16 %v843
      %v961 = vunpack.c.h.b16 %v843
      %v962 = vunpack.c.l.b16 %v844
      %v963 = vunpack.c.h.b16 %v844
      %v964 = vunpack.c.l.b16 %v845
      %v965 = vunpack.c.h.b16 %v845
      %v966 = vunpack.c.l.b16 %v846
      %v967 = vunpack.c.h.b16 %v846
      %v968 = vunpack.c.l.b16 %v847
      %v969 = vunpack.c.h.b16 %v847
      %v970 = vunpack.c.l.b16 %v848
      %v971 = vunpack.c.h.b16 %v848
      %v972 = vunpack.c.l.b16 %v849
      %v973 = vunpack.c.h.b16 %v849
      %v974 = vunpack.c.l.b16 %v850
      %v975 = vunpack.c.h.b16 %v850
      %v976 = vpack.c.b16 %v914, %v912
      %v977 = vpack.c.b16 %v915, %v913
      %v978 = vpack.c.b16 %v918, %v916
      %v979 = vpack.c.b16 %v919, %v917
      %v980 = vpack.c.b16 %v922, %v920
      %v981 = vpack.c.b16 %v923, %v921
      %v982 = vpack.c.b16 %v926, %v924
      %v983 = vpack.c.b16 %v927, %v925
      %v984 = vpack.c.b16 %v930, %v928
      %v985 = vpack.c.b16 %v931, %v929
      %v986 = vpack.c.b16 %v934, %v932
      %v987 = vpack.c.b16 %v935, %v933
      %v988 = vpack.c.b16 %v938, %v936
      %v989 = vpack.c.b16 %v939, %v937
      %v990 = vpack.c.b16 %v942, %v940
      %v991 = vpack.c.b16 %v943, %v941
      %v992 = vpack.c.b16 %v946, %v944
      %v993 = vpack.c.b16 %v947, %v945
      %v994 = vpack.c.b16 %v950, %v948
      %v995 = vpack.c.b16 %v951, %v949
      %v996 = vpack.c.b16 %v954, %v952
      %v997 = vpack.c.b16 %v955, %v953
      %v998 = vpack.c.b16 %v958, %v956
      %v999 = vpack.c.b16 %v959, %v957
      %v1000 = vpack.c.b16 %v962, %v960
      %v1001 = vpack.c.b16 %v963, %v961
      %v1002 = vpack.c.b16 %v966, %v964
      %v1003 = vpack.c.b16 %v967, %v965
      %v1004 = vpack.c.b16 %v970, %v968
      %v1005 = vpack.c.b16 %v971, %v969
      %v1006 = vpack.c.b16 %v974, %v972
      %v1007 = vpack.c.b16 %v975, %v973
      %1040 = vmatprep.subr.bf16.mxu0 %v977
      %1041 = vmatpush1.bf16.msra.mxu0 %v976
      %1042 = vmatprep.subr.bf16.mxu0 %v979
      %1043 = vmatpush1.bf16.msra.mxu0 %v978
      %1044 = vmatprep.subr.bf16.mxu0 %v981
      %1045 = vmatpush1.bf16.msra.mxu0 %v980
      %1046 = vmatprep.subr.bf16.mxu0 %v983
      %1047 = vmatpush1.bf16.msra.mxu0 %v982
      %1048 = vmatprep.subr.bf16.mxu0 %v985
      %1049 = vmatpush1.bf16.msra.mxu0 %v984
      %1050 = vmatprep.subr.bf16.mxu0 %v987
      %1051 = vmatpush1.bf16.msra.mxu0 %v986
      %1052 = vmatprep.subr.bf16.mxu0 %v989
      %1053 = vmatpush1.bf16.msra.mxu0 %v988
      %1054 = vmatprep.subr.bf16.mxu0 %v991
      %1055 = vmatpush1.bf16.msra.mxu0 %v990
      %1056 = vmatprep.subr.bf16.mxu0 %v993
      %1057 = vmatpush1.bf16.msra.mxu0 %v992
      %1058 = vmatprep.subr.bf16.mxu0 %v995
      %1059 = vmatpush1.bf16.msra.mxu0 %v994
      %1060 = vmatprep.subr.bf16.mxu0 %v997
      %1061 = vmatpush1.bf16.msra.mxu0 %v996
      %1062 = vmatprep.subr.bf16.mxu0 %v999
      %1063 = vmatpush1.bf16.msra.mxu0 %v998
      %1064 = vmatprep.subr.bf16.mxu0 %v1001
      %1065 = vmatpush1.bf16.msra.mxu0 %v1000
      %1066 = vmatprep.subr.bf16.mxu0 %v1003
      %1067 = vmatpush1.bf16.msra.mxu0 %v1002
      %1068 = vmatprep.subr.bf16.mxu0 %v1005
      %1069 = vmatpush1.bf16.msra.mxu0 %v1004
      %1070 = vmatprep.subr.bf16.mxu0 %v1007
      %1071 = vmatpush1.bf16.msra.mxu0 %v1006
      %1072 = vmatprep.mubr.bf16.mxu0 %v852
      %1073 = vmatmul.mubr.bf16.gmra.mrb[0].mxu0 %v851
      %v1074 = vpop.f32.mrb[0].mxu0
      %v1075 = vadd.f32 %v873, %v1074
      %v1076 = vpop.f32.mrb[0].mxu0
      %v1077 = vadd.f32 %v877, %v1076
      %v1078 = vpop.f32.mrb[0].mxu0
      %v1079 = vadd.f32 %v873, %v1078
      %v1080 = vpop.f32.mrb[0].mxu0
      %v1081 = vadd.f32 %v877, %v1080
      %1082 = vmatprep.mubr.bf16.mxu0 %v854
      %1083 = vmatmul.mubr.bf16.gmra.mrb[0].mxu0 %v853
      %v1084 = vpop.f32.mrb[0].mxu0
      %v1085 = vadd.f32 %v873, %v1084
      %v1086 = vpop.f32.mrb[0].mxu0
      %v1087 = vadd.f32 %v877, %v1086
      %v1088 = vpop.f32.mrb[0].mxu0
      %v1089 = vadd.f32 %v873, %v1088
      %v1090 = vpop.f32.mrb[0].mxu0
      %v1091 = vadd.f32 %v877, %v1090
      %1092 = vmatprep.mubr.bf16.mxu0 %v856
      %1093 = vmatmul.mubr.bf16.gmra.mrb[0].mxu0 %v855
      %v1094 = vpop.f32.mrb[0].mxu0
      %v1095 = vadd.f32 %v873, %v1094
      %v1096 = vpop.f32.mrb[0].mxu0
      %v1097 = vadd.f32 %v877, %v1096
      %v1098 = vpop.f32.mrb[0].mxu0
      %v1099 = vadd.f32 %v873, %v1098
      %v1100 = vpop.f32.mrb[0].mxu0
      %v1101 = vadd.f32 %v877, %v1100
      %1102 = vmatprep.mubr.bf16.mxu0 %v858
      %1103 = vmatmul.mubr.bf16.gmra.mrb[0].mxu0 %v857
      %v1104 = vpop.f32.mrb[0].mxu0
      %v1105 = vadd.f32 %v873, %v1104
      %v1106 = vpop.f32.mrb[0].mxu0
      %v1107 = vadd.f32 %v877, %v1106
      %v1108 = vpop.f32.mrb[0].mxu0
      %v1109 = vadd.f32 %v873, %v1108
      %v1110 = vpop.f32.mrb[0].mxu0
      %v1111 = vadd.f32 %v877, %v1110
      %1112 = vmatprep.mubr.bf16.mxu0 %v860
      %1113 = vmatmul.mubr.bf16.gmra.mrb[0].mxu0 %v859
      %v1114 = vpop.f32.mrb[0].mxu0
      %v1115 = vadd.f32 %v873, %v1114
      %v1116 = vpop.f32.mrb[0].mxu0
      %v1117 = vadd.f32 %v877, %v1116
      %v1118 = vpop.f32.mrb[0].mxu0
      %v1119 = vadd.f32 %v873, %v1118
      %v1120 = vpop.f32.mrb[0].mxu0
      %v1121 = vadd.f32 %v877, %v1120
      %1122 = vmatprep.mubr.bf16.mxu0 %v862
      %1123 = vmatmul.mubr.bf16.gmra.mrb[0].mxu0 %v861
      %v1124 = vpop.f32.mrb[0].mxu0
      %v1125 = vadd.f32 %v873, %v1124
      %v1126 = vpop.f32.mrb[0].mxu0
      %v1127 = vadd.f32 %v877, %v1126
      %v1128 = vpop.f32.mrb[0].mxu0
      %v1129 = vadd.f32 %v873, %v1128
      %v1130 = vpop.f32.mrb[0].mxu0
      %v1131 = vadd.f32 %v877, %v1130
      %1132 = vmatprep.mubr.bf16.mxu0 %v864
      %1133 = vmatmul.mubr.bf16.gmra.mrb[0].mxu0 %v863
      %v1134 = vpop.f32.mrb[0].mxu0
      %v1135 = vadd.f32 %v873, %v1134
      %v1136 = vpop.f32.mrb[0].mxu0
      %v1137 = vadd.f32 %v877, %v1136
      %v1138 = vpop.f32.mrb[0].mxu0
      %v1139 = vadd.f32 %v873, %v1138
      %v1140 = vpop.f32.mrb[0].mxu0
      %v1141 = vadd.f32 %v877, %v1140
      %1142 = vmatprep.mubr.bf16.mxu0 %v866
      %1143 = vmatmul.mubr.bf16.gmra.mrb[0].mxu0 %v865
      %v1144 = vpop.f32.mrb[0].mxu0
      %v1145 = vadd.f32 %v873, %v1144
      %v1146 = vpop.f32.mrb[0].mxu0
      %v1147 = vadd.f32 %v877, %v1146
      %v1148 = vpop.f32.mrb[0].mxu0
      %v1149 = vadd.f32 %v873, %v1148
      %v1150 = vpop.f32.mrb[0].mxu0
      %v1151 = vadd.f32 %v877, %v1150
      %1152 = vdwg.mxu0
      %v1153 = vmax.f32 %v1075, 0.0
      %v1154 = vmax.f32 %v1077, 0.0
      %v1155 = vmax.f32 %v1079, 0.0
      %v1156 = vmax.f32 %v1081, 0.0
      %v1157 = vmax.f32 %v1085, 0.0
      %v1158 = vmax.f32 %v1087, 0.0
      %v1159 = vmax.f32 %v1089, 0.0
      %v1160 = vmax.f32 %v1091, 0.0
      %v1161 = vmax.f32 %v1095, 0.0
      %v1162 = vmax.f32 %v1097, 0.0
      %v1163 = vmax.f32 %v1099, 0.0
      %v1164 = vmax.f32 %v1101, 0.0
      %v1165 = vmax.f32 %v1105, 0.0
      %v1166 = vmax.f32 %v1107, 0.0
      %v1167 = vmax.f32 %v1109, 0.0
      %v1168 = vmax.f32 %v1111, 0.0
      %v1169 = vmax.f32 %v1115, 0.0
      %v1170 = vmax.f32 %v1117, 0.0
      %v1171 = vmax.f32 %v1119, 0.0
      %v1172 = vmax.f32 %v1121, 0.0
      %v1173 = vmax.f32 %v1125, 0.0
      %v1174 = vmax.f32 %v1127, 0.0
      %v1175 = vmax.f32 %v1129, 0.0
      %v1176 = vmax.f32 %v1131, 0.0
      %v1177 = vmax.f32 %v1135, 0.0
      %v1178 = vmax.f32 %v1137, 0.0
      %v1179 = vmax.f32 %v1139, 0.0
      %v1180 = vmax.f32 %v1141, 0.0
      %v1181 = vmax.f32 %v1145, 0.0
      %v1182 = vmax.f32 %v1147, 0.0
      %v1183 = vmax.f32 %v1149, 0.0
      %v1184 = vmax.f32 %v1151, 0.0
      %s1185 = scalar_lea.vmem %s2, 256
      %v1186 = vld [vmem:[%s1185] sm:$0xff]
      %v1187 = vld [vmem:[%s1185 + $0x8] sm:$0xff]
      %v1188 = vld [vmem:[%s1185 + $0x10] sm:$0xff]
      %v1189 = vld [vmem:[%s1185 + $0x18] sm:$0xff]
      %v1190 = vld [vmem:[%s1185 + $0x20] sm:$0xff]
      %v1191 = vld [vmem:[%s1185 + $0x28] sm:$0xff]
      %v1192 = vld [vmem:[%s1185 + $0x30] sm:$0xff]
      %v1193 = vld [vmem:[%s1185 + $0x38] sm:$0xff]
      %v1194 = vld [vmem:[%s1185 + $0x40] sm:$0xff]
      %v1195 = vld [vmem:[%s1185 + $0x48] sm:$0xff]
      %v1196 = vld [vmem:[%s1185 + $0x50] sm:$0xff]
      %v1197 = vld [vmem:[%s1185 + $0x58] sm:$0xff]
      %v1198 = vld [vmem:[%s1185 + $0x60] sm:$0xff]
      %v1199 = vld [vmem:[%s1185 + $0x68] sm:$0xff]
      %v1200 = vld [vmem:[%s1185 + $0x70] sm:$0xff]
      %v1201 = vld [vmem:[%s1185 + $0x78] sm:$0xff]
      %v1202 = vld [vmem:[%s1185 + $0x80] sm:$0xff]
      %v1203 = vld [vmem:[%s1185 + $0x88] sm:$0xff]
      %v1204 = vld [vmem:[%s1185 + $0x90] sm:$0xff]
      %v1205 = vld [vmem:[%s1185 + $0x98] sm:$0xff]
      %v1206 = vld [vmem:[%s1185 + $0xa0] sm:$0xff]
      %v1207 = vld [vmem:[%s1185 + $0xa8] sm:$0xff]
      %v1208 = vld [vmem:[%s1185 + $0xb0] sm:$0xff]
      %v1209 = vld [vmem:[%s1185 + $0xb8] sm:$0xff]
      %v1210 = vld [vmem:[%s1185 + $0xc0] sm:$0xff]
      %v1211 = vld [vmem:[%s1185 + $0xc8] sm:$0xff]
      %v1212 = vld [vmem:[%s1185 + $0xd0] sm:$0xff]
      %v1213 = vld [vmem:[%s1185 + $0xd8] sm:$0xff]
      %v1214 = vld [vmem:[%s1185 + $0xe0] sm:$0xff]
      %v1215 = vld [vmem:[%s1185 + $0xe8] sm:$0xff]
      %v1216 = vld [vmem:[%s1185 + $0xf0] sm:$0xff]
      %v1217 = vld [vmem:[%s1185 + $0xf8] sm:$0xff]
      %v1218 = vpack.c.bf16 %v1155, %v1153
      %v1219 = vpack.c.bf16 %v1156, %v1154
      %v1220 = vpack.c.bf16 %v1159, %v1157
      %v1221 = vpack.c.bf16 %v1160, %v1158
      %v1222 = vpack.c.bf16 %v1163, %v1161
      %v1223 = vpack.c.bf16 %v1164, %v1162
      %v1224 = vpack.c.bf16 %v1167, %v1165
      %v1225 = vpack.c.bf16 %v1168, %v1166
      %v1226 = vpack.c.bf16 %v1171, %v1169
      %v1227 = vpack.c.bf16 %v1172, %v1170
      %v1228 = vpack.c.bf16 %v1175, %v1173
      %v1229 = vpack.c.bf16 %v1176, %v1174
      %v1230 = vpack.c.bf16 %v1179, %v1177
      %v1231 = vpack.c.bf16 %v1180, %v1178
      %v1232 = vpack.c.bf16 %v1183, %v1181
      %v1233 = vpack.c.bf16 %v1184, %v1182
      %s1234 = scalar_lea.vmem %s6, 4
      %v1235 = vld [vmem:[%s1234] sm:$0x3]
      %v1237 = vlaneseq
      %v1238 = vshrl.u32 %v1237, 7
      %v1239 = vsub.s32 0, %v1238
      %v1240 = vrot.slane %v1235, %v1239
      %v1241 = vlaneseq
      %v1242 = vshrl.u32 %v1241, 7
      %v1243 = vsub.s32 1, %v1242
      %v1244 = vrot.slane %v1235, %v1243
      %v1279 = vunpack.c.l.b16 %v1186
      %v1280 = vunpack.c.h.b16 %v1186
      %v1281 = vunpack.c.l.b16 %v1187
      %v1282 = vunpack.c.h.b16 %v1187
      %v1283 = vunpack.c.l.b16 %v1188
      %v1284 = vunpack.c.h.b16 %v1188
      %v1285 = vunpack.c.l.b16 %v1189
      %v1286 = vunpack.c.h.b16 %v1189
      %v1287 = vunpack.c.l.b16 %v1190
      %v1288 = vunpack.c.h.b16 %v1190
      %v1289 = vunpack.c.l.b16 %v1191
      %v1290 = vunpack.c.h.b16 %v1191
      %v1291 = vunpack.c.l.b16 %v1192
      %v1292 = vunpack.c.h.b16 %v1192
      %v1293 = vunpack.c.l.b16 %v1193
      %v1294 = vunpack.c.h.b16 %v1193
      %v1295 = vunpack.c.l.b16 %v1194
      %v1296 = vunpack.c.h.b16 %v1194
      %v1297 = vunpack.c.l.b16 %v1195
      %v1298 = vunpack.c.h.b16 %v1195
      %v1299 = vunpack.c.l.b16 %v1196
      %v1300 = vunpack.c.h.b16 %v1196
      %v1301 = vunpack.c.l.b16 %v1197
      %v1302 = vunpack.c.h.b16 %v1197
      %v1303 = vunpack.c.l.b16 %v1198
      %v1304 = vunpack.c.h.b16 %v1198
      %v1305 = vunpack.c.l.b16 %v1199
      %v1306 = vunpack.c.h.b16 %v1199
      %v1307 = vunpack.c.l.b16 %v1200
      %v1308 = vunpack.c.h.b16 %v1200
      %v1309 = vunpack.c.l.b16 %v1201
      %v1310 = vunpack.c.h.b16 %v1201
      %v1311 = vunpack.c.l.b16 %v1202
      %v1312 = vunpack.c.h.b16 %v1202
      %v1313 = vunpack.c.l.b16 %v1203
      %v1314 = vunpack.c.h.b16 %v1203
      %v1315 = vunpack.c.l.b16 %v1204
      %v1316 = vunpack.c.h.b16 %v1204
      %v1317 = vunpack.c.l.b16 %v1205
      %v1318 = vunpack.c.h.b16 %v1205
      %v1319 = vunpack.c.l.b16 %v1206
      %v1320 = vunpack.c.h.b16 %v1206
      %v1321 = vunpack.c.l.b16 %v1207
      %v1322 = vunpack.c.h.b16 %v1207
      %v1323 = vunpack.c.l.b16 %v1208
      %v1324 = vunpack.c.h.b16 %v1208
      %v1325 = vunpack.c.l.b16 %v1209
      %v1326 = vunpack.c.h.b16 %v1209
      %v1327 = vunpack.c.l.b16 %v1210
      %v1328 = vunpack.c.h.b16 %v1210
      %v1329 = vunpack.c.l.b16 %v1211
      %v1330 = vunpack.c.h.b16 %v1211
      %v1331 = vunpack.c.l.b16 %v1212
      %v1332 = vunpack.c.h.b16 %v1212
      %v1333 = vunpack.c.l.b16 %v1213
      %v1334 = vunpack.c.h.b16 %v1213
      %v1335 = vunpack.c.l.b16 %v1214
      %v1336 = vunpack.c.h.b16 %v1214
      %v1337 = vunpack.c.l.b16 %v1215
      %v1338 = vunpack.c.h.b16 %v1215
      %v1339 = vunpack.c.l.b16 %v1216
      %v1340 = vunpack.c.h.b16 %v1216
      %v1341 = vunpack.c.l.b16 %v1217
      %v1342 = vunpack.c.h.b16 %v1217
      %v1343 = vpack.c.b16 %v1281, %v1279
      %v1344 = vpack.c.b16 %v1282, %v1280
      %v1345 = vpack.c.b16 %v1285, %v1283
      %v1346 = vpack.c.b16 %v1286, %v1284
      %v1347 = vpack.c.b16 %v1289, %v1287
      %v1348 = vpack.c.b16 %v1290, %v1288
      %v1349 = vpack.c.b16 %v1293, %v1291
      %v1350 = vpack.c.b16 %v1294, %v1292
      %v1351 = vpack.c.b16 %v1297, %v1295
      %v1352 = vpack.c.b16 %v1298, %v1296
      %v1353 = vpack.c.b16 %v1301, %v1299
      %v1354 = vpack.c.b16 %v1302, %v1300
      %v1355 = vpack.c.b16 %v1305, %v1303
      %v1356 = vpack.c.b16 %v1306, %v1304
      %v1357 = vpack.c.b16 %v1309, %v1307
      %v1358 = vpack.c.b16 %v1310, %v1308
      %v1359 = vpack.c.b16 %v1313, %v1311
      %v1360 = vpack.c.b16 %v1314, %v1312
      %v1361 = vpack.c.b16 %v1317, %v1315
      %v1362 = vpack.c.b16 %v1318, %v1316
      %v1363 = vpack.c.b16 %v1321, %v1319
      %v1364 = vpack.c.b16 %v1322, %v1320
      %v1365 = vpack.c.b16 %v1325, %v1323
      %v1366 = vpack.c.b16 %v1326, %v1324
      %v1367 = vpack.c.b16 %v1329, %v1327
      %v1368 = vpack.c.b16 %v1330, %v1328
      %v1369 = vpack.c.b16 %v1333, %v1331
      %v1370 = vpack.c.b16 %v1334, %v1332
      %v1371 = vpack.c.b16 %v1337, %v1335
      %v1372 = vpack.c.b16 %v1338, %v1336
      %v1373 = vpack.c.b16 %v1341, %v1339
      %v1374 = vpack.c.b16 %v1342, %v1340
      %1407 = vmatprep.subr.bf16.mxu0 %v1344
      %1408 = vmatpush1.bf16.msra.mxu0 %v1343
      %1409 = vmatprep.subr.bf16.mxu0 %v1346
      %1410 = vmatpush1.bf16.msra.mxu0 %v1345
      %1411 = vmatprep.subr.bf16.mxu0 %v1348
      %1412 = vmatpush1.bf16.msra.mxu0 %v1347
      %1413 = vmatprep.subr.bf16.mxu0 %v1350
      %1414 = vmatpush1.bf16.msra.mxu0 %v1349
      %1415 = vmatprep.subr.bf16.mxu0 %v1352
      %1416 = vmatpush1.bf16.msra.mxu0 %v1351
      %1417 = vmatprep.subr.bf16.mxu0 %v1354
      %1418 = vmatpush1.bf16.msra.mxu0 %v1353
      %1419 = vmatprep.subr.bf16.mxu0 %v1356
      %1420 = vmatpush1.bf16.msra.mxu0 %v1355
      %1421 = vmatprep.subr.bf16.mxu0 %v1358
      %1422 = vmatpush1.bf16.msra.mxu0 %v1357
      %1423 = vmatprep.subr.bf16.mxu0 %v1360
      %1424 = vmatpush1.bf16.msra.mxu0 %v1359
      %1425 = vmatprep.subr.bf16.mxu0 %v1362
      %1426 = vmatpush1.bf16.msra.mxu0 %v1361
      %1427 = vmatprep.subr.bf16.mxu0 %v1364
      %1428 = vmatpush1.bf16.msra.mxu0 %v1363
      %1429 = vmatprep.subr.bf16.mxu0 %v1366
      %1430 = vmatpush1.bf16.msra.mxu0 %v1365
      %1431 = vmatprep.subr.bf16.mxu0 %v1368
      %1432 = vmatpush1.bf16.msra.mxu0 %v1367
      %1433 = vmatprep.subr.bf16.mxu0 %v1370
      %1434 = vmatpush1.bf16.msra.mxu0 %v1369
      %1435 = vmatprep.subr.bf16.mxu0 %v1372
      %1436 = vmatpush1.bf16.msra.mxu0 %v1371
      %1437 = vmatprep.subr.bf16.mxu0 %v1374
      %1438 = vmatpush1.bf16.msra.mxu0 %v1373
      %1439 = vmatprep.mubr.bf16.mxu0 %v1219
      %1440 = vmatmul.mubr.bf16.gmra.mrb[0].mxu0 %v1218
      %v1441 = vpop.f32.mrb[0].mxu0
      %v1442 = vadd.f32 %v1240, %v1441
      %v1443 = vpop.f32.mrb[0].mxu0
      %v1444 = vadd.f32 %v1244, %v1443
      %v1445 = vpop.f32.mrb[0].mxu0
      %v1446 = vadd.f32 %v1240, %v1445
      %v1447 = vpop.f32.mrb[0].mxu0
      %v1448 = vadd.f32 %v1244, %v1447
      %1449 = vmatprep.mubr.bf16.mxu0 %v1221
      %1450 = vmatmul.mubr.bf16.gmra.mrb[0].mxu0 %v1220
      %v1451 = vpop.f32.mrb[0].mxu0
      %v1452 = vadd.f32 %v1240, %v1451
      %v1453 = vpop.f32.mrb[0].mxu0
      %v1454 = vadd.f32 %v1244, %v1453
      %v1455 = vpop.f32.mrb[0].mxu0
      %v1456 = vadd.f32 %v1240, %v1455
      %v1457 = vpop.f32.mrb[0].mxu0
      %v1458 = vadd.f32 %v1244, %v1457
      %1459 = vmatprep.mubr.bf16.mxu0 %v1223
      %1460 = vmatmul.mubr.bf16.gmra.mrb[0].mxu0 %v1222
      %v1461 = vpop.f32.mrb[0].mxu0
      %v1462 = vadd.f32 %v1240, %v1461
      %v1463 = vpop.f32.mrb[0].mxu0
      %v1464 = vadd.f32 %v1244, %v1463
      %v1465 = vpop.f32.mrb[0].mxu0
      %v1466 = vadd.f32 %v1240, %v1465
      %v1467 = vpop.f32.mrb[0].mxu0
      %v1468 = vadd.f32 %v1244, %v1467
      %1469 = vmatprep.mubr.bf16.mxu0 %v1225
      %1470 = vmatmul.mubr.bf16.gmra.mrb[0].mxu0 %v1224
      %v1471 = vpop.f32.mrb[0].mxu0
      %v1472 = vadd.f32 %v1240, %v1471
      %v1473 = vpop.f32.mrb[0].mxu0
      %v1474 = vadd.f32 %v1244, %v1473
      %v1475 = vpop.f32.mrb[0].mxu0
      %v1476 = vadd.f32 %v1240, %v1475
      %v1477 = vpop.f32.mrb[0].mxu0
      %v1478 = vadd.f32 %v1244, %v1477
      %1479 = vmatprep.mubr.bf16.mxu0 %v1227
      %1480 = vmatmul.mubr.bf16.gmra.mrb[0].mxu0 %v1226
      %v1481 = vpop.f32.mrb[0].mxu0
      %v1482 = vadd.f32 %v1240, %v1481
      %v1483 = vpop.f32.mrb[0].mxu0
      %v1484 = vadd.f32 %v1244, %v1483
      %v1485 = vpop.f32.mrb[0].mxu0
      %v1486 = vadd.f32 %v1240, %v1485
      %v1487 = vpop.f32.mrb[0].mxu0
      %v1488 = vadd.f32 %v1244, %v1487
      %1489 = vmatprep.mubr.bf16.mxu0 %v1229
      %1490 = vmatmul.mubr.bf16.gmra.mrb[0].mxu0 %v1228
      %v1491 = vpop.f32.mrb[0].mxu0
      %v1492 = vadd.f32 %v1240, %v1491
      %v1493 = vpop.f32.mrb[0].mxu0
      %v1494 = vadd.f32 %v1244, %v1493
      %v1495 = vpop.f32.mrb[0].mxu0
      %v1496 = vadd.f32 %v1240, %v1495
      %v1497 = vpop.f32.mrb[0].mxu0
      %v1498 = vadd.f32 %v1244, %v1497
      %1499 = vmatprep.mubr.bf16.mxu0 %v1231
      %1500 = vmatmul.mubr.bf16.gmra.mrb[0].mxu0 %v1230
      %v1501 = vpop.f32.mrb[0].mxu0
      %v1502 = vadd.f32 %v1240, %v1501
      %v1503 = vpop.f32.mrb[0].mxu0
      %v1504 = vadd.f32 %v1244, %v1503
      %v1505 = vpop.f32.mrb[0].mxu0
      %v1506 = vadd.f32 %v1240, %v1505
      %v1507 = vpop.f32.mrb[0].mxu0
      %v1508 = vadd.f32 %v1244, %v1507
      %1509 = vmatprep.mubr.bf16.mxu0 %v1233
      %1510 = vmatmul.mubr.bf16.gmra.mrb[0].mxu0 %v1232
      %v1511 = vpop.f32.mrb[0].mxu0
      %v1512 = vadd.f32 %v1240, %v1511
      %v1513 = vpop.f32.mrb[0].mxu0
      %v1514 = vadd.f32 %v1244, %v1513
      %v1515 = vpop.f32.mrb[0].mxu0
      %v1516 = vadd.f32 %v1240, %v1515
      %v1517 = vpop.f32.mrb[0].mxu0
      %v1518 = vadd.f32 %v1244, %v1517
      %1519 = vdwg.mxu0
      %v1520 = vmax.f32 %v1442, 0.0
      %v1521 = vmax.f32 %v1444, 0.0
      %v1522 = vmax.f32 %v1446, 0.0
      %v1523 = vmax.f32 %v1448, 0.0
      %v1524 = vmax.f32 %v1452, 0.0
      %v1525 = vmax.f32 %v1454, 0.0
      %v1526 = vmax.f32 %v1456, 0.0
      %v1527 = vmax.f32 %v1458, 0.0
      %v1528 = vmax.f32 %v1462, 0.0
      %v1529 = vmax.f32 %v1464, 0.0
      %v1530 = vmax.f32 %v1466, 0.0
      %v1531 = vmax.f32 %v1468, 0.0
      %v1532 = vmax.f32 %v1472, 0.0
      %v1533 = vmax.f32 %v1474, 0.0
      %v1534 = vmax.f32 %v1476, 0.0
      %v1535 = vmax.f32 %v1478, 0.0
      %v1536 = vmax.f32 %v1482, 0.0
      %v1537 = vmax.f32 %v1484, 0.0
      %v1538 = vmax.f32 %v1486, 0.0
      %v1539 = vmax.f32 %v1488, 0.0
      %v1540 = vmax.f32 %v1492, 0.0
      %v1541 = vmax.f32 %v1494, 0.0
      %v1542 = vmax.f32 %v1496, 0.0
      %v1543 = vmax.f32 %v1498, 0.0
      %v1544 = vmax.f32 %v1502, 0.0
      %v1545 = vmax.f32 %v1504, 0.0
      %v1546 = vmax.f32 %v1506, 0.0
      %v1547 = vmax.f32 %v1508, 0.0
      %v1548 = vmax.f32 %v1512, 0.0
      %v1549 = vmax.f32 %v1514, 0.0
      %v1550 = vmax.f32 %v1516, 0.0
      %v1551 = vmax.f32 %v1518, 0.0
      %s1552 = scalar_lea.vmem %s2, 512
      %v1553 = vld [vmem:[%s1552] sm:$0xff]
      %v1554 = vld [vmem:[%s1552 + $0x8] sm:$0xff]
      %v1555 = vld [vmem:[%s1552 + $0x10] sm:$0xff]
      %v1556 = vld [vmem:[%s1552 + $0x18] sm:$0xff]
      %v1557 = vld [vmem:[%s1552 + $0x20] sm:$0xff]
      %v1558 = vld [vmem:[%s1552 + $0x28] sm:$0xff]
      %v1559 = vld [vmem:[%s1552 + $0x30] sm:$0xff]
      %v1560 = vld [vmem:[%s1552 + $0x38] sm:$0xff]
      %v1561 = vld [vmem:[%s1552 + $0x40] sm:$0xff]
      %v1562 = vld [vmem:[%s1552 + $0x48] sm:$0xff]
      %v1563 = vld [vmem:[%s1552 + $0x50] sm:$0xff]
      %v1564 = vld [vmem:[%s1552 + $0x58] sm:$0xff]
      %v1565 = vld [vmem:[%s1552 + $0x60] sm:$0xff]
      %v1566 = vld [vmem:[%s1552 + $0x68] sm:$0xff]
      %v1567 = vld [vmem:[%s1552 + $0x70] sm:$0xff]
      %v1568 = vld [vmem:[%s1552 + $0x78] sm:$0xff]
      %v1569 = vld [vmem:[%s1552 + $0x80] sm:$0xff]
      %v1570 = vld [vmem:[%s1552 + $0x88] sm:$0xff]
      %v1571 = vld [vmem:[%s1552 + $0x90] sm:$0xff]
      %v1572 = vld [vmem:[%s1552 + $0x98] sm:$0xff]
      %v1573 = vld [vmem:[%s1552 + $0xa0] sm:$0xff]
      %v1574 = vld [vmem:[%s1552 + $0xa8] sm:$0xff]
      %v1575 = vld [vmem:[%s1552 + $0xb0] sm:$0xff]
      %v1576 = vld [vmem:[%s1552 + $0xb8] sm:$0xff]
      %v1577 = vld [vmem:[%s1552 + $0xc0] sm:$0xff]
      %v1578 = vld [vmem:[%s1552 + $0xc8] sm:$0xff]
      %v1579 = vld [vmem:[%s1552 + $0xd0] sm:$0xff]
      %v1580 = vld [vmem:[%s1552 + $0xd8] sm:$0xff]
      %v1581 = vld [vmem:[%s1552 + $0xe0] sm:$0xff]
      %v1582 = vld [vmem:[%s1552 + $0xe8] sm:$0xff]
      %v1583 = vld [vmem:[%s1552 + $0xf0] sm:$0xff]
      %v1584 = vld [vmem:[%s1552 + $0xf8] sm:$0xff]
      %v1585 = vpack.c.bf16 %v1522, %v1520
      %v1586 = vpack.c.bf16 %v1523, %v1521
      %v1587 = vpack.c.bf16 %v1526, %v1524
      %v1588 = vpack.c.bf16 %v1527, %v1525
      %v1589 = vpack.c.bf16 %v1530, %v1528
      %v1590 = vpack.c.bf16 %v1531, %v1529
      %v1591 = vpack.c.bf16 %v1534, %v1532
      %v1592 = vpack.c.bf16 %v1535, %v1533
      %v1593 = vpack.c.bf16 %v1538, %v1536
      %v1594 = vpack.c.bf16 %v1539, %v1537
      %v1595 = vpack.c.bf16 %v1542, %v1540
      %v1596 = vpack.c.bf16 %v1543, %v1541
      %v1597 = vpack.c.bf16 %v1546, %v1544
      %v1598 = vpack.c.bf16 %v1547, %v1545
      %v1599 = vpack.c.bf16 %v1550, %v1548
      %v1600 = vpack.c.bf16 %v1551, %v1549
      %s1601 = scalar_lea.vmem %s6, 6
      %v1602 = vld [vmem:[%s1601] sm:$0x3]
      %v1604 = vlaneseq
      %v1605 = vshrl.u32 %v1604, 7
      %v1606 = vsub.s32 0, %v1605
      %v1607 = vrot.slane %v1602, %v1606
      %v1608 = vlaneseq
      %v1609 = vshrl.u32 %v1608, 7
      %v1610 = vsub.s32 1, %v1609
      %v1611 = vrot.slane %v1602, %v1610
      %v1646 = vunpack.c.l.b16 %v1553
      %v1647 = vunpack.c.h.b16 %v1553
      %v1648 = vunpack.c.l.b16 %v1554
      %v1649 = vunpack.c.h.b16 %v1554
      %v1650 = vunpack.c.l.b16 %v1555
      %v1651 = vunpack.c.h.b16 %v1555
      %v1652 = vunpack.c.l.b16 %v1556
      %v1653 = vunpack.c.h.b16 %v1556
      %v1654 = vunpack.c.l.b16 %v1557
      %v1655 = vunpack.c.h.b16 %v1557
      %v1656 = vunpack.c.l.b16 %v1558
      %v1657 = vunpack.c.h.b16 %v1558
      %v1658 = vunpack.c.l.b16 %v1559
      %v1659 = vunpack.c.h.b16 %v1559
      %v1660 = vunpack.c.l.b16 %v1560
      %v1661 = vunpack.c.h.b16 %v1560
      %v1662 = vunpack.c.l.b16 %v1561
      %v1663 = vunpack.c.h.b16 %v1561
      %v1664 = vunpack.c.l.b16 %v1562
      %v1665 = vunpack.c.h.b16 %v1562
      %v1666 = vunpack.c.l.b16 %v1563
      %v1667 = vunpack.c.h.b16 %v1563
      %v1668 = vunpack.c.l.b16 %v1564
      %v1669 = vunpack.c.h.b16 %v1564
      %v1670 = vunpack.c.l.b16 %v1565
      %v1671 = vunpack.c.h.b16 %v1565
      %v1672 = vunpack.c.l.b16 %v1566
      %v1673 = vunpack.c.h.b16 %v1566
      %v1674 = vunpack.c.l.b16 %v1567
      %v1675 = vunpack.c.h.b16 %v1567
      %v1676 = vunpack.c.l.b16 %v1568
      %v1677 = vunpack.c.h.b16 %v1568
      %v1678 = vunpack.c.l.b16 %v1569
      %v1679 = vunpack.c.h.b16 %v1569
      %v1680 = vunpack.c.l.b16 %v1570
      %v1681 = vunpack.c.h.b16 %v1570
      %v1682 = vunpack.c.l.b16 %v1571
      %v1683 = vunpack.c.h.b16 %v1571
      %v1684 = vunpack.c.l.b16 %v1572
      %v1685 = vunpack.c.h.b16 %v1572
      %v1686 = vunpack.c.l.b16 %v1573
      %v1687 = vunpack.c.h.b16 %v1573
      %v1688 = vunpack.c.l.b16 %v1574
      %v1689 = vunpack.c.h.b16 %v1574
      %v1690 = vunpack.c.l.b16 %v1575
      %v1691 = vunpack.c.h.b16 %v1575
      %v1692 = vunpack.c.l.b16 %v1576
      %v1693 = vunpack.c.h.b16 %v1576
      %v1694 = vunpack.c.l.b16 %v1577
      %v1695 = vunpack.c.h.b16 %v1577
      %v1696 = vunpack.c.l.b16 %v1578
      %v1697 = vunpack.c.h.b16 %v1578
      %v1698 = vunpack.c.l.b16 %v1579
      %v1699 = vunpack.c.h.b16 %v1579
      %v1700 = vunpack.c.l.b16 %v1580
      %v1701 = vunpack.c.h.b16 %v1580
      %v1702 = vunpack.c.l.b16 %v1581
      %v1703 = vunpack.c.h.b16 %v1581
      %v1704 = vunpack.c.l.b16 %v1582
      %v1705 = vunpack.c.h.b16 %v1582
      %v1706 = vunpack.c.l.b16 %v1583
      %v1707 = vunpack.c.h.b16 %v1583
      %v1708 = vunpack.c.l.b16 %v1584
      %v1709 = vunpack.c.h.b16 %v1584
      %v1710 = vpack.c.b16 %v1648, %v1646
      %v1711 = vpack.c.b16 %v1649, %v1647
      %v1712 = vpack.c.b16 %v1652, %v1650
      %v1713 = vpack.c.b16 %v1653, %v1651
      %v1714 = vpack.c.b16 %v1656, %v1654
      %v1715 = vpack.c.b16 %v1657, %v1655
      %v1716 = vpack.c.b16 %v1660, %v1658
      %v1717 = vpack.c.b16 %v1661, %v1659
      %v1718 = vpack.c.b16 %v1664, %v1662
      %v1719 = vpack.c.b16 %v1665, %v1663
      %v1720 = vpack.c.b16 %v1668, %v1666
      %v1721 = vpack.c.b16 %v1669, %v1667
      %v1722 = vpack.c.b16 %v1672, %v1670
      %v1723 = vpack.c.b16 %v1673, %v1671
      %v1724 = vpack.c.b16 %v1676, %v1674
      %v1725 = vpack.c.b16 %v1677, %v1675
      %v1726 = vpack.c.b16 %v1680, %v1678
      %v1727 = vpack.c.b16 %v1681, %v1679
      %v1728 = vpack.c.b16 %v1684, %v1682
      %v1729 = vpack.c.b16 %v1685, %v1683
      %v1730 = vpack.c.b16 %v1688, %v1686
      %v1731 = vpack.c.b16 %v1689, %v1687
      %v1732 = vpack.c.b16 %v1692, %v1690
      %v1733 = vpack.c.b16 %v1693, %v1691
      %v1734 = vpack.c.b16 %v1696, %v1694
      %v1735 = vpack.c.b16 %v1697, %v1695
      %v1736 = vpack.c.b16 %v1700, %v1698
      %v1737 = vpack.c.b16 %v1701, %v1699
      %v1738 = vpack.c.b16 %v1704, %v1702
      %v1739 = vpack.c.b16 %v1705, %v1703
      %v1740 = vpack.c.b16 %v1708, %v1706
      %v1741 = vpack.c.b16 %v1709, %v1707
      %1774 = vmatprep.subr.bf16.mxu0 %v1711
      %1775 = vmatpush1.bf16.msra.mxu0 %v1710
      %1776 = vmatprep.subr.bf16.mxu0 %v1713
      %1777 = vmatpush1.bf16.msra.mxu0 %v1712
      %1778 = vmatprep.subr.bf16.mxu0 %v1715
      %1779 = vmatpush1.bf16.msra.mxu0 %v1714
      %1780 = vmatprep.subr.bf16.mxu0 %v1717
      %1781 = vmatpush1.bf16.msra.mxu0 %v1716
      %1782 = vmatprep.subr.bf16.mxu0 %v1719
      %1783 = vmatpush1.bf16.msra.mxu0 %v1718
      %1784 = vmatprep.subr.bf16.mxu0 %v1721
      %1785 = vmatpush1.bf16.msra.mxu0 %v1720
      %1786 = vmatprep.subr.bf16.mxu0 %v1723
      %1787 = vmatpush1.bf16.msra.mxu0 %v1722
      %1788 = vmatprep.subr.bf16.mxu0 %v1725
      %1789 = vmatpush1.bf16.msra.mxu0 %v1724
      %1790 = vmatprep.subr.bf16.mxu0 %v1727
      %1791 = vmatpush1.bf16.msra.mxu0 %v1726
      %1792 = vmatprep.subr.bf16.mxu0 %v1729
      %1793 = vmatpush1.bf16.msra.mxu0 %v1728
      %1794 = vmatprep.subr.bf16.mxu0 %v1731
      %1795 = vmatpush1.bf16.msra.mxu0 %v1730
      %1796 = vmatprep.subr.bf16.mxu0 %v1733
      %1797 = vmatpush1.bf16.msra.mxu0 %v1732
      %1798 = vmatprep.subr.bf16.mxu0 %v1735
      %1799 = vmatpush1.bf16.msra.mxu0 %v1734
      %1800 = vmatprep.subr.bf16.mxu0 %v1737
      %1801 = vmatpush1.bf16.msra.mxu0 %v1736
      %1802 = vmatprep.subr.bf16.mxu0 %v1739
      %1803 = vmatpush1.bf16.msra.mxu0 %v1738
      %1804 = vmatprep.subr.bf16.mxu0 %v1741
      %1805 = vmatpush1.bf16.msra.mxu0 %v1740
      %1806 = vmatprep.mubr.bf16.mxu0 %v1586
      %1807 = vmatmul.mubr.bf16.gmra.mrb[0].mxu0 %v1585
      %v1808 = vpop.f32.mrb[0].mxu0
      %v1809 = vadd.f32 %v1607, %v1808
      %v1810 = vpop.f32.mrb[0].mxu0
      %v1811 = vadd.f32 %v1611, %v1810
      %v1812 = vpop.f32.mrb[0].mxu0
      %v1813 = vadd.f32 %v1607, %v1812
      %v1814 = vpop.f32.mrb[0].mxu0
      %v1815 = vadd.f32 %v1611, %v1814
      %1816 = vmatprep.mubr.bf16.mxu0 %v1588
      %1817 = vmatmul.mubr.bf16.gmra.mrb[0].mxu0 %v1587
      %v1818 = vpop.f32.mrb[0].mxu0
      %v1819 = vadd.f32 %v1607, %v1818
      %v1820 = vpop.f32.mrb[0].mxu0
      %v1821 = vadd.f32 %v1611, %v1820
      %v1822 = vpop.f32.mrb[0].mxu0
      %v1823 = vadd.f32 %v1607, %v1822
      %v1824 = vpop.f32.mrb[0].mxu0
      %v1825 = vadd.f32 %v1611, %v1824
      %1826 = vmatprep.mubr.bf16.mxu0 %v1590
      %1827 = vmatmul.mubr.bf16.gmra.mrb[0].mxu0 %v1589
      %v1828 = vpop.f32.mrb[0].mxu0
      %v1829 = vadd.f32 %v1607, %v1828
      %v1830 = vpop.f32.mrb[0].mxu0
      %v1831 = vadd.f32 %v1611, %v1830
      %v1832 = vpop.f32.mrb[0].mxu0
      %v1833 = vadd.f32 %v1607, %v1832
      %v1834 = vpop.f32.mrb[0].mxu0
      %v1835 = vadd.f32 %v1611, %v1834
      %1836 = vmatprep.mubr.bf16.mxu0 %v1592
      %1837 = vmatmul.mubr.bf16.gmra.mrb[0].mxu0 %v1591
      %v1838 = vpop.f32.mrb[0].mxu0
      %v1839 = vadd.f32 %v1607, %v1838
      %v1840 = vpop.f32.mrb[0].mxu0
      %v1841 = vadd.f32 %v1611, %v1840
      %v1842 = vpop.f32.mrb[0].mxu0
      %v1843 = vadd.f32 %v1607, %v1842
      %v1844 = vpop.f32.mrb[0].mxu0
      %v1845 = vadd.f32 %v1611, %v1844
      %1846 = vmatprep.mubr.bf16.mxu0 %v1594
      %1847 = vmatmul.mubr.bf16.gmra.mrb[0].mxu0 %v1593
      %v1848 = vpop.f32.mrb[0].mxu0
      %v1849 = vadd.f32 %v1607, %v1848
      %v1850 = vpop.f32.mrb[0].mxu0
      %v1851 = vadd.f32 %v1611, %v1850
      %v1852 = vpop.f32.mrb[0].mxu0
      %v1853 = vadd.f32 %v1607, %v1852
      %v1854 = vpop.f32.mrb[0].mxu0
      %v1855 = vadd.f32 %v1611, %v1854
      %1856 = vmatprep.mubr.bf16.mxu0 %v1596
      %1857 = vmatmul.mubr.bf16.gmra.mrb[0].mxu0 %v1595
      %v1858 = vpop.f32.mrb[0].mxu0
      %v1859 = vadd.f32 %v1607, %v1858
      %v1860 = vpop.f32.mrb[0].mxu0
      %v1861 = vadd.f32 %v1611, %v1860
      %v1862 = vpop.f32.mrb[0].mxu0
      %v1863 = vadd.f32 %v1607, %v1862
      %v1864 = vpop.f32.mrb[0].mxu0
      %v1865 = vadd.f32 %v1611, %v1864
      %1866 = vmatprep.mubr.bf16.mxu0 %v1598
      %1867 = vmatmul.mubr.bf16.gmra.mrb[0].mxu0 %v1597
      %v1868 = vpop.f32.mrb[0].mxu0
      %v1869 = vadd.f32 %v1607, %v1868
      %v1870 = vpop.f32.mrb[0].mxu0
      %v1871 = vadd.f32 %v1611, %v1870
      %v1872 = vpop.f32.mrb[0].mxu0
      %v1873 = vadd.f32 %v1607, %v1872
      %v1874 = vpop.f32.mrb[0].mxu0
      %v1875 = vadd.f32 %v1611, %v1874
      %1876 = vmatprep.mubr.bf16.mxu0 %v1600
      %1877 = vmatmul.mubr.bf16.gmra.mrb[0].mxu0 %v1599
      %v1878 = vpop.f32.mrb[0].mxu0
      %v1879 = vadd.f32 %v1607, %v1878
      %v1880 = vpop.f32.mrb[0].mxu0
      %v1881 = vadd.f32 %v1611, %v1880
      %v1882 = vpop.f32.mrb[0].mxu0
      %v1883 = vadd.f32 %v1607, %v1882
      %v1884 = vpop.f32.mrb[0].mxu0
      %v1885 = vadd.f32 %v1611, %v1884
      %1886 = vdwg.mxu0
      %v1887 = vmax.f32 %v1809, 0.0
      %v1888 = vmax.f32 %v1811, 0.0
      %v1889 = vmax.f32 %v1813, 0.0
      %v1890 = vmax.f32 %v1815, 0.0
      %v1891 = vmax.f32 %v1819, 0.0
      %v1892 = vmax.f32 %v1821, 0.0
      %v1893 = vmax.f32 %v1823, 0.0
      %v1894 = vmax.f32 %v1825, 0.0
      %v1895 = vmax.f32 %v1829, 0.0
      %v1896 = vmax.f32 %v1831, 0.0
      %v1897 = vmax.f32 %v1833, 0.0
      %v1898 = vmax.f32 %v1835, 0.0
      %v1899 = vmax.f32 %v1839, 0.0
      %v1900 = vmax.f32 %v1841, 0.0
      %v1901 = vmax.f32 %v1843, 0.0
      %v1902 = vmax.f32 %v1845, 0.0
      %v1903 = vmax.f32 %v1849, 0.0
      %v1904 = vmax.f32 %v1851, 0.0
      %v1905 = vmax.f32 %v1853, 0.0
      %v1906 = vmax.f32 %v1855, 0.0
      %v1907 = vmax.f32 %v1859, 0.0
      %v1908 = vmax.f32 %v1861, 0.0
      %v1909 = vmax.f32 %v1863, 0.0
      %v1910 = vmax.f32 %v1865, 0.0
      %v1911 = vmax.f32 %v1869, 0.0
      %v1912 = vmax.f32 %v1871, 0.0
      %v1913 = vmax.f32 %v1873, 0.0
      %v1914 = vmax.f32 %v1875, 0.0
      %v1915 = vmax.f32 %v1879, 0.0
      %v1916 = vmax.f32 %v1881, 0.0
      %v1917 = vmax.f32 %v1883, 0.0
      %v1918 = vmax.f32 %v1885, 0.0
      %s1919 = scalar_lea.vmem %s2, 768
      %v1920 = vld [vmem:[%s1919] sm:$0xff]
      %v1921 = vld [vmem:[%s1919 + $0x8] sm:$0xff]
      %v1922 = vld [vmem:[%s1919 + $0x10] sm:$0xff]
      %v1923 = vld [vmem:[%s1919 + $0x18] sm:$0xff]
      %v1924 = vld [vmem:[%s1919 + $0x20] sm:$0xff]
      %v1925 = vld [vmem:[%s1919 + $0x28] sm:$0xff]
      %v1926 = vld [vmem:[%s1919 + $0x30] sm:$0xff]
      %v1927 = vld [vmem:[%s1919 + $0x38] sm:$0xff]
      %v1928 = vld [vmem:[%s1919 + $0x40] sm:$0xff]
      %v1929 = vld [vmem:[%s1919 + $0x48] sm:$0xff]
      %v1930 = vld [vmem:[%s1919 + $0x50] sm:$0xff]
      %v1931 = vld [vmem:[%s1919 + $0x58] sm:$0xff]
      %v1932 = vld [vmem:[%s1919 + $0x60] sm:$0xff]
      %v1933 = vld [vmem:[%s1919 + $0x68] sm:$0xff]
      %v1934 = vld [vmem:[%s1919 + $0x70] sm:$0xff]
      %v1935 = vld [vmem:[%s1919 + $0x78] sm:$0xff]
      %v1936 = vld [vmem:[%s1919 + $0x80] sm:$0xff]
      %v1937 = vld [vmem:[%s1919 + $0x88] sm:$0xff]
      %v1938 = vld [vmem:[%s1919 + $0x90] sm:$0xff]
      %v1939 = vld [vmem:[%s1919 + $0x98] sm:$0xff]
      %v1940 = vld [vmem:[%s1919 + $0xa0] sm:$0xff]
      %v1941 = vld [vmem:[%s1919 + $0xa8] sm:$0xff]
      %v1942 = vld [vmem:[%s1919 + $0xb0] sm:$0xff]
      %v1943 = vld [vmem:[%s1919 + $0xb8] sm:$0xff]
      %v1944 = vld [vmem:[%s1919 + $0xc0] sm:$0xff]
      %v1945 = vld [vmem:[%s1919 + $0xc8] sm:$0xff]
      %v1946 = vld [vmem:[%s1919 + $0xd0] sm:$0xff]
      %v1947 = vld [vmem:[%s1919 + $0xd8] sm:$0xff]
      %v1948 = vld [vmem:[%s1919 + $0xe0] sm:$0xff]
      %v1949 = vld [vmem:[%s1919 + $0xe8] sm:$0xff]
      %v1950 = vld [vmem:[%s1919 + $0xf0] sm:$0xff]
      %v1951 = vld [vmem:[%s1919 + $0xf8] sm:$0xff]
      %v1952 = vpack.c.bf16 %v1889, %v1887
      %v1953 = vpack.c.bf16 %v1890, %v1888
      %v1954 = vpack.c.bf16 %v1893, %v1891
      %v1955 = vpack.c.bf16 %v1894, %v1892
      %v1956 = vpack.c.bf16 %v1897, %v1895
      %v1957 = vpack.c.bf16 %v1898, %v1896
      %v1958 = vpack.c.bf16 %v1901, %v1899
      %v1959 = vpack.c.bf16 %v1902, %v1900
      %v1960 = vpack.c.bf16 %v1905, %v1903
      %v1961 = vpack.c.bf16 %v1906, %v1904
      %v1962 = vpack.c.bf16 %v1909, %v1907
      %v1963 = vpack.c.bf16 %v1910, %v1908
      %v1964 = vpack.c.bf16 %v1913, %v1911
      %v1965 = vpack.c.bf16 %v1914, %v1912
      %v1966 = vpack.c.bf16 %v1917, %v1915
      %v1967 = vpack.c.bf16 %v1918, %v1916
      %s1968 = scalar_lea.vmem %s6, 8
      %v1969 = vld [vmem:[%s1968] sm:$0x3]
      %v1971 = vlaneseq
      %v1972 = vshrl.u32 %v1971, 7
      %v1973 = vsub.s32 0, %v1972
      %v1974 = vrot.slane %v1969, %v1973
      %v1975 = vlaneseq
      %v1976 = vshrl.u32 %v1975, 7
      %v1977 = vsub.s32 1, %v1976
      %v1978 = vrot.slane %v1969, %v1977
      %v2013 = vunpack.c.l.b16 %v1920
      %v2014 = vunpack.c.h.b16 %v1920
      %v2015 = vunpack.c.l.b16 %v1921
      %v2016 = vunpack.c.h.b16 %v1921
      %v2017 = vunpack.c.l.b16 %v1922
      %v2018 = vunpack.c.h.b16 %v1922
      %v2019 = vunpack.c.l.b16 %v1923
      %v2020 = vunpack.c.h.b16 %v1923
      %v2021 = vunpack.c.l.b16 %v1924
      %v2022 = vunpack.c.h.b16 %v1924
      %v2023 = vunpack.c.l.b16 %v1925
      %v2024 = vunpack.c.h.b16 %v1925
      %v2025 = vunpack.c.l.b16 %v1926
      %v2026 = vunpack.c.h.b16 %v1926
      %v2027 = vunpack.c.l.b16 %v1927
      %v2028 = vunpack.c.h.b16 %v1927
      %v2029 = vunpack.c.l.b16 %v1928
      %v2030 = vunpack.c.h.b16 %v1928
      %v2031 = vunpack.c.l.b16 %v1929
      %v2032 = vunpack.c.h.b16 %v1929
      %v2033 = vunpack.c.l.b16 %v1930
      %v2034 = vunpack.c.h.b16 %v1930
      %v2035 = vunpack.c.l.b16 %v1931
      %v2036 = vunpack.c.h.b16 %v1931
      %v2037 = vunpack.c.l.b16 %v1932
      %v2038 = vunpack.c.h.b16 %v1932
      %v2039 = vunpack.c.l.b16 %v1933
      %v2040 = vunpack.c.h.b16 %v1933
      %v2041 = vunpack.c.l.b16 %v1934
      %v2042 = vunpack.c.h.b16 %v1934
      %v2043 = vunpack.c.l.b16 %v1935
      %v2044 = vunpack.c.h.b16 %v1935
      %v2045 = vunpack.c.l.b16 %v1936
      %v2046 = vunpack.c.h.b16 %v1936
      %v2047 = vunpack.c.l.b16 %v1937
      %v2048 = vunpack.c.h.b16 %v1937
      %v2049 = vunpack.c.l.b16 %v1938
      %v2050 = vunpack.c.h.b16 %v1938
      %v2051 = vunpack.c.l.b16 %v1939
      %v2052 = vunpack.c.h.b16 %v1939
      %v2053 = vunpack.c.l.b16 %v1940
      %v2054 = vunpack.c.h.b16 %v1940
      %v2055 = vunpack.c.l.b16 %v1941
      %v2056 = vunpack.c.h.b16 %v1941
      %v2057 = vunpack.c.l.b16 %v1942
      %v2058 = vunpack.c.h.b16 %v1942
      %v2059 = vunpack.c.l.b16 %v1943
      %v2060 = vunpack.c.h.b16 %v1943
      %v2061 = vunpack.c.l.b16 %v1944
      %v2062 = vunpack.c.h.b16 %v1944
      %v2063 = vunpack.c.l.b16 %v1945
      %v2064 = vunpack.c.h.b16 %v1945
      %v2065 = vunpack.c.l.b16 %v1946
      %v2066 = vunpack.c.h.b16 %v1946
      %v2067 = vunpack.c.l.b16 %v1947
      %v2068 = vunpack.c.h.b16 %v1947
      %v2069 = vunpack.c.l.b16 %v1948
      %v2070 = vunpack.c.h.b16 %v1948
      %v2071 = vunpack.c.l.b16 %v1949
      %v2072 = vunpack.c.h.b16 %v1949
      %v2073 = vunpack.c.l.b16 %v1950
      %v2074 = vunpack.c.h.b16 %v1950
      %v2075 = vunpack.c.l.b16 %v1951
      %v2076 = vunpack.c.h.b16 %v1951
      %v2077 = vpack.c.b16 %v2015, %v2013
      %v2078 = vpack.c.b16 %v2016, %v2014
      %v2079 = vpack.c.b16 %v2019, %v2017
      %v2080 = vpack.c.b16 %v2020, %v2018
      %v2081 = vpack.c.b16 %v2023, %v2021
      %v2082 = vpack.c.b16 %v2024, %v2022
      %v2083 = vpack.c.b16 %v2027, %v2025
      %v2084 = vpack.c.b16 %v2028, %v2026
      %v2085 = vpack.c.b16 %v2031, %v2029
      %v2086 = vpack.c.b16 %v2032, %v2030
      %v2087 = vpack.c.b16 %v2035, %v2033
      %v2088 = vpack.c.b16 %v2036, %v2034
      %v2089 = vpack.c.b16 %v2039, %v2037
      %v2090 = vpack.c.b16 %v2040, %v2038
      %v2091 = vpack.c.b16 %v2043, %v2041
      %v2092 = vpack.c.b16 %v2044, %v2042
      %v2093 = vpack.c.b16 %v2047, %v2045
      %v2094 = vpack.c.b16 %v2048, %v2046
      %v2095 = vpack.c.b16 %v2051, %v2049
      %v2096 = vpack.c.b16 %v2052, %v2050
      %v2097 = vpack.c.b16 %v2055, %v2053
      %v2098 = vpack.c.b16 %v2056, %v2054
      %v2099 = vpack.c.b16 %v2059, %v2057
      %v2100 = vpack.c.b16 %v2060, %v2058
      %v2101 = vpack.c.b16 %v2063, %v2061
      %v2102 = vpack.c.b16 %v2064, %v2062
      %v2103 = vpack.c.b16 %v2067, %v2065
      %v2104 = vpack.c.b16 %v2068, %v2066
      %v2105 = vpack.c.b16 %v2071, %v2069
      %v2106 = vpack.c.b16 %v2072, %v2070
      %v2107 = vpack.c.b16 %v2075, %v2073
      %v2108 = vpack.c.b16 %v2076, %v2074
      %2141 = vmatprep.subr.bf16.mxu0 %v2078
      %2142 = vmatpush1.bf16.msra.mxu0 %v2077
      %2143 = vmatprep.subr.bf16.mxu0 %v2080
      %2144 = vmatpush1.bf16.msra.mxu0 %v2079
      %2145 = vmatprep.subr.bf16.mxu0 %v2082
      %2146 = vmatpush1.bf16.msra.mxu0 %v2081
      %2147 = vmatprep.subr.bf16.mxu0 %v2084
      %2148 = vmatpush1.bf16.msra.mxu0 %v2083
      %2149 = vmatprep.subr.bf16.mxu0 %v2086
      %2150 = vmatpush1.bf16.msra.mxu0 %v2085
      %2151 = vmatprep.subr.bf16.mxu0 %v2088
      %2152 = vmatpush1.bf16.msra.mxu0 %v2087
      %2153 = vmatprep.subr.bf16.mxu0 %v2090
      %2154 = vmatpush1.bf16.msra.mxu0 %v2089
      %2155 = vmatprep.subr.bf16.mxu0 %v2092
      %2156 = vmatpush1.bf16.msra.mxu0 %v2091
      %2157 = vmatprep.subr.bf16.mxu0 %v2094
      %2158 = vmatpush1.bf16.msra.mxu0 %v2093
      %2159 = vmatprep.subr.bf16.mxu0 %v2096
      %2160 = vmatpush1.bf16.msra.mxu0 %v2095
      %2161 = vmatprep.subr.bf16.mxu0 %v2098
      %2162 = vmatpush1.bf16.msra.mxu0 %v2097
      %2163 = vmatprep.subr.bf16.mxu0 %v2100
      %2164 = vmatpush1.bf16.msra.mxu0 %v2099
      %2165 = vmatprep.subr.bf16.mxu0 %v2102
      %2166 = vmatpush1.bf16.msra.mxu0 %v2101
      %2167 = vmatprep.subr.bf16.mxu0 %v2104
      %2168 = vmatpush1.bf16.msra.mxu0 %v2103
      %2169 = vmatprep.subr.bf16.mxu0 %v2106
      %2170 = vmatpush1.bf16.msra.mxu0 %v2105
      %2171 = vmatprep.subr.bf16.mxu0 %v2108
      %2172 = vmatpush1.bf16.msra.mxu0 %v2107
      %2173 = vmatprep.mubr.bf16.mxu0 %v1953
      %2174 = vmatmul.mubr.bf16.gmra.mrb[0].mxu0 %v1952
      %v2175 = vpop.f32.mrb[0].mxu0
      %v2176 = vadd.f32 %v1974, %v2175
      %v2177 = vpop.f32.mrb[0].mxu0
      %v2178 = vadd.f32 %v1978, %v2177
      %v2179 = vpop.f32.mrb[0].mxu0
      %v2180 = vadd.f32 %v1974, %v2179
      %v2181 = vpop.f32.mrb[0].mxu0
      %v2182 = vadd.f32 %v1978, %v2181
      %2183 = vmatprep.mubr.bf16.mxu0 %v1955
      %2184 = vmatmul.mubr.bf16.gmra.mrb[0].mxu0 %v1954
      %v2185 = vpop.f32.mrb[0].mxu0
      %v2186 = vadd.f32 %v1974, %v2185
      %v2187 = vpop.f32.mrb[0].mxu0
      %v2188 = vadd.f32 %v1978, %v2187
      %v2189 = vpop.f32.mrb[0].mxu0
      %v2190 = vadd.f32 %v1974, %v2189
      %v2191 = vpop.f32.mrb[0].mxu0
      %v2192 = vadd.f32 %v1978, %v2191
      %2193 = vmatprep.mubr.bf16.mxu0 %v1957
      %2194 = vmatmul.mubr.bf16.gmra.mrb[0].mxu0 %v1956
      %v2195 = vpop.f32.mrb[0].mxu0
      %v2196 = vadd.f32 %v1974, %v2195
      %v2197 = vpop.f32.mrb[0].mxu0
      %v2198 = vadd.f32 %v1978, %v2197
      %v2199 = vpop.f32.mrb[0].mxu0
      %v2200 = vadd.f32 %v1974, %v2199
      %v2201 = vpop.f32.mrb[0].mxu0
      %v2202 = vadd.f32 %v1978, %v2201
      %2203 = vmatprep.mubr.bf16.mxu0 %v1959
      %2204 = vmatmul.mubr.bf16.gmra.mrb[0].mxu0 %v1958
      %v2205 = vpop.f32.mrb[0].mxu0
      %v2206 = vadd.f32 %v1974, %v2205
      %v2207 = vpop.f32.mrb[0].mxu0
      %v2208 = vadd.f32 %v1978, %v2207
      %v2209 = vpop.f32.mrb[0].mxu0
      %v2210 = vadd.f32 %v1974, %v2209
      %v2211 = vpop.f32.mrb[0].mxu0
      %v2212 = vadd.f32 %v1978, %v2211
      %2213 = vmatprep.mubr.bf16.mxu0 %v1961
      %2214 = vmatmul.mubr.bf16.gmra.mrb[0].mxu0 %v1960
      %v2215 = vpop.f32.mrb[0].mxu0
      %v2216 = vadd.f32 %v1974, %v2215
      %v2217 = vpop.f32.mrb[0].mxu0
      %v2218 = vadd.f32 %v1978, %v2217
      %v2219 = vpop.f32.mrb[0].mxu0
      %v2220 = vadd.f32 %v1974, %v2219
      %v2221 = vpop.f32.mrb[0].mxu0
      %v2222 = vadd.f32 %v1978, %v2221
      %2223 = vmatprep.mubr.bf16.mxu0 %v1963
      %2224 = vmatmul.mubr.bf16.gmra.mrb[0].mxu0 %v1962
      %v2225 = vpop.f32.mrb[0].mxu0
      %v2226 = vadd.f32 %v1974, %v2225
      %v2227 = vpop.f32.mrb[0].mxu0
      %v2228 = vadd.f32 %v1978, %v2227
      %v2229 = vpop.f32.mrb[0].mxu0
      %v2230 = vadd.f32 %v1974, %v2229
      %v2231 = vpop.f32.mrb[0].mxu0
      %v2232 = vadd.f32 %v1978, %v2231
      %2233 = vmatprep.mubr.bf16.mxu0 %v1965
      %2234 = vmatmul.mubr.bf16.gmra.mrb[0].mxu0 %v1964
      %v2235 = vpop.f32.mrb[0].mxu0
      %v2236 = vadd.f32 %v1974, %v2235
      %v2237 = vpop.f32.mrb[0].mxu0
      %v2238 = vadd.f32 %v1978, %v2237
      %v2239 = vpop.f32.mrb[0].mxu0
      %v2240 = vadd.f32 %v1974, %v2239
      %v2241 = vpop.f32.mrb[0].mxu0
      %v2242 = vadd.f32 %v1978, %v2241
      %2243 = vmatprep.mubr.bf16.mxu0 %v1967
      %2244 = vmatmul.mubr.bf16.gmra.mrb[0].mxu0 %v1966
      %v2245 = vpop.f32.mrb[0].mxu0
      %v2246 = vadd.f32 %v1974, %v2245
      %v2247 = vpop.f32.mrb[0].mxu0
      %v2248 = vadd.f32 %v1978, %v2247
      %v2249 = vpop.f32.mrb[0].mxu0
      %v2250 = vadd.f32 %v1974, %v2249
      %v2251 = vpop.f32.mrb[0].mxu0
      %v2252 = vadd.f32 %v1978, %v2251
      %2253 = vdwg.mxu0
      %v2254 = vmax.f32 %v2176, 0.0
      %v2255 = vmax.f32 %v2178, 0.0
      %v2256 = vmax.f32 %v2180, 0.0
      %v2257 = vmax.f32 %v2182, 0.0
      %v2258 = vmax.f32 %v2186, 0.0
      %v2259 = vmax.f32 %v2188, 0.0
      %v2260 = vmax.f32 %v2190, 0.0
      %v2261 = vmax.f32 %v2192, 0.0
      %v2262 = vmax.f32 %v2196, 0.0
      %v2263 = vmax.f32 %v2198, 0.0
      %v2264 = vmax.f32 %v2200, 0.0
      %v2265 = vmax.f32 %v2202, 0.0
      %v2266 = vmax.f32 %v2206, 0.0
      %v2267 = vmax.f32 %v2208, 0.0
      %v2268 = vmax.f32 %v2210, 0.0
      %v2269 = vmax.f32 %v2212, 0.0
      %v2270 = vmax.f32 %v2216, 0.0
      %v2271 = vmax.f32 %v2218, 0.0
      %v2272 = vmax.f32 %v2220, 0.0
      %v2273 = vmax.f32 %v2222, 0.0
      %v2274 = vmax.f32 %v2226, 0.0
      %v2275 = vmax.f32 %v2228, 0.0
      %v2276 = vmax.f32 %v2230, 0.0
      %v2277 = vmax.f32 %v2232, 0.0
      %v2278 = vmax.f32 %v2236, 0.0
      %v2279 = vmax.f32 %v2238, 0.0
      %v2280 = vmax.f32 %v2240, 0.0
      %v2281 = vmax.f32 %v2242, 0.0
      %v2282 = vmax.f32 %v2246, 0.0
      %v2283 = vmax.f32 %v2248, 0.0
      %v2284 = vmax.f32 %v2250, 0.0
      %v2285 = vmax.f32 %v2252, 0.0
      %s2286 = scalar_lea.vmem %s2, 1024
      %v2287 = vld [vmem:[%s2286] sm:$0xff]
      %v2288 = vld [vmem:[%s2286 + $0x8] sm:$0xff]
      %v2289 = vld [vmem:[%s2286 + $0x10] sm:$0xff]
      %v2290 = vld [vmem:[%s2286 + $0x18] sm:$0xff]
      %v2291 = vld [vmem:[%s2286 + $0x20] sm:$0xff]
      %v2292 = vld [vmem:[%s2286 + $0x28] sm:$0xff]
      %v2293 = vld [vmem:[%s2286 + $0x30] sm:$0xff]
      %v2294 = vld [vmem:[%s2286 + $0x38] sm:$0xff]
      %v2295 = vld [vmem:[%s2286 + $0x40] sm:$0xff]
      %v2296 = vld [vmem:[%s2286 + $0x48] sm:$0xff]
      %v2297 = vld [vmem:[%s2286 + $0x50] sm:$0xff]
      %v2298 = vld [vmem:[%s2286 + $0x58] sm:$0xff]
      %v2299 = vld [vmem:[%s2286 + $0x60] sm:$0xff]
      %v2300 = vld [vmem:[%s2286 + $0x68] sm:$0xff]
      %v2301 = vld [vmem:[%s2286 + $0x70] sm:$0xff]
      %v2302 = vld [vmem:[%s2286 + $0x78] sm:$0xff]
      %v2303 = vld [vmem:[%s2286 + $0x80] sm:$0xff]
      %v2304 = vld [vmem:[%s2286 + $0x88] sm:$0xff]
      %v2305 = vld [vmem:[%s2286 + $0x90] sm:$0xff]
      %v2306 = vld [vmem:[%s2286 + $0x98] sm:$0xff]
      %v2307 = vld [vmem:[%s2286 + $0xa0] sm:$0xff]
      %v2308 = vld [vmem:[%s2286 + $0xa8] sm:$0xff]
      %v2309 = vld [vmem:[%s2286 + $0xb0] sm:$0xff]
      %v2310 = vld [vmem:[%s2286 + $0xb8] sm:$0xff]
      %v2311 = vld [vmem:[%s2286 + $0xc0] sm:$0xff]
      %v2312 = vld [vmem:[%s2286 + $0xc8] sm:$0xff]
      %v2313 = vld [vmem:[%s2286 + $0xd0] sm:$0xff]
      %v2314 = vld [vmem:[%s2286 + $0xd8] sm:$0xff]
      %v2315 = vld [vmem:[%s2286 + $0xe0] sm:$0xff]
      %v2316 = vld [vmem:[%s2286 + $0xe8] sm:$0xff]
      %v2317 = vld [vmem:[%s2286 + $0xf0] sm:$0xff]
      %v2318 = vld [vmem:[%s2286 + $0xf8] sm:$0xff]
      %v2319 = vpack.c.bf16 %v2256, %v2254
      %v2320 = vpack.c.bf16 %v2257, %v2255
      %v2321 = vpack.c.bf16 %v2260, %v2258
      %v2322 = vpack.c.bf16 %v2261, %v2259
      %v2323 = vpack.c.bf16 %v2264, %v2262
      %v2324 = vpack.c.bf16 %v2265, %v2263
      %v2325 = vpack.c.bf16 %v2268, %v2266
      %v2326 = vpack.c.bf16 %v2269, %v2267
      %v2327 = vpack.c.bf16 %v2272, %v2270
      %v2328 = vpack.c.bf16 %v2273, %v2271
      %v2329 = vpack.c.bf16 %v2276, %v2274
      %v2330 = vpack.c.bf16 %v2277, %v2275
      %v2331 = vpack.c.bf16 %v2280, %v2278
      %v2332 = vpack.c.bf16 %v2281, %v2279
      %v2333 = vpack.c.bf16 %v2284, %v2282
      %v2334 = vpack.c.bf16 %v2285, %v2283
      %v2367 = vunpack.c.l.b16 %v2287
      %v2368 = vunpack.c.h.b16 %v2287
      %v2369 = vunpack.c.l.b16 %v2288
      %v2370 = vunpack.c.h.b16 %v2288
      %v2371 = vunpack.c.l.b16 %v2289
      %v2372 = vunpack.c.h.b16 %v2289
      %v2373 = vunpack.c.l.b16 %v2290
      %v2374 = vunpack.c.h.b16 %v2290
      %v2375 = vunpack.c.l.b16 %v2291
      %v2376 = vunpack.c.h.b16 %v2291
      %v2377 = vunpack.c.l.b16 %v2292
      %v2378 = vunpack.c.h.b16 %v2292
      %v2379 = vunpack.c.l.b16 %v2293
      %v2380 = vunpack.c.h.b16 %v2293
      %v2381 = vunpack.c.l.b16 %v2294
      %v2382 = vunpack.c.h.b16 %v2294
      %v2383 = vunpack.c.l.b16 %v2295
      %v2384 = vunpack.c.h.b16 %v2295
      %v2385 = vunpack.c.l.b16 %v2296
      %v2386 = vunpack.c.h.b16 %v2296
      %v2387 = vunpack.c.l.b16 %v2297
      %v2388 = vunpack.c.h.b16 %v2297
      %v2389 = vunpack.c.l.b16 %v2298
      %v2390 = vunpack.c.h.b16 %v2298
      %v2391 = vunpack.c.l.b16 %v2299
      %v2392 = vunpack.c.h.b16 %v2299
      %v2393 = vunpack.c.l.b16 %v2300
      %v2394 = vunpack.c.h.b16 %v2300
      %v2395 = vunpack.c.l.b16 %v2301
      %v2396 = vunpack.c.h.b16 %v2301
      %v2397 = vunpack.c.l.b16 %v2302
      %v2398 = vunpack.c.h.b16 %v2302
      %v2399 = vunpack.c.l.b16 %v2303
      %v2400 = vunpack.c.h.b16 %v2303
      %v2401 = vunpack.c.l.b16 %v2304
      %v2402 = vunpack.c.h.b16 %v2304
      %v2403 = vunpack.c.l.b16 %v2305
      %v2404 = vunpack.c.h.b16 %v2305
      %v2405 = vunpack.c.l.b16 %v2306
      %v2406 = vunpack.c.h.b16 %v2306
      %v2407 = vunpack.c.l.b16 %v2307
      %v2408 = vunpack.c.h.b16 %v2307
      %v2409 = vunpack.c.l.b16 %v2308
      %v2410 = vunpack.c.h.b16 %v2308
      %v2411 = vunpack.c.l.b16 %v2309
      %v2412 = vunpack.c.h.b16 %v2309
      %v2413 = vunpack.c.l.b16 %v2310
      %v2414 = vunpack.c.h.b16 %v2310
      %v2415 = vunpack.c.l.b16 %v2311
      %v2416 = vunpack.c.h.b16 %v2311
      %v2417 = vunpack.c.l.b16 %v2312
      %v2418 = vunpack.c.h.b16 %v2312
      %v2419 = vunpack.c.l.b16 %v2313
      %v2420 = vunpack.c.h.b16 %v2313
      %v2421 = vunpack.c.l.b16 %v2314
      %v2422 = vunpack.c.h.b16 %v2314
      %v2423 = vunpack.c.l.b16 %v2315
      %v2424 = vunpack.c.h.b16 %v2315
      %v2425 = vunpack.c.l.b16 %v2316
      %v2426 = vunpack.c.h.b16 %v2316
      %v2427 = vunpack.c.l.b16 %v2317
      %v2428 = vunpack.c.h.b16 %v2317
      %v2429 = vunpack.c.l.b16 %v2318
      %v2430 = vunpack.c.h.b16 %v2318
      %v2431 = vpack.c.b16 %v2369, %v2367
      %v2432 = vpack.c.b16 %v2370, %v2368
      %v2433 = vpack.c.b16 %v2373, %v2371
      %v2434 = vpack.c.b16 %v2374, %v2372
      %v2435 = vpack.c.b16 %v2377, %v2375
      %v2436 = vpack.c.b16 %v2378, %v2376
      %v2437 = vpack.c.b16 %v2381, %v2379
      %v2438 = vpack.c.b16 %v2382, %v2380
      %v2439 = vpack.c.b16 %v2385, %v2383
      %v2440 = vpack.c.b16 %v2386, %v2384
      %v2441 = vpack.c.b16 %v2389, %v2387
      %v2442 = vpack.c.b16 %v2390, %v2388
      %v2443 = vpack.c.b16 %v2393, %v2391
      %v2444 = vpack.c.b16 %v2394, %v2392
      %v2445 = vpack.c.b16 %v2397, %v2395
      %v2446 = vpack.c.b16 %v2398, %v2396
      %v2447 = vpack.c.b16 %v2401, %v2399
      %v2448 = vpack.c.b16 %v2402, %v2400
      %v2449 = vpack.c.b16 %v2405, %v2403
      %v2450 = vpack.c.b16 %v2406, %v2404
      %v2451 = vpack.c.b16 %v2409, %v2407
      %v2452 = vpack.c.b16 %v2410, %v2408
      %v2453 = vpack.c.b16 %v2413, %v2411
      %v2454 = vpack.c.b16 %v2414, %v2412
      %v2455 = vpack.c.b16 %v2417, %v2415
      %v2456 = vpack.c.b16 %v2418, %v2416
      %v2457 = vpack.c.b16 %v2421, %v2419
      %v2458 = vpack.c.b16 %v2422, %v2420
      %v2459 = vpack.c.b16 %v2425, %v2423
      %v2460 = vpack.c.b16 %v2426, %v2424
      %v2461 = vpack.c.b16 %v2429, %v2427
      %v2462 = vpack.c.b16 %v2430, %v2428
      %2495 = vmatprep.subr.bf16.mxu0 %v2432
      %2496 = vmatpush1.bf16.msra.mxu0 %v2431
      %2497 = vmatprep.subr.bf16.mxu0 %v2434
      %2498 = vmatpush1.bf16.msra.mxu0 %v2433
      %2499 = vmatprep.subr.bf16.mxu0 %v2436
      %2500 = vmatpush1.bf16.msra.mxu0 %v2435
      %2501 = vmatprep.subr.bf16.mxu0 %v2438
      %2502 = vmatpush1.bf16.msra.mxu0 %v2437
      %2503 = vmatprep.subr.bf16.mxu0 %v2440
      %2504 = vmatpush1.bf16.msra.mxu0 %v2439
      %2505 = vmatprep.subr.bf16.mxu0 %v2442
      %2506 = vmatpush1.bf16.msra.mxu0 %v2441
      %2507 = vmatprep.subr.bf16.mxu0 %v2444
      %2508 = vmatpush1.bf16.msra.mxu0 %v2443
      %2509 = vmatprep.subr.bf16.mxu0 %v2446
      %2510 = vmatpush1.bf16.msra.mxu0 %v2445
      %2511 = vmatprep.subr.bf16.mxu0 %v2448
      %2512 = vmatpush1.bf16.msra.mxu0 %v2447
      %2513 = vmatprep.subr.bf16.mxu0 %v2450
      %2514 = vmatpush1.bf16.msra.mxu0 %v2449
      %2515 = vmatprep.subr.bf16.mxu0 %v2452
      %2516 = vmatpush1.bf16.msra.mxu0 %v2451
      %2517 = vmatprep.subr.bf16.mxu0 %v2454
      %2518 = vmatpush1.bf16.msra.mxu0 %v2453
      %2519 = vmatprep.subr.bf16.mxu0 %v2456
      %2520 = vmatpush1.bf16.msra.mxu0 %v2455
      %2521 = vmatprep.subr.bf16.mxu0 %v2458
      %2522 = vmatpush1.bf16.msra.mxu0 %v2457
      %2523 = vmatprep.subr.bf16.mxu0 %v2460
      %2524 = vmatpush1.bf16.msra.mxu0 %v2459
      %2525 = vmatprep.subr.bf16.mxu0 %v2462
      %2526 = vmatpush1.bf16.msra.mxu0 %v2461
      %2527 = vmatprep.mubr.bf16.mxu0 %v2320
      %2528 = vmatmul.mubr.bf16.gmra.mrb[0].mxu0 %v2319
      %v2529 = vpop.f32.mrb[0].mxu0
      %v2530 = vadd.f32 0.0, %v2529
      %v2531 = vpop.f32.mrb[0].mxu0
      %v2532 = vadd.f32 0.0, %v2531
      %v2533 = vpop.f32.mrb[0].mxu0
      %v2534 = vadd.f32 0.0, %v2533
      %v2535 = vpop.f32.mrb[0].mxu0
      %v2536 = vadd.f32 0.0, %v2535
      %2537 = vmatprep.mubr.bf16.mxu0 %v2322
      %2538 = vmatmul.mubr.bf16.gmra.mrb[0].mxu0 %v2321
      %v2539 = vpop.f32.mrb[0].mxu0
      %v2540 = vadd.f32 0.0, %v2539
      %v2541 = vpop.f32.mrb[0].mxu0
      %v2542 = vadd.f32 0.0, %v2541
      %v2543 = vpop.f32.mrb[0].mxu0
      %v2544 = vadd.f32 0.0, %v2543
      %v2545 = vpop.f32.mrb[0].mxu0
      %v2546 = vadd.f32 0.0, %v2545
      %2547 = vmatprep.mubr.bf16.mxu0 %v2324
      %2548 = vmatmul.mubr.bf16.gmra.mrb[0].mxu0 %v2323
      %v2549 = vpop.f32.mrb[0].mxu0
      %v2550 = vadd.f32 0.0, %v2549
      %v2551 = vpop.f32.mrb[0].mxu0
      %v2552 = vadd.f32 0.0, %v2551
      %v2553 = vpop.f32.mrb[0].mxu0
      %v2554 = vadd.f32 0.0, %v2553
      %v2555 = vpop.f32.mrb[0].mxu0
      %v2556 = vadd.f32 0.0, %v2555
      %2557 = vmatprep.mubr.bf16.mxu0 %v2326
      %2558 = vmatmul.mubr.bf16.gmra.mrb[0].mxu0 %v2325
      %v2559 = vpop.f32.mrb[0].mxu0
      %v2560 = vadd.f32 0.0, %v2559
      %v2561 = vpop.f32.mrb[0].mxu0
      %v2562 = vadd.f32 0.0, %v2561
      %v2563 = vpop.f32.mrb[0].mxu0
      %v2564 = vadd.f32 0.0, %v2563
      %v2565 = vpop.f32.mrb[0].mxu0
      %v2566 = vadd.f32 0.0, %v2565
      %2567 = vmatprep.mubr.bf16.mxu0 %v2328
      %2568 = vmatmul.mubr.bf16.gmra.mrb[0].mxu0 %v2327
      %v2569 = vpop.f32.mrb[0].mxu0
      %v2570 = vadd.f32 0.0, %v2569
      %v2571 = vpop.f32.mrb[0].mxu0
      %v2572 = vadd.f32 0.0, %v2571
      %v2573 = vpop.f32.mrb[0].mxu0
      %v2574 = vadd.f32 0.0, %v2573
      %v2575 = vpop.f32.mrb[0].mxu0
      %v2576 = vadd.f32 0.0, %v2575
      %2577 = vmatprep.mubr.bf16.mxu0 %v2330
      %2578 = vmatmul.mubr.bf16.gmra.mrb[0].mxu0 %v2329
      %v2579 = vpop.f32.mrb[0].mxu0
      %v2580 = vadd.f32 0.0, %v2579
      %v2581 = vpop.f32.mrb[0].mxu0
      %v2582 = vadd.f32 0.0, %v2581
      %v2583 = vpop.f32.mrb[0].mxu0
      %v2584 = vadd.f32 0.0, %v2583
      %v2585 = vpop.f32.mrb[0].mxu0
      %v2586 = vadd.f32 0.0, %v2585
      %2587 = vmatprep.mubr.bf16.mxu0 %v2332
      %2588 = vmatmul.mubr.bf16.gmra.mrb[0].mxu0 %v2331
      %v2589 = vpop.f32.mrb[0].mxu0
      %v2590 = vadd.f32 0.0, %v2589
      %v2591 = vpop.f32.mrb[0].mxu0
      %v2592 = vadd.f32 0.0, %v2591
      %v2593 = vpop.f32.mrb[0].mxu0
      %v2594 = vadd.f32 0.0, %v2593
      %v2595 = vpop.f32.mrb[0].mxu0
      %v2596 = vadd.f32 0.0, %v2595
      %2597 = vmatprep.mubr.bf16.mxu0 %v2334
      %2598 = vmatmul.mubr.bf16.gmra.mrb[0].mxu0 %v2333
      %v2599 = vpop.f32.mrb[0].mxu0
      %v2600 = vadd.f32 0.0, %v2599
      %v2601 = vpop.f32.mrb[0].mxu0
      %v2602 = vadd.f32 0.0, %v2601
      %v2603 = vpop.f32.mrb[0].mxu0
      %v2604 = vadd.f32 0.0, %v2603
      %v2605 = vpop.f32.mrb[0].mxu0
      %v2606 = vadd.f32 0.0, %v2605
      %2607 = vdwg.mxu0
      %v2608 = vadd.f32 %v568, %v2530
      %v2609 = vadd.f32 %v570, %v2532
      %v2610 = vadd.f32 %v572, %v2534
      %v2611 = vadd.f32 %v574, %v2536
      %v2612 = vadd.f32 %v578, %v2540
      %v2613 = vadd.f32 %v580, %v2542
      %v2614 = vadd.f32 %v582, %v2544
      %v2615 = vadd.f32 %v584, %v2546
      %v2616 = vadd.f32 %v588, %v2550
      %v2617 = vadd.f32 %v590, %v2552
      %v2618 = vadd.f32 %v592, %v2554
      %v2619 = vadd.f32 %v594, %v2556
      %v2620 = vadd.f32 %v598, %v2560
      %v2621 = vadd.f32 %v600, %v2562
      %v2622 = vadd.f32 %v602, %v2564
      %v2623 = vadd.f32 %v604, %v2566
      %v2624 = vadd.f32 %v608, %v2570
      %v2625 = vadd.f32 %v610, %v2572
      %v2626 = vadd.f32 %v612, %v2574
      %v2627 = vadd.f32 %v614, %v2576
      %v2628 = vadd.f32 %v618, %v2580
      %v2629 = vadd.f32 %v620, %v2582
      %v2630 = vadd.f32 %v622, %v2584
      %v2631 = vadd.f32 %v624, %v2586
      %v2632 = vadd.f32 %v628, %v2590
      %v2633 = vadd.f32 %v630, %v2592
      %v2634 = vadd.f32 %v632, %v2594
      %v2635 = vadd.f32 %v634, %v2596
      %v2636 = vadd.f32 %v638, %v2600
      %v2637 = vadd.f32 %v640, %v2602
      %v2638 = vadd.f32 %v642, %v2604
      %v2639 = vadd.f32 %v644, %v2606
      %s2640 = scalar_lea.vmem %s6, 10
      %v2641 = vld [vmem:[%s2640] sm:$0x3]
      %v2643 = vlaneseq
      %v2644 = vshrl.u32 %v2643, 7
      %v2645 = vsub.s32 0, %v2644
      %v2646 = vrot.slane %v2641, %v2645
      %v2647 = vlaneseq
      %v2648 = vshrl.u32 %v2647, 7
      %v2649 = vsub.s32 1, %v2648
      %v2650 = vrot.slane %v2641, %v2649
      %v2653 = vadd.f32 %v2608, %v2646
      %v2654 = vadd.f32 %v2609, %v2650
      %v2655 = vadd.f32 %v2610, %v2646
      %v2656 = vadd.f32 %v2611, %v2650
      %v2657 = vadd.f32 %v2612, %v2646
      %v2658 = vadd.f32 %v2613, %v2650
      %v2659 = vadd.f32 %v2614, %v2646
      %v2660 = vadd.f32 %v2615, %v2650
      %v2661 = vadd.f32 %v2616, %v2646
      %v2662 = vadd.f32 %v2617, %v2650
      %v2663 = vadd.f32 %v2618, %v2646
      %v2664 = vadd.f32 %v2619, %v2650
      %v2665 = vadd.f32 %v2620, %v2646
      %v2666 = vadd.f32 %v2621, %v2650
      %v2667 = vadd.f32 %v2622, %v2646
      %v2668 = vadd.f32 %v2623, %v2650
      %v2669 = vadd.f32 %v2624, %v2646
      %v2670 = vadd.f32 %v2625, %v2650
      %v2671 = vadd.f32 %v2626, %v2646
      %v2672 = vadd.f32 %v2627, %v2650
      %v2673 = vadd.f32 %v2628, %v2646
      %v2674 = vadd.f32 %v2629, %v2650
      %v2675 = vadd.f32 %v2630, %v2646
      %v2676 = vadd.f32 %v2631, %v2650
      %v2677 = vadd.f32 %v2632, %v2646
      %v2678 = vadd.f32 %v2633, %v2650
      %v2679 = vadd.f32 %v2634, %v2646
      %v2680 = vadd.f32 %v2635, %v2650
      %v2681 = vadd.f32 %v2636, %v2646
      %v2682 = vadd.f32 %v2637, %v2650
      %v2683 = vadd.f32 %v2638, %v2646
      %v2684 = vadd.f32 %v2639, %v2650
      %v2685 = vmax.f32 %v2653, 0.0
      %v2686 = vmax.f32 %v2654, 0.0
      %v2687 = vmax.f32 %v2655, 0.0
      %v2688 = vmax.f32 %v2656, 0.0
      %v2689 = vmax.f32 %v2657, 0.0
      %v2690 = vmax.f32 %v2658, 0.0
      %v2691 = vmax.f32 %v2659, 0.0
      %v2692 = vmax.f32 %v2660, 0.0
      %v2693 = vmax.f32 %v2661, 0.0
      %v2694 = vmax.f32 %v2662, 0.0
      %v2695 = vmax.f32 %v2663, 0.0
      %v2696 = vmax.f32 %v2664, 0.0
      %v2697 = vmax.f32 %v2665, 0.0
      %v2698 = vmax.f32 %v2666, 0.0
      %v2699 = vmax.f32 %v2667, 0.0
      %v2700 = vmax.f32 %v2668, 0.0
      %v2701 = vmax.f32 %v2669, 0.0
      %v2702 = vmax.f32 %v2670, 0.0
      %v2703 = vmax.f32 %v2671, 0.0
      %v2704 = vmax.f32 %v2672, 0.0
      %v2705 = vmax.f32 %v2673, 0.0
      %v2706 = vmax.f32 %v2674, 0.0
      %v2707 = vmax.f32 %v2675, 0.0
      %v2708 = vmax.f32 %v2676, 0.0
      %v2709 = vmax.f32 %v2677, 0.0
      %v2710 = vmax.f32 %v2678, 0.0
      %v2711 = vmax.f32 %v2679, 0.0
      %v2712 = vmax.f32 %v2680, 0.0
      %v2713 = vmax.f32 %v2681, 0.0
      %v2714 = vmax.f32 %v2682, 0.0
      %v2715 = vmax.f32 %v2683, 0.0
      %v2716 = vmax.f32 %v2684, 0.0
      %s2717 = scalar_lea.vmem %s2, 1280
      %v2718 = vld [vmem:[%s2717] sm:$0xff]
      %v2719 = vld [vmem:[%s2717 + $0x8] sm:$0xff]
      %v2720 = vld [vmem:[%s2717 + $0x10] sm:$0xff]
      %v2721 = vld [vmem:[%s2717 + $0x18] sm:$0xff]
      %v2722 = vld [vmem:[%s2717 + $0x20] sm:$0xff]
      %v2723 = vld [vmem:[%s2717 + $0x28] sm:$0xff]
      %v2724 = vld [vmem:[%s2717 + $0x30] sm:$0xff]
      %v2725 = vld [vmem:[%s2717 + $0x38] sm:$0xff]
      %v2726 = vld [vmem:[%s2717 + $0x40] sm:$0xff]
      %v2727 = vld [vmem:[%s2717 + $0x48] sm:$0xff]
      %v2728 = vld [vmem:[%s2717 + $0x50] sm:$0xff]
      %v2729 = vld [vmem:[%s2717 + $0x58] sm:$0xff]
      %v2730 = vld [vmem:[%s2717 + $0x60] sm:$0xff]
      %v2731 = vld [vmem:[%s2717 + $0x68] sm:$0xff]
      %v2732 = vld [vmem:[%s2717 + $0x70] sm:$0xff]
      %v2733 = vld [vmem:[%s2717 + $0x78] sm:$0xff]
      %v2734 = vld [vmem:[%s2717 + $0x80] sm:$0xff]
      %v2735 = vld [vmem:[%s2717 + $0x88] sm:$0xff]
      %v2736 = vld [vmem:[%s2717 + $0x90] sm:$0xff]
      %v2737 = vld [vmem:[%s2717 + $0x98] sm:$0xff]
      %v2738 = vld [vmem:[%s2717 + $0xa0] sm:$0xff]
      %v2739 = vld [vmem:[%s2717 + $0xa8] sm:$0xff]
      %v2740 = vld [vmem:[%s2717 + $0xb0] sm:$0xff]
      %v2741 = vld [vmem:[%s2717 + $0xb8] sm:$0xff]
      %v2742 = vld [vmem:[%s2717 + $0xc0] sm:$0xff]
      %v2743 = vld [vmem:[%s2717 + $0xc8] sm:$0xff]
      %v2744 = vld [vmem:[%s2717 + $0xd0] sm:$0xff]
      %v2745 = vld [vmem:[%s2717 + $0xd8] sm:$0xff]
      %v2746 = vld [vmem:[%s2717 + $0xe0] sm:$0xff]
      %v2747 = vld [vmem:[%s2717 + $0xe8] sm:$0xff]
      %v2748 = vld [vmem:[%s2717 + $0xf0] sm:$0xff]
      %v2749 = vld [vmem:[%s2717 + $0xf8] sm:$0xff]
      %v2750 = vpack.c.bf16 %v2687, %v2685
      %v2751 = vpack.c.bf16 %v2688, %v2686
      %v2752 = vpack.c.bf16 %v2691, %v2689
      %v2753 = vpack.c.bf16 %v2692, %v2690
      %v2754 = vpack.c.bf16 %v2695, %v2693
      %v2755 = vpack.c.bf16 %v2696, %v2694
      %v2756 = vpack.c.bf16 %v2699, %v2697
      %v2757 = vpack.c.bf16 %v2700, %v2698
      %v2758 = vpack.c.bf16 %v2703, %v2701
      %v2759 = vpack.c.bf16 %v2704, %v2702
      %v2760 = vpack.c.bf16 %v2707, %v2705
      %v2761 = vpack.c.bf16 %v2708, %v2706
      %v2762 = vpack.c.bf16 %v2711, %v2709
      %v2763 = vpack.c.bf16 %v2712, %v2710
      %v2764 = vpack.c.bf16 %v2715, %v2713
      %v2765 = vpack.c.bf16 %v2716, %v2714
      %s2766 = scalar_lea.vmem %s6, 12
      %v2767 = vld [vmem:[%s2766] sm:$0x3]
      %v2769 = vlaneseq
      %v2770 = vshrl.u32 %v2769, 7
      %v2771 = vsub.s32 0, %v2770
      %v2772 = vrot.slane %v2767, %v2771
      %v2773 = vlaneseq
      %v2774 = vshrl.u32 %v2773, 7
      %v2775 = vsub.s32 1, %v2774
      %v2776 = vrot.slane %v2767, %v2775
      %v2811 = vunpack.c.l.b16 %v2718
      %v2812 = vunpack.c.h.b16 %v2718
      %v2813 = vunpack.c.l.b16 %v2719
      %v2814 = vunpack.c.h.b16 %v2719
      %v2815 = vunpack.c.l.b16 %v2720
      %v2816 = vunpack.c.h.b16 %v2720
      %v2817 = vunpack.c.l.b16 %v2721
      %v2818 = vunpack.c.h.b16 %v2721
      %v2819 = vunpack.c.l.b16 %v2722
      %v2820 = vunpack.c.h.b16 %v2722
      %v2821 = vunpack.c.l.b16 %v2723
      %v2822 = vunpack.c.h.b16 %v2723
      %v2823 = vunpack.c.l.b16 %v2724
      %v2824 = vunpack.c.h.b16 %v2724
      %v2825 = vunpack.c.l.b16 %v2725
      %v2826 = vunpack.c.h.b16 %v2725
      %v2827 = vunpack.c.l.b16 %v2726
      %v2828 = vunpack.c.h.b16 %v2726
      %v2829 = vunpack.c.l.b16 %v2727
      %v2830 = vunpack.c.h.b16 %v2727
      %v2831 = vunpack.c.l.b16 %v2728
      %v2832 = vunpack.c.h.b16 %v2728
      %v2833 = vunpack.c.l.b16 %v2729
      %v2834 = vunpack.c.h.b16 %v2729
      %v2835 = vunpack.c.l.b16 %v2730
      %v2836 = vunpack.c.h.b16 %v2730
      %v2837 = vunpack.c.l.b16 %v2731
      %v2838 = vunpack.c.h.b16 %v2731
      %v2839 = vunpack.c.l.b16 %v2732
      %v2840 = vunpack.c.h.b16 %v2732
      %v2841 = vunpack.c.l.b16 %v2733
      %v2842 = vunpack.c.h.b16 %v2733
      %v2843 = vunpack.c.l.b16 %v2734
      %v2844 = vunpack.c.h.b16 %v2734
      %v2845 = vunpack.c.l.b16 %v2735
      %v2846 = vunpack.c.h.b16 %v2735
      %v2847 = vunpack.c.l.b16 %v2736
      %v2848 = vunpack.c.h.b16 %v2736
      %v2849 = vunpack.c.l.b16 %v2737
      %v2850 = vunpack.c.h.b16 %v2737
      %v2851 = vunpack.c.l.b16 %v2738
      %v2852 = vunpack.c.h.b16 %v2738
      %v2853 = vunpack.c.l.b16 %v2739
      %v2854 = vunpack.c.h.b16 %v2739
      %v2855 = vunpack.c.l.b16 %v2740
      %v2856 = vunpack.c.h.b16 %v2740
      %v2857 = vunpack.c.l.b16 %v2741
      %v2858 = vunpack.c.h.b16 %v2741
      %v2859 = vunpack.c.l.b16 %v2742
      %v2860 = vunpack.c.h.b16 %v2742
      %v2861 = vunpack.c.l.b16 %v2743
      %v2862 = vunpack.c.h.b16 %v2743
      %v2863 = vunpack.c.l.b16 %v2744
      %v2864 = vunpack.c.h.b16 %v2744
      %v2865 = vunpack.c.l.b16 %v2745
      %v2866 = vunpack.c.h.b16 %v2745
      %v2867 = vunpack.c.l.b16 %v2746
      %v2868 = vunpack.c.h.b16 %v2746
      %v2869 = vunpack.c.l.b16 %v2747
      %v2870 = vunpack.c.h.b16 %v2747
      %v2871 = vunpack.c.l.b16 %v2748
      %v2872 = vunpack.c.h.b16 %v2748
      %v2873 = vunpack.c.l.b16 %v2749
      %v2874 = vunpack.c.h.b16 %v2749
      %v2875 = vpack.c.b16 %v2813, %v2811
      %v2876 = vpack.c.b16 %v2814, %v2812
      %v2877 = vpack.c.b16 %v2817, %v2815
      %v2878 = vpack.c.b16 %v2818, %v2816
      %v2879 = vpack.c.b16 %v2821, %v2819
      %v2880 = vpack.c.b16 %v2822, %v2820
      %v2881 = vpack.c.b16 %v2825, %v2823
      %v2882 = vpack.c.b16 %v2826, %v2824
      %v2883 = vpack.c.b16 %v2829, %v2827
      %v2884 = vpack.c.b16 %v2830, %v2828
      %v2885 = vpack.c.b16 %v2833, %v2831
      %v2886 = vpack.c.b16 %v2834, %v2832
      %v2887 = vpack.c.b16 %v2837, %v2835
      %v2888 = vpack.c.b16 %v2838, %v2836
      %v2889 = vpack.c.b16 %v2841, %v2839
      %v2890 = vpack.c.b16 %v2842, %v2840
      %v2891 = vpack.c.b16 %v2845, %v2843
      %v2892 = vpack.c.b16 %v2846, %v2844
      %v2893 = vpack.c.b16 %v2849, %v2847
      %v2894 = vpack.c.b16 %v2850, %v2848
      %v2895 = vpack.c.b16 %v2853, %v2851
      %v2896 = vpack.c.b16 %v2854, %v2852
      %v2897 = vpack.c.b16 %v2857, %v2855
      %v2898 = vpack.c.b16 %v2858, %v2856
      %v2899 = vpack.c.b16 %v2861, %v2859
      %v2900 = vpack.c.b16 %v2862, %v2860
      %v2901 = vpack.c.b16 %v2865, %v2863
      %v2902 = vpack.c.b16 %v2866, %v2864
      %v2903 = vpack.c.b16 %v2869, %v2867
      %v2904 = vpack.c.b16 %v2870, %v2868
      %v2905 = vpack.c.b16 %v2873, %v2871
      %v2906 = vpack.c.b16 %v2874, %v2872
      %2939 = vmatprep.subr.bf16.mxu0 %v2876
      %2940 = vmatpush1.bf16.msra.mxu0 %v2875
      %2941 = vmatprep.subr.bf16.mxu0 %v2878
      %2942 = vmatpush1.bf16.msra.mxu0 %v2877
      %2943 = vmatprep.subr.bf16.mxu0 %v2880
      %2944 = vmatpush1.bf16.msra.mxu0 %v2879
      %2945 = vmatprep.subr.bf16.mxu0 %v2882
      %2946 = vmatpush1.bf16.msra.mxu0 %v2881
      %2947 = vmatprep.subr.bf16.mxu0 %v2884
      %2948 = vmatpush1.bf16.msra.mxu0 %v2883
      %2949 = vmatprep.subr.bf16.mxu0 %v2886
      %2950 = vmatpush1.bf16.msra.mxu0 %v2885
      %2951 = vmatprep.subr.bf16.mxu0 %v2888
      %2952 = vmatpush1.bf16.msra.mxu0 %v2887
      %2953 = vmatprep.subr.bf16.mxu0 %v2890
      %2954 = vmatpush1.bf16.msra.mxu0 %v2889
      %2955 = vmatprep.subr.bf16.mxu0 %v2892
      %2956 = vmatpush1.bf16.msra.mxu0 %v2891
      %2957 = vmatprep.subr.bf16.mxu0 %v2894
      %2958 = vmatpush1.bf16.msra.mxu0 %v2893
      %2959 = vmatprep.subr.bf16.mxu0 %v2896
      %2960 = vmatpush1.bf16.msra.mxu0 %v2895
      %2961 = vmatprep.subr.bf16.mxu0 %v2898
      %2962 = vmatpush1.bf16.msra.mxu0 %v2897
      %2963 = vmatprep.subr.bf16.mxu0 %v2900
      %2964 = vmatpush1.bf16.msra.mxu0 %v2899
      %2965 = vmatprep.subr.bf16.mxu0 %v2902
      %2966 = vmatpush1.bf16.msra.mxu0 %v2901
      %2967 = vmatprep.subr.bf16.mxu0 %v2904
      %2968 = vmatpush1.bf16.msra.mxu0 %v2903
      %2969 = vmatprep.subr.bf16.mxu0 %v2906
      %2970 = vmatpush1.bf16.msra.mxu0 %v2905
      %2971 = vmatprep.mubr.bf16.mxu0 %v2751
      %2972 = vmatmul.mubr.bf16.gmra.mrb[0].mxu0 %v2750
      %v2973 = vpop.f32.mrb[0].mxu0
      %v2974 = vadd.f32 %v2772, %v2973
      %v2975 = vpop.f32.mrb[0].mxu0
      %v2976 = vadd.f32 %v2776, %v2975
      %v2977 = vpop.f32.mrb[0].mxu0
      %v2978 = vadd.f32 %v2772, %v2977
      %v2979 = vpop.f32.mrb[0].mxu0
      %v2980 = vadd.f32 %v2776, %v2979
      %2981 = vmatprep.mubr.bf16.mxu0 %v2753
      %2982 = vmatmul.mubr.bf16.gmra.mrb[0].mxu0 %v2752
      %v2983 = vpop.f32.mrb[0].mxu0
      %v2984 = vadd.f32 %v2772, %v2983
      %v2985 = vpop.f32.mrb[0].mxu0
      %v2986 = vadd.f32 %v2776, %v2985
      %v2987 = vpop.f32.mrb[0].mxu0
      %v2988 = vadd.f32 %v2772, %v2987
      %v2989 = vpop.f32.mrb[0].mxu0
      %v2990 = vadd.f32 %v2776, %v2989
      %2991 = vmatprep.mubr.bf16.mxu0 %v2755
      %2992 = vmatmul.mubr.bf16.gmra.mrb[0].mxu0 %v2754
      %v2993 = vpop.f32.mrb[0].mxu0
      %v2994 = vadd.f32 %v2772, %v2993
      %v2995 = vpop.f32.mrb[0].mxu0
      %v2996 = vadd.f32 %v2776, %v2995
      %v2997 = vpop.f32.mrb[0].mxu0
      %v2998 = vadd.f32 %v2772, %v2997
      %v2999 = vpop.f32.mrb[0].mxu0
      %v3000 = vadd.f32 %v2776, %v2999
      %3001 = vmatprep.mubr.bf16.mxu0 %v2757
      %3002 = vmatmul.mubr.bf16.gmra.mrb[0].mxu0 %v2756
      %v3003 = vpop.f32.mrb[0].mxu0
      %v3004 = vadd.f32 %v2772, %v3003
      %v3005 = vpop.f32.mrb[0].mxu0
      %v3006 = vadd.f32 %v2776, %v3005
      %v3007 = vpop.f32.mrb[0].mxu0
      %v3008 = vadd.f32 %v2772, %v3007
      %v3009 = vpop.f32.mrb[0].mxu0
      %v3010 = vadd.f32 %v2776, %v3009
      %3011 = vmatprep.mubr.bf16.mxu0 %v2759
      %3012 = vmatmul.mubr.bf16.gmra.mrb[0].mxu0 %v2758
      %v3013 = vpop.f32.mrb[0].mxu0
      %v3014 = vadd.f32 %v2772, %v3013
      %v3015 = vpop.f32.mrb[0].mxu0
      %v3016 = vadd.f32 %v2776, %v3015
      %v3017 = vpop.f32.mrb[0].mxu0
      %v3018 = vadd.f32 %v2772, %v3017
      %v3019 = vpop.f32.mrb[0].mxu0
      %v3020 = vadd.f32 %v2776, %v3019
      %3021 = vmatprep.mubr.bf16.mxu0 %v2761
      %3022 = vmatmul.mubr.bf16.gmra.mrb[0].mxu0 %v2760
      %v3023 = vpop.f32.mrb[0].mxu0
      %v3024 = vadd.f32 %v2772, %v3023
      %v3025 = vpop.f32.mrb[0].mxu0
      %v3026 = vadd.f32 %v2776, %v3025
      %v3027 = vpop.f32.mrb[0].mxu0
      %v3028 = vadd.f32 %v2772, %v3027
      %v3029 = vpop.f32.mrb[0].mxu0
      %v3030 = vadd.f32 %v2776, %v3029
      %3031 = vmatprep.mubr.bf16.mxu0 %v2763
      %3032 = vmatmul.mubr.bf16.gmra.mrb[0].mxu0 %v2762
      %v3033 = vpop.f32.mrb[0].mxu0
      %v3034 = vadd.f32 %v2772, %v3033
      %v3035 = vpop.f32.mrb[0].mxu0
      %v3036 = vadd.f32 %v2776, %v3035
      %v3037 = vpop.f32.mrb[0].mxu0
      %v3038 = vadd.f32 %v2772, %v3037
      %v3039 = vpop.f32.mrb[0].mxu0
      %v3040 = vadd.f32 %v2776, %v3039
      %3041 = vmatprep.mubr.bf16.mxu0 %v2765
      %3042 = vmatmul.mubr.bf16.gmra.mrb[0].mxu0 %v2764
      %v3043 = vpop.f32.mrb[0].mxu0
      %v3044 = vadd.f32 %v2772, %v3043
      %v3045 = vpop.f32.mrb[0].mxu0
      %v3046 = vadd.f32 %v2776, %v3045
      %v3047 = vpop.f32.mrb[0].mxu0
      %v3048 = vadd.f32 %v2772, %v3047
      %v3049 = vpop.f32.mrb[0].mxu0
      %v3050 = vadd.f32 %v2776, %v3049
      %3051 = vdwg.mxu0
      %v3052 = vmax.f32 %v2974, 0.0
      %v3053 = vmax.f32 %v2976, 0.0
      %v3054 = vmax.f32 %v2978, 0.0
      %v3055 = vmax.f32 %v2980, 0.0
      %v3056 = vmax.f32 %v2984, 0.0
      %v3057 = vmax.f32 %v2986, 0.0
      %v3058 = vmax.f32 %v2988, 0.0
      %v3059 = vmax.f32 %v2990, 0.0
      %v3060 = vmax.f32 %v2994, 0.0
      %v3061 = vmax.f32 %v2996, 0.0
      %v3062 = vmax.f32 %v2998, 0.0
      %v3063 = vmax.f32 %v3000, 0.0
      %v3064 = vmax.f32 %v3004, 0.0
      %v3065 = vmax.f32 %v3006, 0.0
      %v3066 = vmax.f32 %v3008, 0.0
      %v3067 = vmax.f32 %v3010, 0.0
      %v3068 = vmax.f32 %v3014, 0.0
      %v3069 = vmax.f32 %v3016, 0.0
      %v3070 = vmax.f32 %v3018, 0.0
      %v3071 = vmax.f32 %v3020, 0.0
      %v3072 = vmax.f32 %v3024, 0.0
      %v3073 = vmax.f32 %v3026, 0.0
      %v3074 = vmax.f32 %v3028, 0.0
      %v3075 = vmax.f32 %v3030, 0.0
      %v3076 = vmax.f32 %v3034, 0.0
      %v3077 = vmax.f32 %v3036, 0.0
      %v3078 = vmax.f32 %v3038, 0.0
      %v3079 = vmax.f32 %v3040, 0.0
      %v3080 = vmax.f32 %v3044, 0.0
      %v3081 = vmax.f32 %v3046, 0.0
      %v3082 = vmax.f32 %v3048, 0.0
      %v3083 = vmax.f32 %v3050, 0.0
      %s3084 = scalar_lea.vmem %s2, 1536
      %v3085 = vld [vmem:[%s3084] sm:$0xff]
      %v3086 = vld [vmem:[%s3084 + $0x8] sm:$0xff]
      %v3087 = vld [vmem:[%s3084 + $0x10] sm:$0xff]
      %v3088 = vld [vmem:[%s3084 + $0x18] sm:$0xff]
      %v3089 = vld [vmem:[%s3084 + $0x20] sm:$0xff]
      %v3090 = vld [vmem:[%s3084 + $0x28] sm:$0xff]
      %v3091 = vld [vmem:[%s3084 + $0x30] sm:$0xff]
      %v3092 = vld [vmem:[%s3084 + $0x38] sm:$0xff]
      %v3093 = vld [vmem:[%s3084 + $0x40] sm:$0xff]
      %v3094 = vld [vmem:[%s3084 + $0x48] sm:$0xff]
      %v3095 = vld [vmem:[%s3084 + $0x50] sm:$0xff]
      %v3096 = vld [vmem:[%s3084 + $0x58] sm:$0xff]
      %v3097 = vld [vmem:[%s3084 + $0x60] sm:$0xff]
      %v3098 = vld [vmem:[%s3084 + $0x68] sm:$0xff]
      %v3099 = vld [vmem:[%s3084 + $0x70] sm:$0xff]
      %v3100 = vld [vmem:[%s3084 + $0x78] sm:$0xff]
      %v3101 = vld [vmem:[%s3084 + $0x80] sm:$0xff]
      %v3102 = vld [vmem:[%s3084 + $0x88] sm:$0xff]
      %v3103 = vld [vmem:[%s3084 + $0x90] sm:$0xff]
      %v3104 = vld [vmem:[%s3084 + $0x98] sm:$0xff]
      %v3105 = vld [vmem:[%s3084 + $0xa0] sm:$0xff]
      %v3106 = vld [vmem:[%s3084 + $0xa8] sm:$0xff]
      %v3107 = vld [vmem:[%s3084 + $0xb0] sm:$0xff]
      %v3108 = vld [vmem:[%s3084 + $0xb8] sm:$0xff]
      %v3109 = vld [vmem:[%s3084 + $0xc0] sm:$0xff]
      %v3110 = vld [vmem:[%s3084 + $0xc8] sm:$0xff]
      %v3111 = vld [vmem:[%s3084 + $0xd0] sm:$0xff]
      %v3112 = vld [vmem:[%s3084 + $0xd8] sm:$0xff]
      %v3113 = vld [vmem:[%s3084 + $0xe0] sm:$0xff]
      %v3114 = vld [vmem:[%s3084 + $0xe8] sm:$0xff]
      %v3115 = vld [vmem:[%s3084 + $0xf0] sm:$0xff]
      %v3116 = vld [vmem:[%s3084 + $0xf8] sm:$0xff]
      %v3117 = vpack.c.bf16 %v3054, %v3052
      %v3118 = vpack.c.bf16 %v3055, %v3053
      %v3119 = vpack.c.bf16 %v3058, %v3056
      %v3120 = vpack.c.bf16 %v3059, %v3057
      %v3121 = vpack.c.bf16 %v3062, %v3060
      %v3122 = vpack.c.bf16 %v3063, %v3061
      %v3123 = vpack.c.bf16 %v3066, %v3064
      %v3124 = vpack.c.bf16 %v3067, %v3065
      %v3125 = vpack.c.bf16 %v3070, %v3068
      %v3126 = vpack.c.bf16 %v3071, %v3069
      %v3127 = vpack.c.bf16 %v3074, %v3072
      %v3128 = vpack.c.bf16 %v3075, %v3073
      %v3129 = vpack.c.bf16 %v3078, %v3076
      %v3130 = vpack.c.bf16 %v3079, %v3077
      %v3131 = vpack.c.bf16 %v3082, %v3080
      %v3132 = vpack.c.bf16 %v3083, %v3081
      %s3133 = scalar_lea.vmem %s6, 14
      %v3134 = vld [vmem:[%s3133] sm:$0x3]
      %v3136 = vlaneseq
      %v3137 = vshrl.u32 %v3136, 7
      %v3138 = vsub.s32 0, %v3137
      %v3139 = vrot.slane %v3134, %v3138
      %v3140 = vlaneseq
      %v3141 = vshrl.u32 %v3140, 7
      %v3142 = vsub.s32 1, %v3141
      %v3143 = vrot.slane %v3134, %v3142
      %v3178 = vunpack.c.l.b16 %v3085
      %v3179 = vunpack.c.h.b16 %v3085
      %v3180 = vunpack.c.l.b16 %v3086
      %v3181 = vunpack.c.h.b16 %v3086
      %v3182 = vunpack.c.l.b16 %v3087
      %v3183 = vunpack.c.h.b16 %v3087
      %v3184 = vunpack.c.l.b16 %v3088
      %v3185 = vunpack.c.h.b16 %v3088
      %v3186 = vunpack.c.l.b16 %v3089
      %v3187 = vunpack.c.h.b16 %v3089
      %v3188 = vunpack.c.l.b16 %v3090
      %v3189 = vunpack.c.h.b16 %v3090
      %v3190 = vunpack.c.l.b16 %v3091
      %v3191 = vunpack.c.h.b16 %v3091
      %v3192 = vunpack.c.l.b16 %v3092
      %v3193 = vunpack.c.h.b16 %v3092
      %v3194 = vunpack.c.l.b16 %v3093
      %v3195 = vunpack.c.h.b16 %v3093
      %v3196 = vunpack.c.l.b16 %v3094
      %v3197 = vunpack.c.h.b16 %v3094
      %v3198 = vunpack.c.l.b16 %v3095
      %v3199 = vunpack.c.h.b16 %v3095
      %v3200 = vunpack.c.l.b16 %v3096
      %v3201 = vunpack.c.h.b16 %v3096
      %v3202 = vunpack.c.l.b16 %v3097
      %v3203 = vunpack.c.h.b16 %v3097
      %v3204 = vunpack.c.l.b16 %v3098
      %v3205 = vunpack.c.h.b16 %v3098
      %v3206 = vunpack.c.l.b16 %v3099
      %v3207 = vunpack.c.h.b16 %v3099
      %v3208 = vunpack.c.l.b16 %v3100
      %v3209 = vunpack.c.h.b16 %v3100
      %v3210 = vunpack.c.l.b16 %v3101
      %v3211 = vunpack.c.h.b16 %v3101
      %v3212 = vunpack.c.l.b16 %v3102
      %v3213 = vunpack.c.h.b16 %v3102
      %v3214 = vunpack.c.l.b16 %v3103
      %v3215 = vunpack.c.h.b16 %v3103
      %v3216 = vunpack.c.l.b16 %v3104
      %v3217 = vunpack.c.h.b16 %v3104
      %v3218 = vunpack.c.l.b16 %v3105
      %v3219 = vunpack.c.h.b16 %v3105
      %v3220 = vunpack.c.l.b16 %v3106
      %v3221 = vunpack.c.h.b16 %v3106
      %v3222 = vunpack.c.l.b16 %v3107
      %v3223 = vunpack.c.h.b16 %v3107
      %v3224 = vunpack.c.l.b16 %v3108
      %v3225 = vunpack.c.h.b16 %v3108
      %v3226 = vunpack.c.l.b16 %v3109
      %v3227 = vunpack.c.h.b16 %v3109
      %v3228 = vunpack.c.l.b16 %v3110
      %v3229 = vunpack.c.h.b16 %v3110
      %v3230 = vunpack.c.l.b16 %v3111
      %v3231 = vunpack.c.h.b16 %v3111
      %v3232 = vunpack.c.l.b16 %v3112
      %v3233 = vunpack.c.h.b16 %v3112
      %v3234 = vunpack.c.l.b16 %v3113
      %v3235 = vunpack.c.h.b16 %v3113
      %v3236 = vunpack.c.l.b16 %v3114
      %v3237 = vunpack.c.h.b16 %v3114
      %v3238 = vunpack.c.l.b16 %v3115
      %v3239 = vunpack.c.h.b16 %v3115
      %v3240 = vunpack.c.l.b16 %v3116
      %v3241 = vunpack.c.h.b16 %v3116
      %v3242 = vpack.c.b16 %v3180, %v3178
      %v3243 = vpack.c.b16 %v3181, %v3179
      %v3244 = vpack.c.b16 %v3184, %v3182
      %v3245 = vpack.c.b16 %v3185, %v3183
      %v3246 = vpack.c.b16 %v3188, %v3186
      %v3247 = vpack.c.b16 %v3189, %v3187
      %v3248 = vpack.c.b16 %v3192, %v3190
      %v3249 = vpack.c.b16 %v3193, %v3191
      %v3250 = vpack.c.b16 %v3196, %v3194
      %v3251 = vpack.c.b16 %v3197, %v3195
      %v3252 = vpack.c.b16 %v3200, %v3198
      %v3253 = vpack.c.b16 %v3201, %v3199
      %v3254 = vpack.c.b16 %v3204, %v3202
      %v3255 = vpack.c.b16 %v3205, %v3203
      %v3256 = vpack.c.b16 %v3208, %v3206
      %v3257 = vpack.c.b16 %v3209, %v3207
      %v3258 = vpack.c.b16 %v3212, %v3210
      %v3259 = vpack.c.b16 %v3213, %v3211
      %v3260 = vpack.c.b16 %v3216, %v3214
      %v3261 = vpack.c.b16 %v3217, %v3215
      %v3262 = vpack.c.b16 %v3220, %v3218
      %v3263 = vpack.c.b16 %v3221, %v3219
      %v3264 = vpack.c.b16 %v3224, %v3222
      %v3265 = vpack.c.b16 %v3225, %v3223
      %v3266 = vpack.c.b16 %v3228, %v3226
      %v3267 = vpack.c.b16 %v3229, %v3227
      %v3268 = vpack.c.b16 %v3232, %v3230
      %v3269 = vpack.c.b16 %v3233, %v3231
      %v3270 = vpack.c.b16 %v3236, %v3234
      %v3271 = vpack.c.b16 %v3237, %v3235
      %v3272 = vpack.c.b16 %v3240, %v3238
      %v3273 = vpack.c.b16 %v3241, %v3239
      %3306 = vmatprep.subr.bf16.mxu0 %v3243
      %3307 = vmatpush1.bf16.msra.mxu0 %v3242
      %3308 = vmatprep.subr.bf16.mxu0 %v3245
      %3309 = vmatpush1.bf16.msra.mxu0 %v3244
      %3310 = vmatprep.subr.bf16.mxu0 %v3247
      %3311 = vmatpush1.bf16.msra.mxu0 %v3246
      %3312 = vmatprep.subr.bf16.mxu0 %v3249
      %3313 = vmatpush1.bf16.msra.mxu0 %v3248
      %3314 = vmatprep.subr.bf16.mxu0 %v3251
      %3315 = vmatpush1.bf16.msra.mxu0 %v3250
      %3316 = vmatprep.subr.bf16.mxu0 %v3253
      %3317 = vmatpush1.bf16.msra.mxu0 %v3252
      %3318 = vmatprep.subr.bf16.mxu0 %v3255
      %3319 = vmatpush1.bf16.msra.mxu0 %v3254
      %3320 = vmatprep.subr.bf16.mxu0 %v3257
      %3321 = vmatpush1.bf16.msra.mxu0 %v3256
      %3322 = vmatprep.subr.bf16.mxu0 %v3259
      %3323 = vmatpush1.bf16.msra.mxu0 %v3258
      %3324 = vmatprep.subr.bf16.mxu0 %v3261
      %3325 = vmatpush1.bf16.msra.mxu0 %v3260
      %3326 = vmatprep.subr.bf16.mxu0 %v3263
      %3327 = vmatpush1.bf16.msra.mxu0 %v3262
      %3328 = vmatprep.subr.bf16.mxu0 %v3265
      %3329 = vmatpush1.bf16.msra.mxu0 %v3264
      %3330 = vmatprep.subr.bf16.mxu0 %v3267
      %3331 = vmatpush1.bf16.msra.mxu0 %v3266
      %3332 = vmatprep.subr.bf16.mxu0 %v3269
      %3333 = vmatpush1.bf16.msra.mxu0 %v3268
      %3334 = vmatprep.subr.bf16.mxu0 %v3271
      %3335 = vmatpush1.bf16.msra.mxu0 %v3270
      %3336 = vmatprep.subr.bf16.mxu0 %v3273
      %3337 = vmatpush1.bf16.msra.mxu0 %v3272
      %3338 = vmatprep.mubr.bf16.mxu0 %v3118
      %3339 = vmatmul.mubr.bf16.gmra.mrb[0].mxu0 %v3117
      %v3340 = vpop.f32.mrb[0].mxu0
      %v3341 = vadd.f32 %v3139, %v3340
      %v3342 = vpop.f32.mrb[0].mxu0
      %v3343 = vadd.f32 %v3143, %v3342
      %v3344 = vpop.f32.mrb[0].mxu0
      %v3345 = vadd.f32 %v3139, %v3344
      %v3346 = vpop.f32.mrb[0].mxu0
      %v3347 = vadd.f32 %v3143, %v3346
      %3348 = vmatprep.mubr.bf16.mxu0 %v3120
      %3349 = vmatmul.mubr.bf16.gmra.mrb[0].mxu0 %v3119
      %v3350 = vpop.f32.mrb[0].mxu0
      %v3351 = vadd.f32 %v3139, %v3350
      %v3352 = vpop.f32.mrb[0].mxu0
      %v3353 = vadd.f32 %v3143, %v3352
      %v3354 = vpop.f32.mrb[0].mxu0
      %v3355 = vadd.f32 %v3139, %v3354
      %v3356 = vpop.f32.mrb[0].mxu0
      %v3357 = vadd.f32 %v3143, %v3356
      %3358 = vmatprep.mubr.bf16.mxu0 %v3122
      %3359 = vmatmul.mubr.bf16.gmra.mrb[0].mxu0 %v3121
      %v3360 = vpop.f32.mrb[0].mxu0
      %v3361 = vadd.f32 %v3139, %v3360
      %v3362 = vpop.f32.mrb[0].mxu0
      %v3363 = vadd.f32 %v3143, %v3362
      %v3364 = vpop.f32.mrb[0].mxu0
      %v3365 = vadd.f32 %v3139, %v3364
      %v3366 = vpop.f32.mrb[0].mxu0
      %v3367 = vadd.f32 %v3143, %v3366
      %3368 = vmatprep.mubr.bf16.mxu0 %v3124
      %3369 = vmatmul.mubr.bf16.gmra.mrb[0].mxu0 %v3123
      %v3370 = vpop.f32.mrb[0].mxu0
      %v3371 = vadd.f32 %v3139, %v3370
      %v3372 = vpop.f32.mrb[0].mxu0
      %v3373 = vadd.f32 %v3143, %v3372
      %v3374 = vpop.f32.mrb[0].mxu0
      %v3375 = vadd.f32 %v3139, %v3374
      %v3376 = vpop.f32.mrb[0].mxu0
      %v3377 = vadd.f32 %v3143, %v3376
      %3378 = vmatprep.mubr.bf16.mxu0 %v3126
      %3379 = vmatmul.mubr.bf16.gmra.mrb[0].mxu0 %v3125
      %v3380 = vpop.f32.mrb[0].mxu0
      %v3381 = vadd.f32 %v3139, %v3380
      %v3382 = vpop.f32.mrb[0].mxu0
      %v3383 = vadd.f32 %v3143, %v3382
      %v3384 = vpop.f32.mrb[0].mxu0
      %v3385 = vadd.f32 %v3139, %v3384
      %v3386 = vpop.f32.mrb[0].mxu0
      %v3387 = vadd.f32 %v3143, %v3386
      %3388 = vmatprep.mubr.bf16.mxu0 %v3128
      %3389 = vmatmul.mubr.bf16.gmra.mrb[0].mxu0 %v3127
      %v3390 = vpop.f32.mrb[0].mxu0
      %v3391 = vadd.f32 %v3139, %v3390
      %v3392 = vpop.f32.mrb[0].mxu0
      %v3393 = vadd.f32 %v3143, %v3392
      %v3394 = vpop.f32.mrb[0].mxu0
      %v3395 = vadd.f32 %v3139, %v3394
      %v3396 = vpop.f32.mrb[0].mxu0
      %v3397 = vadd.f32 %v3143, %v3396
      %3398 = vmatprep.mubr.bf16.mxu0 %v3130
      %3399 = vmatmul.mubr.bf16.gmra.mrb[0].mxu0 %v3129
      %v3400 = vpop.f32.mrb[0].mxu0
      %v3401 = vadd.f32 %v3139, %v3400
      %v3402 = vpop.f32.mrb[0].mxu0
      %v3403 = vadd.f32 %v3143, %v3402
      %v3404 = vpop.f32.mrb[0].mxu0
      %v3405 = vadd.f32 %v3139, %v3404
      %v3406 = vpop.f32.mrb[0].mxu0
      %v3407 = vadd.f32 %v3143, %v3406
      %3408 = vmatprep.mubr.bf16.mxu0 %v3132
      %3409 = vmatmul.mubr.bf16.gmra.mrb[0].mxu0 %v3131
      %v3410 = vpop.f32.mrb[0].mxu0
      %v3411 = vadd.f32 %v3139, %v3410
      %v3412 = vpop.f32.mrb[0].mxu0
      %v3413 = vadd.f32 %v3143, %v3412
      %v3414 = vpop.f32.mrb[0].mxu0
      %v3415 = vadd.f32 %v3139, %v3414
      %v3416 = vpop.f32.mrb[0].mxu0
      %v3417 = vadd.f32 %v3143, %v3416
      %3418 = vdwg.mxu0
      %v3419 = vmax.f32 %v3341, 0.0
      %v3420 = vmax.f32 %v3343, 0.0
      %v3421 = vmax.f32 %v3345, 0.0
      %v3422 = vmax.f32 %v3347, 0.0
      %v3423 = vmax.f32 %v3351, 0.0
      %v3424 = vmax.f32 %v3353, 0.0
      %v3425 = vmax.f32 %v3355, 0.0
      %v3426 = vmax.f32 %v3357, 0.0
      %v3427 = vmax.f32 %v3361, 0.0
      %v3428 = vmax.f32 %v3363, 0.0
      %v3429 = vmax.f32 %v3365, 0.0
      %v3430 = vmax.f32 %v3367, 0.0
      %v3431 = vmax.f32 %v3371, 0.0
      %v3432 = vmax.f32 %v3373, 0.0
      %v3433 = vmax.f32 %v3375, 0.0
      %v3434 = vmax.f32 %v3377, 0.0
      %v3435 = vmax.f32 %v3381, 0.0
      %v3436 = vmax.f32 %v3383, 0.0
      %v3437 = vmax.f32 %v3385, 0.0
      %v3438 = vmax.f32 %v3387, 0.0
      %v3439 = vmax.f32 %v3391, 0.0
      %v3440 = vmax.f32 %v3393, 0.0
      %v3441 = vmax.f32 %v3395, 0.0
      %v3442 = vmax.f32 %v3397, 0.0
      %v3443 = vmax.f32 %v3401, 0.0
      %v3444 = vmax.f32 %v3403, 0.0
      %v3445 = vmax.f32 %v3405, 0.0
      %v3446 = vmax.f32 %v3407, 0.0
      %v3447 = vmax.f32 %v3411, 0.0
      %v3448 = vmax.f32 %v3413, 0.0
      %v3449 = vmax.f32 %v3415, 0.0
      %v3450 = vmax.f32 %v3417, 0.0
      %v3451 = vld [vmem:[%s3] sm:$0xff]
      %v3452 = vld [vmem:[%s3 + $0x8] sm:$0xf]
      %v3453 = vld [vmem:[%s3 + $0xc] sm:$0xff]
      %v3454 = vld [vmem:[%s3 + $0x14] sm:$0xf]
      %v3455 = vld [vmem:[%s3 + $0x18] sm:$0xff]
      %v3456 = vld [vmem:[%s3 + $0x20] sm:$0xf]
      %v3457 = vld [vmem:[%s3 + $0x24] sm:$0xff]
      %v3458 = vld [vmem:[%s3 + $0x2c] sm:$0xf]
      %v3459 = vld [vmem:[%s3 + $0x30] sm:$0xff]
      %v3460 = vld [vmem:[%s3 + $0x38] sm:$0xf]
      %v3461 = vld [vmem:[%s3 + $0x3c] sm:$0xff]
      %v3462 = vld [vmem:[%s3 + $0x44] sm:$0xf]
      %v3463 = vld [vmem:[%s3 + $0x48] sm:$0xff]
      %v3464 = vld [vmem:[%s3 + $0x50] sm:$0xf]
      %v3465 = vld [vmem:[%s3 + $0x54] sm:$0xff]
      %v3466 = vld [vmem:[%s3 + $0x5c] sm:$0xf]
      %v3467 = vld [vmem:[%s3 + $0x60] sm:$0xff]
      %v3468 = vld [vmem:[%s3 + $0x68] sm:$0xf]
      %v3469 = vld [vmem:[%s3 + $0x6c] sm:$0xff]
      %v3470 = vld [vmem:[%s3 + $0x74] sm:$0xf]
      %v3471 = vld [vmem:[%s3 + $0x78] sm:$0xff]
      %v3472 = vld [vmem:[%s3 + $0x80] sm:$0xf]
      %v3473 = vld [vmem:[%s3 + $0x84] sm:$0xff]
      %v3474 = vld [vmem:[%s3 + $0x8c] sm:$0xf]
      %v3475 = vld [vmem:[%s3 + $0x90] sm:$0xff]
      %v3476 = vld [vmem:[%s3 + $0x98] sm:$0xf]
      %v3477 = vld [vmem:[%s3 + $0x9c] sm:$0xff]
      %v3478 = vld [vmem:[%s3 + $0xa4] sm:$0xf]
      %v3479 = vld [vmem:[%s3 + $0xa8] sm:$0xff]
      %v3480 = vld [vmem:[%s3 + $0xb0] sm:$0xf]
      %v3481 = vld [vmem:[%s3 + $0xb4] sm:$0xff]
      %v3482 = vld [vmem:[%s3 + $0xbc] sm:$0xf]
      %v3483 = vld [vmem:[%s3 + $0xc0] sm:$0xff]
      %v3484 = vld [vmem:[%s3 + $0xc8] sm:$0xf]
      %v3485 = vld [vmem:[%s3 + $0xcc] sm:$0xff]
      %v3486 = vld [vmem:[%s3 + $0xd4] sm:$0xf]
      %v3487 = vld [vmem:[%s3 + $0xd8] sm:$0xff]
      %v3488 = vld [vmem:[%s3 + $0xe0] sm:$0xf]
      %v3489 = vld [vmem:[%s3 + $0xe4] sm:$0xff]
      %v3490 = vld [vmem:[%s3 + $0xec] sm:$0xf]
      %v3491 = vld [vmem:[%s3 + $0xf0] sm:$0xff]
      %v3492 = vld [vmem:[%s3 + $0xf8] sm:$0xf]
      %v3493 = vld [vmem:[%s3 + $0xfc] sm:$0xff]
      %v3494 = vld [vmem:[%s3 + $0x104] sm:$0xf]
      %v3495 = vld [vmem:[%s3 + $0x108] sm:$0xff]
      %v3496 = vld [vmem:[%s3 + $0x110] sm:$0xf]
      %v3497 = vld [vmem:[%s3 + $0x114] sm:$0xff]
      %v3498 = vld [vmem:[%s3 + $0x11c] sm:$0xf]
      %v3499 = vld [vmem:[%s3 + $0x120] sm:$0xff]
      %v3500 = vld [vmem:[%s3 + $0x128] sm:$0xf]
      %v3501 = vld [vmem:[%s3 + $0x12c] sm:$0xff]
      %v3502 = vld [vmem:[%s3 + $0x134] sm:$0xf]
      %v3503 = vld [vmem:[%s3 + $0x138] sm:$0xff]
      %v3504 = vld [vmem:[%s3 + $0x140] sm:$0xf]
      %v3505 = vld [vmem:[%s3 + $0x144] sm:$0xff]
      %v3506 = vld [vmem:[%s3 + $0x14c] sm:$0xf]
      %v3507 = vld [vmem:[%s3 + $0x150] sm:$0xff]
      %v3508 = vld [vmem:[%s3 + $0x158] sm:$0xf]
      %v3509 = vld [vmem:[%s3 + $0x15c] sm:$0xff]
      %v3510 = vld [vmem:[%s3 + $0x164] sm:$0xf]
      %v3511 = vld [vmem:[%s3 + $0x168] sm:$0xff]
      %v3512 = vld [vmem:[%s3 + $0x170] sm:$0xf]
      %v3513 = vld [vmem:[%s3 + $0x174] sm:$0xff]
      %v3514 = vld [vmem:[%s3 + $0x17c] sm:$0xf]
      %v3515 = vpack.c.bf16 %v3421, %v3419
      %v3516 = vpack.c.bf16 %v3422, %v3420
      %v3517 = vpack.c.bf16 %v3425, %v3423
      %v3518 = vpack.c.bf16 %v3426, %v3424
      %v3519 = vpack.c.bf16 %v3429, %v3427
      %v3520 = vpack.c.bf16 %v3430, %v3428
      %v3521 = vpack.c.bf16 %v3433, %v3431
      %v3522 = vpack.c.bf16 %v3434, %v3432
      %v3523 = vpack.c.bf16 %v3437, %v3435
      %v3524 = vpack.c.bf16 %v3438, %v3436
      %v3525 = vpack.c.bf16 %v3441, %v3439
      %v3526 = vpack.c.bf16 %v3442, %v3440
      %v3527 = vpack.c.bf16 %v3445, %v3443
      %v3528 = vpack.c.bf16 %v3446, %v3444
      %v3529 = vpack.c.bf16 %v3449, %v3447
      %v3530 = vpack.c.bf16 %v3450, %v3448
      %v3531 = vld [vmem:[%s7] sm:$0x7]
      %v3533 = vlaneseq
      %v3534 = vshrl.u32 %v3533, 7
      %v3535 = vsub.s32 0, %v3534
      %v3536 = vrot.slane %v3531, %v3535
      %v3537 = vlaneseq
      %v3538 = vshrl.u32 %v3537, 7
      %v3539 = vsub.s32 1, %v3538
      %v3540 = vrot.slane %v3531, %v3539
      %v3541 = vlaneseq
      %v3542 = vshrl.u32 %v3541, 7
      %v3543 = vsub.s32 2, %v3542
      %v3544 = vrot.slane %v3531, %v3543
      %v3612 = vunpack.c.l.b16 %v3451
      %v3613 = vunpack.c.h.b16 %v3451
      %v3614 = vunpack.c.l.b16 %v3452
      %v3615 = vunpack.c.l.b16 %v3453
      %v3616 = vunpack.c.h.b16 %v3453
      %v3617 = vunpack.c.l.b16 %v3454
      %v3618 = vunpack.c.l.b16 %v3455
      %v3619 = vunpack.c.h.b16 %v3455
      %v3620 = vunpack.c.l.b16 %v3456
      %v3621 = vunpack.c.l.b16 %v3457
      %v3622 = vunpack.c.h.b16 %v3457
      %v3623 = vunpack.c.l.b16 %v3458
      %v3624 = vunpack.c.l.b16 %v3459
      %v3625 = vunpack.c.h.b16 %v3459
      %v3626 = vunpack.c.l.b16 %v3460
      %v3627 = vunpack.c.l.b16 %v3461
      %v3628 = vunpack.c.h.b16 %v3461
      %v3629 = vunpack.c.l.b16 %v3462
      %v3630 = vunpack.c.l.b16 %v3463
      %v3631 = vunpack.c.h.b16 %v3463
      %v3632 = vunpack.c.l.b16 %v3464
      %v3633 = vunpack.c.l.b16 %v3465
      %v3634 = vunpack.c.h.b16 %v3465
      %v3635 = vunpack.c.l.b16 %v3466
      %v3636 = vunpack.c.l.b16 %v3467
      %v3637 = vunpack.c.h.b16 %v3467
      %v3638 = vunpack.c.l.b16 %v3468
      %v3639 = vunpack.c.l.b16 %v3469
      %v3640 = vunpack.c.h.b16 %v3469
      %v3641 = vunpack.c.l.b16 %v3470
      %v3642 = vunpack.c.l.b16 %v3471
      %v3643 = vunpack.c.h.b16 %v3471
      %v3644 = vunpack.c.l.b16 %v3472
      %v3645 = vunpack.c.l.b16 %v3473
      %v3646 = vunpack.c.h.b16 %v3473
      %v3647 = vunpack.c.l.b16 %v3474
      %v3648 = vunpack.c.l.b16 %v3475
      %v3649 = vunpack.c.h.b16 %v3475
      %v3650 = vunpack.c.l.b16 %v3476
      %v3651 = vunpack.c.l.b16 %v3477
      %v3652 = vunpack.c.h.b16 %v3477
      %v3653 = vunpack.c.l.b16 %v3478
      %v3654 = vunpack.c.l.b16 %v3479
      %v3655 = vunpack.c.h.b16 %v3479
      %v3656 = vunpack.c.l.b16 %v3480
      %v3657 = vunpack.c.l.b16 %v3481
      %v3658 = vunpack.c.h.b16 %v3481
      %v3659 = vunpack.c.l.b16 %v3482
      %v3660 = vunpack.c.l.b16 %v3483
      %v3661 = vunpack.c.h.b16 %v3483
      %v3662 = vunpack.c.l.b16 %v3484
      %v3663 = vunpack.c.l.b16 %v3485
      %v3664 = vunpack.c.h.b16 %v3485
      %v3665 = vunpack.c.l.b16 %v3486
      %v3666 = vunpack.c.l.b16 %v3487
      %v3667 = vunpack.c.h.b16 %v3487
      %v3668 = vunpack.c.l.b16 %v3488
      %v3669 = vunpack.c.l.b16 %v3489
      %v3670 = vunpack.c.h.b16 %v3489
      %v3671 = vunpack.c.l.b16 %v3490
      %v3672 = vunpack.c.l.b16 %v3491
      %v3673 = vunpack.c.h.b16 %v3491
      %v3674 = vunpack.c.l.b16 %v3492
      %v3675 = vunpack.c.l.b16 %v3493
      %v3676 = vunpack.c.h.b16 %v3493
      %v3677 = vunpack.c.l.b16 %v3494
      %v3678 = vunpack.c.l.b16 %v3495
      %v3679 = vunpack.c.h.b16 %v3495
      %v3680 = vunpack.c.l.b16 %v3496
      %v3681 = vunpack.c.l.b16 %v3497
      %v3682 = vunpack.c.h.b16 %v3497
      %v3683 = vunpack.c.l.b16 %v3498
      %v3684 = vunpack.c.l.b16 %v3499
      %v3685 = vunpack.c.h.b16 %v3499
      %v3686 = vunpack.c.l.b16 %v3500
      %v3687 = vunpack.c.l.b16 %v3501
      %v3688 = vunpack.c.h.b16 %v3501
      %v3689 = vunpack.c.l.b16 %v3502
      %v3690 = vunpack.c.l.b16 %v3503
      %v3691 = vunpack.c.h.b16 %v3503
      %v3692 = vunpack.c.l.b16 %v3504
      %v3693 = vunpack.c.l.b16 %v3505
      %v3694 = vunpack.c.h.b16 %v3505
      %v3695 = vunpack.c.l.b16 %v3506
      %v3696 = vunpack.c.l.b16 %v3507
      %v3697 = vunpack.c.h.b16 %v3507
      %v3698 = vunpack.c.l.b16 %v3508
      %v3699 = vunpack.c.l.b16 %v3509
      %v3700 = vunpack.c.h.b16 %v3509
      %v3701 = vunpack.c.l.b16 %v3510
      %v3702 = vunpack.c.l.b16 %v3511
      %v3703 = vunpack.c.h.b16 %v3511
      %v3704 = vunpack.c.l.b16 %v3512
      %v3705 = vunpack.c.l.b16 %v3513
      %v3706 = vunpack.c.h.b16 %v3513
      %v3707 = vunpack.c.l.b16 %v3514
      %v3708 = vpack.c.b16 %v3615, %v3612
      %v3709 = vpack.c.b16 %v3616, %v3613
      %v3710 = vpack.c.b16 %v3617, %v3614
      %v3711 = vpack.c.b16 %v3621, %v3618
      %v3712 = vpack.c.b16 %v3622, %v3619
      %v3713 = vpack.c.b16 %v3623, %v3620
      %v3714 = vpack.c.b16 %v3627, %v3624
      %v3715 = vpack.c.b16 %v3628, %v3625
      %v3716 = vpack.c.b16 %v3629, %v3626
      %v3717 = vpack.c.b16 %v3633, %v3630
      %v3718 = vpack.c.b16 %v3634, %v3631
      %v3719 = vpack.c.b16 %v3635, %v3632
      %v3720 = vpack.c.b16 %v3639, %v3636
      %v3721 = vpack.c.b16 %v3640, %v3637
      %v3722 = vpack.c.b16 %v3641, %v3638
      %v3723 = vpack.c.b16 %v3645, %v3642
      %v3724 = vpack.c.b16 %v3646, %v3643
      %v3725 = vpack.c.b16 %v3647, %v3644
      %v3726 = vpack.c.b16 %v3651, %v3648
      %v3727 = vpack.c.b16 %v3652, %v3649
      %v3728 = vpack.c.b16 %v3653, %v3650
      %v3729 = vpack.c.b16 %v3657, %v3654
      %v3730 = vpack.c.b16 %v3658, %v3655
      %v3731 = vpack.c.b16 %v3659, %v3656
      %v3732 = vpack.c.b16 %v3663, %v3660
      %v3733 = vpack.c.b16 %v3664, %v3661
      %v3734 = vpack.c.b16 %v3665, %v3662
      %v3735 = vpack.c.b16 %v3669, %v3666
      %v3736 = vpack.c.b16 %v3670, %v3667
      %v3737 = vpack.c.b16 %v3671, %v3668
      %v3738 = vpack.c.b16 %v3675, %v3672
      %v3739 = vpack.c.b16 %v3676, %v3673
      %v3740 = vpack.c.b16 %v3677, %v3674
      %v3741 = vpack.c.b16 %v3681, %v3678
      %v3742 = vpack.c.b16 %v3682, %v3679
      %v3743 = vpack.c.b16 %v3683, %v3680
      %v3744 = vpack.c.b16 %v3687, %v3684
      %v3745 = vpack.c.b16 %v3688, %v3685
      %v3746 = vpack.c.b16 %v3689, %v3686
      %v3747 = vpack.c.b16 %v3693, %v3690
      %v3748 = vpack.c.b16 %v3694, %v3691
      %v3749 = vpack.c.b16 %v3695, %v3692
      %v3750 = vpack.c.b16 %v3699, %v3696
      %v3751 = vpack.c.b16 %v3700, %v3697
      %v3752 = vpack.c.b16 %v3701, %v3698
      %v3753 = vpack.c.b16 %v3705, %v3702
      %v3754 = vpack.c.b16 %v3706, %v3703
      %v3755 = vpack.c.b16 %v3707, %v3704
      %3804 = vmatprep.subr.bf16.mxu0 %v3709
      %3805 = vmatpush1.bf16.msra.mxu0 %v3708
      %3806 = vmatprep.subr.bf16.mxu0 %v3712
      %3807 = vmatpush1.bf16.msra.mxu0 %v3711
      %3808 = vmatprep.subr.bf16.mxu0 %v3715
      %3809 = vmatpush1.bf16.msra.mxu0 %v3714
      %3810 = vmatprep.subr.bf16.mxu0 %v3718
      %3811 = vmatpush1.bf16.msra.mxu0 %v3717
      %3812 = vmatprep.subr.bf16.mxu0 %v3721
      %3813 = vmatpush1.bf16.msra.mxu0 %v3720
      %3814 = vmatprep.subr.bf16.mxu0 %v3724
      %3815 = vmatpush1.bf16.msra.mxu0 %v3723
      %3816 = vmatprep.subr.bf16.mxu0 %v3727
      %3817 = vmatpush1.bf16.msra.mxu0 %v3726
      %3818 = vmatprep.subr.bf16.mxu0 %v3730
      %3819 = vmatpush1.bf16.msra.mxu0 %v3729
      %3820 = vmatprep.subr.bf16.mxu0 %v3733
      %3821 = vmatpush1.bf16.msra.mxu0 %v3732
      %3822 = vmatprep.subr.bf16.mxu0 %v3736
      %3823 = vmatpush1.bf16.msra.mxu0 %v3735
      %3824 = vmatprep.subr.bf16.mxu0 %v3739
      %3825 = vmatpush1.bf16.msra.mxu0 %v3738
      %3826 = vmatprep.subr.bf16.mxu0 %v3742
      %3827 = vmatpush1.bf16.msra.mxu0 %v3741
      %3828 = vmatprep.subr.bf16.mxu0 %v3745
      %3829 = vmatpush1.bf16.msra.mxu0 %v3744
      %3830 = vmatprep.subr.bf16.mxu0 %v3748
      %3831 = vmatpush1.bf16.msra.mxu0 %v3747
      %3832 = vmatprep.subr.bf16.mxu0 %v3751
      %3833 = vmatpush1.bf16.msra.mxu0 %v3750
      %3834 = vmatprep.subr.bf16.mxu0 %v3754
      %3835 = vmatpush1.bf16.msra.mxu0 %v3753
      %3836 = vmatprep.mubr.bf16.mxu0 %v3516
      %3837 = vmatmul.mubr.bf16.gmra.mrb[0].mxu0 %v3515
      %v3838 = vpop.f32.mrb[0].mxu0
      %v3839 = vadd.f32 %v3536, %v3838
      %v3840 = vpop.f32.mrb[0].mxu0
      %v3841 = vadd.f32 %v3540, %v3840
      %v3842 = vpop.f32.mrb[0].mxu0
      %v3843 = vadd.f32 %v3536, %v3842
      %v3844 = vpop.f32.mrb[0].mxu0
      %v3845 = vadd.f32 %v3540, %v3844
      %3846 = vmatprep.mubr.bf16.mxu0 %v3518
      %3847 = vmatmul.mubr.bf16.gmra.mrb[0].mxu0 %v3517
      %v3848 = vpop.f32.mrb[0].mxu0
      %v3849 = vadd.f32 %v3536, %v3848
      %v3850 = vpop.f32.mrb[0].mxu0
      %v3851 = vadd.f32 %v3540, %v3850
      %v3852 = vpop.f32.mrb[0].mxu0
      %v3853 = vadd.f32 %v3536, %v3852
      %v3854 = vpop.f32.mrb[0].mxu0
      %v3855 = vadd.f32 %v3540, %v3854
      %3856 = vmatprep.mubr.bf16.mxu0 %v3520
      %3857 = vmatmul.mubr.bf16.gmra.mrb[0].mxu0 %v3519
      %v3858 = vpop.f32.mrb[0].mxu0
      %v3859 = vadd.f32 %v3536, %v3858
      %v3860 = vpop.f32.mrb[0].mxu0
      %v3861 = vadd.f32 %v3540, %v3860
      %v3862 = vpop.f32.mrb[0].mxu0
      %v3863 = vadd.f32 %v3536, %v3862
      %v3864 = vpop.f32.mrb[0].mxu0
      %v3865 = vadd.f32 %v3540, %v3864
      %3866 = vmatprep.mubr.bf16.mxu0 %v3522
      %3867 = vmatmul.mubr.bf16.gmra.mrb[0].mxu0 %v3521
      %v3868 = vpop.f32.mrb[0].mxu0
      %v3869 = vadd.f32 %v3536, %v3868
      %v3870 = vpop.f32.mrb[0].mxu0
      %v3871 = vadd.f32 %v3540, %v3870
      %v3872 = vpop.f32.mrb[0].mxu0
      %v3873 = vadd.f32 %v3536, %v3872
      %v3874 = vpop.f32.mrb[0].mxu0
      %v3875 = vadd.f32 %v3540, %v3874
      %3876 = vmatprep.mubr.bf16.mxu0 %v3524
      %3877 = vmatmul.mubr.bf16.gmra.mrb[0].mxu0 %v3523
      %v3878 = vpop.f32.mrb[0].mxu0
      %v3879 = vadd.f32 %v3536, %v3878
      %v3880 = vpop.f32.mrb[0].mxu0
      %v3881 = vadd.f32 %v3540, %v3880
      %v3882 = vpop.f32.mrb[0].mxu0
      %v3883 = vadd.f32 %v3536, %v3882
      %v3884 = vpop.f32.mrb[0].mxu0
      %v3885 = vadd.f32 %v3540, %v3884
      %3886 = vmatprep.mubr.bf16.mxu0 %v3526
      %3887 = vmatmul.mubr.bf16.gmra.mrb[0].mxu0 %v3525
      %v3888 = vpop.f32.mrb[0].mxu0
      %v3889 = vadd.f32 %v3536, %v3888
      %v3890 = vpop.f32.mrb[0].mxu0
      %v3891 = vadd.f32 %v3540, %v3890
      %v3892 = vpop.f32.mrb[0].mxu0
      %v3893 = vadd.f32 %v3536, %v3892
      %v3894 = vpop.f32.mrb[0].mxu0
      %v3895 = vadd.f32 %v3540, %v3894
      %3896 = vmatprep.mubr.bf16.mxu0 %v3528
      %3897 = vmatmul.mubr.bf16.gmra.mrb[0].mxu0 %v3527
      %v3898 = vpop.f32.mrb[0].mxu0
      %v3899 = vadd.f32 %v3536, %v3898
      %v3900 = vpop.f32.mrb[0].mxu0
      %v3901 = vadd.f32 %v3540, %v3900
      %v3902 = vpop.f32.mrb[0].mxu0
      %v3903 = vadd.f32 %v3536, %v3902
      %v3904 = vpop.f32.mrb[0].mxu0
      %v3905 = vadd.f32 %v3540, %v3904
      %3906 = vmatprep.mubr.bf16.mxu0 %v3530
      %3907 = vmatmul.mubr.bf16.gmra.mrb[0].mxu0 %v3529
      %v3908 = vpop.f32.mrb[0].mxu0
      %v3909 = vadd.f32 %v3536, %v3908
      %v3910 = vpop.f32.mrb[0].mxu0
      %v3911 = vadd.f32 %v3540, %v3910
      %v3912 = vpop.f32.mrb[0].mxu0
      %v3913 = vadd.f32 %v3536, %v3912
      %v3914 = vpop.f32.mrb[0].mxu0
      %v3915 = vadd.f32 %v3540, %v3914
      %3916 = vdwg.mxu0
      %3917 = vmatprep.subr.bf16.mxu0 0
      %3918 = vmatpush1.bf16.msra.mxu0 %v3710
      %3919 = vmatprep.subr.bf16.mxu0 0
      %3920 = vmatpush1.bf16.msra.mxu0 %v3713
      %3921 = vmatprep.subr.bf16.mxu0 0
      %3922 = vmatpush1.bf16.msra.mxu0 %v3716
      %3923 = vmatprep.subr.bf16.mxu0 0
      %3924 = vmatpush1.bf16.msra.mxu0 %v3719
      %3925 = vmatprep.subr.bf16.mxu0 0
      %3926 = vmatpush1.bf16.msra.mxu0 %v3722
      %3927 = vmatprep.subr.bf16.mxu0 0
      %3928 = vmatpush1.bf16.msra.mxu0 %v3725
      %3929 = vmatprep.subr.bf16.mxu0 0
      %3930 = vmatpush1.bf16.msra.mxu0 %v3728
      %3931 = vmatprep.subr.bf16.mxu0 0
      %3932 = vmatpush1.bf16.msra.mxu0 %v3731
      %3933 = vmatprep.subr.bf16.mxu0 0
      %3934 = vmatpush1.bf16.msra.mxu0 %v3734
      %3935 = vmatprep.subr.bf16.mxu0 0
      %3936 = vmatpush1.bf16.msra.mxu0 %v3737
      %3937 = vmatprep.subr.bf16.mxu0 0
      %3938 = vmatpush1.bf16.msra.mxu0 %v3740
      %3939 = vmatprep.subr.bf16.mxu0 0
      %3940 = vmatpush1.bf16.msra.mxu0 %v3743
      %3941 = vmatprep.subr.bf16.mxu0 0
      %3942 = vmatpush1.bf16.msra.mxu0 %v3746
      %3943 = vmatprep.subr.bf16.mxu0 0
      %3944 = vmatpush1.bf16.msra.mxu0 %v3749
      %3945 = vmatprep.subr.bf16.mxu0 0
      %3946 = vmatpush1.bf16.msra.mxu0 %v3752
      %3947 = vmatprep.subr.bf16.mxu0 0
      %3948 = vmatpush1.bf16.msra.mxu0 %v3755
      %3949 = vmatprep.mubr.bf16.mxu0 %v3516
      %3950 = vmatmul.mubr.bf16.gmra.mrb[0].mxu0 %v3515
      %v3951 = vpop.f32.mrb[0].mxu0
      %v3952 = vadd.f32 %v3544, %v3951
      %v3953 = vpop.f32.mrb[0].mxu0
      %v3954 = vpop.f32.mrb[0].mxu0
      %v3955 = vadd.f32 %v3544, %v3954
      %v3956 = vpop.f32.mrb[0].mxu0
      %3957 = vmatprep.mubr.bf16.mxu0 %v3518
      %3958 = vmatmul.mubr.bf16.gmra.mrb[0].mxu0 %v3517
      %v3959 = vpop.f32.mrb[0].mxu0
      %v3960 = vadd.f32 %v3544, %v3959
      %v3961 = vpop.f32.mrb[0].mxu0
      %v3962 = vpop.f32.mrb[0].mxu0
      %v3963 = vadd.f32 %v3544, %v3962
      %v3964 = vpop.f32.mrb[0].mxu0
      %3965 = vmatprep.mubr.bf16.mxu0 %v3520
      %3966 = vmatmul.mubr.bf16.gmra.mrb[0].mxu0 %v3519
      %v3967 = vpop.f32.mrb[0].mxu0
      %v3968 = vadd.f32 %v3544, %v3967
      %v3969 = vpop.f32.mrb[0].mxu0
      %v3970 = vpop.f32.mrb[0].mxu0
      %v3971 = vadd.f32 %v3544, %v3970
      %v3972 = vpop.f32.mrb[0].mxu0
      %3973 = vmatprep.mubr.bf16.mxu0 %v3522
      %3974 = vmatmul.mubr.bf16.gmra.mrb[0].mxu0 %v3521
      %v3975 = vpop.f32.mrb[0].mxu0
      %v3976 = vadd.f32 %v3544, %v3975
      %v3977 = vpop.f32.mrb[0].mxu0
      %v3978 = vpop.f32.mrb[0].mxu0
      %v3979 = vadd.f32 %v3544, %v3978
      %v3980 = vpop.f32.mrb[0].mxu0
      %3981 = vmatprep.mubr.bf16.mxu0 %v3524
      %3982 = vmatmul.mubr.bf16.gmra.mrb[0].mxu0 %v3523
      %v3983 = vpop.f32.mrb[0].mxu0
      %v3984 = vadd.f32 %v3544, %v3983
      %v3985 = vpop.f32.mrb[0].mxu0
      %v3986 = vpop.f32.mrb[0].mxu0
      %v3987 = vadd.f32 %v3544, %v3986
      %v3988 = vpop.f32.mrb[0].mxu0
      %3989 = vmatprep.mubr.bf16.mxu0 %v3526
      %3990 = vmatmul.mubr.bf16.gmra.mrb[0].mxu0 %v3525
      %v3991 = vpop.f32.mrb[0].mxu0
      %v3992 = vadd.f32 %v3544, %v3991
      %v3993 = vpop.f32.mrb[0].mxu0
      %v3994 = vpop.f32.mrb[0].mxu0
      %v3995 = vadd.f32 %v3544, %v3994
      %v3996 = vpop.f32.mrb[0].mxu0
      %3997 = vmatprep.mubr.bf16.mxu0 %v3528
      %3998 = vmatmul.mubr.bf16.gmra.mrb[0].mxu0 %v3527
      %v3999 = vpop.f32.mrb[0].mxu0
      %v4000 = vadd.f32 %v3544, %v3999
      %v4001 = vpop.f32.mrb[0].mxu0
      %v4002 = vpop.f32.mrb[0].mxu0
      %v4003 = vadd.f32 %v3544, %v4002
      %v4004 = vpop.f32.mrb[0].mxu0
      %4005 = vmatprep.mubr.bf16.mxu0 %v3530
      %4006 = vmatmul.mubr.bf16.gmra.mrb[0].mxu0 %v3529
      %v4007 = vpop.f32.mrb[0].mxu0
      %v4008 = vadd.f32 %v3544, %v4007
      %v4009 = vpop.f32.mrb[0].mxu0
      %v4010 = vpop.f32.mrb[0].mxu0
      %v4011 = vadd.f32 %v3544, %v4010
      %v4012 = vpop.f32.mrb[0].mxu0
      %4013 = vdwg.mxu0
      %v4014 = vmax.f32 %v3952, 0.0
      %v4015 = vmax.f32 %v3955, 0.0
      %v4016 = vmax.f32 %v3960, 0.0
      %v4017 = vmax.f32 %v3963, 0.0
      %v4018 = vmax.f32 %v3968, 0.0
      %v4019 = vmax.f32 %v3971, 0.0
      %v4020 = vmax.f32 %v3976, 0.0
      %v4021 = vmax.f32 %v3979, 0.0
      %v4022 = vmax.f32 %v3984, 0.0
      %v4023 = vmax.f32 %v3987, 0.0
      %v4024 = vmax.f32 %v3992, 0.0
      %v4025 = vmax.f32 %v3995, 0.0
      %v4026 = vmax.f32 %v4000, 0.0
      %v4027 = vmax.f32 %v4003, 0.0
      %v4028 = vmax.f32 %v4008, 0.0
      %v4029 = vmax.f32 %v4011, 0.0
      %v4030 = vld [vmem:[%s4] sm:$0xf]
      %v4031 = vld [vmem:[%s4 + $0x4] sm:$0xf]
      %v4032 = vld [vmem:[%s4 + $0x8] sm:$0xf]
      %v4033 = vld [vmem:[%s4 + $0xc] sm:$0xf]
      %v4034 = vld [vmem:[%s4 + $0x10] sm:$0xf]
      %v4035 = vld [vmem:[%s4 + $0x14] sm:$0xf]
      %v4036 = vld [vmem:[%s4 + $0x18] sm:$0xf]
      %v4037 = vld [vmem:[%s4 + $0x1c] sm:$0xf]
      %v4038 = vld [vmem:[%s4 + $0x20] sm:$0xf]
      %v4039 = vld [vmem:[%s4 + $0x24] sm:$0xf]
      %v4040 = vld [vmem:[%s4 + $0x28] sm:$0xf]
      %v4041 = vld [vmem:[%s4 + $0x2c] sm:$0xf]
      %v4042 = vld [vmem:[%s4 + $0x30] sm:$0xf]
      %v4043 = vld [vmem:[%s4 + $0x34] sm:$0xf]
      %v4044 = vld [vmem:[%s4 + $0x38] sm:$0xf]
      %v4045 = vld [vmem:[%s4 + $0x3c] sm:$0xf]
      %v4046 = vld [vmem:[%s4 + $0x40] sm:$0xf]
      %v4047 = vld [vmem:[%s4 + $0x44] sm:$0xf]
      %v4048 = vld [vmem:[%s4 + $0x48] sm:$0xf]
      %v4049 = vld [vmem:[%s4 + $0x4c] sm:$0xf]
      %v4050 = vld [vmem:[%s4 + $0x50] sm:$0xf]
      %v4051 = vld [vmem:[%s4 + $0x54] sm:$0xf]
      %v4052 = vld [vmem:[%s4 + $0x58] sm:$0xf]
      %v4053 = vld [vmem:[%s4 + $0x5c] sm:$0xf]
      %v4054 = vld [vmem:[%s4 + $0x60] sm:$0xf]
      %v4055 = vld [vmem:[%s4 + $0x64] sm:$0xf]
      %v4056 = vld [vmem:[%s4 + $0x68] sm:$0xf]
      %v4057 = vld [vmem:[%s4 + $0x6c] sm:$0xf]
      %v4058 = vld [vmem:[%s4 + $0x70] sm:$0xf]
      %v4059 = vld [vmem:[%s4 + $0x74] sm:$0xf]
      %v4060 = vld [vmem:[%s4 + $0x78] sm:$0xf]
      %v4061 = vld [vmem:[%s4 + $0x7c] sm:$0xf]
      %v4062 = vpack.c.bf16 %v3843, %v3839
      %v4063 = vpack.c.bf16 %v3845, %v3841
      %v4064 = vpack.c.bf16 %v3853, %v3849
      %v4065 = vpack.c.bf16 %v3855, %v3851
      %v4066 = vpack.c.bf16 %v3863, %v3859
      %v4067 = vpack.c.bf16 %v3865, %v3861
      %v4068 = vpack.c.bf16 %v3873, %v3869
      %v4069 = vpack.c.bf16 %v3875, %v3871
      %v4070 = vpack.c.bf16 %v3883, %v3879
      %v4071 = vpack.c.bf16 %v3885, %v3881
      %v4072 = vpack.c.bf16 %v3893, %v3889
      %v4073 = vpack.c.bf16 %v3895, %v3891
      %v4074 = vpack.c.bf16 %v3903, %v3899
      %v4075 = vpack.c.bf16 %v3905, %v3901
      %v4076 = vpack.c.bf16 %v3913, %v3909
      %v4077 = vpack.c.bf16 %v3915, %v3911
      %v4110 = vunpack.c.l.b16 %v4030
      %v4111 = vunpack.c.l.b16 %v4031
      %v4112 = vunpack.c.l.b16 %v4032
      %v4113 = vunpack.c.l.b16 %v4033
      %v4114 = vunpack.c.l.b16 %v4034
      %v4115 = vunpack.c.l.b16 %v4035
      %v4116 = vunpack.c.l.b16 %v4036
      %v4117 = vunpack.c.l.b16 %v4037
      %v4118 = vunpack.c.l.b16 %v4038
      %v4119 = vunpack.c.l.b16 %v4039
      %v4120 = vunpack.c.l.b16 %v4040
      %v4121 = vunpack.c.l.b16 %v4041
      %v4122 = vunpack.c.l.b16 %v4042
      %v4123 = vunpack.c.l.b16 %v4043
      %v4124 = vunpack.c.l.b16 %v4044
      %v4125 = vunpack.c.l.b16 %v4045
      %v4126 = vunpack.c.l.b16 %v4046
      %v4127 = vunpack.c.l.b16 %v4047
      %v4128 = vunpack.c.l.b16 %v4048
      %v4129 = vunpack.c.l.b16 %v4049
      %v4130 = vunpack.c.l.b16 %v4050
      %v4131 = vunpack.c.l.b16 %v4051
      %v4132 = vunpack.c.l.b16 %v4052
      %v4133 = vunpack.c.l.b16 %v4053
      %v4134 = vunpack.c.l.b16 %v4054
      %v4135 = vunpack.c.l.b16 %v4055
      %v4136 = vunpack.c.l.b16 %v4056
      %v4137 = vunpack.c.l.b16 %v4057
      %v4138 = vunpack.c.l.b16 %v4058
      %v4139 = vunpack.c.l.b16 %v4059
      %v4140 = vunpack.c.l.b16 %v4060
      %v4141 = vunpack.c.l.b16 %v4061
      %v4142 = vpack.c.b16 %v4111, %v4110
      %v4143 = vpack.c.b16 %v4113, %v4112
      %v4144 = vpack.c.b16 %v4115, %v4114
      %v4145 = vpack.c.b16 %v4117, %v4116
      %v4146 = vpack.c.b16 %v4119, %v4118
      %v4147 = vpack.c.b16 %v4121, %v4120
      %v4148 = vpack.c.b16 %v4123, %v4122
      %v4149 = vpack.c.b16 %v4125, %v4124
      %v4150 = vpack.c.b16 %v4127, %v4126
      %v4151 = vpack.c.b16 %v4129, %v4128
      %v4152 = vpack.c.b16 %v4131, %v4130
      %v4153 = vpack.c.b16 %v4133, %v4132
      %v4154 = vpack.c.b16 %v4135, %v4134
      %v4155 = vpack.c.b16 %v4137, %v4136
      %v4156 = vpack.c.b16 %v4139, %v4138
      %v4157 = vpack.c.b16 %v4141, %v4140
      %4174 = vmatprep.subr.bf16.mxu0 0
      %4175 = vmatpush1.bf16.msra.mxu0 %v4142
      %4176 = vmatprep.subr.bf16.mxu0 0
      %4177 = vmatpush1.bf16.msra.mxu0 %v4143
      %4178 = vmatprep.subr.bf16.mxu0 0
      %4179 = vmatpush1.bf16.msra.mxu0 %v4144
      %4180 = vmatprep.subr.bf16.mxu0 0
      %4181 = vmatpush1.bf16.msra.mxu0 %v4145
      %4182 = vmatprep.subr.bf16.mxu0 0
      %4183 = vmatpush1.bf16.msra.mxu0 %v4146
      %4184 = vmatprep.subr.bf16.mxu0 0
      %4185 = vmatpush1.bf16.msra.mxu0 %v4147
      %4186 = vmatprep.subr.bf16.mxu0 0
      %4187 = vmatpush1.bf16.msra.mxu0 %v4148
      %4188 = vmatprep.subr.bf16.mxu0 0
      %4189 = vmatpush1.bf16.msra.mxu0 %v4149
      %4190 = vmatprep.subr.bf16.mxu0 0
      %4191 = vmatpush1.bf16.msra.mxu0 %v4150
      %4192 = vmatprep.subr.bf16.mxu0 0
      %4193 = vmatpush1.bf16.msra.mxu0 %v4151
      %4194 = vmatprep.subr.bf16.mxu0 0
      %4195 = vmatpush1.bf16.msra.mxu0 %v4152
      %4196 = vmatprep.subr.bf16.mxu0 0
      %4197 = vmatpush1.bf16.msra.mxu0 %v4153
      %4198 = vmatprep.subr.bf16.mxu0 0
      %4199 = vmatpush1.bf16.msra.mxu0 %v4154
      %4200 = vmatprep.subr.bf16.mxu0 0
      %4201 = vmatpush1.bf16.msra.mxu0 %v4155
      %4202 = vmatprep.subr.bf16.mxu0 0
      %4203 = vmatpush1.bf16.msra.mxu0 %v4156
      %4204 = vmatprep.subr.bf16.mxu0 0
      %4205 = vmatpush1.bf16.msra.mxu0 %v4157
      %4206 = vmatprep.mubr.bf16.mxu0 %v4063
      %4207 = vmatmul.mubr.bf16.gmra.mrb[0].mxu0 %v4062
      %v4208 = vpop.f32.mrb[0].mxu0
      %v4209 = vadd.f32 %v681, %v4208
      %v4210 = vpop.f32.mrb[0].mxu0
      %v4211 = vpop.f32.mrb[0].mxu0
      %v4212 = vadd.f32 %v684, %v4211
      %v4213 = vpop.f32.mrb[0].mxu0
      %4214 = vmatprep.mubr.bf16.mxu0 %v4065
      %4215 = vmatmul.mubr.bf16.gmra.mrb[0].mxu0 %v4064
      %v4216 = vpop.f32.mrb[0].mxu0
      %v4217 = vadd.f32 %v689, %v4216
      %v4218 = vpop.f32.mrb[0].mxu0
      %v4219 = vpop.f32.mrb[0].mxu0
      %v4220 = vadd.f32 %v692, %v4219
      %v4221 = vpop.f32.mrb[0].mxu0
      %4222 = vmatprep.mubr.bf16.mxu0 %v4067
      %4223 = vmatmul.mubr.bf16.gmra.mrb[0].mxu0 %v4066
      %v4224 = vpop.f32.mrb[0].mxu0
      %v4225 = vadd.f32 %v697, %v4224
      %v4226 = vpop.f32.mrb[0].mxu0
      %v4227 = vpop.f32.mrb[0].mxu0
      %v4228 = vadd.f32 %v700, %v4227
      %v4229 = vpop.f32.mrb[0].mxu0
      %4230 = vmatprep.mubr.bf16.mxu0 %v4069
      %4231 = vmatmul.mubr.bf16.gmra.mrb[0].mxu0 %v4068
      %v4232 = vpop.f32.mrb[0].mxu0
      %v4233 = vadd.f32 %v705, %v4232
      %v4234 = vpop.f32.mrb[0].mxu0
      %v4235 = vpop.f32.mrb[0].mxu0
      %v4236 = vadd.f32 %v708, %v4235
      %v4237 = vpop.f32.mrb[0].mxu0
      %4238 = vmatprep.mubr.bf16.mxu0 %v4071
      %4239 = vmatmul.mubr.bf16.gmra.mrb[0].mxu0 %v4070
      %v4240 = vpop.f32.mrb[0].mxu0
      %v4241 = vadd.f32 %v713, %v4240
      %v4242 = vpop.f32.mrb[0].mxu0
      %v4243 = vpop.f32.mrb[0].mxu0
      %v4244 = vadd.f32 %v716, %v4243
      %v4245 = vpop.f32.mrb[0].mxu0
      %4246 = vmatprep.mubr.bf16.mxu0 %v4073
      %4247 = vmatmul.mubr.bf16.gmra.mrb[0].mxu0 %v4072
      %v4248 = vpop.f32.mrb[0].mxu0
      %v4249 = vadd.f32 %v721, %v4248
      %v4250 = vpop.f32.mrb[0].mxu0
      %v4251 = vpop.f32.mrb[0].mxu0
      %v4252 = vadd.f32 %v724, %v4251
      %v4253 = vpop.f32.mrb[0].mxu0
      %4254 = vmatprep.mubr.bf16.mxu0 %v4075
      %4255 = vmatmul.mubr.bf16.gmra.mrb[0].mxu0 %v4074
      %v4256 = vpop.f32.mrb[0].mxu0
      %v4257 = vadd.f32 %v729, %v4256
      %v4258 = vpop.f32.mrb[0].mxu0
      %v4259 = vpop.f32.mrb[0].mxu0
      %v4260 = vadd.f32 %v732, %v4259
      %v4261 = vpop.f32.mrb[0].mxu0
      %4262 = vmatprep.mubr.bf16.mxu0 %v4077
      %4263 = vmatmul.mubr.bf16.gmra.mrb[0].mxu0 %v4076
      %v4264 = vpop.f32.mrb[0].mxu0
      %v4265 = vadd.f32 %v737, %v4264
      %v4266 = vpop.f32.mrb[0].mxu0
      %v4267 = vpop.f32.mrb[0].mxu0
      %v4268 = vadd.f32 %v740, %v4267
      %v4269 = vpop.f32.mrb[0].mxu0
      %4270 = vdwg.mxu0
      %v4271 = vld [vmem:[%s8] sm:$0x1]
      %v4273 = vlaneseq
      %v4274 = vshrl.u32 %v4273, 7
      %v4275 = vsub.s32 0, %v4274
      %v4276 = vrot.slane %v4271, %v4275
      %v4278 = vadd.f32 %v4209, %v4276
      %v4279 = vadd.f32 %v4212, %v4276
      %v4280 = vadd.f32 %v4217, %v4276
      %v4281 = vadd.f32 %v4220, %v4276
      %v4282 = vadd.f32 %v4225, %v4276
      %v4283 = vadd.f32 %v4228, %v4276
      %v4284 = vadd.f32 %v4233, %v4276
      %v4285 = vadd.f32 %v4236, %v4276
      %v4286 = vadd.f32 %v4241, %v4276
      %v4287 = vadd.f32 %v4244, %v4276
      %v4288 = vadd.f32 %v4249, %v4276
      %v4289 = vadd.f32 %v4252, %v4276
      %v4290 = vadd.f32 %v4257, %v4276
      %v4291 = vadd.f32 %v4260, %v4276
      %v4292 = vadd.f32 %v4265, %v4276
      %v4293 = vadd.f32 %v4268, %v4276
      %v4294 = vmax.f32 %v4278, 0.0
      %v4295 = vmax.f32 %v4279, 0.0
      %v4296 = vmax.f32 %v4280, 0.0
      %v4297 = vmax.f32 %v4281, 0.0
      %v4298 = vmax.f32 %v4282, 0.0
      %v4299 = vmax.f32 %v4283, 0.0
      %v4300 = vmax.f32 %v4284, 0.0
      %v4301 = vmax.f32 %v4285, 0.0
      %v4302 = vmax.f32 %v4286, 0.0
      %v4303 = vmax.f32 %v4287, 0.0
      %v4304 = vmax.f32 %v4288, 0.0
      %v4305 = vmax.f32 %v4289, 0.0
      %v4306 = vmax.f32 %v4290, 0.0
      %v4307 = vmax.f32 %v4291, 0.0
      %v4308 = vmax.f32 %v4292, 0.0
      %v4309 = vmax.f32 %v4293, 0.0
      %v4310 = vld [vmem:[%s5] sm:$0xf]
      %v4311 = vld [vmem:[%s5 + $0x4] sm:$0xf]
      %v4312 = vld [vmem:[%s5 + $0x8] sm:$0xf]
      %v4313 = vld [vmem:[%s5 + $0xc] sm:$0xf]
      %v4314 = vld [vmem:[%s5 + $0x10] sm:$0xf]
      %v4315 = vld [vmem:[%s5 + $0x14] sm:$0xf]
      %v4316 = vld [vmem:[%s5 + $0x18] sm:$0xf]
      %v4317 = vld [vmem:[%s5 + $0x1c] sm:$0xf]
      %v4318 = vld [vmem:[%s5 + $0x20] sm:$0xf]
      %v4319 = vld [vmem:[%s5 + $0x24] sm:$0xf]
      %v4320 = vld [vmem:[%s5 + $0x28] sm:$0xf]
      %v4321 = vld [vmem:[%s5 + $0x2c] sm:$0xf]
      %v4322 = vld [vmem:[%s5 + $0x30] sm:$0xf]
      %v4323 = vld [vmem:[%s5 + $0x34] sm:$0xf]
      %v4324 = vld [vmem:[%s5 + $0x38] sm:$0xf]
      %v4325 = vld [vmem:[%s5 + $0x3c] sm:$0xf]
      %v4326 = vpack.c.bf16 %v4295, %v4294
      %v4327 = vpack.c.bf16 %v4297, %v4296
      %v4328 = vpack.c.bf16 %v4299, %v4298
      %v4329 = vpack.c.bf16 %v4301, %v4300
      %v4330 = vpack.c.bf16 %v4303, %v4302
      %v4331 = vpack.c.bf16 %v4305, %v4304
      %v4332 = vpack.c.bf16 %v4307, %v4306
      %v4333 = vpack.c.bf16 %v4309, %v4308
      %s4334 = scalar_lea.vmem %s8, 1
      %v4335 = vld [vmem:[%s4334] sm:$0x1]
      %v4337 = vlaneseq
      %v4338 = vshrl.u32 %v4337, 7
      %v4339 = vsub.s32 0, %v4338
      %v4340 = vrot.slane %v4335, %v4339
      %v4358 = vunpack.c.l.b16 %v4310
      %v4359 = vunpack.c.l.b16 %v4311
      %v4360 = vunpack.c.l.b16 %v4312
      %v4361 = vunpack.c.l.b16 %v4313
      %v4362 = vunpack.c.l.b16 %v4314
      %v4363 = vunpack.c.l.b16 %v4315
      %v4364 = vunpack.c.l.b16 %v4316
      %v4365 = vunpack.c.l.b16 %v4317
      %v4366 = vunpack.c.l.b16 %v4318
      %v4367 = vunpack.c.l.b16 %v4319
      %v4368 = vunpack.c.l.b16 %v4320
      %v4369 = vunpack.c.l.b16 %v4321
      %v4370 = vunpack.c.l.b16 %v4322
      %v4371 = vunpack.c.l.b16 %v4323
      %v4372 = vunpack.c.l.b16 %v4324
      %v4373 = vunpack.c.l.b16 %v4325
      %v4374 = vpack.c.b16 %v4359, %v4358
      %v4375 = vpack.c.b16 %v4361, %v4360
      %v4376 = vpack.c.b16 %v4363, %v4362
      %v4377 = vpack.c.b16 %v4365, %v4364
      %v4378 = vpack.c.b16 %v4367, %v4366
      %v4379 = vpack.c.b16 %v4369, %v4368
      %v4380 = vpack.c.b16 %v4371, %v4370
      %v4381 = vpack.c.b16 %v4373, %v4372
      %4390 = vmatprep.subr.bf16.mxu0 0
      %4391 = vmatpush1.bf16.msra.mxu0 %v4374
      %4392 = vmatprep.subr.bf16.mxu0 0
      %4393 = vmatpush1.bf16.msra.mxu0 %v4375
      %4394 = vmatprep.subr.bf16.mxu0 0
      %4395 = vmatpush1.bf16.msra.mxu0 %v4376
      %4396 = vmatprep.subr.bf16.mxu0 0
      %4397 = vmatpush1.bf16.msra.mxu0 %v4377
      %4398 = vmatprep.subr.bf16.mxu0 0
      %4399 = vmatpush1.bf16.msra.mxu0 %v4378
      %4400 = vmatprep.subr.bf16.mxu0 0
      %4401 = vmatpush1.bf16.msra.mxu0 %v4379
      %4402 = vmatprep.subr.bf16.mxu0 0
      %4403 = vmatpush1.bf16.msra.mxu0 %v4380
      %4404 = vmatprep.subr.bf16.mxu0 0
      %4405 = vmatpush1.bf16.msra.mxu0 %v4381
      %4406 = vmatprep.subr.bf16.mxu0 0
      %4407 = vmatpush1.bf16.msra.mxu0 0
      %4408 = vmatprep.subr.bf16.mxu0 0
      %4409 = vmatpush1.bf16.msra.mxu0 0
      %4410 = vmatprep.subr.bf16.mxu0 0
      %4411 = vmatpush1.bf16.msra.mxu0 0
      %4412 = vmatprep.subr.bf16.mxu0 0
      %4413 = vmatpush1.bf16.msra.mxu0 0
      %4414 = vmatprep.subr.bf16.mxu0 0
      %4415 = vmatpush1.bf16.msra.mxu0 0
      %4416 = vmatprep.subr.bf16.mxu0 0
      %4417 = vmatpush1.bf16.msra.mxu0 0
      %4418 = vmatprep.subr.bf16.mxu0 0
      %4419 = vmatpush1.bf16.msra.mxu0 0
      %4420 = vmatprep.subr.bf16.mxu0 0
      %4421 = vmatpush1.bf16.msra.mxu0 0
      %4422 = vmatprep.mubr.bf16.mxu0 0
      %4423 = vmatmul.mubr.bf16.gmra.mrb[0].mxu0 %v4326
      %v4424 = vpop.f32.mrb[0].mxu0
      %v4425 = vadd.f32 %v4340, %v4424
      %v4426 = vpop.f32.mrb[0].mxu0
      %v4427 = vpop.f32.mrb[0].mxu0
      %v4428 = vadd.f32 %v4340, %v4427
      %v4429 = vpop.f32.mrb[0].mxu0
      %4430 = vmatprep.mubr.bf16.mxu0 0
      %4431 = vmatmul.mubr.bf16.gmra.mrb[0].mxu0 %v4327
      %v4432 = vpop.f32.mrb[0].mxu0
      %v4433 = vadd.f32 %v4340, %v4432
      %v4434 = vpop.f32.mrb[0].mxu0
      %v4435 = vpop.f32.mrb[0].mxu0
      %v4436 = vadd.f32 %v4340, %v4435
      %v4437 = vpop.f32.mrb[0].mxu0
      %4438 = vmatprep.mubr.bf16.mxu0 0
      %4439 = vmatmul.mubr.bf16.gmra.mrb[0].mxu0 %v4328
      %v4440 = vpop.f32.mrb[0].mxu0
      %v4441 = vadd.f32 %v4340, %v4440
      %v4442 = vpop.f32.mrb[0].mxu0
      %v4443 = vpop.f32.mrb[0].mxu0
      %v4444 = vadd.f32 %v4340, %v4443
      %v4445 = vpop.f32.mrb[0].mxu0
      %4446 = vmatprep.mubr.bf16.mxu0 0
      %4447 = vmatmul.mubr.bf16.gmra.mrb[0].mxu0 %v4329
      %v4448 = vpop.f32.mrb[0].mxu0
      %v4449 = vadd.f32 %v4340, %v4448
      %v4450 = vpop.f32.mrb[0].mxu0
      %v4451 = vpop.f32.mrb[0].mxu0
      %v4452 = vadd.f32 %v4340, %v4451
      %v4453 = vpop.f32.mrb[0].mxu0
      %4454 = vmatprep.mubr.bf16.mxu0 0
      %4455 = vmatmul.mubr.bf16.gmra.mrb[0].mxu0 %v4330
      %v4456 = vpop.f32.mrb[0].mxu0
      %v4457 = vadd.f32 %v4340, %v4456
      %v4458 = vpop.f32.mrb[0].mxu0
      %v4459 = vpop.f32.mrb[0].mxu0
      %v4460 = vadd.f32 %v4340, %v4459
      %v4461 = vpop.f32.mrb[0].mxu0
      %4462 = vmatprep.mubr.bf16.mxu0 0
      %4463 = vmatmul.mubr.bf16.gmra.mrb[0].mxu0 %v4331
      %v4464 = vpop.f32.mrb[0].mxu0
      %v4465 = vadd.f32 %v4340, %v4464
      %v4466 = vpop.f32.mrb[0].mxu0
      %v4467 = vpop.f32.mrb[0].mxu0
      %v4468 = vadd.f32 %v4340, %v4467
      %v4469 = vpop.f32.mrb[0].mxu0
      %4470 = vmatprep.mubr.bf16.mxu0 0
      %4471 = vmatmul.mubr.bf16.gmra.mrb[0].mxu0 %v4332
      %v4472 = vpop.f32.mrb[0].mxu0
      %v4473 = vadd.f32 %v4340, %v4472
      %v4474 = vpop.f32.mrb[0].mxu0
      %v4475 = vpop.f32.mrb[0].mxu0
      %v4476 = vadd.f32 %v4340, %v4475
      %v4477 = vpop.f32.mrb[0].mxu0
      %4478 = vmatprep.mubr.bf16.mxu0 0
      %4479 = vmatmul.mubr.bf16.gmra.mrb[0].mxu0 %v4333
      %v4480 = vpop.f32.mrb[0].mxu0
      %v4481 = vadd.f32 %v4340, %v4480
      %v4482 = vpop.f32.mrb[0].mxu0
      %v4483 = vpop.f32.mrb[0].mxu0
      %v4484 = vadd.f32 %v4340, %v4483
      %v4485 = vpop.f32.mrb[0].mxu0
      %4486 = vdwg.mxu0
      %v4487 = vxor.u32 %v4425, 2147483648
      %v4488 = vxor.u32 %v4428, 2147483648
      %v4489 = vxor.u32 %v4433, 2147483648
      %v4490 = vxor.u32 %v4436, 2147483648
      %v4491 = vxor.u32 %v4441, 2147483648
      %v4492 = vxor.u32 %v4444, 2147483648
      %v4493 = vxor.u32 %v4449, 2147483648
      %v4494 = vxor.u32 %v4452, 2147483648
      %v4495 = vxor.u32 %v4457, 2147483648
      %v4496 = vxor.u32 %v4460, 2147483648
      %v4497 = vxor.u32 %v4465, 2147483648
      %v4498 = vxor.u32 %v4468, 2147483648
      %v4499 = vxor.u32 %v4473, 2147483648
      %v4500 = vxor.u32 %v4476, 2147483648
      %v4501 = vxor.u32 %v4481, 2147483648
      %v4502 = vxor.u32 %v4484, 2147483648
      %v4503 = vmul.f32 %v4487, 1.442695
      %v4504 = vpow.pop %v4503
      %v4505 = vmul.f32 %v4488, 1.442695
      %v4506 = vpow.pop %v4505
      %v4507 = vmul.f32 %v4489, 1.442695
      %v4508 = vpow.pop %v4507
      %v4509 = vmul.f32 %v4490, 1.442695
      %v4510 = vpow.pop %v4509
      %v4511 = vmul.f32 %v4491, 1.442695
      %v4512 = vpow.pop %v4511
      %v4513 = vmul.f32 %v4492, 1.442695
      %v4514 = vpow.pop %v4513
      %v4515 = vmul.f32 %v4493, 1.442695
      %v4516 = vpow.pop %v4515
      %v4517 = vmul.f32 %v4494, 1.442695
      %v4518 = vpow.pop %v4517
      %v4519 = vmul.f32 %v4495, 1.442695
      %v4520 = vpow.pop %v4519
      %v4521 = vmul.f32 %v4496, 1.442695
      %v4522 = vpow.pop %v4521
      %v4523 = vmul.f32 %v4497, 1.442695
      %v4524 = vpow.pop %v4523
      %v4525 = vmul.f32 %v4498, 1.442695
      %v4526 = vpow.pop %v4525
      %v4527 = vmul.f32 %v4499, 1.442695
      %v4528 = vpow.pop %v4527
      %v4529 = vmul.f32 %v4500, 1.442695
      %v4530 = vpow.pop %v4529
      %v4531 = vmul.f32 %v4501, 1.442695
      %v4532 = vpow.pop %v4531
      %v4533 = vmul.f32 %v4502, 1.442695
      %v4534 = vpow.pop %v4533
      %v4535 = vadd.f32 %v4504, 1.0
      %v4536 = vadd.f32 %v4506, 1.0
      %v4537 = vadd.f32 %v4508, 1.0
      %v4538 = vadd.f32 %v4510, 1.0
      %v4539 = vadd.f32 %v4512, 1.0
      %v4540 = vadd.f32 %v4514, 1.0
      %v4541 = vadd.f32 %v4516, 1.0
      %v4542 = vadd.f32 %v4518, 1.0
      %v4543 = vadd.f32 %v4520, 1.0
      %v4544 = vadd.f32 %v4522, 1.0
      %v4545 = vadd.f32 %v4524, 1.0
      %v4546 = vadd.f32 %v4526, 1.0
      %v4547 = vadd.f32 %v4528, 1.0
      %v4548 = vadd.f32 %v4530, 1.0
      %v4549 = vadd.f32 %v4532, 1.0
      %v4550 = vadd.f32 %v4534, 1.0
      %v4551 = vrcp.pop %v4535
      %v4552 = vmul.f32 1.0, %v4551
      %v4553 = vrcp.pop %v4536
      %v4554 = vmul.f32 1.0, %v4553
      %v4555 = vrcp.pop %v4537
      %v4556 = vmul.f32 1.0, %v4555
      %v4557 = vrcp.pop %v4538
      %v4558 = vmul.f32 1.0, %v4557
      %v4559 = vrcp.pop %v4539
      %v4560 = vmul.f32 1.0, %v4559
      %v4561 = vrcp.pop %v4540
      %v4562 = vmul.f32 1.0, %v4561
      %v4563 = vrcp.pop %v4541
      %v4564 = vmul.f32 1.0, %v4563
      %v4565 = vrcp.pop %v4542
      %v4566 = vmul.f32 1.0, %v4565
      %v4567 = vrcp.pop %v4543
      %v4568 = vmul.f32 1.0, %v4567
      %v4569 = vrcp.pop %v4544
      %v4570 = vmul.f32 1.0, %v4569
      %v4571 = vrcp.pop %v4545
      %v4572 = vmul.f32 1.0, %v4571
      %v4573 = vrcp.pop %v4546
      %v4574 = vmul.f32 1.0, %v4573
      %v4575 = vrcp.pop %v4547
      %v4576 = vmul.f32 1.0, %v4575
      %v4577 = vrcp.pop %v4548
      %v4578 = vmul.f32 1.0, %v4577
      %v4579 = vrcp.pop %v4549
      %v4580 = vmul.f32 1.0, %v4579
      %v4581 = vrcp.pop %v4550
      %v4582 = vmul.f32 1.0, %v4581
      %vm4583 = vcmp.lt.s32.totalorder %v338, 3
      %v4584 = vsel %vm4583, %v4552, %v4014
      %v4585 = vsel %vm4583, %v4554, %v4015
      %v4586 = vsel %vm4583, %v4556, %v4016
      %v4587 = vsel %vm4583, %v4558, %v4017
      %v4588 = vsel %vm4583, %v4560, %v4018
      %v4589 = vsel %vm4583, %v4562, %v4019
      %v4590 = vsel %vm4583, %v4564, %v4020
      %v4591 = vsel %vm4583, %v4566, %v4021
      %v4592 = vsel %vm4583, %v4568, %v4022
      %v4593 = vsel %vm4583, %v4570, %v4023
      %v4594 = vsel %vm4583, %v4572, %v4024
      %v4595 = vsel %vm4583, %v4574, %v4025
      %v4596 = vsel %vm4583, %v4576, %v4026
      %v4597 = vsel %vm4583, %v4578, %v4027
      %v4598 = vsel %vm4583, %v4580, %v4028
      %v4599 = vsel %vm4583, %v4582, %v4029
      %v4600 = vpack.c.bf16 %v4585, %v4584
      %v4601 = vpack.c.bf16 %v4587, %v4586
      %v4602 = vpack.c.bf16 %v4589, %v4588
      %v4603 = vpack.c.bf16 %v4591, %v4590
      %v4604 = vpack.c.bf16 %v4593, %v4592
      %v4605 = vpack.c.bf16 %v4595, %v4594
      %v4606 = vpack.c.bf16 %v4597, %v4596
      %v4607 = vpack.c.bf16 %v4599, %v4598
      %v4616 = vunpack.c.l.b16 %v4600
      %v4617 = vunpack.c.h.b16 %v4600
      %v4618 = vunpack.c.l.b16 %v4601
      %v4619 = vunpack.c.h.b16 %v4601
      %v4620 = vunpack.c.l.b16 %v4602
      %v4621 = vunpack.c.h.b16 %v4602
      %v4622 = vunpack.c.l.b16 %v4603
      %v4623 = vunpack.c.h.b16 %v4603
      %v4624 = vunpack.c.l.b16 %v4604
      %v4625 = vunpack.c.h.b16 %v4604
      %v4626 = vunpack.c.l.b16 %v4605
      %v4627 = vunpack.c.h.b16 %v4605
      %v4628 = vunpack.c.l.b16 %v4606
      %v4629 = vunpack.c.h.b16 %v4606
      %v4630 = vunpack.c.l.b16 %v4607
      %v4631 = vunpack.c.h.b16 %v4607
      %v4632 = vpack.c.b16 %v4616, %v4616
      %v4633 = vpack.c.b16 %v4617, %v4617
      %v4634 = vpack.c.b16 %v4618, %v4618
      %v4635 = vpack.c.b16 %v4619, %v4619
      %v4636 = vpack.c.b16 %v4620, %v4620
      %v4637 = vpack.c.b16 %v4621, %v4621
      %v4638 = vpack.c.b16 %v4622, %v4622
      %v4639 = vpack.c.b16 %v4623, %v4623
      %v4640 = vpack.c.b16 %v4624, %v4624
      %v4641 = vpack.c.b16 %v4625, %v4625
      %v4642 = vpack.c.b16 %v4626, %v4626
      %v4643 = vpack.c.b16 %v4627, %v4627
      %v4644 = vpack.c.b16 %v4628, %v4628
      %v4645 = vpack.c.b16 %v4629, %v4629
      %v4646 = vpack.c.b16 %v4630, %v4630
      %v4647 = vpack.c.b16 %v4631, %v4631
      %4664 = vst [vmem:[%s334] sm:$0xf] %v4632
      %4665 = vst [vmem:[%s334 + $0x4] sm:$0xf] %v4633
      %4666 = vst [vmem:[%s334 + $0x8] sm:$0xf] %v4634
      %4667 = vst [vmem:[%s334 + $0xc] sm:$0xf] %v4635
      %4668 = vst [vmem:[%s334 + $0x10] sm:$0xf] %v4636
      %4669 = vst [vmem:[%s334 + $0x14] sm:$0xf] %v4637
      %4670 = vst [vmem:[%s334 + $0x18] sm:$0xf] %v4638
      %4671 = vst [vmem:[%s334 + $0x1c] sm:$0xf] %v4639
      %4672 = vst [vmem:[%s334 + $0x20] sm:$0xf] %v4640
      %4673 = vst [vmem:[%s334 + $0x24] sm:$0xf] %v4641
      %4674 = vst [vmem:[%s334 + $0x28] sm:$0xf] %v4642
      %4675 = vst [vmem:[%s334 + $0x2c] sm:$0xf] %v4643
      %4676 = vst [vmem:[%s334 + $0x30] sm:$0xf] %v4644
      %4677 = vst [vmem:[%s334 + $0x34] sm:$0xf] %v4645
      %4678 = vst [vmem:[%s334 + $0x38] sm:$0xf] %v4646
      %4679 = vst [vmem:[%s334 + $0x3c] sm:$0xf] %v4647
      %v4680 = vld [vmem:[%s328 + $0x80] sm:$0xff]
      %v4681 = vld [vmem:[%s328 + $0x88] sm:$0xff]
      %v4682 = vld [vmem:[%s328 + $0x90] sm:$0xff]
      %v4683 = vld [vmem:[%s328 + $0x98] sm:$0xff]
      %v4684 = vld [vmem:[%s328 + $0xa0] sm:$0xff]
      %v4685 = vld [vmem:[%s328 + $0xa8] sm:$0xff]
      %v4686 = vld [vmem:[%s328 + $0xb0] sm:$0xff]
      %v4687 = vld [vmem:[%s328 + $0xb8] sm:$0xff]
      %v4688 = vld [vmem:[%s328 + $0xc0] sm:$0xff]
      %v4689 = vld [vmem:[%s328 + $0xc8] sm:$0xff]
      %v4690 = vld [vmem:[%s328 + $0xd0] sm:$0xff]
      %v4691 = vld [vmem:[%s328 + $0xd8] sm:$0xff]
      %v4692 = vld [vmem:[%s328 + $0xe0] sm:$0xff]
      %v4693 = vld [vmem:[%s328 + $0xe8] sm:$0xff]
      %v4694 = vld [vmem:[%s328 + $0xf0] sm:$0xff]
      %v4695 = vld [vmem:[%s328 + $0xf8] sm:$0xff]
      %v4696 = vld [vmem:[%s1] sm:$0xff]
      %v4697 = vld [vmem:[%s1 + $0x8] sm:$0xff]
      %v4698 = vld [vmem:[%s1 + $0x10] sm:$0xf]
      %v4699 = vpack.c.bf16 %v4681, %v4680
      %v4700 = vpack.c.bf16 %v4683, %v4682
      %v4701 = vpack.c.bf16 %v4685, %v4684
      %v4702 = vpack.c.bf16 %v4687, %v4686
      %v4703 = vpack.c.bf16 %v4689, %v4688
      %v4704 = vpack.c.bf16 %v4691, %v4690
      %v4705 = vpack.c.bf16 %v4693, %v4692
      %v4706 = vpack.c.bf16 %v4695, %v4694
      %v4710 = vunpack.c.l.b16 %v4696
      %v4711 = vunpack.c.h.b16 %v4696
      %v4712 = vunpack.c.l.b16 %v4697
      %v4713 = vunpack.c.h.b16 %v4697
      %v4714 = vunpack.c.l.b16 %v4698
      %v4715 = vpack.c.b16 %v4710, %v4710
      %v4716 = vpack.c.b16 %v4711, %v4711
      %v4717 = vpack.c.b16 %v4712, %v4712
      %v4718 = vpack.c.b16 %v4713, %v4713
      %v4719 = vpack.c.b16 %v4714, %v4714
      %v4721 = vsel %vm379, %v4699, 0
      %v4724 = vsel %vm379, %v4700, 0
      %v4727 = vsel %vm379, %v4701, 0
      %v4730 = vsel %vm379, %v4702, 0
      %v4733 = vsel %vm379, %v4703, 0
      %v4736 = vsel %vm379, %v4704, 0
      %v4739 = vsel %vm379, %v4705, 0
      %v4742 = vsel %vm379, %v4706, 0
      %v4745 = vsel %vm404, %v4715, 0
      %v4748 = vsel %vm404, %v4716, 0
      %v4751 = vsel %vm404, %v4717, 0
      %v4754 = vsel %vm404, %v4718, 0
      %v4757 = vsel %vm404, %v4719, 0
      %4759 = vmatprep.subr.bf16.mxu0 %v4748
      %4760 = vmatpush1.bf16.msra.mxu0 %v4745
      %4761 = vmatprep.subr.bf16.mxu0 0
      %4762 = vmatpush1.bf16.msra.mxu0 0
      %4763 = vmatprep.subr.bf16.mxu0 0
      %4764 = vmatpush1.bf16.msra.mxu0 0
      %4765 = vmatprep.subr.bf16.mxu0 0
      %4766 = vmatpush1.bf16.msra.mxu0 0
      %4767 = vmatprep.subr.bf16.mxu0 0
      %4768 = vmatpush1.bf16.msra.mxu0 0
      %4769 = vmatprep.subr.bf16.mxu0 0
      %4770 = vmatpush1.bf16.msra.mxu0 0
      %4771 = vmatprep.subr.bf16.mxu0 0
      %4772 = vmatpush1.bf16.msra.mxu0 0
      %4773 = vmatprep.subr.bf16.mxu0 0
      %4774 = vmatpush1.bf16.msra.mxu0 0
      %4775 = vmatprep.subr.bf16.mxu0 0
      %4776 = vmatpush1.bf16.msra.mxu0 0
      %4777 = vmatprep.subr.bf16.mxu0 0
      %4778 = vmatpush1.bf16.msra.mxu0 0
      %4779 = vmatprep.subr.bf16.mxu0 0
      %4780 = vmatpush1.bf16.msra.mxu0 0
      %4781 = vmatprep.subr.bf16.mxu0 0
      %4782 = vmatpush1.bf16.msra.mxu0 0
      %4783 = vmatprep.subr.bf16.mxu0 0
      %4784 = vmatpush1.bf16.msra.mxu0 0
      %4785 = vmatprep.subr.bf16.mxu0 0
      %4786 = vmatpush1.bf16.msra.mxu0 0
      %4787 = vmatprep.subr.bf16.mxu0 0
      %4788 = vmatpush1.bf16.msra.mxu0 0
      %4789 = vmatprep.subr.bf16.mxu0 0
      %4790 = vmatpush1.bf16.msra.mxu0 0
      %4791 = vmatprep.mubr.bf16.mxu0 0
      %4792 = vmatmul.mubr.bf16.gmra.mrb[0].mxu0 %v4721
      %v4793 = vpop.f32.mrb[0].mxu0
      %v4794 = vadd.f32 0.0, %v4793
      %v4795 = vpop.f32.mrb[0].mxu0
      %v4796 = vadd.f32 0.0, %v4795
      %v4797 = vpop.f32.mrb[0].mxu0
      %v4798 = vadd.f32 0.0, %v4797
      %v4799 = vpop.f32.mrb[0].mxu0
      %v4800 = vadd.f32 0.0, %v4799
      %4801 = vmatprep.mubr.bf16.mxu0 0
      %4802 = vmatmul.mubr.bf16.gmra.mrb[0].mxu0 %v4724
      %v4803 = vpop.f32.mrb[0].mxu0
      %v4804 = vadd.f32 0.0, %v4803
      %v4805 = vpop.f32.mrb[0].mxu0
      %v4806 = vadd.f32 0.0, %v4805
      %v4807 = vpop.f32.mrb[0].mxu0
      %v4808 = vadd.f32 0.0, %v4807
      %v4809 = vpop.f32.mrb[0].mxu0
      %v4810 = vadd.f32 0.0, %v4809
      %4811 = vmatprep.mubr.bf16.mxu0 0
      %4812 = vmatmul.mubr.bf16.gmra.mrb[0].mxu0 %v4727
      %v4813 = vpop.f32.mrb[0].mxu0
      %v4814 = vadd.f32 0.0, %v4813
      %v4815 = vpop.f32.mrb[0].mxu0
      %v4816 = vadd.f32 0.0, %v4815
      %v4817 = vpop.f32.mrb[0].mxu0
      %v4818 = vadd.f32 0.0, %v4817
      %v4819 = vpop.f32.mrb[0].mxu0
      %v4820 = vadd.f32 0.0, %v4819
      %4821 = vmatprep.mubr.bf16.mxu0 0
      %4822 = vmatmul.mubr.bf16.gmra.mrb[0].mxu0 %v4730
      %v4823 = vpop.f32.mrb[0].mxu0
      %v4824 = vadd.f32 0.0, %v4823
      %v4825 = vpop.f32.mrb[0].mxu0
      %v4826 = vadd.f32 0.0, %v4825
      %v4827 = vpop.f32.mrb[0].mxu0
      %v4828 = vadd.f32 0.0, %v4827
      %v4829 = vpop.f32.mrb[0].mxu0
      %v4830 = vadd.f32 0.0, %v4829
      %4831 = vmatprep.mubr.bf16.mxu0 0
      %4832 = vmatmul.mubr.bf16.gmra.mrb[0].mxu0 %v4733
      %v4833 = vpop.f32.mrb[0].mxu0
      %v4834 = vadd.f32 0.0, %v4833
      %v4835 = vpop.f32.mrb[0].mxu0
      %v4836 = vadd.f32 0.0, %v4835
      %v4837 = vpop.f32.mrb[0].mxu0
      %v4838 = vadd.f32 0.0, %v4837
      %v4839 = vpop.f32.mrb[0].mxu0
      %v4840 = vadd.f32 0.0, %v4839
      %4841 = vmatprep.mubr.bf16.mxu0 0
      %4842 = vmatmul.mubr.bf16.gmra.mrb[0].mxu0 %v4736
      %v4843 = vpop.f32.mrb[0].mxu0
      %v4844 = vadd.f32 0.0, %v4843
      %v4845 = vpop.f32.mrb[0].mxu0
      %v4846 = vadd.f32 0.0, %v4845
      %v4847 = vpop.f32.mrb[0].mxu0
      %v4848 = vadd.f32 0.0, %v4847
      %v4849 = vpop.f32.mrb[0].mxu0
      %v4850 = vadd.f32 0.0, %v4849
      %4851 = vmatprep.mubr.bf16.mxu0 0
      %4852 = vmatmul.mubr.bf16.gmra.mrb[0].mxu0 %v4739
      %v4853 = vpop.f32.mrb[0].mxu0
      %v4854 = vadd.f32 0.0, %v4853
      %v4855 = vpop.f32.mrb[0].mxu0
      %v4856 = vadd.f32 0.0, %v4855
      %v4857 = vpop.f32.mrb[0].mxu0
      %v4858 = vadd.f32 0.0, %v4857
      %v4859 = vpop.f32.mrb[0].mxu0
      %v4860 = vadd.f32 0.0, %v4859
      %4861 = vmatprep.mubr.bf16.mxu0 0
      %4862 = vmatmul.mubr.bf16.gmra.mrb[0].mxu0 %v4742
      %v4863 = vpop.f32.mrb[0].mxu0
      %v4864 = vadd.f32 0.0, %v4863
      %v4865 = vpop.f32.mrb[0].mxu0
      %v4866 = vadd.f32 0.0, %v4865
      %v4867 = vpop.f32.mrb[0].mxu0
      %v4868 = vadd.f32 0.0, %v4867
      %v4869 = vpop.f32.mrb[0].mxu0
      %v4870 = vadd.f32 0.0, %v4869
      %4871 = vdwg.mxu0
      %4872 = vmatprep.subr.bf16.mxu0 %v4754
      %4873 = vmatpush1.bf16.msra.mxu0 %v4751
      %4874 = vmatprep.subr.bf16.mxu0 0
      %4875 = vmatpush1.bf16.msra.mxu0 0
      %4876 = vmatprep.subr.bf16.mxu0 0
      %4877 = vmatpush1.bf16.msra.mxu0 0
      %4878 = vmatprep.subr.bf16.mxu0 0
      %4879 = vmatpush1.bf16.msra.mxu0 0
      %4880 = vmatprep.subr.bf16.mxu0 0
      %4881 = vmatpush1.bf16.msra.mxu0 0
      %4882 = vmatprep.subr.bf16.mxu0 0
      %4883 = vmatpush1.bf16.msra.mxu0 0
      %4884 = vmatprep.subr.bf16.mxu0 0
      %4885 = vmatpush1.bf16.msra.mxu0 0
      %4886 = vmatprep.subr.bf16.mxu0 0
      %4887 = vmatpush1.bf16.msra.mxu0 0
      %4888 = vmatprep.subr.bf16.mxu0 0
      %4889 = vmatpush1.bf16.msra.mxu0 0
      %4890 = vmatprep.subr.bf16.mxu0 0
      %4891 = vmatpush1.bf16.msra.mxu0 0
      %4892 = vmatprep.subr.bf16.mxu0 0
      %4893 = vmatpush1.bf16.msra.mxu0 0
      %4894 = vmatprep.subr.bf16.mxu0 0
      %4895 = vmatpush1.bf16.msra.mxu0 0
      %4896 = vmatprep.subr.bf16.mxu0 0
      %4897 = vmatpush1.bf16.msra.mxu0 0
      %4898 = vmatprep.subr.bf16.mxu0 0
      %4899 = vmatpush1.bf16.msra.mxu0 0
      %4900 = vmatprep.subr.bf16.mxu0 0
      %4901 = vmatpush1.bf16.msra.mxu0 0
      %4902 = vmatprep.subr.bf16.mxu0 0
      %4903 = vmatpush1.bf16.msra.mxu0 0
      %4904 = vmatprep.mubr.bf16.mxu0 0
      %4905 = vmatmul.mubr.bf16.gmra.mrb[0].mxu0 %v4721
      %v4906 = vpop.f32.mrb[0].mxu0
      %v4907 = vadd.f32 0.0, %v4906
      %v4908 = vpop.f32.mrb[0].mxu0
      %v4909 = vadd.f32 0.0, %v4908
      %v4910 = vpop.f32.mrb[0].mxu0
      %v4911 = vadd.f32 0.0, %v4910
      %v4912 = vpop.f32.mrb[0].mxu0
      %v4913 = vadd.f32 0.0, %v4912
      %4914 = vmatprep.mubr.bf16.mxu0 0
      %4915 = vmatmul.mubr.bf16.gmra.mrb[0].mxu0 %v4724
      %v4916 = vpop.f32.mrb[0].mxu0
      %v4917 = vadd.f32 0.0, %v4916
      %v4918 = vpop.f32.mrb[0].mxu0
      %v4919 = vadd.f32 0.0, %v4918
      %v4920 = vpop.f32.mrb[0].mxu0
      %v4921 = vadd.f32 0.0, %v4920
      %v4922 = vpop.f32.mrb[0].mxu0
      %v4923 = vadd.f32 0.0, %v4922
      %4924 = vmatprep.mubr.bf16.mxu0 0
      %4925 = vmatmul.mubr.bf16.gmra.mrb[0].mxu0 %v4727
      %v4926 = vpop.f32.mrb[0].mxu0
      %v4927 = vadd.f32 0.0, %v4926
      %v4928 = vpop.f32.mrb[0].mxu0
      %v4929 = vadd.f32 0.0, %v4928
      %v4930 = vpop.f32.mrb[0].mxu0
      %v4931 = vadd.f32 0.0, %v4930
      %v4932 = vpop.f32.mrb[0].mxu0
      %v4933 = vadd.f32 0.0, %v4932
      %4934 = vmatprep.mubr.bf16.mxu0 0
      %4935 = vmatmul.mubr.bf16.gmra.mrb[0].mxu0 %v4730
      %v4936 = vpop.f32.mrb[0].mxu0
      %v4937 = vadd.f32 0.0, %v4936
      %v4938 = vpop.f32.mrb[0].mxu0
      %v4939 = vadd.f32 0.0, %v4938
      %v4940 = vpop.f32.mrb[0].mxu0
      %v4941 = vadd.f32 0.0, %v4940
      %v4942 = vpop.f32.mrb[0].mxu0
      %v4943 = vadd.f32 0.0, %v4942
      %4944 = vmatprep.mubr.bf16.mxu0 0
      %4945 = vmatmul.mubr.bf16.gmra.mrb[0].mxu0 %v4733
      %v4946 = vpop.f32.mrb[0].mxu0
      %v4947 = vadd.f32 0.0, %v4946
      %v4948 = vpop.f32.mrb[0].mxu0
      %v4949 = vadd.f32 0.0, %v4948
      %v4950 = vpop.f32.mrb[0].mxu0
      %v4951 = vadd.f32 0.0, %v4950
      %v4952 = vpop.f32.mrb[0].mxu0
      %v4953 = vadd.f32 0.0, %v4952
      %4954 = vmatprep.mubr.bf16.mxu0 0
      %4955 = vmatmul.mubr.bf16.gmra.mrb[0].mxu0 %v4736
      %v4956 = vpop.f32.mrb[0].mxu0
      %v4957 = vadd.f32 0.0, %v4956
      %v4958 = vpop.f32.mrb[0].mxu0
      %v4959 = vadd.f32 0.0, %v4958
      %v4960 = vpop.f32.mrb[0].mxu0
      %v4961 = vadd.f32 0.0, %v4960
      %v4962 = vpop.f32.mrb[0].mxu0
      %v4963 = vadd.f32 0.0, %v4962
      %4964 = vmatprep.mubr.bf16.mxu0 0
      %4965 = vmatmul.mubr.bf16.gmra.mrb[0].mxu0 %v4739
      %v4966 = vpop.f32.mrb[0].mxu0
      %v4967 = vadd.f32 0.0, %v4966
      %v4968 = vpop.f32.mrb[0].mxu0
      %v4969 = vadd.f32 0.0, %v4968
      %v4970 = vpop.f32.mrb[0].mxu0
      %v4971 = vadd.f32 0.0, %v4970
      %v4972 = vpop.f32.mrb[0].mxu0
      %v4973 = vadd.f32 0.0, %v4972
      %4974 = vmatprep.mubr.bf16.mxu0 0
      %4975 = vmatmul.mubr.bf16.gmra.mrb[0].mxu0 %v4742
      %v4976 = vpop.f32.mrb[0].mxu0
      %v4977 = vadd.f32 0.0, %v4976
      %v4978 = vpop.f32.mrb[0].mxu0
      %v4979 = vadd.f32 0.0, %v4978
      %v4980 = vpop.f32.mrb[0].mxu0
      %v4981 = vadd.f32 0.0, %v4980
      %v4982 = vpop.f32.mrb[0].mxu0
      %v4983 = vadd.f32 0.0, %v4982
      %4984 = vdwg.mxu0
      %4985 = vmatprep.subr.bf16.mxu0 0
      %4986 = vmatpush1.bf16.msra.mxu0 %v4757
      %4987 = vmatprep.subr.bf16.mxu0 0
      %4988 = vmatpush1.bf16.msra.mxu0 0
      %4989 = vmatprep.subr.bf16.mxu0 0
      %4990 = vmatpush1.bf16.msra.mxu0 0
      %4991 = vmatprep.subr.bf16.mxu0 0
      %4992 = vmatpush1.bf16.msra.mxu0 0
      %4993 = vmatprep.subr.bf16.mxu0 0
      %4994 = vmatpush1.bf16.msra.mxu0 0
      %4995 = vmatprep.subr.bf16.mxu0 0
      %4996 = vmatpush1.bf16.msra.mxu0 0
      %4997 = vmatprep.subr.bf16.mxu0 0
      %4998 = vmatpush1.bf16.msra.mxu0 0
      %4999 = vmatprep.subr.bf16.mxu0 0
      %5000 = vmatpush1.bf16.msra.mxu0 0
      %5001 = vmatprep.subr.bf16.mxu0 0
      %5002 = vmatpush1.bf16.msra.mxu0 0
      %5003 = vmatprep.subr.bf16.mxu0 0
      %5004 = vmatpush1.bf16.msra.mxu0 0
      %5005 = vmatprep.subr.bf16.mxu0 0
      %5006 = vmatpush1.bf16.msra.mxu0 0
      %5007 = vmatprep.subr.bf16.mxu0 0
      %5008 = vmatpush1.bf16.msra.mxu0 0
      %5009 = vmatprep.subr.bf16.mxu0 0
      %5010 = vmatpush1.bf16.msra.mxu0 0
      %5011 = vmatprep.subr.bf16.mxu0 0
      %5012 = vmatpush1.bf16.msra.mxu0 0
      %5013 = vmatprep.subr.bf16.mxu0 0
      %5014 = vmatpush1.bf16.msra.mxu0 0
      %5015 = vmatprep.subr.bf16.mxu0 0
      %5016 = vmatpush1.bf16.msra.mxu0 0
      %5017 = vmatprep.mubr.bf16.mxu0 0
      %5018 = vmatmul.mubr.bf16.gmra.mrb[0].mxu0 %v4721
      %v5019 = vpop.f32.mrb[0].mxu0
      %v5020 = vadd.f32 0.0, %v5019
      %v5021 = vpop.f32.mrb[0].mxu0
      %v5022 = vpop.f32.mrb[0].mxu0
      %v5023 = vadd.f32 0.0, %v5022
      %v5024 = vpop.f32.mrb[0].mxu0
      %5025 = vmatprep.mubr.bf16.mxu0 0
      %5026 = vmatmul.mubr.bf16.gmra.mrb[0].mxu0 %v4724
      %v5027 = vpop.f32.mrb[0].mxu0
      %v5028 = vadd.f32 0.0, %v5027
      %v5029 = vpop.f32.mrb[0].mxu0
      %v5030 = vpop.f32.mrb[0].mxu0
      %v5031 = vadd.f32 0.0, %v5030
      %v5032 = vpop.f32.mrb[0].mxu0
      %5033 = vmatprep.mubr.bf16.mxu0 0
      %5034 = vmatmul.mubr.bf16.gmra.mrb[0].mxu0 %v4727
      %v5035 = vpop.f32.mrb[0].mxu0
      %v5036 = vadd.f32 0.0, %v5035
      %v5037 = vpop.f32.mrb[0].mxu0
      %v5038 = vpop.f32.mrb[0].mxu0
      %v5039 = vadd.f32 0.0, %v5038
      %v5040 = vpop.f32.mrb[0].mxu0
      %5041 = vmatprep.mubr.bf16.mxu0 0
      %5042 = vmatmul.mubr.bf16.gmra.mrb[0].mxu0 %v4730
      %v5043 = vpop.f32.mrb[0].mxu0
      %v5044 = vadd.f32 0.0, %v5043
      %v5045 = vpop.f32.mrb[0].mxu0
      %v5046 = vpop.f32.mrb[0].mxu0
      %v5047 = vadd.f32 0.0, %v5046
      %v5048 = vpop.f32.mrb[0].mxu0
      %5049 = vmatprep.mubr.bf16.mxu0 0
      %5050 = vmatmul.mubr.bf16.gmra.mrb[0].mxu0 %v4733
      %v5051 = vpop.f32.mrb[0].mxu0
      %v5052 = vadd.f32 0.0, %v5051
      %v5053 = vpop.f32.mrb[0].mxu0
      %v5054 = vpop.f32.mrb[0].mxu0
      %v5055 = vadd.f32 0.0, %v5054
      %v5056 = vpop.f32.mrb[0].mxu0
      %5057 = vmatprep.mubr.bf16.mxu0 0
      %5058 = vmatmul.mubr.bf16.gmra.mrb[0].mxu0 %v4736
      %v5059 = vpop.f32.mrb[0].mxu0
      %v5060 = vadd.f32 0.0, %v5059
      %v5061 = vpop.f32.mrb[0].mxu0
      %v5062 = vpop.f32.mrb[0].mxu0
      %v5063 = vadd.f32 0.0, %v5062
      %v5064 = vpop.f32.mrb[0].mxu0
      %5065 = vmatprep.mubr.bf16.mxu0 0
      %5066 = vmatmul.mubr.bf16.gmra.mrb[0].mxu0 %v4739
      %v5067 = vpop.f32.mrb[0].mxu0
      %v5068 = vadd.f32 0.0, %v5067
      %v5069 = vpop.f32.mrb[0].mxu0
      %v5070 = vpop.f32.mrb[0].mxu0
      %v5071 = vadd.f32 0.0, %v5070
      %v5072 = vpop.f32.mrb[0].mxu0
      %5073 = vmatprep.mubr.bf16.mxu0 0
      %5074 = vmatmul.mubr.bf16.gmra.mrb[0].mxu0 %v4742
      %v5075 = vpop.f32.mrb[0].mxu0
      %v5076 = vadd.f32 0.0, %v5075
      %v5077 = vpop.f32.mrb[0].mxu0
      %v5078 = vpop.f32.mrb[0].mxu0
      %v5079 = vadd.f32 0.0, %v5078
      %v5080 = vpop.f32.mrb[0].mxu0
      %5081 = vdwg.mxu0
      %v5082 = vld [vmem:[%s6] sm:$0x3]
      %v5084 = vlaneseq
      %v5085 = vshrl.u32 %v5084, 7
      %v5086 = vsub.s32 0, %v5085
      %v5087 = vrot.slane %v5082, %v5086
      %v5088 = vlaneseq
      %v5089 = vshrl.u32 %v5088, 7
      %v5090 = vsub.s32 1, %v5089
      %v5091 = vrot.slane %v5082, %v5090
      %v5094 = vadd.f32 %v4794, %v5087
      %v5095 = vadd.f32 %v4796, %v5091
      %v5096 = vadd.f32 %v4798, %v5087
      %v5097 = vadd.f32 %v4800, %v5091
      %v5098 = vadd.f32 %v4804, %v5087
      %v5099 = vadd.f32 %v4806, %v5091
      %v5100 = vadd.f32 %v4808, %v5087
      %v5101 = vadd.f32 %v4810, %v5091
      %v5102 = vadd.f32 %v4814, %v5087
      %v5103 = vadd.f32 %v4816, %v5091
      %v5104 = vadd.f32 %v4818, %v5087
      %v5105 = vadd.f32 %v4820, %v5091
      %v5106 = vadd.f32 %v4824, %v5087
      %v5107 = vadd.f32 %v4826, %v5091
      %v5108 = vadd.f32 %v4828, %v5087
      %v5109 = vadd.f32 %v4830, %v5091
      %v5110 = vadd.f32 %v4834, %v5087
      %v5111 = vadd.f32 %v4836, %v5091
      %v5112 = vadd.f32 %v4838, %v5087
      %v5113 = vadd.f32 %v4840, %v5091
      %v5114 = vadd.f32 %v4844, %v5087
      %v5115 = vadd.f32 %v4846, %v5091
      %v5116 = vadd.f32 %v4848, %v5087
      %v5117 = vadd.f32 %v4850, %v5091
      %v5118 = vadd.f32 %v4854, %v5087
      %v5119 = vadd.f32 %v4856, %v5091
      %v5120 = vadd.f32 %v4858, %v5087
      %v5121 = vadd.f32 %v4860, %v5091
      %v5122 = vadd.f32 %v4864, %v5087
      %v5123 = vadd.f32 %v4866, %v5091
      %v5124 = vadd.f32 %v4868, %v5087
      %v5125 = vadd.f32 %v4870, %v5091
      %v5126 = vmax.f32 %v5094, 0.0
      %v5127 = vmax.f32 %v5095, 0.0
      %v5128 = vmax.f32 %v5096, 0.0
      %v5129 = vmax.f32 %v5097, 0.0
      %v5130 = vmax.f32 %v5098, 0.0
      %v5131 = vmax.f32 %v5099, 0.0
      %v5132 = vmax.f32 %v5100, 0.0
      %v5133 = vmax.f32 %v5101, 0.0
      %v5134 = vmax.f32 %v5102, 0.0
      %v5135 = vmax.f32 %v5103, 0.0
      %v5136 = vmax.f32 %v5104, 0.0
      %v5137 = vmax.f32 %v5105, 0.0
      %v5138 = vmax.f32 %v5106, 0.0
      %v5139 = vmax.f32 %v5107, 0.0
      %v5140 = vmax.f32 %v5108, 0.0
      %v5141 = vmax.f32 %v5109, 0.0
      %v5142 = vmax.f32 %v5110, 0.0
      %v5143 = vmax.f32 %v5111, 0.0
      %v5144 = vmax.f32 %v5112, 0.0
      %v5145 = vmax.f32 %v5113, 0.0
      %v5146 = vmax.f32 %v5114, 0.0
      %v5147 = vmax.f32 %v5115, 0.0
      %v5148 = vmax.f32 %v5116, 0.0
      %v5149 = vmax.f32 %v5117, 0.0
      %v5150 = vmax.f32 %v5118, 0.0
      %v5151 = vmax.f32 %v5119, 0.0
      %v5152 = vmax.f32 %v5120, 0.0
      %v5153 = vmax.f32 %v5121, 0.0
      %v5154 = vmax.f32 %v5122, 0.0
      %v5155 = vmax.f32 %v5123, 0.0
      %v5156 = vmax.f32 %v5124, 0.0
      %v5157 = vmax.f32 %v5125, 0.0
      %v5158 = vld [vmem:[%s2] sm:$0xff]
      %v5159 = vld [vmem:[%s2 + $0x8] sm:$0xff]
      %v5160 = vld [vmem:[%s2 + $0x10] sm:$0xff]
      %v5161 = vld [vmem:[%s2 + $0x18] sm:$0xff]
      %v5162 = vld [vmem:[%s2 + $0x20] sm:$0xff]
      %v5163 = vld [vmem:[%s2 + $0x28] sm:$0xff]
      %v5164 = vld [vmem:[%s2 + $0x30] sm:$0xff]
      %v5165 = vld [vmem:[%s2 + $0x38] sm:$0xff]
      %v5166 = vld [vmem:[%s2 + $0x40] sm:$0xff]
      %v5167 = vld [vmem:[%s2 + $0x48] sm:$0xff]
      %v5168 = vld [vmem:[%s2 + $0x50] sm:$0xff]
      %v5169 = vld [vmem:[%s2 + $0x58] sm:$0xff]
      %v5170 = vld [vmem:[%s2 + $0x60] sm:$0xff]
      %v5171 = vld [vmem:[%s2 + $0x68] sm:$0xff]
      %v5172 = vld [vmem:[%s2 + $0x70] sm:$0xff]
      %v5173 = vld [vmem:[%s2 + $0x78] sm:$0xff]
      %v5174 = vld [vmem:[%s2 + $0x80] sm:$0xff]
      %v5175 = vld [vmem:[%s2 + $0x88] sm:$0xff]
      %v5176 = vld [vmem:[%s2 + $0x90] sm:$0xff]
      %v5177 = vld [vmem:[%s2 + $0x98] sm:$0xff]
      %v5178 = vld [vmem:[%s2 + $0xa0] sm:$0xff]
      %v5179 = vld [vmem:[%s2 + $0xa8] sm:$0xff]
      %v5180 = vld [vmem:[%s2 + $0xb0] sm:$0xff]
      %v5181 = vld [vmem:[%s2 + $0xb8] sm:$0xff]
      %v5182 = vld [vmem:[%s2 + $0xc0] sm:$0xff]
      %v5183 = vld [vmem:[%s2 + $0xc8] sm:$0xff]
      %v5184 = vld [vmem:[%s2 + $0xd0] sm:$0xff]
      %v5185 = vld [vmem:[%s2 + $0xd8] sm:$0xff]
      %v5186 = vld [vmem:[%s2 + $0xe0] sm:$0xff]
      %v5187 = vld [vmem:[%s2 + $0xe8] sm:$0xff]
      %v5188 = vld [vmem:[%s2 + $0xf0] sm:$0xff]
      %v5189 = vld [vmem:[%s2 + $0xf8] sm:$0xff]
      %v5190 = vpack.c.bf16 %v5128, %v5126
      %v5191 = vpack.c.bf16 %v5129, %v5127
      %v5192 = vpack.c.bf16 %v5132, %v5130
      %v5193 = vpack.c.bf16 %v5133, %v5131
      %v5194 = vpack.c.bf16 %v5136, %v5134
      %v5195 = vpack.c.bf16 %v5137, %v5135
      %v5196 = vpack.c.bf16 %v5140, %v5138
      %v5197 = vpack.c.bf16 %v5141, %v5139
      %v5198 = vpack.c.bf16 %v5144, %v5142
      %v5199 = vpack.c.bf16 %v5145, %v5143
      %v5200 = vpack.c.bf16 %v5148, %v5146
      %v5201 = vpack.c.bf16 %v5149, %v5147
      %v5202 = vpack.c.bf16 %v5152, %v5150
      %v5203 = vpack.c.bf16 %v5153, %v5151
      %v5204 = vpack.c.bf16 %v5156, %v5154
      %v5205 = vpack.c.bf16 %v5157, %v5155
      %v5206 = vld [vmem:[%s867] sm:$0x3]
      %v5208 = vlaneseq
      %v5209 = vshrl.u32 %v5208, 7
      %v5210 = vsub.s32 0, %v5209
      %v5211 = vrot.slane %v5206, %v5210
      %v5212 = vlaneseq
      %v5213 = vshrl.u32 %v5212, 7
      %v5214 = vsub.s32 1, %v5213
      %v5215 = vrot.slane %v5206, %v5214
      %v5250 = vunpack.c.l.b16 %v5158
      %v5251 = vunpack.c.h.b16 %v5158
      %v5252 = vunpack.c.l.b16 %v5159
      %v5253 = vunpack.c.h.b16 %v5159
      %v5254 = vunpack.c.l.b16 %v5160
      %v5255 = vunpack.c.h.b16 %v5160
      %v5256 = vunpack.c.l.b16 %v5161
      %v5257 = vunpack.c.h.b16 %v5161
      %v5258 = vunpack.c.l.b16 %v5162
      %v5259 = vunpack.c.h.b16 %v5162
      %v5260 = vunpack.c.l.b16 %v5163
      %v5261 = vunpack.c.h.b16 %v5163
      %v5262 = vunpack.c.l.b16 %v5164
      %v5263 = vunpack.c.h.b16 %v5164
      %v5264 = vunpack.c.l.b16 %v5165
      %v5265 = vunpack.c.h.b16 %v5165
      %v5266 = vunpack.c.l.b16 %v5166
      %v5267 = vunpack.c.h.b16 %v5166
      %v5268 = vunpack.c.l.b16 %v5167
      %v5269 = vunpack.c.h.b16 %v5167
      %v5270 = vunpack.c.l.b16 %v5168
      %v5271 = vunpack.c.h.b16 %v5168
      %v5272 = vunpack.c.l.b16 %v5169
      %v5273 = vunpack.c.h.b16 %v5169
      %v5274 = vunpack.c.l.b16 %v5170
      %v5275 = vunpack.c.h.b16 %v5170
      %v5276 = vunpack.c.l.b16 %v5171
      %v5277 = vunpack.c.h.b16 %v5171
      %v5278 = vunpack.c.l.b16 %v5172
      %v5279 = vunpack.c.h.b16 %v5172
      %v5280 = vunpack.c.l.b16 %v5173
      %v5281 = vunpack.c.h.b16 %v5173
      %v5282 = vunpack.c.l.b16 %v5174
      %v5283 = vunpack.c.h.b16 %v5174
      %v5284 = vunpack.c.l.b16 %v5175
      %v5285 = vunpack.c.h.b16 %v5175
      %v5286 = vunpack.c.l.b16 %v5176
      %v5287 = vunpack.c.h.b16 %v5176
      %v5288 = vunpack.c.l.b16 %v5177
      %v5289 = vunpack.c.h.b16 %v5177
      %v5290 = vunpack.c.l.b16 %v5178
      %v5291 = vunpack.c.h.b16 %v5178
      %v5292 = vunpack.c.l.b16 %v5179
      %v5293 = vunpack.c.h.b16 %v5179
      %v5294 = vunpack.c.l.b16 %v5180
      %v5295 = vunpack.c.h.b16 %v5180
      %v5296 = vunpack.c.l.b16 %v5181
      %v5297 = vunpack.c.h.b16 %v5181
      %v5298 = vunpack.c.l.b16 %v5182
      %v5299 = vunpack.c.h.b16 %v5182
      %v5300 = vunpack.c.l.b16 %v5183
      %v5301 = vunpack.c.h.b16 %v5183
      %v5302 = vunpack.c.l.b16 %v5184
      %v5303 = vunpack.c.h.b16 %v5184
      %v5304 = vunpack.c.l.b16 %v5185
      %v5305 = vunpack.c.h.b16 %v5185
      %v5306 = vunpack.c.l.b16 %v5186
      %v5307 = vunpack.c.h.b16 %v5186
      %v5308 = vunpack.c.l.b16 %v5187
      %v5309 = vunpack.c.h.b16 %v5187
      %v5310 = vunpack.c.l.b16 %v5188
      %v5311 = vunpack.c.h.b16 %v5188
      %v5312 = vunpack.c.l.b16 %v5189
      %v5313 = vunpack.c.h.b16 %v5189
      %v5314 = vpack.c.b16 %v5252, %v5250
      %v5315 = vpack.c.b16 %v5253, %v5251
      %v5316 = vpack.c.b16 %v5256, %v5254
      %v5317 = vpack.c.b16 %v5257, %v5255
      %v5318 = vpack.c.b16 %v5260, %v5258
      %v5319 = vpack.c.b16 %v5261, %v5259
      %v5320 = vpack.c.b16 %v5264, %v5262
      %v5321 = vpack.c.b16 %v5265, %v5263
      %v5322 = vpack.c.b16 %v5268, %v5266
      %v5323 = vpack.c.b16 %v5269, %v5267
      %v5324 = vpack.c.b16 %v5272, %v5270
      %v5325 = vpack.c.b16 %v5273, %v5271
      %v5326 = vpack.c.b16 %v5276, %v5274
      %v5327 = vpack.c.b16 %v5277, %v5275
      %v5328 = vpack.c.b16 %v5280, %v5278
      %v5329 = vpack.c.b16 %v5281, %v5279
      %v5330 = vpack.c.b16 %v5284, %v5282
      %v5331 = vpack.c.b16 %v5285, %v5283
      %v5332 = vpack.c.b16 %v5288, %v5286
      %v5333 = vpack.c.b16 %v5289, %v5287
      %v5334 = vpack.c.b16 %v5292, %v5290
      %v5335 = vpack.c.b16 %v5293, %v5291
      %v5336 = vpack.c.b16 %v5296, %v5294
      %v5337 = vpack.c.b16 %v5297, %v5295
      %v5338 = vpack.c.b16 %v5300, %v5298
      %v5339 = vpack.c.b16 %v5301, %v5299
      %v5340 = vpack.c.b16 %v5304, %v5302
      %v5341 = vpack.c.b16 %v5305, %v5303
      %v5342 = vpack.c.b16 %v5308, %v5306
      %v5343 = vpack.c.b16 %v5309, %v5307
      %v5344 = vpack.c.b16 %v5312, %v5310
      %v5345 = vpack.c.b16 %v5313, %v5311
      %5378 = vmatprep.subr.bf16.mxu0 %v5315
      %5379 = vmatpush1.bf16.msra.mxu0 %v5314
      %5380 = vmatprep.subr.bf16.mxu0 %v5317
      %5381 = vmatpush1.bf16.msra.mxu0 %v5316
      %5382 = vmatprep.subr.bf16.mxu0 %v5319
      %5383 = vmatpush1.bf16.msra.mxu0 %v5318
      %5384 = vmatprep.subr.bf16.mxu0 %v5321
      %5385 = vmatpush1.bf16.msra.mxu0 %v5320
      %5386 = vmatprep.subr.bf16.mxu0 %v5323
      %5387 = vmatpush1.bf16.msra.mxu0 %v5322
      %5388 = vmatprep.subr.bf16.mxu0 %v5325
      %5389 = vmatpush1.bf16.msra.mxu0 %v5324
      %5390 = vmatprep.subr.bf16.mxu0 %v5327
      %5391 = vmatpush1.bf16.msra.mxu0 %v5326
      %5392 = vmatprep.subr.bf16.mxu0 %v5329
      %5393 = vmatpush1.bf16.msra.mxu0 %v5328
      %5394 = vmatprep.subr.bf16.mxu0 %v5331
      %5395 = vmatpush1.bf16.msra.mxu0 %v5330
      %5396 = vmatprep.subr.bf16.mxu0 %v5333
      %5397 = vmatpush1.bf16.msra.mxu0 %v5332
      %5398 = vmatprep.subr.bf16.mxu0 %v5335
      %5399 = vmatpush1.bf16.msra.mxu0 %v5334
      %5400 = vmatprep.subr.bf16.mxu0 %v5337
      %5401 = vmatpush1.bf16.msra.mxu0 %v5336
      %5402 = vmatprep.subr.bf16.mxu0 %v5339
      %5403 = vmatpush1.bf16.msra.mxu0 %v5338
      %5404 = vmatprep.subr.bf16.mxu0 %v5341
      %5405 = vmatpush1.bf16.msra.mxu0 %v5340
      %5406 = vmatprep.subr.bf16.mxu0 %v5343
      %5407 = vmatpush1.bf16.msra.mxu0 %v5342
      %5408 = vmatprep.subr.bf16.mxu0 %v5345
      %5409 = vmatpush1.bf16.msra.mxu0 %v5344
      %5410 = vmatprep.mubr.bf16.mxu0 %v5191
      %5411 = vmatmul.mubr.bf16.gmra.mrb[0].mxu0 %v5190
      %v5412 = vpop.f32.mrb[0].mxu0
      %v5413 = vadd.f32 %v5211, %v5412
      %v5414 = vpop.f32.mrb[0].mxu0
      %v5415 = vadd.f32 %v5215, %v5414
      %v5416 = vpop.f32.mrb[0].mxu0
      %v5417 = vadd.f32 %v5211, %v5416
      %v5418 = vpop.f32.mrb[0].mxu0
      %v5419 = vadd.f32 %v5215, %v5418
      %5420 = vmatprep.mubr.bf16.mxu0 %v5193
      %5421 = vmatmul.mubr.bf16.gmra.mrb[0].mxu0 %v5192
      %v5422 = vpop.f32.mrb[0].mxu0
      %v5423 = vadd.f32 %v5211, %v5422
      %v5424 = vpop.f32.mrb[0].mxu0
      %v5425 = vadd.f32 %v5215, %v5424
      %v5426 = vpop.f32.mrb[0].mxu0
      %v5427 = vadd.f32 %v5211, %v5426
      %v5428 = vpop.f32.mrb[0].mxu0
      %v5429 = vadd.f32 %v5215, %v5428
      %5430 = vmatprep.mubr.bf16.mxu0 %v5195
      %5431 = vmatmul.mubr.bf16.gmra.mrb[0].mxu0 %v5194
      %v5432 = vpop.f32.mrb[0].mxu0
      %v5433 = vadd.f32 %v5211, %v5432
      %v5434 = vpop.f32.mrb[0].mxu0
      %v5435 = vadd.f32 %v5215, %v5434
      %v5436 = vpop.f32.mrb[0].mxu0
      %v5437 = vadd.f32 %v5211, %v5436
      %v5438 = vpop.f32.mrb[0].mxu0
      %v5439 = vadd.f32 %v5215, %v5438
      %5440 = vmatprep.mubr.bf16.mxu0 %v5197
      %5441 = vmatmul.mubr.bf16.gmra.mrb[0].mxu0 %v5196
      %v5442 = vpop.f32.mrb[0].mxu0
      %v5443 = vadd.f32 %v5211, %v5442
      %v5444 = vpop.f32.mrb[0].mxu0
      %v5445 = vadd.f32 %v5215, %v5444
      %v5446 = vpop.f32.mrb[0].mxu0
      %v5447 = vadd.f32 %v5211, %v5446
      %v5448 = vpop.f32.mrb[0].mxu0
      %v5449 = vadd.f32 %v5215, %v5448
      %5450 = vmatprep.mubr.bf16.mxu0 %v5199
      %5451 = vmatmul.mubr.bf16.gmra.mrb[0].mxu0 %v5198
      %v5452 = vpop.f32.mrb[0].mxu0
      %v5453 = vadd.f32 %v5211, %v5452
      %v5454 = vpop.f32.mrb[0].mxu0
      %v5455 = vadd.f32 %v5215, %v5454
      %v5456 = vpop.f32.mrb[0].mxu0
      %v5457 = vadd.f32 %v5211, %v5456
      %v5458 = vpop.f32.mrb[0].mxu0
      %v5459 = vadd.f32 %v5215, %v5458
      %5460 = vmatprep.mubr.bf16.mxu0 %v5201
      %5461 = vmatmul.mubr.bf16.gmra.mrb[0].mxu0 %v5200
      %v5462 = vpop.f32.mrb[0].mxu0
      %v5463 = vadd.f32 %v5211, %v5462
      %v5464 = vpop.f32.mrb[0].mxu0
      %v5465 = vadd.f32 %v5215, %v5464
      %v5466 = vpop.f32.mrb[0].mxu0
      %v5467 = vadd.f32 %v5211, %v5466
      %v5468 = vpop.f32.mrb[0].mxu0
      %v5469 = vadd.f32 %v5215, %v5468
      %5470 = vmatprep.mubr.bf16.mxu0 %v5203
      %5471 = vmatmul.mubr.bf16.gmra.mrb[0].mxu0 %v5202
      %v5472 = vpop.f32.mrb[0].mxu0
      %v5473 = vadd.f32 %v5211, %v5472
      %v5474 = vpop.f32.mrb[0].mxu0
      %v5475 = vadd.f32 %v5215, %v5474
      %v5476 = vpop.f32.mrb[0].mxu0
      %v5477 = vadd.f32 %v5211, %v5476
      %v5478 = vpop.f32.mrb[0].mxu0
      %v5479 = vadd.f32 %v5215, %v5478
      %5480 = vmatprep.mubr.bf16.mxu0 %v5205
      %5481 = vmatmul.mubr.bf16.gmra.mrb[0].mxu0 %v5204
      %v5482 = vpop.f32.mrb[0].mxu0
      %v5483 = vadd.f32 %v5211, %v5482
      %v5484 = vpop.f32.mrb[0].mxu0
      %v5485 = vadd.f32 %v5215, %v5484
      %v5486 = vpop.f32.mrb[0].mxu0
      %v5487 = vadd.f32 %v5211, %v5486
      %v5488 = vpop.f32.mrb[0].mxu0
      %v5489 = vadd.f32 %v5215, %v5488
      %5490 = vdwg.mxu0
      %v5491 = vmax.f32 %v5413, 0.0
      %v5492 = vmax.f32 %v5415, 0.0
      %v5493 = vmax.f32 %v5417, 0.0
      %v5494 = vmax.f32 %v5419, 0.0
      %v5495 = vmax.f32 %v5423, 0.0
      %v5496 = vmax.f32 %v5425, 0.0
      %v5497 = vmax.f32 %v5427, 0.0
      %v5498 = vmax.f32 %v5429, 0.0
      %v5499 = vmax.f32 %v5433, 0.0
      %v5500 = vmax.f32 %v5435, 0.0
      %v5501 = vmax.f32 %v5437, 0.0
      %v5502 = vmax.f32 %v5439, 0.0
      %v5503 = vmax.f32 %v5443, 0.0
      %v5504 = vmax.f32 %v5445, 0.0
      %v5505 = vmax.f32 %v5447, 0.0
      %v5506 = vmax.f32 %v5449, 0.0
      %v5507 = vmax.f32 %v5453, 0.0
      %v5508 = vmax.f32 %v5455, 0.0
      %v5509 = vmax.f32 %v5457, 0.0
      %v5510 = vmax.f32 %v5459, 0.0
      %v5511 = vmax.f32 %v5463, 0.0
      %v5512 = vmax.f32 %v5465, 0.0
      %v5513 = vmax.f32 %v5467, 0.0
      %v5514 = vmax.f32 %v5469, 0.0
      %v5515 = vmax.f32 %v5473, 0.0
      %v5516 = vmax.f32 %v5475, 0.0
      %v5517 = vmax.f32 %v5477, 0.0
      %v5518 = vmax.f32 %v5479, 0.0
      %v5519 = vmax.f32 %v5483, 0.0
      %v5520 = vmax.f32 %v5485, 0.0
      %v5521 = vmax.f32 %v5487, 0.0
      %v5522 = vmax.f32 %v5489, 0.0
      %v5523 = vld [vmem:[%s1185] sm:$0xff]
      %v5524 = vld [vmem:[%s1185 + $0x8] sm:$0xff]
      %v5525 = vld [vmem:[%s1185 + $0x10] sm:$0xff]
      %v5526 = vld [vmem:[%s1185 + $0x18] sm:$0xff]
      %v5527 = vld [vmem:[%s1185 + $0x20] sm:$0xff]
      %v5528 = vld [vmem:[%s1185 + $0x28] sm:$0xff]
      %v5529 = vld [vmem:[%s1185 + $0x30] sm:$0xff]
      %v5530 = vld [vmem:[%s1185 + $0x38] sm:$0xff]
      %v5531 = vld [vmem:[%s1185 + $0x40] sm:$0xff]
      %v5532 = vld [vmem:[%s1185 + $0x48] sm:$0xff]
      %v5533 = vld [vmem:[%s1185 + $0x50] sm:$0xff]
      %v5534 = vld [vmem:[%s1185 + $0x58] sm:$0xff]
      %v5535 = vld [vmem:[%s1185 + $0x60] sm:$0xff]
      %v5536 = vld [vmem:[%s1185 + $0x68] sm:$0xff]
      %v5537 = vld [vmem:[%s1185 + $0x70] sm:$0xff]
      %v5538 = vld [vmem:[%s1185 + $0x78] sm:$0xff]
      %v5539 = vld [vmem:[%s1185 + $0x80] sm:$0xff]
      %v5540 = vld [vmem:[%s1185 + $0x88] sm:$0xff]
      %v5541 = vld [vmem:[%s1185 + $0x90] sm:$0xff]
      %v5542 = vld [vmem:[%s1185 + $0x98] sm:$0xff]
      %v5543 = vld [vmem:[%s1185 + $0xa0] sm:$0xff]
      %v5544 = vld [vmem:[%s1185 + $0xa8] sm:$0xff]
      %v5545 = vld [vmem:[%s1185 + $0xb0] sm:$0xff]
      %v5546 = vld [vmem:[%s1185 + $0xb8] sm:$0xff]
      %v5547 = vld [vmem:[%s1185 + $0xc0] sm:$0xff]
      %v5548 = vld [vmem:[%s1185 + $0xc8] sm:$0xff]
      %v5549 = vld [vmem:[%s1185 + $0xd0] sm:$0xff]
      %v5550 = vld [vmem:[%s1185 + $0xd8] sm:$0xff]
      %v5551 = vld [vmem:[%s1185 + $0xe0] sm:$0xff]
      %v5552 = vld [vmem:[%s1185 + $0xe8] sm:$0xff]
      %v5553 = vld [vmem:[%s1185 + $0xf0] sm:$0xff]
      %v5554 = vld [vmem:[%s1185 + $0xf8] sm:$0xff]
      %v5555 = vpack.c.bf16 %v5493, %v5491
      %v5556 = vpack.c.bf16 %v5494, %v5492
      %v5557 = vpack.c.bf16 %v5497, %v5495
      %v5558 = vpack.c.bf16 %v5498, %v5496
      %v5559 = vpack.c.bf16 %v5501, %v5499
      %v5560 = vpack.c.bf16 %v5502, %v5500
      %v5561 = vpack.c.bf16 %v5505, %v5503
      %v5562 = vpack.c.bf16 %v5506, %v5504
      %v5563 = vpack.c.bf16 %v5509, %v5507
      %v5564 = vpack.c.bf16 %v5510, %v5508
      %v5565 = vpack.c.bf16 %v5513, %v5511
      %v5566 = vpack.c.bf16 %v5514, %v5512
      %v5567 = vpack.c.bf16 %v5517, %v5515
      %v5568 = vpack.c.bf16 %v5518, %v5516
      %v5569 = vpack.c.bf16 %v5521, %v5519
      %v5570 = vpack.c.bf16 %v5522, %v5520
      %v5571 = vld [vmem:[%s1234] sm:$0x3]
      %v5573 = vlaneseq
      %v5574 = vshrl.u32 %v5573, 7
      %v5575 = vsub.s32 0, %v5574
      %v5576 = vrot.slane %v5571, %v5575
      %v5577 = vlaneseq
      %v5578 = vshrl.u32 %v5577, 7
      %v5579 = vsub.s32 1, %v5578
      %v5580 = vrot.slane %v5571, %v5579
      %v5615 = vunpack.c.l.b16 %v5523
      %v5616 = vunpack.c.h.b16 %v5523
      %v5617 = vunpack.c.l.b16 %v5524
      %v5618 = vunpack.c.h.b16 %v5524
      %v5619 = vunpack.c.l.b16 %v5525
      %v5620 = vunpack.c.h.b16 %v5525
      %v5621 = vunpack.c.l.b16 %v5526
      %v5622 = vunpack.c.h.b16 %v5526
      %v5623 = vunpack.c.l.b16 %v5527
      %v5624 = vunpack.c.h.b16 %v5527
      %v5625 = vunpack.c.l.b16 %v5528
      %v5626 = vunpack.c.h.b16 %v5528
      %v5627 = vunpack.c.l.b16 %v5529
      %v5628 = vunpack.c.h.b16 %v5529
      %v5629 = vunpack.c.l.b16 %v5530
      %v5630 = vunpack.c.h.b16 %v5530
      %v5631 = vunpack.c.l.b16 %v5531
      %v5632 = vunpack.c.h.b16 %v5531
      %v5633 = vunpack.c.l.b16 %v5532
      %v5634 = vunpack.c.h.b16 %v5532
      %v5635 = vunpack.c.l.b16 %v5533
      %v5636 = vunpack.c.h.b16 %v5533
      %v5637 = vunpack.c.l.b16 %v5534
      %v5638 = vunpack.c.h.b16 %v5534
      %v5639 = vunpack.c.l.b16 %v5535
      %v5640 = vunpack.c.h.b16 %v5535
      %v5641 = vunpack.c.l.b16 %v5536
      %v5642 = vunpack.c.h.b16 %v5536
      %v5643 = vunpack.c.l.b16 %v5537
      %v5644 = vunpack.c.h.b16 %v5537
      %v5645 = vunpack.c.l.b16 %v5538
      %v5646 = vunpack.c.h.b16 %v5538
      %v5647 = vunpack.c.l.b16 %v5539
      %v5648 = vunpack.c.h.b16 %v5539
      %v5649 = vunpack.c.l.b16 %v5540
      %v5650 = vunpack.c.h.b16 %v5540
      %v5651 = vunpack.c.l.b16 %v5541
      %v5652 = vunpack.c.h.b16 %v5541
      %v5653 = vunpack.c.l.b16 %v5542
      %v5654 = vunpack.c.h.b16 %v5542
      %v5655 = vunpack.c.l.b16 %v5543
      %v5656 = vunpack.c.h.b16 %v5543
      %v5657 = vunpack.c.l.b16 %v5544
      %v5658 = vunpack.c.h.b16 %v5544
      %v5659 = vunpack.c.l.b16 %v5545
      %v5660 = vunpack.c.h.b16 %v5545
      %v5661 = vunpack.c.l.b16 %v5546
      %v5662 = vunpack.c.h.b16 %v5546
      %v5663 = vunpack.c.l.b16 %v5547
      %v5664 = vunpack.c.h.b16 %v5547
      %v5665 = vunpack.c.l.b16 %v5548
      %v5666 = vunpack.c.h.b16 %v5548
      %v5667 = vunpack.c.l.b16 %v5549
      %v5668 = vunpack.c.h.b16 %v5549
      %v5669 = vunpack.c.l.b16 %v5550
      %v5670 = vunpack.c.h.b16 %v5550
      %v5671 = vunpack.c.l.b16 %v5551
      %v5672 = vunpack.c.h.b16 %v5551
      %v5673 = vunpack.c.l.b16 %v5552
      %v5674 = vunpack.c.h.b16 %v5552
      %v5675 = vunpack.c.l.b16 %v5553
      %v5676 = vunpack.c.h.b16 %v5553
      %v5677 = vunpack.c.l.b16 %v5554
      %v5678 = vunpack.c.h.b16 %v5554
      %v5679 = vpack.c.b16 %v5617, %v5615
      %v5680 = vpack.c.b16 %v5618, %v5616
      %v5681 = vpack.c.b16 %v5621, %v5619
      %v5682 = vpack.c.b16 %v5622, %v5620
      %v5683 = vpack.c.b16 %v5625, %v5623
      %v5684 = vpack.c.b16 %v5626, %v5624
      %v5685 = vpack.c.b16 %v5629, %v5627
      %v5686 = vpack.c.b16 %v5630, %v5628
      %v5687 = vpack.c.b16 %v5633, %v5631
      %v5688 = vpack.c.b16 %v5634, %v5632
      %v5689 = vpack.c.b16 %v5637, %v5635
      %v5690 = vpack.c.b16 %v5638, %v5636
      %v5691 = vpack.c.b16 %v5641, %v5639
      %v5692 = vpack.c.b16 %v5642, %v5640
      %v5693 = vpack.c.b16 %v5645, %v5643
      %v5694 = vpack.c.b16 %v5646, %v5644
      %v5695 = vpack.c.b16 %v5649, %v5647
      %v5696 = vpack.c.b16 %v5650, %v5648
      %v5697 = vpack.c.b16 %v5653, %v5651
      %v5698 = vpack.c.b16 %v5654, %v5652
      %v5699 = vpack.c.b16 %v5657, %v5655
      %v5700 = vpack.c.b16 %v5658, %v5656
      %v5701 = vpack.c.b16 %v5661, %v5659
      %v5702 = vpack.c.b16 %v5662, %v5660
      %v5703 = vpack.c.b16 %v5665, %v5663
      %v5704 = vpack.c.b16 %v5666, %v5664
      %v5705 = vpack.c.b16 %v5669, %v5667
      %v5706 = vpack.c.b16 %v5670, %v5668
      %v5707 = vpack.c.b16 %v5673, %v5671
      %v5708 = vpack.c.b16 %v5674, %v5672
      %v5709 = vpack.c.b16 %v5677, %v5675
      %v5710 = vpack.c.b16 %v5678, %v5676
      %5743 = vmatprep.subr.bf16.mxu0 %v5680
      %5744 = vmatpush1.bf16.msra.mxu0 %v5679
      %5745 = vmatprep.subr.bf16.mxu0 %v5682
      %5746 = vmatpush1.bf16.msra.mxu0 %v5681
      %5747 = vmatprep.subr.bf16.mxu0 %v5684
      %5748 = vmatpush1.bf16.msra.mxu0 %v5683
      %5749 = vmatprep.subr.bf16.mxu0 %v5686
      %5750 = vmatpush1.bf16.msra.mxu0 %v5685
      %5751 = vmatprep.subr.bf16.mxu0 %v5688
      %5752 = vmatpush1.bf16.msra.mxu0 %v5687
      %5753 = vmatprep.subr.bf16.mxu0 %v5690
      %5754 = vmatpush1.bf16.msra.mxu0 %v5689
      %5755 = vmatprep.subr.bf16.mxu0 %v5692
      %5756 = vmatpush1.bf16.msra.mxu0 %v5691
      %5757 = vmatprep.subr.bf16.mxu0 %v5694
      %5758 = vmatpush1.bf16.msra.mxu0 %v5693
      %5759 = vmatprep.subr.bf16.mxu0 %v5696
      %5760 = vmatpush1.bf16.msra.mxu0 %v5695
      %5761 = vmatprep.subr.bf16.mxu0 %v5698
      %5762 = vmatpush1.bf16.msra.mxu0 %v5697
      %5763 = vmatprep.subr.bf16.mxu0 %v5700
      %5764 = vmatpush1.bf16.msra.mxu0 %v5699
      %5765 = vmatprep.subr.bf16.mxu0 %v5702
      %5766 = vmatpush1.bf16.msra.mxu0 %v5701
      %5767 = vmatprep.subr.bf16.mxu0 %v5704
      %5768 = vmatpush1.bf16.msra.mxu0 %v5703
      %5769 = vmatprep.subr.bf16.mxu0 %v5706
      %5770 = vmatpush1.bf16.msra.mxu0 %v5705
      %5771 = vmatprep.subr.bf16.mxu0 %v5708
      %5772 = vmatpush1.bf16.msra.mxu0 %v5707
      %5773 = vmatprep.subr.bf16.mxu0 %v5710
      %5774 = vmatpush1.bf16.msra.mxu0 %v5709
      %5775 = vmatprep.mubr.bf16.mxu0 %v5556
      %5776 = vmatmul.mubr.bf16.gmra.mrb[0].mxu0 %v5555
      %v5777 = vpop.f32.mrb[0].mxu0
      %v5778 = vadd.f32 %v5576, %v5777
      %v5779 = vpop.f32.mrb[0].mxu0
      %v5780 = vadd.f32 %v5580, %v5779
      %v5781 = vpop.f32.mrb[0].mxu0
      %v5782 = vadd.f32 %v5576, %v5781
      %v5783 = vpop.f32.mrb[0].mxu0
      %v5784 = vadd.f32 %v5580, %v5783
      %5785 = vmatprep.mubr.bf16.mxu0 %v5558
      %5786 = vmatmul.mubr.bf16.gmra.mrb[0].mxu0 %v5557
      %v5787 = vpop.f32.mrb[0].mxu0
      %v5788 = vadd.f32 %v5576, %v5787
      %v5789 = vpop.f32.mrb[0].mxu0
      %v5790 = vadd.f32 %v5580, %v5789
      %v5791 = vpop.f32.mrb[0].mxu0
      %v5792 = vadd.f32 %v5576, %v5791
      %v5793 = vpop.f32.mrb[0].mxu0
      %v5794 = vadd.f32 %v5580, %v5793
      %5795 = vmatprep.mubr.bf16.mxu0 %v5560
      %5796 = vmatmul.mubr.bf16.gmra.mrb[0].mxu0 %v5559
      %v5797 = vpop.f32.mrb[0].mxu0
      %v5798 = vadd.f32 %v5576, %v5797
      %v5799 = vpop.f32.mrb[0].mxu0
      %v5800 = vadd.f32 %v5580, %v5799
      %v5801 = vpop.f32.mrb[0].mxu0
      %v5802 = vadd.f32 %v5576, %v5801
      %v5803 = vpop.f32.mrb[0].mxu0
      %v5804 = vadd.f32 %v5580, %v5803
      %5805 = vmatprep.mubr.bf16.mxu0 %v5562
      %5806 = vmatmul.mubr.bf16.gmra.mrb[0].mxu0 %v5561
      %v5807 = vpop.f32.mrb[0].mxu0
      %v5808 = vadd.f32 %v5576, %v5807
      %v5809 = vpop.f32.mrb[0].mxu0
      %v5810 = vadd.f32 %v5580, %v5809
      %v5811 = vpop.f32.mrb[0].mxu0
      %v5812 = vadd.f32 %v5576, %v5811
      %v5813 = vpop.f32.mrb[0].mxu0
      %v5814 = vadd.f32 %v5580, %v5813
      %5815 = vmatprep.mubr.bf16.mxu0 %v5564
      %5816 = vmatmul.mubr.bf16.gmra.mrb[0].mxu0 %v5563
      %v5817 = vpop.f32.mrb[0].mxu0
      %v5818 = vadd.f32 %v5576, %v5817
      %v5819 = vpop.f32.mrb[0].mxu0
      %v5820 = vadd.f32 %v5580, %v5819
      %v5821 = vpop.f32.mrb[0].mxu0
      %v5822 = vadd.f32 %v5576, %v5821
      %v5823 = vpop.f32.mrb[0].mxu0
      %v5824 = vadd.f32 %v5580, %v5823
      %5825 = vmatprep.mubr.bf16.mxu0 %v5566
      %5826 = vmatmul.mubr.bf16.gmra.mrb[0].mxu0 %v5565
      %v5827 = vpop.f32.mrb[0].mxu0
      %v5828 = vadd.f32 %v5576, %v5827
      %v5829 = vpop.f32.mrb[0].mxu0
      %v5830 = vadd.f32 %v5580, %v5829
      %v5831 = vpop.f32.mrb[0].mxu0
      %v5832 = vadd.f32 %v5576, %v5831
      %v5833 = vpop.f32.mrb[0].mxu0
      %v5834 = vadd.f32 %v5580, %v5833
      %5835 = vmatprep.mubr.bf16.mxu0 %v5568
      %5836 = vmatmul.mubr.bf16.gmra.mrb[0].mxu0 %v5567
      %v5837 = vpop.f32.mrb[0].mxu0
      %v5838 = vadd.f32 %v5576, %v5837
      %v5839 = vpop.f32.mrb[0].mxu0
      %v5840 = vadd.f32 %v5580, %v5839
      %v5841 = vpop.f32.mrb[0].mxu0
      %v5842 = vadd.f32 %v5576, %v5841
      %v5843 = vpop.f32.mrb[0].mxu0
      %v5844 = vadd.f32 %v5580, %v5843
      %5845 = vmatprep.mubr.bf16.mxu0 %v5570
      %5846 = vmatmul.mubr.bf16.gmra.mrb[0].mxu0 %v5569
      %v5847 = vpop.f32.mrb[0].mxu0
      %v5848 = vadd.f32 %v5576, %v5847
      %v5849 = vpop.f32.mrb[0].mxu0
      %v5850 = vadd.f32 %v5580, %v5849
      %v5851 = vpop.f32.mrb[0].mxu0
      %v5852 = vadd.f32 %v5576, %v5851
      %v5853 = vpop.f32.mrb[0].mxu0
      %v5854 = vadd.f32 %v5580, %v5853
      %5855 = vdwg.mxu0
      %v5856 = vmax.f32 %v5778, 0.0
      %v5857 = vmax.f32 %v5780, 0.0
      %v5858 = vmax.f32 %v5782, 0.0
      %v5859 = vmax.f32 %v5784, 0.0
      %v5860 = vmax.f32 %v5788, 0.0
      %v5861 = vmax.f32 %v5790, 0.0
      %v5862 = vmax.f32 %v5792, 0.0
      %v5863 = vmax.f32 %v5794, 0.0
      %v5864 = vmax.f32 %v5798, 0.0
      %v5865 = vmax.f32 %v5800, 0.0
      %v5866 = vmax.f32 %v5802, 0.0
      %v5867 = vmax.f32 %v5804, 0.0
      %v5868 = vmax.f32 %v5808, 0.0
      %v5869 = vmax.f32 %v5810, 0.0
      %v5870 = vmax.f32 %v5812, 0.0
      %v5871 = vmax.f32 %v5814, 0.0
      %v5872 = vmax.f32 %v5818, 0.0
      %v5873 = vmax.f32 %v5820, 0.0
      %v5874 = vmax.f32 %v5822, 0.0
      %v5875 = vmax.f32 %v5824, 0.0
      %v5876 = vmax.f32 %v5828, 0.0
      %v5877 = vmax.f32 %v5830, 0.0
      %v5878 = vmax.f32 %v5832, 0.0
      %v5879 = vmax.f32 %v5834, 0.0
      %v5880 = vmax.f32 %v5838, 0.0
      %v5881 = vmax.f32 %v5840, 0.0
      %v5882 = vmax.f32 %v5842, 0.0
      %v5883 = vmax.f32 %v5844, 0.0
      %v5884 = vmax.f32 %v5848, 0.0
      %v5885 = vmax.f32 %v5850, 0.0
      %v5886 = vmax.f32 %v5852, 0.0
      %v5887 = vmax.f32 %v5854, 0.0
      %v5888 = vld [vmem:[%s1552] sm:$0xff]
      %v5889 = vld [vmem:[%s1552 + $0x8] sm:$0xff]
      %v5890 = vld [vmem:[%s1552 + $0x10] sm:$0xff]
      %v5891 = vld [vmem:[%s1552 + $0x18] sm:$0xff]
      %v5892 = vld [vmem:[%s1552 + $0x20] sm:$0xff]
      %v5893 = vld [vmem:[%s1552 + $0x28] sm:$0xff]
      %v5894 = vld [vmem:[%s1552 + $0x30] sm:$0xff]
      %v5895 = vld [vmem:[%s1552 + $0x38] sm:$0xff]
      %v5896 = vld [vmem:[%s1552 + $0x40] sm:$0xff]
      %v5897 = vld [vmem:[%s1552 + $0x48] sm:$0xff]
      %v5898 = vld [vmem:[%s1552 + $0x50] sm:$0xff]
      %v5899 = vld [vmem:[%s1552 + $0x58] sm:$0xff]
      %v5900 = vld [vmem:[%s1552 + $0x60] sm:$0xff]
      %v5901 = vld [vmem:[%s1552 + $0x68] sm:$0xff]
      %v5902 = vld [vmem:[%s1552 + $0x70] sm:$0xff]
      %v5903 = vld [vmem:[%s1552 + $0x78] sm:$0xff]
      %v5904 = vld [vmem:[%s1552 + $0x80] sm:$0xff]
      %v5905 = vld [vmem:[%s1552 + $0x88] sm:$0xff]
      %v5906 = vld [vmem:[%s1552 + $0x90] sm:$0xff]
      %v5907 = vld [vmem:[%s1552 + $0x98] sm:$0xff]
      %v5908 = vld [vmem:[%s1552 + $0xa0] sm:$0xff]
      %v5909 = vld [vmem:[%s1552 + $0xa8] sm:$0xff]
      %v5910 = vld [vmem:[%s1552 + $0xb0] sm:$0xff]
      %v5911 = vld [vmem:[%s1552 + $0xb8] sm:$0xff]
      %v5912 = vld [vmem:[%s1552 + $0xc0] sm:$0xff]
      %v5913 = vld [vmem:[%s1552 + $0xc8] sm:$0xff]
      %v5914 = vld [vmem:[%s1552 + $0xd0] sm:$0xff]
      %v5915 = vld [vmem:[%s1552 + $0xd8] sm:$0xff]
      %v5916 = vld [vmem:[%s1552 + $0xe0] sm:$0xff]
      %v5917 = vld [vmem:[%s1552 + $0xe8] sm:$0xff]
      %v5918 = vld [vmem:[%s1552 + $0xf0] sm:$0xff]
      %v5919 = vld [vmem:[%s1552 + $0xf8] sm:$0xff]
      %v5920 = vpack.c.bf16 %v5858, %v5856
      %v5921 = vpack.c.bf16 %v5859, %v5857
      %v5922 = vpack.c.bf16 %v5862, %v5860
      %v5923 = vpack.c.bf16 %v5863, %v5861
      %v5924 = vpack.c.bf16 %v5866, %v5864
      %v5925 = vpack.c.bf16 %v5867, %v5865
      %v5926 = vpack.c.bf16 %v5870, %v5868
      %v5927 = vpack.c.bf16 %v5871, %v5869
      %v5928 = vpack.c.bf16 %v5874, %v5872
      %v5929 = vpack.c.bf16 %v5875, %v5873
      %v5930 = vpack.c.bf16 %v5878, %v5876
      %v5931 = vpack.c.bf16 %v5879, %v5877
      %v5932 = vpack.c.bf16 %v5882, %v5880
      %v5933 = vpack.c.bf16 %v5883, %v5881
      %v5934 = vpack.c.bf16 %v5886, %v5884
      %v5935 = vpack.c.bf16 %v5887, %v5885
      %v5936 = vld [vmem:[%s1601] sm:$0x3]
      %v5938 = vlaneseq
      %v5939 = vshrl.u32 %v5938, 7
      %v5940 = vsub.s32 0, %v5939
      %v5941 = vrot.slane %v5936, %v5940
      %v5942 = vlaneseq
      %v5943 = vshrl.u32 %v5942, 7
      %v5944 = vsub.s32 1, %v5943
      %v5945 = vrot.slane %v5936, %v5944
      %v5980 = vunpack.c.l.b16 %v5888
      %v5981 = vunpack.c.h.b16 %v5888
      %v5982 = vunpack.c.l.b16 %v5889
      %v5983 = vunpack.c.h.b16 %v5889
      %v5984 = vunpack.c.l.b16 %v5890
      %v5985 = vunpack.c.h.b16 %v5890
      %v5986 = vunpack.c.l.b16 %v5891
      %v5987 = vunpack.c.h.b16 %v5891
      %v5988 = vunpack.c.l.b16 %v5892
      %v5989 = vunpack.c.h.b16 %v5892
      %v5990 = vunpack.c.l.b16 %v5893
      %v5991 = vunpack.c.h.b16 %v5893
      %v5992 = vunpack.c.l.b16 %v5894
      %v5993 = vunpack.c.h.b16 %v5894
      %v5994 = vunpack.c.l.b16 %v5895
      %v5995 = vunpack.c.h.b16 %v5895
      %v5996 = vunpack.c.l.b16 %v5896
      %v5997 = vunpack.c.h.b16 %v5896
      %v5998 = vunpack.c.l.b16 %v5897
      %v5999 = vunpack.c.h.b16 %v5897
      %v6000 = vunpack.c.l.b16 %v5898
      %v6001 = vunpack.c.h.b16 %v5898
      %v6002 = vunpack.c.l.b16 %v5899
      %v6003 = vunpack.c.h.b16 %v5899
      %v6004 = vunpack.c.l.b16 %v5900
      %v6005 = vunpack.c.h.b16 %v5900
      %v6006 = vunpack.c.l.b16 %v5901
      %v6007 = vunpack.c.h.b16 %v5901
      %v6008 = vunpack.c.l.b16 %v5902
      %v6009 = vunpack.c.h.b16 %v5902
      %v6010 = vunpack.c.l.b16 %v5903
      %v6011 = vunpack.c.h.b16 %v5903
      %v6012 = vunpack.c.l.b16 %v5904
      %v6013 = vunpack.c.h.b16 %v5904
      %v6014 = vunpack.c.l.b16 %v5905
      %v6015 = vunpack.c.h.b16 %v5905
      %v6016 = vunpack.c.l.b16 %v5906
      %v6017 = vunpack.c.h.b16 %v5906
      %v6018 = vunpack.c.l.b16 %v5907
      %v6019 = vunpack.c.h.b16 %v5907
      %v6020 = vunpack.c.l.b16 %v5908
      %v6021 = vunpack.c.h.b16 %v5908
      %v6022 = vunpack.c.l.b16 %v5909
      %v6023 = vunpack.c.h.b16 %v5909
      %v6024 = vunpack.c.l.b16 %v5910
      %v6025 = vunpack.c.h.b16 %v5910
      %v6026 = vunpack.c.l.b16 %v5911
      %v6027 = vunpack.c.h.b16 %v5911
      %v6028 = vunpack.c.l.b16 %v5912
      %v6029 = vunpack.c.h.b16 %v5912
      %v6030 = vunpack.c.l.b16 %v5913
      %v6031 = vunpack.c.h.b16 %v5913
      %v6032 = vunpack.c.l.b16 %v5914
      %v6033 = vunpack.c.h.b16 %v5914
      %v6034 = vunpack.c.l.b16 %v5915
      %v6035 = vunpack.c.h.b16 %v5915
      %v6036 = vunpack.c.l.b16 %v5916
      %v6037 = vunpack.c.h.b16 %v5916
      %v6038 = vunpack.c.l.b16 %v5917
      %v6039 = vunpack.c.h.b16 %v5917
      %v6040 = vunpack.c.l.b16 %v5918
      %v6041 = vunpack.c.h.b16 %v5918
      %v6042 = vunpack.c.l.b16 %v5919
      %v6043 = vunpack.c.h.b16 %v5919
      %v6044 = vpack.c.b16 %v5982, %v5980
      %v6045 = vpack.c.b16 %v5983, %v5981
      %v6046 = vpack.c.b16 %v5986, %v5984
      %v6047 = vpack.c.b16 %v5987, %v5985
      %v6048 = vpack.c.b16 %v5990, %v5988
      %v6049 = vpack.c.b16 %v5991, %v5989
      %v6050 = vpack.c.b16 %v5994, %v5992
      %v6051 = vpack.c.b16 %v5995, %v5993
      %v6052 = vpack.c.b16 %v5998, %v5996
      %v6053 = vpack.c.b16 %v5999, %v5997
      %v6054 = vpack.c.b16 %v6002, %v6000
      %v6055 = vpack.c.b16 %v6003, %v6001
      %v6056 = vpack.c.b16 %v6006, %v6004
      %v6057 = vpack.c.b16 %v6007, %v6005
      %v6058 = vpack.c.b16 %v6010, %v6008
      %v6059 = vpack.c.b16 %v6011, %v6009
      %v6060 = vpack.c.b16 %v6014, %v6012
      %v6061 = vpack.c.b16 %v6015, %v6013
      %v6062 = vpack.c.b16 %v6018, %v6016
      %v6063 = vpack.c.b16 %v6019, %v6017
      %v6064 = vpack.c.b16 %v6022, %v6020
      %v6065 = vpack.c.b16 %v6023, %v6021
      %v6066 = vpack.c.b16 %v6026, %v6024
      %v6067 = vpack.c.b16 %v6027, %v6025
      %v6068 = vpack.c.b16 %v6030, %v6028
      %v6069 = vpack.c.b16 %v6031, %v6029
      %v6070 = vpack.c.b16 %v6034, %v6032
      %v6071 = vpack.c.b16 %v6035, %v6033
      %v6072 = vpack.c.b16 %v6038, %v6036
      %v6073 = vpack.c.b16 %v6039, %v6037
      %v6074 = vpack.c.b16 %v6042, %v6040
      %v6075 = vpack.c.b16 %v6043, %v6041
      %6108 = vmatprep.subr.bf16.mxu0 %v6045
      %6109 = vmatpush1.bf16.msra.mxu0 %v6044
      %6110 = vmatprep.subr.bf16.mxu0 %v6047
      %6111 = vmatpush1.bf16.msra.mxu0 %v6046
      %6112 = vmatprep.subr.bf16.mxu0 %v6049
      %6113 = vmatpush1.bf16.msra.mxu0 %v6048
      %6114 = vmatprep.subr.bf16.mxu0 %v6051
      %6115 = vmatpush1.bf16.msra.mxu0 %v6050
      %6116 = vmatprep.subr.bf16.mxu0 %v6053
      %6117 = vmatpush1.bf16.msra.mxu0 %v6052
      %6118 = vmatprep.subr.bf16.mxu0 %v6055
      %6119 = vmatpush1.bf16.msra.mxu0 %v6054
      %6120 = vmatprep.subr.bf16.mxu0 %v6057
      %6121 = vmatpush1.bf16.msra.mxu0 %v6056
      %6122 = vmatprep.subr.bf16.mxu0 %v6059
      %6123 = vmatpush1.bf16.msra.mxu0 %v6058
      %6124 = vmatprep.subr.bf16.mxu0 %v6061
      %6125 = vmatpush1.bf16.msra.mxu0 %v6060
      %6126 = vmatprep.subr.bf16.mxu0 %v6063
      %6127 = vmatpush1.bf16.msra.mxu0 %v6062
      %6128 = vmatprep.subr.bf16.mxu0 %v6065
      %6129 = vmatpush1.bf16.msra.mxu0 %v6064
      %6130 = vmatprep.subr.bf16.mxu0 %v6067
      %6131 = vmatpush1.bf16.msra.mxu0 %v6066
      %6132 = vmatprep.subr.bf16.mxu0 %v6069
      %6133 = vmatpush1.bf16.msra.mxu0 %v6068
      %6134 = vmatprep.subr.bf16.mxu0 %v6071
      %6135 = vmatpush1.bf16.msra.mxu0 %v6070
      %6136 = vmatprep.subr.bf16.mxu0 %v6073
      %6137 = vmatpush1.bf16.msra.mxu0 %v6072
      %6138 = vmatprep.subr.bf16.mxu0 %v6075
      %6139 = vmatpush1.bf16.msra.mxu0 %v6074
      %6140 = vmatprep.mubr.bf16.mxu0 %v5921
      %6141 = vmatmul.mubr.bf16.gmra.mrb[0].mxu0 %v5920
      %v6142 = vpop.f32.mrb[0].mxu0
      %v6143 = vadd.f32 %v5941, %v6142
      %v6144 = vpop.f32.mrb[0].mxu0
      %v6145 = vadd.f32 %v5945, %v6144
      %v6146 = vpop.f32.mrb[0].mxu0
      %v6147 = vadd.f32 %v5941, %v6146
      %v6148 = vpop.f32.mrb[0].mxu0
      %v6149 = vadd.f32 %v5945, %v6148
      %6150 = vmatprep.mubr.bf16.mxu0 %v5923
      %6151 = vmatmul.mubr.bf16.gmra.mrb[0].mxu0 %v5922
      %v6152 = vpop.f32.mrb[0].mxu0
      %v6153 = vadd.f32 %v5941, %v6152
      %v6154 = vpop.f32.mrb[0].mxu0
      %v6155 = vadd.f32 %v5945, %v6154
      %v6156 = vpop.f32.mrb[0].mxu0
      %v6157 = vadd.f32 %v5941, %v6156
      %v6158 = vpop.f32.mrb[0].mxu0
      %v6159 = vadd.f32 %v5945, %v6158
      %6160 = vmatprep.mubr.bf16.mxu0 %v5925
      %6161 = vmatmul.mubr.bf16.gmra.mrb[0].mxu0 %v5924
      %v6162 = vpop.f32.mrb[0].mxu0
      %v6163 = vadd.f32 %v5941, %v6162
      %v6164 = vpop.f32.mrb[0].mxu0
      %v6165 = vadd.f32 %v5945, %v6164
      %v6166 = vpop.f32.mrb[0].mxu0
      %v6167 = vadd.f32 %v5941, %v6166
      %v6168 = vpop.f32.mrb[0].mxu0
      %v6169 = vadd.f32 %v5945, %v6168
      %6170 = vmatprep.mubr.bf16.mxu0 %v5927
      %6171 = vmatmul.mubr.bf16.gmra.mrb[0].mxu0 %v5926
      %v6172 = vpop.f32.mrb[0].mxu0
      %v6173 = vadd.f32 %v5941, %v6172
      %v6174 = vpop.f32.mrb[0].mxu0
      %v6175 = vadd.f32 %v5945, %v6174
      %v6176 = vpop.f32.mrb[0].mxu0
      %v6177 = vadd.f32 %v5941, %v6176
      %v6178 = vpop.f32.mrb[0].mxu0
      %v6179 = vadd.f32 %v5945, %v6178
      %6180 = vmatprep.mubr.bf16.mxu0 %v5929
      %6181 = vmatmul.mubr.bf16.gmra.mrb[0].mxu0 %v5928
      %v6182 = vpop.f32.mrb[0].mxu0
      %v6183 = vadd.f32 %v5941, %v6182
      %v6184 = vpop.f32.mrb[0].mxu0
      %v6185 = vadd.f32 %v5945, %v6184
      %v6186 = vpop.f32.mrb[0].mxu0
      %v6187 = vadd.f32 %v5941, %v6186
      %v6188 = vpop.f32.mrb[0].mxu0
      %v6189 = vadd.f32 %v5945, %v6188
      %6190 = vmatprep.mubr.bf16.mxu0 %v5931
      %6191 = vmatmul.mubr.bf16.gmra.mrb[0].mxu0 %v5930
      %v6192 = vpop.f32.mrb[0].mxu0
      %v6193 = vadd.f32 %v5941, %v6192
      %v6194 = vpop.f32.mrb[0].mxu0
      %v6195 = vadd.f32 %v5945, %v6194
      %v6196 = vpop.f32.mrb[0].mxu0
      %v6197 = vadd.f32 %v5941, %v6196
      %v6198 = vpop.f32.mrb[0].mxu0
      %v6199 = vadd.f32 %v5945, %v6198
      %6200 = vmatprep.mubr.bf16.mxu0 %v5933
      %6201 = vmatmul.mubr.bf16.gmra.mrb[0].mxu0 %v5932
      %v6202 = vpop.f32.mrb[0].mxu0
      %v6203 = vadd.f32 %v5941, %v6202
      %v6204 = vpop.f32.mrb[0].mxu0
      %v6205 = vadd.f32 %v5945, %v6204
      %v6206 = vpop.f32.mrb[0].mxu0
      %v6207 = vadd.f32 %v5941, %v6206
      %v6208 = vpop.f32.mrb[0].mxu0
      %v6209 = vadd.f32 %v5945, %v6208
      %6210 = vmatprep.mubr.bf16.mxu0 %v5935
      %6211 = vmatmul.mubr.bf16.gmra.mrb[0].mxu0 %v5934
      %v6212 = vpop.f32.mrb[0].mxu0
      %v6213 = vadd.f32 %v5941, %v6212
      %v6214 = vpop.f32.mrb[0].mxu0
      %v6215 = vadd.f32 %v5945, %v6214
      %v6216 = vpop.f32.mrb[0].mxu0
      %v6217 = vadd.f32 %v5941, %v6216
      %v6218 = vpop.f32.mrb[0].mxu0
      %v6219 = vadd.f32 %v5945, %v6218
      %6220 = vdwg.mxu0
      %v6221 = vmax.f32 %v6143, 0.0
      %v6222 = vmax.f32 %v6145, 0.0
      %v6223 = vmax.f32 %v6147, 0.0
      %v6224 = vmax.f32 %v6149, 0.0
      %v6225 = vmax.f32 %v6153, 0.0
      %v6226 = vmax.f32 %v6155, 0.0
      %v6227 = vmax.f32 %v6157, 0.0
      %v6228 = vmax.f32 %v6159, 0.0
      %v6229 = vmax.f32 %v6163, 0.0
      %v6230 = vmax.f32 %v6165, 0.0
      %v6231 = vmax.f32 %v6167, 0.0
      %v6232 = vmax.f32 %v6169, 0.0
      %v6233 = vmax.f32 %v6173, 0.0
      %v6234 = vmax.f32 %v6175, 0.0
      %v6235 = vmax.f32 %v6177, 0.0
      %v6236 = vmax.f32 %v6179, 0.0
      %v6237 = vmax.f32 %v6183, 0.0
      %v6238 = vmax.f32 %v6185, 0.0
      %v6239 = vmax.f32 %v6187, 0.0
      %v6240 = vmax.f32 %v6189, 0.0
      %v6241 = vmax.f32 %v6193, 0.0
      %v6242 = vmax.f32 %v6195, 0.0
      %v6243 = vmax.f32 %v6197, 0.0
      %v6244 = vmax.f32 %v6199, 0.0
      %v6245 = vmax.f32 %v6203, 0.0
      %v6246 = vmax.f32 %v6205, 0.0
      %v6247 = vmax.f32 %v6207, 0.0
      %v6248 = vmax.f32 %v6209, 0.0
      %v6249 = vmax.f32 %v6213, 0.0
      %v6250 = vmax.f32 %v6215, 0.0
      %v6251 = vmax.f32 %v6217, 0.0
      %v6252 = vmax.f32 %v6219, 0.0
      %v6253 = vld [vmem:[%s1919] sm:$0xff]
      %v6254 = vld [vmem:[%s1919 + $0x8] sm:$0xff]
      %v6255 = vld [vmem:[%s1919 + $0x10] sm:$0xff]
      %v6256 = vld [vmem:[%s1919 + $0x18] sm:$0xff]
      %v6257 = vld [vmem:[%s1919 + $0x20] sm:$0xff]
      %v6258 = vld [vmem:[%s1919 + $0x28] sm:$0xff]
      %v6259 = vld [vmem:[%s1919 + $0x30] sm:$0xff]
      %v6260 = vld [vmem:[%s1919 + $0x38] sm:$0xff]
      %v6261 = vld [vmem:[%s1919 + $0x40] sm:$0xff]
      %v6262 = vld [vmem:[%s1919 + $0x48] sm:$0xff]
      %v6263 = vld [vmem:[%s1919 + $0x50] sm:$0xff]
      %v6264 = vld [vmem:[%s1919 + $0x58] sm:$0xff]
      %v6265 = vld [vmem:[%s1919 + $0x60] sm:$0xff]
      %v6266 = vld [vmem:[%s1919 + $0x68] sm:$0xff]
      %v6267 = vld [vmem:[%s1919 + $0x70] sm:$0xff]
      %v6268 = vld [vmem:[%s1919 + $0x78] sm:$0xff]
      %v6269 = vld [vmem:[%s1919 + $0x80] sm:$0xff]
      %v6270 = vld [vmem:[%s1919 + $0x88] sm:$0xff]
      %v6271 = vld [vmem:[%s1919 + $0x90] sm:$0xff]
      %v6272 = vld [vmem:[%s1919 + $0x98] sm:$0xff]
      %v6273 = vld [vmem:[%s1919 + $0xa0] sm:$0xff]
      %v6274 = vld [vmem:[%s1919 + $0xa8] sm:$0xff]
      %v6275 = vld [vmem:[%s1919 + $0xb0] sm:$0xff]
      %v6276 = vld [vmem:[%s1919 + $0xb8] sm:$0xff]
      %v6277 = vld [vmem:[%s1919 + $0xc0] sm:$0xff]
      %v6278 = vld [vmem:[%s1919 + $0xc8] sm:$0xff]
      %v6279 = vld [vmem:[%s1919 + $0xd0] sm:$0xff]
      %v6280 = vld [vmem:[%s1919 + $0xd8] sm:$0xff]
      %v6281 = vld [vmem:[%s1919 + $0xe0] sm:$0xff]
      %v6282 = vld [vmem:[%s1919 + $0xe8] sm:$0xff]
      %v6283 = vld [vmem:[%s1919 + $0xf0] sm:$0xff]
      %v6284 = vld [vmem:[%s1919 + $0xf8] sm:$0xff]
      %v6285 = vpack.c.bf16 %v6223, %v6221
      %v6286 = vpack.c.bf16 %v6224, %v6222
      %v6287 = vpack.c.bf16 %v6227, %v6225
      %v6288 = vpack.c.bf16 %v6228, %v6226
      %v6289 = vpack.c.bf16 %v6231, %v6229
      %v6290 = vpack.c.bf16 %v6232, %v6230
      %v6291 = vpack.c.bf16 %v6235, %v6233
      %v6292 = vpack.c.bf16 %v6236, %v6234
      %v6293 = vpack.c.bf16 %v6239, %v6237
      %v6294 = vpack.c.bf16 %v6240, %v6238
      %v6295 = vpack.c.bf16 %v6243, %v6241
      %v6296 = vpack.c.bf16 %v6244, %v6242
      %v6297 = vpack.c.bf16 %v6247, %v6245
      %v6298 = vpack.c.bf16 %v6248, %v6246
      %v6299 = vpack.c.bf16 %v6251, %v6249
      %v6300 = vpack.c.bf16 %v6252, %v6250
      %v6301 = vld [vmem:[%s1968] sm:$0x3]
      %v6303 = vlaneseq
      %v6304 = vshrl.u32 %v6303, 7
      %v6305 = vsub.s32 0, %v6304
      %v6306 = vrot.slane %v6301, %v6305
      %v6307 = vlaneseq
      %v6308 = vshrl.u32 %v6307, 7
      %v6309 = vsub.s32 1, %v6308
      %v6310 = vrot.slane %v6301, %v6309
      %v6345 = vunpack.c.l.b16 %v6253
      %v6346 = vunpack.c.h.b16 %v6253
      %v6347 = vunpack.c.l.b16 %v6254
      %v6348 = vunpack.c.h.b16 %v6254
      %v6349 = vunpack.c.l.b16 %v6255
      %v6350 = vunpack.c.h.b16 %v6255
      %v6351 = vunpack.c.l.b16 %v6256
      %v6352 = vunpack.c.h.b16 %v6256
      %v6353 = vunpack.c.l.b16 %v6257
      %v6354 = vunpack.c.h.b16 %v6257
      %v6355 = vunpack.c.l.b16 %v6258
      %v6356 = vunpack.c.h.b16 %v6258
      %v6357 = vunpack.c.l.b16 %v6259
      %v6358 = vunpack.c.h.b16 %v6259
      %v6359 = vunpack.c.l.b16 %v6260
      %v6360 = vunpack.c.h.b16 %v6260
      %v6361 = vunpack.c.l.b16 %v6261
      %v6362 = vunpack.c.h.b16 %v6261
      %v6363 = vunpack.c.l.b16 %v6262
      %v6364 = vunpack.c.h.b16 %v6262
      %v6365 = vunpack.c.l.b16 %v6263
      %v6366 = vunpack.c.h.b16 %v6263
      %v6367 = vunpack.c.l.b16 %v6264
      %v6368 = vunpack.c.h.b16 %v6264
      %v6369 = vunpack.c.l.b16 %v6265
      %v6370 = vunpack.c.h.b16 %v6265
      %v6371 = vunpack.c.l.b16 %v6266
      %v6372 = vunpack.c.h.b16 %v6266
      %v6373 = vunpack.c.l.b16 %v6267
      %v6374 = vunpack.c.h.b16 %v6267
      %v6375 = vunpack.c.l.b16 %v6268
      %v6376 = vunpack.c.h.b16 %v6268
      %v6377 = vunpack.c.l.b16 %v6269
      %v6378 = vunpack.c.h.b16 %v6269
      %v6379 = vunpack.c.l.b16 %v6270
      %v6380 = vunpack.c.h.b16 %v6270
      %v6381 = vunpack.c.l.b16 %v6271
      %v6382 = vunpack.c.h.b16 %v6271
      %v6383 = vunpack.c.l.b16 %v6272
      %v6384 = vunpack.c.h.b16 %v6272
      %v6385 = vunpack.c.l.b16 %v6273
      %v6386 = vunpack.c.h.b16 %v6273
      %v6387 = vunpack.c.l.b16 %v6274
      %v6388 = vunpack.c.h.b16 %v6274
      %v6389 = vunpack.c.l.b16 %v6275
      %v6390 = vunpack.c.h.b16 %v6275
      %v6391 = vunpack.c.l.b16 %v6276
      %v6392 = vunpack.c.h.b16 %v6276
      %v6393 = vunpack.c.l.b16 %v6277
      %v6394 = vunpack.c.h.b16 %v6277
      %v6395 = vunpack.c.l.b16 %v6278
      %v6396 = vunpack.c.h.b16 %v6278
      %v6397 = vunpack.c.l.b16 %v6279
      %v6398 = vunpack.c.h.b16 %v6279
      %v6399 = vunpack.c.l.b16 %v6280
      %v6400 = vunpack.c.h.b16 %v6280
      %v6401 = vunpack.c.l.b16 %v6281
      %v6402 = vunpack.c.h.b16 %v6281
      %v6403 = vunpack.c.l.b16 %v6282
      %v6404 = vunpack.c.h.b16 %v6282
      %v6405 = vunpack.c.l.b16 %v6283
      %v6406 = vunpack.c.h.b16 %v6283
      %v6407 = vunpack.c.l.b16 %v6284
      %v6408 = vunpack.c.h.b16 %v6284
      %v6409 = vpack.c.b16 %v6347, %v6345
      %v6410 = vpack.c.b16 %v6348, %v6346
      %v6411 = vpack.c.b16 %v6351, %v6349
      %v6412 = vpack.c.b16 %v6352, %v6350
      %v6413 = vpack.c.b16 %v6355, %v6353
      %v6414 = vpack.c.b16 %v6356, %v6354
      %v6415 = vpack.c.b16 %v6359, %v6357
      %v6416 = vpack.c.b16 %v6360, %v6358
      %v6417 = vpack.c.b16 %v6363, %v6361
      %v6418 = vpack.c.b16 %v6364, %v6362
      %v6419 = vpack.c.b16 %v6367, %v6365
      %v6420 = vpack.c.b16 %v6368, %v6366
      %v6421 = vpack.c.b16 %v6371, %v6369
      %v6422 = vpack.c.b16 %v6372, %v6370
      %v6423 = vpack.c.b16 %v6375, %v6373
      %v6424 = vpack.c.b16 %v6376, %v6374
      %v6425 = vpack.c.b16 %v6379, %v6377
      %v6426 = vpack.c.b16 %v6380, %v6378
      %v6427 = vpack.c.b16 %v6383, %v6381
      %v6428 = vpack.c.b16 %v6384, %v6382
      %v6429 = vpack.c.b16 %v6387, %v6385
      %v6430 = vpack.c.b16 %v6388, %v6386
      %v6431 = vpack.c.b16 %v6391, %v6389
      %v6432 = vpack.c.b16 %v6392, %v6390
      %v6433 = vpack.c.b16 %v6395, %v6393
      %v6434 = vpack.c.b16 %v6396, %v6394
      %v6435 = vpack.c.b16 %v6399, %v6397
      %v6436 = vpack.c.b16 %v6400, %v6398
      %v6437 = vpack.c.b16 %v6403, %v6401
      %v6438 = vpack.c.b16 %v6404, %v6402
      %v6439 = vpack.c.b16 %v6407, %v6405
      %v6440 = vpack.c.b16 %v6408, %v6406
      %6473 = vmatprep.subr.bf16.mxu0 %v6410
      %6474 = vmatpush1.bf16.msra.mxu0 %v6409
      %6475 = vmatprep.subr.bf16.mxu0 %v6412
      %6476 = vmatpush1.bf16.msra.mxu0 %v6411
      %6477 = vmatprep.subr.bf16.mxu0 %v6414
      %6478 = vmatpush1.bf16.msra.mxu0 %v6413
      %6479 = vmatprep.subr.bf16.mxu0 %v6416
      %6480 = vmatpush1.bf16.msra.mxu0 %v6415
      %6481 = vmatprep.subr.bf16.mxu0 %v6418
      %6482 = vmatpush1.bf16.msra.mxu0 %v6417
      %6483 = vmatprep.subr.bf16.mxu0 %v6420
      %6484 = vmatpush1.bf16.msra.mxu0 %v6419
      %6485 = vmatprep.subr.bf16.mxu0 %v6422
      %6486 = vmatpush1.bf16.msra.mxu0 %v6421
      %6487 = vmatprep.subr.bf16.mxu0 %v6424
      %6488 = vmatpush1.bf16.msra.mxu0 %v6423
      %6489 = vmatprep.subr.bf16.mxu0 %v6426
      %6490 = vmatpush1.bf16.msra.mxu0 %v6425
      %6491 = vmatprep.subr.bf16.mxu0 %v6428
      %6492 = vmatpush1.bf16.msra.mxu0 %v6427
      %6493 = vmatprep.subr.bf16.mxu0 %v6430
      %6494 = vmatpush1.bf16.msra.mxu0 %v6429
      %6495 = vmatprep.subr.bf16.mxu0 %v6432
      %6496 = vmatpush1.bf16.msra.mxu0 %v6431
      %6497 = vmatprep.subr.bf16.mxu0 %v6434
      %6498 = vmatpush1.bf16.msra.mxu0 %v6433
      %6499 = vmatprep.subr.bf16.mxu0 %v6436
      %6500 = vmatpush1.bf16.msra.mxu0 %v6435
      %6501 = vmatprep.subr.bf16.mxu0 %v6438
      %6502 = vmatpush1.bf16.msra.mxu0 %v6437
      %6503 = vmatprep.subr.bf16.mxu0 %v6440
      %6504 = vmatpush1.bf16.msra.mxu0 %v6439
      %6505 = vmatprep.mubr.bf16.mxu0 %v6286
      %6506 = vmatmul.mubr.bf16.gmra.mrb[0].mxu0 %v6285
      %v6507 = vpop.f32.mrb[0].mxu0
      %v6508 = vadd.f32 %v6306, %v6507
      %v6509 = vpop.f32.mrb[0].mxu0
      %v6510 = vadd.f32 %v6310, %v6509
      %v6511 = vpop.f32.mrb[0].mxu0
      %v6512 = vadd.f32 %v6306, %v6511
      %v6513 = vpop.f32.mrb[0].mxu0
      %v6514 = vadd.f32 %v6310, %v6513
      %6515 = vmatprep.mubr.bf16.mxu0 %v6288
      %6516 = vmatmul.mubr.bf16.gmra.mrb[0].mxu0 %v6287
      %v6517 = vpop.f32.mrb[0].mxu0
      %v6518 = vadd.f32 %v6306, %v6517
      %v6519 = vpop.f32.mrb[0].mxu0
      %v6520 = vadd.f32 %v6310, %v6519
      %v6521 = vpop.f32.mrb[0].mxu0
      %v6522 = vadd.f32 %v6306, %v6521
      %v6523 = vpop.f32.mrb[0].mxu0
      %v6524 = vadd.f32 %v6310, %v6523
      %6525 = vmatprep.mubr.bf16.mxu0 %v6290
      %6526 = vmatmul.mubr.bf16.gmra.mrb[0].mxu0 %v6289
      %v6527 = vpop.f32.mrb[0].mxu0
      %v6528 = vadd.f32 %v6306, %v6527
      %v6529 = vpop.f32.mrb[0].mxu0
      %v6530 = vadd.f32 %v6310, %v6529
      %v6531 = vpop.f32.mrb[0].mxu0
      %v6532 = vadd.f32 %v6306, %v6531
      %v6533 = vpop.f32.mrb[0].mxu0
      %v6534 = vadd.f32 %v6310, %v6533
      %6535 = vmatprep.mubr.bf16.mxu0 %v6292
      %6536 = vmatmul.mubr.bf16.gmra.mrb[0].mxu0 %v6291
      %v6537 = vpop.f32.mrb[0].mxu0
      %v6538 = vadd.f32 %v6306, %v6537
      %v6539 = vpop.f32.mrb[0].mxu0
      %v6540 = vadd.f32 %v6310, %v6539
      %v6541 = vpop.f32.mrb[0].mxu0
      %v6542 = vadd.f32 %v6306, %v6541
      %v6543 = vpop.f32.mrb[0].mxu0
      %v6544 = vadd.f32 %v6310, %v6543
      %6545 = vmatprep.mubr.bf16.mxu0 %v6294
      %6546 = vmatmul.mubr.bf16.gmra.mrb[0].mxu0 %v6293
      %v6547 = vpop.f32.mrb[0].mxu0
      %v6548 = vadd.f32 %v6306, %v6547
      %v6549 = vpop.f32.mrb[0].mxu0
      %v6550 = vadd.f32 %v6310, %v6549
      %v6551 = vpop.f32.mrb[0].mxu0
      %v6552 = vadd.f32 %v6306, %v6551
      %v6553 = vpop.f32.mrb[0].mxu0
      %v6554 = vadd.f32 %v6310, %v6553
      %6555 = vmatprep.mubr.bf16.mxu0 %v6296
      %6556 = vmatmul.mubr.bf16.gmra.mrb[0].mxu0 %v6295
      %v6557 = vpop.f32.mrb[0].mxu0
      %v6558 = vadd.f32 %v6306, %v6557
      %v6559 = vpop.f32.mrb[0].mxu0
      %v6560 = vadd.f32 %v6310, %v6559
      %v6561 = vpop.f32.mrb[0].mxu0
      %v6562 = vadd.f32 %v6306, %v6561
      %v6563 = vpop.f32.mrb[0].mxu0
      %v6564 = vadd.f32 %v6310, %v6563
      %6565 = vmatprep.mubr.bf16.mxu0 %v6298
      %6566 = vmatmul.mubr.bf16.gmra.mrb[0].mxu0 %v6297
      %v6567 = vpop.f32.mrb[0].mxu0
      %v6568 = vadd.f32 %v6306, %v6567
      %v6569 = vpop.f32.mrb[0].mxu0
      %v6570 = vadd.f32 %v6310, %v6569
      %v6571 = vpop.f32.mrb[0].mxu0
      %v6572 = vadd.f32 %v6306, %v6571
      %v6573 = vpop.f32.mrb[0].mxu0
      %v6574 = vadd.f32 %v6310, %v6573
      %6575 = vmatprep.mubr.bf16.mxu0 %v6300
      %6576 = vmatmul.mubr.bf16.gmra.mrb[0].mxu0 %v6299
      %v6577 = vpop.f32.mrb[0].mxu0
      %v6578 = vadd.f32 %v6306, %v6577
      %v6579 = vpop.f32.mrb[0].mxu0
      %v6580 = vadd.f32 %v6310, %v6579
      %v6581 = vpop.f32.mrb[0].mxu0
      %v6582 = vadd.f32 %v6306, %v6581
      %v6583 = vpop.f32.mrb[0].mxu0
      %v6584 = vadd.f32 %v6310, %v6583
      %6585 = vdwg.mxu0
      %v6586 = vmax.f32 %v6508, 0.0
      %v6587 = vmax.f32 %v6510, 0.0
      %v6588 = vmax.f32 %v6512, 0.0
      %v6589 = vmax.f32 %v6514, 0.0
      %v6590 = vmax.f32 %v6518, 0.0
      %v6591 = vmax.f32 %v6520, 0.0
      %v6592 = vmax.f32 %v6522, 0.0
      %v6593 = vmax.f32 %v6524, 0.0
      %v6594 = vmax.f32 %v6528, 0.0
      %v6595 = vmax.f32 %v6530, 0.0
      %v6596 = vmax.f32 %v6532, 0.0
      %v6597 = vmax.f32 %v6534, 0.0
      %v6598 = vmax.f32 %v6538, 0.0
      %v6599 = vmax.f32 %v6540, 0.0
      %v6600 = vmax.f32 %v6542, 0.0
      %v6601 = vmax.f32 %v6544, 0.0
      %v6602 = vmax.f32 %v6548, 0.0
      %v6603 = vmax.f32 %v6550, 0.0
      %v6604 = vmax.f32 %v6552, 0.0
      %v6605 = vmax.f32 %v6554, 0.0
      %v6606 = vmax.f32 %v6558, 0.0
      %v6607 = vmax.f32 %v6560, 0.0
      %v6608 = vmax.f32 %v6562, 0.0
      %v6609 = vmax.f32 %v6564, 0.0
      %v6610 = vmax.f32 %v6568, 0.0
      %v6611 = vmax.f32 %v6570, 0.0
      %v6612 = vmax.f32 %v6572, 0.0
      %v6613 = vmax.f32 %v6574, 0.0
      %v6614 = vmax.f32 %v6578, 0.0
      %v6615 = vmax.f32 %v6580, 0.0
      %v6616 = vmax.f32 %v6582, 0.0
      %v6617 = vmax.f32 %v6584, 0.0
      %v6618 = vld [vmem:[%s2286] sm:$0xff]
      %v6619 = vld [vmem:[%s2286 + $0x8] sm:$0xff]
      %v6620 = vld [vmem:[%s2286 + $0x10] sm:$0xff]
      %v6621 = vld [vmem:[%s2286 + $0x18] sm:$0xff]
      %v6622 = vld [vmem:[%s2286 + $0x20] sm:$0xff]
      %v6623 = vld [vmem:[%s2286 + $0x28] sm:$0xff]
      %v6624 = vld [vmem:[%s2286 + $0x30] sm:$0xff]
      %v6625 = vld [vmem:[%s2286 + $0x38] sm:$0xff]
      %v6626 = vld [vmem:[%s2286 + $0x40] sm:$0xff]
      %v6627 = vld [vmem:[%s2286 + $0x48] sm:$0xff]
      %v6628 = vld [vmem:[%s2286 + $0x50] sm:$0xff]
      %v6629 = vld [vmem:[%s2286 + $0x58] sm:$0xff]
      %v6630 = vld [vmem:[%s2286 + $0x60] sm:$0xff]
      %v6631 = vld [vmem:[%s2286 + $0x68] sm:$0xff]
      %v6632 = vld [vmem:[%s2286 + $0x70] sm:$0xff]
      %v6633 = vld [vmem:[%s2286 + $0x78] sm:$0xff]
      %v6634 = vld [vmem:[%s2286 + $0x80] sm:$0xff]
      %v6635 = vld [vmem:[%s2286 + $0x88] sm:$0xff]
      %v6636 = vld [vmem:[%s2286 + $0x90] sm:$0xff]
      %v6637 = vld [vmem:[%s2286 + $0x98] sm:$0xff]
      %v6638 = vld [vmem:[%s2286 + $0xa0] sm:$0xff]
      %v6639 = vld [vmem:[%s2286 + $0xa8] sm:$0xff]
      %v6640 = vld [vmem:[%s2286 + $0xb0] sm:$0xff]
      %v6641 = vld [vmem:[%s2286 + $0xb8] sm:$0xff]
      %v6642 = vld [vmem:[%s2286 + $0xc0] sm:$0xff]
      %v6643 = vld [vmem:[%s2286 + $0xc8] sm:$0xff]
      %v6644 = vld [vmem:[%s2286 + $0xd0] sm:$0xff]
      %v6645 = vld [vmem:[%s2286 + $0xd8] sm:$0xff]
      %v6646 = vld [vmem:[%s2286 + $0xe0] sm:$0xff]
      %v6647 = vld [vmem:[%s2286 + $0xe8] sm:$0xff]
      %v6648 = vld [vmem:[%s2286 + $0xf0] sm:$0xff]
      %v6649 = vld [vmem:[%s2286 + $0xf8] sm:$0xff]
      %v6650 = vpack.c.bf16 %v6588, %v6586
      %v6651 = vpack.c.bf16 %v6589, %v6587
      %v6652 = vpack.c.bf16 %v6592, %v6590
      %v6653 = vpack.c.bf16 %v6593, %v6591
      %v6654 = vpack.c.bf16 %v6596, %v6594
      %v6655 = vpack.c.bf16 %v6597, %v6595
      %v6656 = vpack.c.bf16 %v6600, %v6598
      %v6657 = vpack.c.bf16 %v6601, %v6599
      %v6658 = vpack.c.bf16 %v6604, %v6602
      %v6659 = vpack.c.bf16 %v6605, %v6603
      %v6660 = vpack.c.bf16 %v6608, %v6606
      %v6661 = vpack.c.bf16 %v6609, %v6607
      %v6662 = vpack.c.bf16 %v6612, %v6610
      %v6663 = vpack.c.bf16 %v6613, %v6611
      %v6664 = vpack.c.bf16 %v6616, %v6614
      %v6665 = vpack.c.bf16 %v6617, %v6615
      %v6698 = vunpack.c.l.b16 %v6618
      %v6699 = vunpack.c.h.b16 %v6618
      %v6700 = vunpack.c.l.b16 %v6619
      %v6701 = vunpack.c.h.b16 %v6619
      %v6702 = vunpack.c.l.b16 %v6620
      %v6703 = vunpack.c.h.b16 %v6620
      %v6704 = vunpack.c.l.b16 %v6621
      %v6705 = vunpack.c.h.b16 %v6621
      %v6706 = vunpack.c.l.b16 %v6622
      %v6707 = vunpack.c.h.b16 %v6622
      %v6708 = vunpack.c.l.b16 %v6623
      %v6709 = vunpack.c.h.b16 %v6623
      %v6710 = vunpack.c.l.b16 %v6624
      %v6711 = vunpack.c.h.b16 %v6624
      %v6712 = vunpack.c.l.b16 %v6625
      %v6713 = vunpack.c.h.b16 %v6625
      %v6714 = vunpack.c.l.b16 %v6626
      %v6715 = vunpack.c.h.b16 %v6626
      %v6716 = vunpack.c.l.b16 %v6627
      %v6717 = vunpack.c.h.b16 %v6627
      %v6718 = vunpack.c.l.b16 %v6628
      %v6719 = vunpack.c.h.b16 %v6628
      %v6720 = vunpack.c.l.b16 %v6629
      %v6721 = vunpack.c.h.b16 %v6629
      %v6722 = vunpack.c.l.b16 %v6630
      %v6723 = vunpack.c.h.b16 %v6630
      %v6724 = vunpack.c.l.b16 %v6631
      %v6725 = vunpack.c.h.b16 %v6631
      %v6726 = vunpack.c.l.b16 %v6632
      %v6727 = vunpack.c.h.b16 %v6632
      %v6728 = vunpack.c.l.b16 %v6633
      %v6729 = vunpack.c.h.b16 %v6633
      %v6730 = vunpack.c.l.b16 %v6634
      %v6731 = vunpack.c.h.b16 %v6634
      %v6732 = vunpack.c.l.b16 %v6635
      %v6733 = vunpack.c.h.b16 %v6635
      %v6734 = vunpack.c.l.b16 %v6636
      %v6735 = vunpack.c.h.b16 %v6636
      %v6736 = vunpack.c.l.b16 %v6637
      %v6737 = vunpack.c.h.b16 %v6637
      %v6738 = vunpack.c.l.b16 %v6638
      %v6739 = vunpack.c.h.b16 %v6638
      %v6740 = vunpack.c.l.b16 %v6639
      %v6741 = vunpack.c.h.b16 %v6639
      %v6742 = vunpack.c.l.b16 %v6640
      %v6743 = vunpack.c.h.b16 %v6640
      %v6744 = vunpack.c.l.b16 %v6641
      %v6745 = vunpack.c.h.b16 %v6641
      %v6746 = vunpack.c.l.b16 %v6642
      %v6747 = vunpack.c.h.b16 %v6642
      %v6748 = vunpack.c.l.b16 %v6643
      %v6749 = vunpack.c.h.b16 %v6643
      %v6750 = vunpack.c.l.b16 %v6644
      %v6751 = vunpack.c.h.b16 %v6644
      %v6752 = vunpack.c.l.b16 %v6645
      %v6753 = vunpack.c.h.b16 %v6645
      %v6754 = vunpack.c.l.b16 %v6646
      %v6755 = vunpack.c.h.b16 %v6646
      %v6756 = vunpack.c.l.b16 %v6647
      %v6757 = vunpack.c.h.b16 %v6647
      %v6758 = vunpack.c.l.b16 %v6648
      %v6759 = vunpack.c.h.b16 %v6648
      %v6760 = vunpack.c.l.b16 %v6649
      %v6761 = vunpack.c.h.b16 %v6649
      %v6762 = vpack.c.b16 %v6700, %v6698
      %v6763 = vpack.c.b16 %v6701, %v6699
      %v6764 = vpack.c.b16 %v6704, %v6702
      %v6765 = vpack.c.b16 %v6705, %v6703
      %v6766 = vpack.c.b16 %v6708, %v6706
      %v6767 = vpack.c.b16 %v6709, %v6707
      %v6768 = vpack.c.b16 %v6712, %v6710
      %v6769 = vpack.c.b16 %v6713, %v6711
      %v6770 = vpack.c.b16 %v6716, %v6714
      %v6771 = vpack.c.b16 %v6717, %v6715
      %v6772 = vpack.c.b16 %v6720, %v6718
      %v6773 = vpack.c.b16 %v6721, %v6719
      %v6774 = vpack.c.b16 %v6724, %v6722
      %v6775 = vpack.c.b16 %v6725, %v6723
      %v6776 = vpack.c.b16 %v6728, %v6726
      %v6777 = vpack.c.b16 %v6729, %v6727
      %v6778 = vpack.c.b16 %v6732, %v6730
      %v6779 = vpack.c.b16 %v6733, %v6731
      %v6780 = vpack.c.b16 %v6736, %v6734
      %v6781 = vpack.c.b16 %v6737, %v6735
      %v6782 = vpack.c.b16 %v6740, %v6738
      %v6783 = vpack.c.b16 %v6741, %v6739
      %v6784 = vpack.c.b16 %v6744, %v6742
      %v6785 = vpack.c.b16 %v6745, %v6743
      %v6786 = vpack.c.b16 %v6748, %v6746
      %v6787 = vpack.c.b16 %v6749, %v6747
      %v6788 = vpack.c.b16 %v6752, %v6750
      %v6789 = vpack.c.b16 %v6753, %v6751
      %v6790 = vpack.c.b16 %v6756, %v6754
      %v6791 = vpack.c.b16 %v6757, %v6755
      %v6792 = vpack.c.b16 %v6760, %v6758
      %v6793 = vpack.c.b16 %v6761, %v6759
      %6826 = vmatprep.subr.bf16.mxu0 %v6763
      %6827 = vmatpush1.bf16.msra.mxu0 %v6762
      %6828 = vmatprep.subr.bf16.mxu0 %v6765
      %6829 = vmatpush1.bf16.msra.mxu0 %v6764
      %6830 = vmatprep.subr.bf16.mxu0 %v6767
      %6831 = vmatpush1.bf16.msra.mxu0 %v6766
      %6832 = vmatprep.subr.bf16.mxu0 %v6769
      %6833 = vmatpush1.bf16.msra.mxu0 %v6768
      %6834 = vmatprep.subr.bf16.mxu0 %v6771
      %6835 = vmatpush1.bf16.msra.mxu0 %v6770
      %6836 = vmatprep.subr.bf16.mxu0 %v6773
      %6837 = vmatpush1.bf16.msra.mxu0 %v6772
      %6838 = vmatprep.subr.bf16.mxu0 %v6775
      %6839 = vmatpush1.bf16.msra.mxu0 %v6774
      %6840 = vmatprep.subr.bf16.mxu0 %v6777
      %6841 = vmatpush1.bf16.msra.mxu0 %v6776
      %6842 = vmatprep.subr.bf16.mxu0 %v6779
      %6843 = vmatpush1.bf16.msra.mxu0 %v6778
      %6844 = vmatprep.subr.bf16.mxu0 %v6781
      %6845 = vmatpush1.bf16.msra.mxu0 %v6780
      %6846 = vmatprep.subr.bf16.mxu0 %v6783
      %6847 = vmatpush1.bf16.msra.mxu0 %v6782
      %6848 = vmatprep.subr.bf16.mxu0 %v6785
      %6849 = vmatpush1.bf16.msra.mxu0 %v6784
      %6850 = vmatprep.subr.bf16.mxu0 %v6787
      %6851 = vmatpush1.bf16.msra.mxu0 %v6786
      %6852 = vmatprep.subr.bf16.mxu0 %v6789
      %6853 = vmatpush1.bf16.msra.mxu0 %v6788
      %6854 = vmatprep.subr.bf16.mxu0 %v6791
      %6855 = vmatpush1.bf16.msra.mxu0 %v6790
      %6856 = vmatprep.subr.bf16.mxu0 %v6793
      %6857 = vmatpush1.bf16.msra.mxu0 %v6792
      %6858 = vmatprep.mubr.bf16.mxu0 %v6651
      %6859 = vmatmul.mubr.bf16.gmra.mrb[0].mxu0 %v6650
      %v6860 = vpop.f32.mrb[0].mxu0
      %v6861 = vadd.f32 0.0, %v6860
      %v6862 = vpop.f32.mrb[0].mxu0
      %v6863 = vadd.f32 0.0, %v6862
      %v6864 = vpop.f32.mrb[0].mxu0
      %v6865 = vadd.f32 0.0, %v6864
      %v6866 = vpop.f32.mrb[0].mxu0
      %v6867 = vadd.f32 0.0, %v6866
      %6868 = vmatprep.mubr.bf16.mxu0 %v6653
      %6869 = vmatmul.mubr.bf16.gmra.mrb[0].mxu0 %v6652
      %v6870 = vpop.f32.mrb[0].mxu0
      %v6871 = vadd.f32 0.0, %v6870
      %v6872 = vpop.f32.mrb[0].mxu0
      %v6873 = vadd.f32 0.0, %v6872
      %v6874 = vpop.f32.mrb[0].mxu0
      %v6875 = vadd.f32 0.0, %v6874
      %v6876 = vpop.f32.mrb[0].mxu0
      %v6877 = vadd.f32 0.0, %v6876
      %6878 = vmatprep.mubr.bf16.mxu0 %v6655
      %6879 = vmatmul.mubr.bf16.gmra.mrb[0].mxu0 %v6654
      %v6880 = vpop.f32.mrb[0].mxu0
      %v6881 = vadd.f32 0.0, %v6880
      %v6882 = vpop.f32.mrb[0].mxu0
      %v6883 = vadd.f32 0.0, %v6882
      %v6884 = vpop.f32.mrb[0].mxu0
      %v6885 = vadd.f32 0.0, %v6884
      %v6886 = vpop.f32.mrb[0].mxu0
      %v6887 = vadd.f32 0.0, %v6886
      %6888 = vmatprep.mubr.bf16.mxu0 %v6657
      %6889 = vmatmul.mubr.bf16.gmra.mrb[0].mxu0 %v6656
      %v6890 = vpop.f32.mrb[0].mxu0
      %v6891 = vadd.f32 0.0, %v6890
      %v6892 = vpop.f32.mrb[0].mxu0
      %v6893 = vadd.f32 0.0, %v6892
      %v6894 = vpop.f32.mrb[0].mxu0
      %v6895 = vadd.f32 0.0, %v6894
      %v6896 = vpop.f32.mrb[0].mxu0
      %v6897 = vadd.f32 0.0, %v6896
      %6898 = vmatprep.mubr.bf16.mxu0 %v6659
      %6899 = vmatmul.mubr.bf16.gmra.mrb[0].mxu0 %v6658
      %v6900 = vpop.f32.mrb[0].mxu0
      %v6901 = vadd.f32 0.0, %v6900
      %v6902 = vpop.f32.mrb[0].mxu0
      %v6903 = vadd.f32 0.0, %v6902
      %v6904 = vpop.f32.mrb[0].mxu0
      %v6905 = vadd.f32 0.0, %v6904
      %v6906 = vpop.f32.mrb[0].mxu0
      %v6907 = vadd.f32 0.0, %v6906
      %6908 = vmatprep.mubr.bf16.mxu0 %v6661
      %6909 = vmatmul.mubr.bf16.gmra.mrb[0].mxu0 %v6660
      %v6910 = vpop.f32.mrb[0].mxu0
      %v6911 = vadd.f32 0.0, %v6910
      %v6912 = vpop.f32.mrb[0].mxu0
      %v6913 = vadd.f32 0.0, %v6912
      %v6914 = vpop.f32.mrb[0].mxu0
      %v6915 = vadd.f32 0.0, %v6914
      %v6916 = vpop.f32.mrb[0].mxu0
      %v6917 = vadd.f32 0.0, %v6916
      %6918 = vmatprep.mubr.bf16.mxu0 %v6663
      %6919 = vmatmul.mubr.bf16.gmra.mrb[0].mxu0 %v6662
      %v6920 = vpop.f32.mrb[0].mxu0
      %v6921 = vadd.f32 0.0, %v6920
      %v6922 = vpop.f32.mrb[0].mxu0
      %v6923 = vadd.f32 0.0, %v6922
      %v6924 = vpop.f32.mrb[0].mxu0
      %v6925 = vadd.f32 0.0, %v6924
      %v6926 = vpop.f32.mrb[0].mxu0
      %v6927 = vadd.f32 0.0, %v6926
      %6928 = vmatprep.mubr.bf16.mxu0 %v6665
      %6929 = vmatmul.mubr.bf16.gmra.mrb[0].mxu0 %v6664
      %v6930 = vpop.f32.mrb[0].mxu0
      %v6931 = vadd.f32 0.0, %v6930
      %v6932 = vpop.f32.mrb[0].mxu0
      %v6933 = vadd.f32 0.0, %v6932
      %v6934 = vpop.f32.mrb[0].mxu0
      %v6935 = vadd.f32 0.0, %v6934
      %v6936 = vpop.f32.mrb[0].mxu0
      %v6937 = vadd.f32 0.0, %v6936
      %6938 = vdwg.mxu0
      %v6939 = vadd.f32 %v4907, %v6861
      %v6940 = vadd.f32 %v4909, %v6863
      %v6941 = vadd.f32 %v4911, %v6865
      %v6942 = vadd.f32 %v4913, %v6867
      %v6943 = vadd.f32 %v4917, %v6871
      %v6944 = vadd.f32 %v4919, %v6873
      %v6945 = vadd.f32 %v4921, %v6875
      %v6946 = vadd.f32 %v4923, %v6877
      %v6947 = vadd.f32 %v4927, %v6881
      %v6948 = vadd.f32 %v4929, %v6883
      %v6949 = vadd.f32 %v4931, %v6885
      %v6950 = vadd.f32 %v4933, %v6887
      %v6951 = vadd.f32 %v4937, %v6891
      %v6952 = vadd.f32 %v4939, %v6893
      %v6953 = vadd.f32 %v4941, %v6895
      %v6954 = vadd.f32 %v4943, %v6897
      %v6955 = vadd.f32 %v4947, %v6901
      %v6956 = vadd.f32 %v4949, %v6903
      %v6957 = vadd.f32 %v4951, %v6905
      %v6958 = vadd.f32 %v4953, %v6907
      %v6959 = vadd.f32 %v4957, %v6911
      %v6960 = vadd.f32 %v4959, %v6913
      %v6961 = vadd.f32 %v4961, %v6915
      %v6962 = vadd.f32 %v4963, %v6917
      %v6963 = vadd.f32 %v4967, %v6921
      %v6964 = vadd.f32 %v4969, %v6923
      %v6965 = vadd.f32 %v4971, %v6925
      %v6966 = vadd.f32 %v4973, %v6927
      %v6967 = vadd.f32 %v4977, %v6931
      %v6968 = vadd.f32 %v4979, %v6933
      %v6969 = vadd.f32 %v4981, %v6935
      %v6970 = vadd.f32 %v4983, %v6937
      %v6971 = vld [vmem:[%s2640] sm:$0x3]
      %v6973 = vlaneseq
      %v6974 = vshrl.u32 %v6973, 7
      %v6975 = vsub.s32 0, %v6974
      %v6976 = vrot.slane %v6971, %v6975
      %v6977 = vlaneseq
      %v6978 = vshrl.u32 %v6977, 7
      %v6979 = vsub.s32 1, %v6978
      %v6980 = vrot.slane %v6971, %v6979
      %v6983 = vadd.f32 %v6939, %v6976
      %v6984 = vadd.f32 %v6940, %v6980
      %v6985 = vadd.f32 %v6941, %v6976
      %v6986 = vadd.f32 %v6942, %v6980
      %v6987 = vadd.f32 %v6943, %v6976
      %v6988 = vadd.f32 %v6944, %v6980
      %v6989 = vadd.f32 %v6945, %v6976
      %v6990 = vadd.f32 %v6946, %v6980
      %v6991 = vadd.f32 %v6947, %v6976
      %v6992 = vadd.f32 %v6948, %v6980
      %v6993 = vadd.f32 %v6949, %v6976
      %v6994 = vadd.f32 %v6950, %v6980
      %v6995 = vadd.f32 %v6951, %v6976
      %v6996 = vadd.f32 %v6952, %v6980
      %v6997 = vadd.f32 %v6953, %v6976
      %v6998 = vadd.f32 %v6954, %v6980
      %v6999 = vadd.f32 %v6955, %v6976
      %v7000 = vadd.f32 %v6956, %v6980
      %v7001 = vadd.f32 %v6957, %v6976
      %v7002 = vadd.f32 %v6958, %v6980
      %v7003 = vadd.f32 %v6959, %v6976
      %v7004 = vadd.f32 %v6960, %v6980
      %v7005 = vadd.f32 %v6961, %v6976
      %v7006 = vadd.f32 %v6962, %v6980
      %v7007 = vadd.f32 %v6963, %v6976
      %v7008 = vadd.f32 %v6964, %v6980
      %v7009 = vadd.f32 %v6965, %v6976
      %v7010 = vadd.f32 %v6966, %v6980
      %v7011 = vadd.f32 %v6967, %v6976
      %v7012 = vadd.f32 %v6968, %v6980
      %v7013 = vadd.f32 %v6969, %v6976
      %v7014 = vadd.f32 %v6970, %v6980
      %v7015 = vmax.f32 %v6983, 0.0
      %v7016 = vmax.f32 %v6984, 0.0
      %v7017 = vmax.f32 %v6985, 0.0
      %v7018 = vmax.f32 %v6986, 0.0
      %v7019 = vmax.f32 %v6987, 0.0
      %v7020 = vmax.f32 %v6988, 0.0
      %v7021 = vmax.f32 %v6989, 0.0
      %v7022 = vmax.f32 %v6990, 0.0
      %v7023 = vmax.f32 %v6991, 0.0
      %v7024 = vmax.f32 %v6992, 0.0
      %v7025 = vmax.f32 %v6993, 0.0
      %v7026 = vmax.f32 %v6994, 0.0
      %v7027 = vmax.f32 %v6995, 0.0
      %v7028 = vmax.f32 %v6996, 0.0
      %v7029 = vmax.f32 %v6997, 0.0
      %v7030 = vmax.f32 %v6998, 0.0
      %v7031 = vmax.f32 %v6999, 0.0
      %v7032 = vmax.f32 %v7000, 0.0
      %v7033 = vmax.f32 %v7001, 0.0
      %v7034 = vmax.f32 %v7002, 0.0
      %v7035 = vmax.f32 %v7003, 0.0
      %v7036 = vmax.f32 %v7004, 0.0
      %v7037 = vmax.f32 %v7005, 0.0
      %v7038 = vmax.f32 %v7006, 0.0
      %v7039 = vmax.f32 %v7007, 0.0
      %v7040 = vmax.f32 %v7008, 0.0
      %v7041 = vmax.f32 %v7009, 0.0
      %v7042 = vmax.f32 %v7010, 0.0
      %v7043 = vmax.f32 %v7011, 0.0
      %v7044 = vmax.f32 %v7012, 0.0
      %v7045 = vmax.f32 %v7013, 0.0
      %v7046 = vmax.f32 %v7014, 0.0
      %v7047 = vld [vmem:[%s2717] sm:$0xff]
      %v7048 = vld [vmem:[%s2717 + $0x8] sm:$0xff]
      %v7049 = vld [vmem:[%s2717 + $0x10] sm:$0xff]
      %v7050 = vld [vmem:[%s2717 + $0x18] sm:$0xff]
      %v7051 = vld [vmem:[%s2717 + $0x20] sm:$0xff]
      %v7052 = vld [vmem:[%s2717 + $0x28] sm:$0xff]
      %v7053 = vld [vmem:[%s2717 + $0x30] sm:$0xff]
      %v7054 = vld [vmem:[%s2717 + $0x38] sm:$0xff]
      %v7055 = vld [vmem:[%s2717 + $0x40] sm:$0xff]
      %v7056 = vld [vmem:[%s2717 + $0x48] sm:$0xff]
      %v7057 = vld [vmem:[%s2717 + $0x50] sm:$0xff]
      %v7058 = vld [vmem:[%s2717 + $0x58] sm:$0xff]
      %v7059 = vld [vmem:[%s2717 + $0x60] sm:$0xff]
      %v7060 = vld [vmem:[%s2717 + $0x68] sm:$0xff]
      %v7061 = vld [vmem:[%s2717 + $0x70] sm:$0xff]
      %v7062 = vld [vmem:[%s2717 + $0x78] sm:$0xff]
      %v7063 = vld [vmem:[%s2717 + $0x80] sm:$0xff]
      %v7064 = vld [vmem:[%s2717 + $0x88] sm:$0xff]
      %v7065 = vld [vmem:[%s2717 + $0x90] sm:$0xff]
      %v7066 = vld [vmem:[%s2717 + $0x98] sm:$0xff]
      %v7067 = vld [vmem:[%s2717 + $0xa0] sm:$0xff]
      %v7068 = vld [vmem:[%s2717 + $0xa8] sm:$0xff]
      %v7069 = vld [vmem:[%s2717 + $0xb0] sm:$0xff]
      %v7070 = vld [vmem:[%s2717 + $0xb8] sm:$0xff]
      %v7071 = vld [vmem:[%s2717 + $0xc0] sm:$0xff]
      %v7072 = vld [vmem:[%s2717 + $0xc8] sm:$0xff]
      %v7073 = vld [vmem:[%s2717 + $0xd0] sm:$0xff]
      %v7074 = vld [vmem:[%s2717 + $0xd8] sm:$0xff]
      %v7075 = vld [vmem:[%s2717 + $0xe0] sm:$0xff]
      %v7076 = vld [vmem:[%s2717 + $0xe8] sm:$0xff]
      %v7077 = vld [vmem:[%s2717 + $0xf0] sm:$0xff]
      %v7078 = vld [vmem:[%s2717 + $0xf8] sm:$0xff]
      %v7079 = vpack.c.bf16 %v7017, %v7015
      %v7080 = vpack.c.bf16 %v7018, %v7016
      %v7081 = vpack.c.bf16 %v7021, %v7019
      %v7082 = vpack.c.bf16 %v7022, %v7020
      %v7083 = vpack.c.bf16 %v7025, %v7023
      %v7084 = vpack.c.bf16 %v7026, %v7024
      %v7085 = vpack.c.bf16 %v7029, %v7027
      %v7086 = vpack.c.bf16 %v7030, %v7028
      %v7087 = vpack.c.bf16 %v7033, %v7031
      %v7088 = vpack.c.bf16 %v7034, %v7032
      %v7089 = vpack.c.bf16 %v7037, %v7035
      %v7090 = vpack.c.bf16 %v7038, %v7036
      %v7091 = vpack.c.bf16 %v7041, %v7039
      %v7092 = vpack.c.bf16 %v7042, %v7040
      %v7093 = vpack.c.bf16 %v7045, %v7043
      %v7094 = vpack.c.bf16 %v7046, %v7044
      %v7095 = vld [vmem:[%s2766] sm:$0x3]
      %v7097 = vlaneseq
      %v7098 = vshrl.u32 %v7097, 7
      %v7099 = vsub.s32 0, %v7098
      %v7100 = vrot.slane %v7095, %v7099
      %v7101 = vlaneseq
      %v7102 = vshrl.u32 %v7101, 7
      %v7103 = vsub.s32 1, %v7102
      %v7104 = vrot.slane %v7095, %v7103
      %v7139 = vunpack.c.l.b16 %v7047
      %v7140 = vunpack.c.h.b16 %v7047
      %v7141 = vunpack.c.l.b16 %v7048
      %v7142 = vunpack.c.h.b16 %v7048
      %v7143 = vunpack.c.l.b16 %v7049
      %v7144 = vunpack.c.h.b16 %v7049
      %v7145 = vunpack.c.l.b16 %v7050
      %v7146 = vunpack.c.h.b16 %v7050
      %v7147 = vunpack.c.l.b16 %v7051
      %v7148 = vunpack.c.h.b16 %v7051
      %v7149 = vunpack.c.l.b16 %v7052
      %v7150 = vunpack.c.h.b16 %v7052
      %v7151 = vunpack.c.l.b16 %v7053
      %v7152 = vunpack.c.h.b16 %v7053
      %v7153 = vunpack.c.l.b16 %v7054
      %v7154 = vunpack.c.h.b16 %v7054
      %v7155 = vunpack.c.l.b16 %v7055
      %v7156 = vunpack.c.h.b16 %v7055
      %v7157 = vunpack.c.l.b16 %v7056
      %v7158 = vunpack.c.h.b16 %v7056
      %v7159 = vunpack.c.l.b16 %v7057
      %v7160 = vunpack.c.h.b16 %v7057
      %v7161 = vunpack.c.l.b16 %v7058
      %v7162 = vunpack.c.h.b16 %v7058
      %v7163 = vunpack.c.l.b16 %v7059
      %v7164 = vunpack.c.h.b16 %v7059
      %v7165 = vunpack.c.l.b16 %v7060
      %v7166 = vunpack.c.h.b16 %v7060
      %v7167 = vunpack.c.l.b16 %v7061
      %v7168 = vunpack.c.h.b16 %v7061
      %v7169 = vunpack.c.l.b16 %v7062
      %v7170 = vunpack.c.h.b16 %v7062
      %v7171 = vunpack.c.l.b16 %v7063
      %v7172 = vunpack.c.h.b16 %v7063
      %v7173 = vunpack.c.l.b16 %v7064
      %v7174 = vunpack.c.h.b16 %v7064
      %v7175 = vunpack.c.l.b16 %v7065
      %v7176 = vunpack.c.h.b16 %v7065
      %v7177 = vunpack.c.l.b16 %v7066
      %v7178 = vunpack.c.h.b16 %v7066
      %v7179 = vunpack.c.l.b16 %v7067
      %v7180 = vunpack.c.h.b16 %v7067
      %v7181 = vunpack.c.l.b16 %v7068
      %v7182 = vunpack.c.h.b16 %v7068
      %v7183 = vunpack.c.l.b16 %v7069
      %v7184 = vunpack.c.h.b16 %v7069
      %v7185 = vunpack.c.l.b16 %v7070
      %v7186 = vunpack.c.h.b16 %v7070
      %v7187 = vunpack.c.l.b16 %v7071
      %v7188 = vunpack.c.h.b16 %v7071
      %v7189 = vunpack.c.l.b16 %v7072
      %v7190 = vunpack.c.h.b16 %v7072
      %v7191 = vunpack.c.l.b16 %v7073
      %v7192 = vunpack.c.h.b16 %v7073
      %v7193 = vunpack.c.l.b16 %v7074
      %v7194 = vunpack.c.h.b16 %v7074
      %v7195 = vunpack.c.l.b16 %v7075
      %v7196 = vunpack.c.h.b16 %v7075
      %v7197 = vunpack.c.l.b16 %v7076
      %v7198 = vunpack.c.h.b16 %v7076
      %v7199 = vunpack.c.l.b16 %v7077
      %v7200 = vunpack.c.h.b16 %v7077
      %v7201 = vunpack.c.l.b16 %v7078
      %v7202 = vunpack.c.h.b16 %v7078
      %v7203 = vpack.c.b16 %v7141, %v7139
      %v7204 = vpack.c.b16 %v7142, %v7140
      %v7205 = vpack.c.b16 %v7145, %v7143
      %v7206 = vpack.c.b16 %v7146, %v7144
      %v7207 = vpack.c.b16 %v7149, %v7147
      %v7208 = vpack.c.b16 %v7150, %v7148
      %v7209 = vpack.c.b16 %v7153, %v7151
      %v7210 = vpack.c.b16 %v7154, %v7152
      %v7211 = vpack.c.b16 %v7157, %v7155
      %v7212 = vpack.c.b16 %v7158, %v7156
      %v7213 = vpack.c.b16 %v7161, %v7159
      %v7214 = vpack.c.b16 %v7162, %v7160
      %v7215 = vpack.c.b16 %v7165, %v7163
      %v7216 = vpack.c.b16 %v7166, %v7164
      %v7217 = vpack.c.b16 %v7169, %v7167
      %v7218 = vpack.c.b16 %v7170, %v7168
      %v7219 = vpack.c.b16 %v7173, %v7171
      %v7220 = vpack.c.b16 %v7174, %v7172
      %v7221 = vpack.c.b16 %v7177, %v7175
      %v7222 = vpack.c.b16 %v7178, %v7176
      %v7223 = vpack.c.b16 %v7181, %v7179
      %v7224 = vpack.c.b16 %v7182, %v7180
      %v7225 = vpack.c.b16 %v7185, %v7183
      %v7226 = vpack.c.b16 %v7186, %v7184
      %v7227 = vpack.c.b16 %v7189, %v7187
      %v7228 = vpack.c.b16 %v7190, %v7188
      %v7229 = vpack.c.b16 %v7193, %v7191
      %v7230 = vpack.c.b16 %v7194, %v7192
      %v7231 = vpack.c.b16 %v7197, %v7195
      %v7232 = vpack.c.b16 %v7198, %v7196
      %v7233 = vpack.c.b16 %v7201, %v7199
      %v7234 = vpack.c.b16 %v7202, %v7200
      %7267 = vmatprep.subr.bf16.mxu0 %v7204
      %7268 = vmatpush1.bf16.msra.mxu0 %v7203
      %7269 = vmatprep.subr.bf16.mxu0 %v7206
      %7270 = vmatpush1.bf16.msra.mxu0 %v7205
      %7271 = vmatprep.subr.bf16.mxu0 %v7208
      %7272 = vmatpush1.bf16.msra.mxu0 %v7207
      %7273 = vmatprep.subr.bf16.mxu0 %v7210
      %7274 = vmatpush1.bf16.msra.mxu0 %v7209
      %7275 = vmatprep.subr.bf16.mxu0 %v7212
      %7276 = vmatpush1.bf16.msra.mxu0 %v7211
      %7277 = vmatprep.subr.bf16.mxu0 %v7214
      %7278 = vmatpush1.bf16.msra.mxu0 %v7213
      %7279 = vmatprep.subr.bf16.mxu0 %v7216
      %7280 = vmatpush1.bf16.msra.mxu0 %v7215
      %7281 = vmatprep.subr.bf16.mxu0 %v7218
      %7282 = vmatpush1.bf16.msra.mxu0 %v7217
      %7283 = vmatprep.subr.bf16.mxu0 %v7220
      %7284 = vmatpush1.bf16.msra.mxu0 %v7219
      %7285 = vmatprep.subr.bf16.mxu0 %v7222
      %7286 = vmatpush1.bf16.msra.mxu0 %v7221
      %7287 = vmatprep.subr.bf16.mxu0 %v7224
      %7288 = vmatpush1.bf16.msra.mxu0 %v7223
      %7289 = vmatprep.subr.bf16.mxu0 %v7226
      %7290 = vmatpush1.bf16.msra.mxu0 %v7225
      %7291 = vmatprep.subr.bf16.mxu0 %v7228
      %7292 = vmatpush1.bf16.msra.mxu0 %v7227
      %7293 = vmatprep.subr.bf16.mxu0 %v7230
      %7294 = vmatpush1.bf16.msra.mxu0 %v7229
      %7295 = vmatprep.subr.bf16.mxu0 %v7232
      %7296 = vmatpush1.bf16.msra.mxu0 %v7231
      %7297 = vmatprep.subr.bf16.mxu0 %v7234
      %7298 = vmatpush1.bf16.msra.mxu0 %v7233
      %7299 = vmatprep.mubr.bf16.mxu0 %v7080
      %7300 = vmatmul.mubr.bf16.gmra.mrb[0].mxu0 %v7079
      %v7301 = vpop.f32.mrb[0].mxu0
      %v7302 = vadd.f32 %v7100, %v7301
      %v7303 = vpop.f32.mrb[0].mxu0
      %v7304 = vadd.f32 %v7104, %v7303
      %v7305 = vpop.f32.mrb[0].mxu0
      %v7306 = vadd.f32 %v7100, %v7305
      %v7307 = vpop.f32.mrb[0].mxu0
      %v7308 = vadd.f32 %v7104, %v7307
      %7309 = vmatprep.mubr.bf16.mxu0 %v7082
      %7310 = vmatmul.mubr.bf16.gmra.mrb[0].mxu0 %v7081
      %v7311 = vpop.f32.mrb[0].mxu0
      %v7312 = vadd.f32 %v7100, %v7311
      %v7313 = vpop.f32.mrb[0].mxu0
      %v7314 = vadd.f32 %v7104, %v7313
      %v7315 = vpop.f32.mrb[0].mxu0
      %v7316 = vadd.f32 %v7100, %v7315
      %v7317 = vpop.f32.mrb[0].mxu0
      %v7318 = vadd.f32 %v7104, %v7317
      %7319 = vmatprep.mubr.bf16.mxu0 %v7084
      %7320 = vmatmul.mubr.bf16.gmra.mrb[0].mxu0 %v7083
      %v7321 = vpop.f32.mrb[0].mxu0
      %v7322 = vadd.f32 %v7100, %v7321
      %v7323 = vpop.f32.mrb[0].mxu0
      %v7324 = vadd.f32 %v7104, %v7323
      %v7325 = vpop.f32.mrb[0].mxu0
      %v7326 = vadd.f32 %v7100, %v7325
      %v7327 = vpop.f32.mrb[0].mxu0
      %v7328 = vadd.f32 %v7104, %v7327
      %7329 = vmatprep.mubr.bf16.mxu0 %v7086
      %7330 = vmatmul.mubr.bf16.gmra.mrb[0].mxu0 %v7085
      %v7331 = vpop.f32.mrb[0].mxu0
      %v7332 = vadd.f32 %v7100, %v7331
      %v7333 = vpop.f32.mrb[0].mxu0
      %v7334 = vadd.f32 %v7104, %v7333
      %v7335 = vpop.f32.mrb[0].mxu0
      %v7336 = vadd.f32 %v7100, %v7335
      %v7337 = vpop.f32.mrb[0].mxu0
      %v7338 = vadd.f32 %v7104, %v7337
      %7339 = vmatprep.mubr.bf16.mxu0 %v7088
      %7340 = vmatmul.mubr.bf16.gmra.mrb[0].mxu0 %v7087
      %v7341 = vpop.f32.mrb[0].mxu0
      %v7342 = vadd.f32 %v7100, %v7341
      %v7343 = vpop.f32.mrb[0].mxu0
      %v7344 = vadd.f32 %v7104, %v7343
      %v7345 = vpop.f32.mrb[0].mxu0
      %v7346 = vadd.f32 %v7100, %v7345
      %v7347 = vpop.f32.mrb[0].mxu0
      %v7348 = vadd.f32 %v7104, %v7347
      %7349 = vmatprep.mubr.bf16.mxu0 %v7090
      %7350 = vmatmul.mubr.bf16.gmra.mrb[0].mxu0 %v7089
      %v7351 = vpop.f32.mrb[0].mxu0
      %v7352 = vadd.f32 %v7100, %v7351
      %v7353 = vpop.f32.mrb[0].mxu0
      %v7354 = vadd.f32 %v7104, %v7353
      %v7355 = vpop.f32.mrb[0].mxu0
      %v7356 = vadd.f32 %v7100, %v7355
      %v7357 = vpop.f32.mrb[0].mxu0
      %v7358 = vadd.f32 %v7104, %v7357
      %7359 = vmatprep.mubr.bf16.mxu0 %v7092
      %7360 = vmatmul.mubr.bf16.gmra.mrb[0].mxu0 %v7091
      %v7361 = vpop.f32.mrb[0].mxu0
      %v7362 = vadd.f32 %v7100, %v7361
      %v7363 = vpop.f32.mrb[0].mxu0
      %v7364 = vadd.f32 %v7104, %v7363
      %v7365 = vpop.f32.mrb[0].mxu0
      %v7366 = vadd.f32 %v7100, %v7365
      %v7367 = vpop.f32.mrb[0].mxu0
      %v7368 = vadd.f32 %v7104, %v7367
      %7369 = vmatprep.mubr.bf16.mxu0 %v7094
      %7370 = vmatmul.mubr.bf16.gmra.mrb[0].mxu0 %v7093
      %v7371 = vpop.f32.mrb[0].mxu0
      %v7372 = vadd.f32 %v7100, %v7371
      %v7373 = vpop.f32.mrb[0].mxu0
      %v7374 = vadd.f32 %v7104, %v7373
      %v7375 = vpop.f32.mrb[0].mxu0
      %v7376 = vadd.f32 %v7100, %v7375
      %v7377 = vpop.f32.mrb[0].mxu0
      %v7378 = vadd.f32 %v7104, %v7377
      %7379 = vdwg.mxu0
      %v7380 = vmax.f32 %v7302, 0.0
      %v7381 = vmax.f32 %v7304, 0.0
      %v7382 = vmax.f32 %v7306, 0.0
      %v7383 = vmax.f32 %v7308, 0.0
      %v7384 = vmax.f32 %v7312, 0.0
      %v7385 = vmax.f32 %v7314, 0.0
      %v7386 = vmax.f32 %v7316, 0.0
      %v7387 = vmax.f32 %v7318, 0.0
      %v7388 = vmax.f32 %v7322, 0.0
      %v7389 = vmax.f32 %v7324, 0.0
      %v7390 = vmax.f32 %v7326, 0.0
      %v7391 = vmax.f32 %v7328, 0.0
      %v7392 = vmax.f32 %v7332, 0.0
      %v7393 = vmax.f32 %v7334, 0.0
      %v7394 = vmax.f32 %v7336, 0.0
      %v7395 = vmax.f32 %v7338, 0.0
      %v7396 = vmax.f32 %v7342, 0.0
      %v7397 = vmax.f32 %v7344, 0.0
      %v7398 = vmax.f32 %v7346, 0.0
      %v7399 = vmax.f32 %v7348, 0.0
      %v7400 = vmax.f32 %v7352, 0.0
      %v7401 = vmax.f32 %v7354, 0.0
      %v7402 = vmax.f32 %v7356, 0.0
      %v7403 = vmax.f32 %v7358, 0.0
      %v7404 = vmax.f32 %v7362, 0.0
      %v7405 = vmax.f32 %v7364, 0.0
      %v7406 = vmax.f32 %v7366, 0.0
      %v7407 = vmax.f32 %v7368, 0.0
      %v7408 = vmax.f32 %v7372, 0.0
      %v7409 = vmax.f32 %v7374, 0.0
      %v7410 = vmax.f32 %v7376, 0.0
      %v7411 = vmax.f32 %v7378, 0.0
      %v7412 = vld [vmem:[%s3084] sm:$0xff]
      %v7413 = vld [vmem:[%s3084 + $0x8] sm:$0xff]
      %v7414 = vld [vmem:[%s3084 + $0x10] sm:$0xff]
      %v7415 = vld [vmem:[%s3084 + $0x18] sm:$0xff]
      %v7416 = vld [vmem:[%s3084 + $0x20] sm:$0xff]
      %v7417 = vld [vmem:[%s3084 + $0x28] sm:$0xff]
      %v7418 = vld [vmem:[%s3084 + $0x30] sm:$0xff]
      %v7419 = vld [vmem:[%s3084 + $0x38] sm:$0xff]
      %v7420 = vld [vmem:[%s3084 + $0x40] sm:$0xff]
      %v7421 = vld [vmem:[%s3084 + $0x48] sm:$0xff]
      %v7422 = vld [vmem:[%s3084 + $0x50] sm:$0xff]
      %v7423 = vld [vmem:[%s3084 + $0x58] sm:$0xff]
      %v7424 = vld [vmem:[%s3084 + $0x60] sm:$0xff]
      %v7425 = vld [vmem:[%s3084 + $0x68] sm:$0xff]
      %v7426 = vld [vmem:[%s3084 + $0x70] sm:$0xff]
      %v7427 = vld [vmem:[%s3084 + $0x78] sm:$0xff]
      %v7428 = vld [vmem:[%s3084 + $0x80] sm:$0xff]
      %v7429 = vld [vmem:[%s3084 + $0x88] sm:$0xff]
      %v7430 = vld [vmem:[%s3084 + $0x90] sm:$0xff]
      %v7431 = vld [vmem:[%s3084 + $0x98] sm:$0xff]
      %v7432 = vld [vmem:[%s3084 + $0xa0] sm:$0xff]
      %v7433 = vld [vmem:[%s3084 + $0xa8] sm:$0xff]
      %v7434 = vld [vmem:[%s3084 + $0xb0] sm:$0xff]
      %v7435 = vld [vmem:[%s3084 + $0xb8] sm:$0xff]
      %v7436 = vld [vmem:[%s3084 + $0xc0] sm:$0xff]
      %v7437 = vld [vmem:[%s3084 + $0xc8] sm:$0xff]
      %v7438 = vld [vmem:[%s3084 + $0xd0] sm:$0xff]
      %v7439 = vld [vmem:[%s3084 + $0xd8] sm:$0xff]
      %v7440 = vld [vmem:[%s3084 + $0xe0] sm:$0xff]
      %v7441 = vld [vmem:[%s3084 + $0xe8] sm:$0xff]
      %v7442 = vld [vmem:[%s3084 + $0xf0] sm:$0xff]
      %v7443 = vld [vmem:[%s3084 + $0xf8] sm:$0xff]
      %v7444 = vpack.c.bf16 %v7382, %v7380
      %v7445 = vpack.c.bf16 %v7383, %v7381
      %v7446 = vpack.c.bf16 %v7386, %v7384
      %v7447 = vpack.c.bf16 %v7387, %v7385
      %v7448 = vpack.c.bf16 %v7390, %v7388
      %v7449 = vpack.c.bf16 %v7391, %v7389
      %v7450 = vpack.c.bf16 %v7394, %v7392
      %v7451 = vpack.c.bf16 %v7395, %v7393
      %v7452 = vpack.c.bf16 %v7398, %v7396
      %v7453 = vpack.c.bf16 %v7399, %v7397
      %v7454 = vpack.c.bf16 %v7402, %v7400
      %v7455 = vpack.c.bf16 %v7403, %v7401
      %v7456 = vpack.c.bf16 %v7406, %v7404
      %v7457 = vpack.c.bf16 %v7407, %v7405
      %v7458 = vpack.c.bf16 %v7410, %v7408
      %v7459 = vpack.c.bf16 %v7411, %v7409
      %v7460 = vld [vmem:[%s3133] sm:$0x3]
      %v7462 = vlaneseq
      %v7463 = vshrl.u32 %v7462, 7
      %v7464 = vsub.s32 0, %v7463
      %v7465 = vrot.slane %v7460, %v7464
      %v7466 = vlaneseq
      %v7467 = vshrl.u32 %v7466, 7
      %v7468 = vsub.s32 1, %v7467
      %v7469 = vrot.slane %v7460, %v7468
      %v7504 = vunpack.c.l.b16 %v7412
      %v7505 = vunpack.c.h.b16 %v7412
      %v7506 = vunpack.c.l.b16 %v7413
      %v7507 = vunpack.c.h.b16 %v7413
      %v7508 = vunpack.c.l.b16 %v7414
      %v7509 = vunpack.c.h.b16 %v7414
      %v7510 = vunpack.c.l.b16 %v7415
      %v7511 = vunpack.c.h.b16 %v7415
      %v7512 = vunpack.c.l.b16 %v7416
      %v7513 = vunpack.c.h.b16 %v7416
      %v7514 = vunpack.c.l.b16 %v7417
      %v7515 = vunpack.c.h.b16 %v7417
      %v7516 = vunpack.c.l.b16 %v7418
      %v7517 = vunpack.c.h.b16 %v7418
      %v7518 = vunpack.c.l.b16 %v7419
      %v7519 = vunpack.c.h.b16 %v7419
      %v7520 = vunpack.c.l.b16 %v7420
      %v7521 = vunpack.c.h.b16 %v7420
      %v7522 = vunpack.c.l.b16 %v7421
      %v7523 = vunpack.c.h.b16 %v7421
      %v7524 = vunpack.c.l.b16 %v7422
      %v7525 = vunpack.c.h.b16 %v7422
      %v7526 = vunpack.c.l.b16 %v7423
      %v7527 = vunpack.c.h.b16 %v7423
      %v7528 = vunpack.c.l.b16 %v7424
      %v7529 = vunpack.c.h.b16 %v7424
      %v7530 = vunpack.c.l.b16 %v7425
      %v7531 = vunpack.c.h.b16 %v7425
      %v7532 = vunpack.c.l.b16 %v7426
      %v7533 = vunpack.c.h.b16 %v7426
      %v7534 = vunpack.c.l.b16 %v7427
      %v7535 = vunpack.c.h.b16 %v7427
      %v7536 = vunpack.c.l.b16 %v7428
      %v7537 = vunpack.c.h.b16 %v7428
      %v7538 = vunpack.c.l.b16 %v7429
      %v7539 = vunpack.c.h.b16 %v7429
      %v7540 = vunpack.c.l.b16 %v7430
      %v7541 = vunpack.c.h.b16 %v7430
      %v7542 = vunpack.c.l.b16 %v7431
      %v7543 = vunpack.c.h.b16 %v7431
      %v7544 = vunpack.c.l.b16 %v7432
      %v7545 = vunpack.c.h.b16 %v7432
      %v7546 = vunpack.c.l.b16 %v7433
      %v7547 = vunpack.c.h.b16 %v7433
      %v7548 = vunpack.c.l.b16 %v7434
      %v7549 = vunpack.c.h.b16 %v7434
      %v7550 = vunpack.c.l.b16 %v7435
      %v7551 = vunpack.c.h.b16 %v7435
      %v7552 = vunpack.c.l.b16 %v7436
      %v7553 = vunpack.c.h.b16 %v7436
      %v7554 = vunpack.c.l.b16 %v7437
      %v7555 = vunpack.c.h.b16 %v7437
      %v7556 = vunpack.c.l.b16 %v7438
      %v7557 = vunpack.c.h.b16 %v7438
      %v7558 = vunpack.c.l.b16 %v7439
      %v7559 = vunpack.c.h.b16 %v7439
      %v7560 = vunpack.c.l.b16 %v7440
      %v7561 = vunpack.c.h.b16 %v7440
      %v7562 = vunpack.c.l.b16 %v7441
      %v7563 = vunpack.c.h.b16 %v7441
      %v7564 = vunpack.c.l.b16 %v7442
      %v7565 = vunpack.c.h.b16 %v7442
      %v7566 = vunpack.c.l.b16 %v7443
      %v7567 = vunpack.c.h.b16 %v7443
      %v7568 = vpack.c.b16 %v7506, %v7504
      %v7569 = vpack.c.b16 %v7507, %v7505
      %v7570 = vpack.c.b16 %v7510, %v7508
      %v7571 = vpack.c.b16 %v7511, %v7509
      %v7572 = vpack.c.b16 %v7514, %v7512
      %v7573 = vpack.c.b16 %v7515, %v7513
      %v7574 = vpack.c.b16 %v7518, %v7516
      %v7575 = vpack.c.b16 %v7519, %v7517
      %v7576 = vpack.c.b16 %v7522, %v7520
      %v7577 = vpack.c.b16 %v7523, %v7521
      %v7578 = vpack.c.b16 %v7526, %v7524
      %v7579 = vpack.c.b16 %v7527, %v7525
      %v7580 = vpack.c.b16 %v7530, %v7528
      %v7581 = vpack.c.b16 %v7531, %v7529
      %v7582 = vpack.c.b16 %v7534, %v7532
      %v7583 = vpack.c.b16 %v7535, %v7533
      %v7584 = vpack.c.b16 %v7538, %v7536
      %v7585 = vpack.c.b16 %v7539, %v7537
      %v7586 = vpack.c.b16 %v7542, %v7540
      %v7587 = vpack.c.b16 %v7543, %v7541
      %v7588 = vpack.c.b16 %v7546, %v7544
      %v7589 = vpack.c.b16 %v7547, %v7545
      %v7590 = vpack.c.b16 %v7550, %v7548
      %v7591 = vpack.c.b16 %v7551, %v7549
      %v7592 = vpack.c.b16 %v7554, %v7552
      %v7593 = vpack.c.b16 %v7555, %v7553
      %v7594 = vpack.c.b16 %v7558, %v7556
      %v7595 = vpack.c.b16 %v7559, %v7557
      %v7596 = vpack.c.b16 %v7562, %v7560
      %v7597 = vpack.c.b16 %v7563, %v7561
      %v7598 = vpack.c.b16 %v7566, %v7564
      %v7599 = vpack.c.b16 %v7567, %v7565
      %7632 = vmatprep.subr.bf16.mxu0 %v7569
      %7633 = vmatpush1.bf16.msra.mxu0 %v7568
      %7634 = vmatprep.subr.bf16.mxu0 %v7571
      %7635 = vmatpush1.bf16.msra.mxu0 %v7570
      %7636 = vmatprep.subr.bf16.mxu0 %v7573
      %7637 = vmatpush1.bf16.msra.mxu0 %v7572
      %7638 = vmatprep.subr.bf16.mxu0 %v7575
      %7639 = vmatpush1.bf16.msra.mxu0 %v7574
      %7640 = vmatprep.subr.bf16.mxu0 %v7577
      %7641 = vmatpush1.bf16.msra.mxu0 %v7576
      %7642 = vmatprep.subr.bf16.mxu0 %v7579
      %7643 = vmatpush1.bf16.msra.mxu0 %v7578
      %7644 = vmatprep.subr.bf16.mxu0 %v7581
      %7645 = vmatpush1.bf16.msra.mxu0 %v7580
      %7646 = vmatprep.subr.bf16.mxu0 %v7583
      %7647 = vmatpush1.bf16.msra.mxu0 %v7582
      %7648 = vmatprep.subr.bf16.mxu0 %v7585
      %7649 = vmatpush1.bf16.msra.mxu0 %v7584
      %7650 = vmatprep.subr.bf16.mxu0 %v7587
      %7651 = vmatpush1.bf16.msra.mxu0 %v7586
      %7652 = vmatprep.subr.bf16.mxu0 %v7589
      %7653 = vmatpush1.bf16.msra.mxu0 %v7588
      %7654 = vmatprep.subr.bf16.mxu0 %v7591
      %7655 = vmatpush1.bf16.msra.mxu0 %v7590
      %7656 = vmatprep.subr.bf16.mxu0 %v7593
      %7657 = vmatpush1.bf16.msra.mxu0 %v7592
      %7658 = vmatprep.subr.bf16.mxu0 %v7595
      %7659 = vmatpush1.bf16.msra.mxu0 %v7594
      %7660 = vmatprep.subr.bf16.mxu0 %v7597
      %7661 = vmatpush1.bf16.msra.mxu0 %v7596
      %7662 = vmatprep.subr.bf16.mxu0 %v7599
      %7663 = vmatpush1.bf16.msra.mxu0 %v7598
      %7664 = vmatprep.mubr.bf16.mxu0 %v7445
      %7665 = vmatmul.mubr.bf16.gmra.mrb[0].mxu0 %v7444
      %v7666 = vpop.f32.mrb[0].mxu0
      %v7667 = vadd.f32 %v7465, %v7666
      %v7668 = vpop.f32.mrb[0].mxu0
      %v7669 = vadd.f32 %v7469, %v7668
      %v7670 = vpop.f32.mrb[0].mxu0
      %v7671 = vadd.f32 %v7465, %v7670
      %v7672 = vpop.f32.mrb[0].mxu0
      %v7673 = vadd.f32 %v7469, %v7672
      %7674 = vmatprep.mubr.bf16.mxu0 %v7447
      %7675 = vmatmul.mubr.bf16.gmra.mrb[0].mxu0 %v7446
      %v7676 = vpop.f32.mrb[0].mxu0
      %v7677 = vadd.f32 %v7465, %v7676
      %v7678 = vpop.f32.mrb[0].mxu0
      %v7679 = vadd.f32 %v7469, %v7678
      %v7680 = vpop.f32.mrb[0].mxu0
      %v7681 = vadd.f32 %v7465, %v7680
      %v7682 = vpop.f32.mrb[0].mxu0
      %v7683 = vadd.f32 %v7469, %v7682
      %7684 = vmatprep.mubr.bf16.mxu0 %v7449
      %7685 = vmatmul.mubr.bf16.gmra.mrb[0].mxu0 %v7448
      %v7686 = vpop.f32.mrb[0].mxu0
      %v7687 = vadd.f32 %v7465, %v7686
      %v7688 = vpop.f32.mrb[0].mxu0
      %v7689 = vadd.f32 %v7469, %v7688
      %v7690 = vpop.f32.mrb[0].mxu0
      %v7691 = vadd.f32 %v7465, %v7690
      %v7692 = vpop.f32.mrb[0].mxu0
      %v7693 = vadd.f32 %v7469, %v7692
      %7694 = vmatprep.mubr.bf16.mxu0 %v7451
      %7695 = vmatmul.mubr.bf16.gmra.mrb[0].mxu0 %v7450
      %v7696 = vpop.f32.mrb[0].mxu0
      %v7697 = vadd.f32 %v7465, %v7696
      %v7698 = vpop.f32.mrb[0].mxu0
      %v7699 = vadd.f32 %v7469, %v7698
      %v7700 = vpop.f32.mrb[0].mxu0
      %v7701 = vadd.f32 %v7465, %v7700
      %v7702 = vpop.f32.mrb[0].mxu0
      %v7703 = vadd.f32 %v7469, %v7702
      %7704 = vmatprep.mubr.bf16.mxu0 %v7453
      %7705 = vmatmul.mubr.bf16.gmra.mrb[0].mxu0 %v7452
      %v7706 = vpop.f32.mrb[0].mxu0
      %v7707 = vadd.f32 %v7465, %v7706
      %v7708 = vpop.f32.mrb[0].mxu0
      %v7709 = vadd.f32 %v7469, %v7708
      %v7710 = vpop.f32.mrb[0].mxu0
      %v7711 = vadd.f32 %v7465, %v7710
      %v7712 = vpop.f32.mrb[0].mxu0
      %v7713 = vadd.f32 %v7469, %v7712
      %7714 = vmatprep.mubr.bf16.mxu0 %v7455
      %7715 = vmatmul.mubr.bf16.gmra.mrb[0].mxu0 %v7454
      %v7716 = vpop.f32.mrb[0].mxu0
      %v7717 = vadd.f32 %v7465, %v7716
      %v7718 = vpop.f32.mrb[0].mxu0
      %v7719 = vadd.f32 %v7469, %v7718
      %v7720 = vpop.f32.mrb[0].mxu0
      %v7721 = vadd.f32 %v7465, %v7720
      %v7722 = vpop.f32.mrb[0].mxu0
      %v7723 = vadd.f32 %v7469, %v7722
      %7724 = vmatprep.mubr.bf16.mxu0 %v7457
      %7725 = vmatmul.mubr.bf16.gmra.mrb[0].mxu0 %v7456
      %v7726 = vpop.f32.mrb[0].mxu0
      %v7727 = vadd.f32 %v7465, %v7726
      %v7728 = vpop.f32.mrb[0].mxu0
      %v7729 = vadd.f32 %v7469, %v7728
      %v7730 = vpop.f32.mrb[0].mxu0
      %v7731 = vadd.f32 %v7465, %v7730
      %v7732 = vpop.f32.mrb[0].mxu0
      %v7733 = vadd.f32 %v7469, %v7732
      %7734 = vmatprep.mubr.bf16.mxu0 %v7459
      %7735 = vmatmul.mubr.bf16.gmra.mrb[0].mxu0 %v7458
      %v7736 = vpop.f32.mrb[0].mxu0
      %v7737 = vadd.f32 %v7465, %v7736
      %v7738 = vpop.f32.mrb[0].mxu0
      %v7739 = vadd.f32 %v7469, %v7738
      %v7740 = vpop.f32.mrb[0].mxu0
      %v7741 = vadd.f32 %v7465, %v7740
      %v7742 = vpop.f32.mrb[0].mxu0
      %v7743 = vadd.f32 %v7469, %v7742
      %7744 = vdwg.mxu0
      %v7745 = vmax.f32 %v7667, 0.0
      %v7746 = vmax.f32 %v7669, 0.0
      %v7747 = vmax.f32 %v7671, 0.0
      %v7748 = vmax.f32 %v7673, 0.0
      %v7749 = vmax.f32 %v7677, 0.0
      %v7750 = vmax.f32 %v7679, 0.0
      %v7751 = vmax.f32 %v7681, 0.0
      %v7752 = vmax.f32 %v7683, 0.0
      %v7753 = vmax.f32 %v7687, 0.0
      %v7754 = vmax.f32 %v7689, 0.0
      %v7755 = vmax.f32 %v7691, 0.0
      %v7756 = vmax.f32 %v7693, 0.0
      %v7757 = vmax.f32 %v7697, 0.0
      %v7758 = vmax.f32 %v7699, 0.0
      %v7759 = vmax.f32 %v7701, 0.0
      %v7760 = vmax.f32 %v7703, 0.0
      %v7761 = vmax.f32 %v7707, 0.0
      %v7762 = vmax.f32 %v7709, 0.0
      %v7763 = vmax.f32 %v7711, 0.0
      %v7764 = vmax.f32 %v7713, 0.0
      %v7765 = vmax.f32 %v7717, 0.0
      %v7766 = vmax.f32 %v7719, 0.0
      %v7767 = vmax.f32 %v7721, 0.0
      %v7768 = vmax.f32 %v7723, 0.0
      %v7769 = vmax.f32 %v7727, 0.0
      %v7770 = vmax.f32 %v7729, 0.0
      %v7771 = vmax.f32 %v7731, 0.0
      %v7772 = vmax.f32 %v7733, 0.0
      %v7773 = vmax.f32 %v7737, 0.0
      %v7774 = vmax.f32 %v7739, 0.0
      %v7775 = vmax.f32 %v7741, 0.0
      %v7776 = vmax.f32 %v7743, 0.0
      %v7777 = vld [vmem:[%s3] sm:$0xff]
      %v7778 = vld [vmem:[%s3 + $0x8] sm:$0xf]
      %v7779 = vld [vmem:[%s3 + $0xc] sm:$0xff]
      %v7780 = vld [vmem:[%s3 + $0x14] sm:$0xf]
      %v7781 = vld [vmem:[%s3 + $0x18] sm:$0xff]
      %v7782 = vld [vmem:[%s3 + $0x20] sm:$0xf]
      %v7783 = vld [vmem:[%s3 + $0x24] sm:$0xff]
      %v7784 = vld [vmem:[%s3 + $0x2c] sm:$0xf]
      %v7785 = vld [vmem:[%s3 + $0x30] sm:$0xff]
      %v7786 = vld [vmem:[%s3 + $0x38] sm:$0xf]
      %v7787 = vld [vmem:[%s3 + $0x3c] sm:$0xff]
      %v7788 = vld [vmem:[%s3 + $0x44] sm:$0xf]
      %v7789 = vld [vmem:[%s3 + $0x48] sm:$0xff]
      %v7790 = vld [vmem:[%s3 + $0x50] sm:$0xf]
      %v7791 = vld [vmem:[%s3 + $0x54] sm:$0xff]
      %v7792 = vld [vmem:[%s3 + $0x5c] sm:$0xf]
      %v7793 = vld [vmem:[%s3 + $0x60] sm:$0xff]
      %v7794 = vld [vmem:[%s3 + $0x68] sm:$0xf]
      %v7795 = vld [vmem:[%s3 + $0x6c] sm:$0xff]
      %v7796 = vld [vmem:[%s3 + $0x74] sm:$0xf]
      %v7797 = vld [vmem:[%s3 + $0x78] sm:$0xff]
      %v7798 = vld [vmem:[%s3 + $0x80] sm:$0xf]
      %v7799 = vld [vmem:[%s3 + $0x84] sm:$0xff]
      %v7800 = vld [vmem:[%s3 + $0x8c] sm:$0xf]
      %v7801 = vld [vmem:[%s3 + $0x90] sm:$0xff]
      %v7802 = vld [vmem:[%s3 + $0x98] sm:$0xf]
      %v7803 = vld [vmem:[%s3 + $0x9c] sm:$0xff]
      %v7804 = vld [vmem:[%s3 + $0xa4] sm:$0xf]
      %v7805 = vld [vmem:[%s3 + $0xa8] sm:$0xff]
      %v7806 = vld [vmem:[%s3 + $0xb0] sm:$0xf]
      %v7807 = vld [vmem:[%s3 + $0xb4] sm:$0xff]
      %v7808 = vld [vmem:[%s3 + $0xbc] sm:$0xf]
      %v7809 = vld [vmem:[%s3 + $0xc0] sm:$0xff]
      %v7810 = vld [vmem:[%s3 + $0xc8] sm:$0xf]
      %v7811 = vld [vmem:[%s3 + $0xcc] sm:$0xff]
      %v7812 = vld [vmem:[%s3 + $0xd4] sm:$0xf]
      %v7813 = vld [vmem:[%s3 + $0xd8] sm:$0xff]
      %v7814 = vld [vmem:[%s3 + $0xe0] sm:$0xf]
      %v7815 = vld [vmem:[%s3 + $0xe4] sm:$0xff]
      %v7816 = vld [vmem:[%s3 + $0xec] sm:$0xf]
      %v7817 = vld [vmem:[%s3 + $0xf0] sm:$0xff]
      %v7818 = vld [vmem:[%s3 + $0xf8] sm:$0xf]
      %v7819 = vld [vmem:[%s3 + $0xfc] sm:$0xff]
      %v7820 = vld [vmem:[%s3 + $0x104] sm:$0xf]
      %v7821 = vld [vmem:[%s3 + $0x108] sm:$0xff]
      %v7822 = vld [vmem:[%s3 + $0x110] sm:$0xf]
      %v7823 = vld [vmem:[%s3 + $0x114] sm:$0xff]
      %v7824 = vld [vmem:[%s3 + $0x11c] sm:$0xf]
      %v7825 = vld [vmem:[%s3 + $0x120] sm:$0xff]
      %v7826 = vld [vmem:[%s3 + $0x128] sm:$0xf]
      %v7827 = vld [vmem:[%s3 + $0x12c] sm:$0xff]
      %v7828 = vld [vmem:[%s3 + $0x134] sm:$0xf]
      %v7829 = vld [vmem:[%s3 + $0x138] sm:$0xff]
      %v7830 = vld [vmem:[%s3 + $0x140] sm:$0xf]
      %v7831 = vld [vmem:[%s3 + $0x144] sm:$0xff]
      %v7832 = vld [vmem:[%s3 + $0x14c] sm:$0xf]
      %v7833 = vld [vmem:[%s3 + $0x150] sm:$0xff]
      %v7834 = vld [vmem:[%s3 + $0x158] sm:$0xf]
      %v7835 = vld [vmem:[%s3 + $0x15c] sm:$0xff]
      %v7836 = vld [vmem:[%s3 + $0x164] sm:$0xf]
      %v7837 = vld [vmem:[%s3 + $0x168] sm:$0xff]
      %v7838 = vld [vmem:[%s3 + $0x170] sm:$0xf]
      %v7839 = vld [vmem:[%s3 + $0x174] sm:$0xff]
      %v7840 = vld [vmem:[%s3 + $0x17c] sm:$0xf]
      %v7841 = vpack.c.bf16 %v7747, %v7745
      %v7842 = vpack.c.bf16 %v7748, %v7746
      %v7843 = vpack.c.bf16 %v7751, %v7749
      %v7844 = vpack.c.bf16 %v7752, %v7750
      %v7845 = vpack.c.bf16 %v7755, %v7753
      %v7846 = vpack.c.bf16 %v7756, %v7754
      %v7847 = vpack.c.bf16 %v7759, %v7757
      %v7848 = vpack.c.bf16 %v7760, %v7758
      %v7849 = vpack.c.bf16 %v7763, %v7761
      %v7850 = vpack.c.bf16 %v7764, %v7762
      %v7851 = vpack.c.bf16 %v7767, %v7765
      %v7852 = vpack.c.bf16 %v7768, %v7766
      %v7853 = vpack.c.bf16 %v7771, %v7769
      %v7854 = vpack.c.bf16 %v7772, %v7770
      %v7855 = vpack.c.bf16 %v7775, %v7773
      %v7856 = vpack.c.bf16 %v7776, %v7774
      %v7857 = vld [vmem:[%s7] sm:$0x7]
      %v7859 = vlaneseq
      %v7860 = vshrl.u32 %v7859, 7
      %v7861 = vsub.s32 0, %v7860
      %v7862 = vrot.slane %v7857, %v7861
      %v7863 = vlaneseq
      %v7864 = vshrl.u32 %v7863, 7
      %v7865 = vsub.s32 1, %v7864
      %v7866 = vrot.slane %v7857, %v7865
      %v7867 = vlaneseq
      %v7868 = vshrl.u32 %v7867, 7
      %v7869 = vsub.s32 2, %v7868
      %v7870 = vrot.slane %v7857, %v7869
      %v7938 = vunpack.c.l.b16 %v7777
      %v7939 = vunpack.c.h.b16 %v7777
      %v7940 = vunpack.c.l.b16 %v7778
      %v7941 = vunpack.c.l.b16 %v7779
      %v7942 = vunpack.c.h.b16 %v7779
      %v7943 = vunpack.c.l.b16 %v7780
      %v7944 = vunpack.c.l.b16 %v7781
      %v7945 = vunpack.c.h.b16 %v7781
      %v7946 = vunpack.c.l.b16 %v7782
      %v7947 = vunpack.c.l.b16 %v7783
      %v7948 = vunpack.c.h.b16 %v7783
      %v7949 = vunpack.c.l.b16 %v7784
      %v7950 = vunpack.c.l.b16 %v7785
      %v7951 = vunpack.c.h.b16 %v7785
      %v7952 = vunpack.c.l.b16 %v7786
      %v7953 = vunpack.c.l.b16 %v7787
      %v7954 = vunpack.c.h.b16 %v7787
      %v7955 = vunpack.c.l.b16 %v7788
      %v7956 = vunpack.c.l.b16 %v7789
      %v7957 = vunpack.c.h.b16 %v7789
      %v7958 = vunpack.c.l.b16 %v7790
      %v7959 = vunpack.c.l.b16 %v7791
      %v7960 = vunpack.c.h.b16 %v7791
      %v7961 = vunpack.c.l.b16 %v7792
      %v7962 = vunpack.c.l.b16 %v7793
      %v7963 = vunpack.c.h.b16 %v7793
      %v7964 = vunpack.c.l.b16 %v7794
      %v7965 = vunpack.c.l.b16 %v7795
      %v7966 = vunpack.c.h.b16 %v7795
      %v7967 = vunpack.c.l.b16 %v7796
      %v7968 = vunpack.c.l.b16 %v7797
      %v7969 = vunpack.c.h.b16 %v7797
      %v7970 = vunpack.c.l.b16 %v7798
      %v7971 = vunpack.c.l.b16 %v7799
      %v7972 = vunpack.c.h.b16 %v7799
      %v7973 = vunpack.c.l.b16 %v7800
      %v7974 = vunpack.c.l.b16 %v7801
      %v7975 = vunpack.c.h.b16 %v7801
      %v7976 = vunpack.c.l.b16 %v7802
      %v7977 = vunpack.c.l.b16 %v7803
      %v7978 = vunpack.c.h.b16 %v7803
      %v7979 = vunpack.c.l.b16 %v7804
      %v7980 = vunpack.c.l.b16 %v7805
      %v7981 = vunpack.c.h.b16 %v7805
      %v7982 = vunpack.c.l.b16 %v7806
      %v7983 = vunpack.c.l.b16 %v7807
      %v7984 = vunpack.c.h.b16 %v7807
      %v7985 = vunpack.c.l.b16 %v7808
      %v7986 = vunpack.c.l.b16 %v7809
      %v7987 = vunpack.c.h.b16 %v7809
      %v7988 = vunpack.c.l.b16 %v7810
      %v7989 = vunpack.c.l.b16 %v7811
      %v7990 = vunpack.c.h.b16 %v7811
      %v7991 = vunpack.c.l.b16 %v7812
      %v7992 = vunpack.c.l.b16 %v7813
      %v7993 = vunpack.c.h.b16 %v7813
      %v7994 = vunpack.c.l.b16 %v7814
      %v7995 = vunpack.c.l.b16 %v7815
      %v7996 = vunpack.c.h.b16 %v7815
      %v7997 = vunpack.c.l.b16 %v7816
      %v7998 = vunpack.c.l.b16 %v7817
      %v7999 = vunpack.c.h.b16 %v7817
      %v8000 = vunpack.c.l.b16 %v7818
      %v8001 = vunpack.c.l.b16 %v7819
      %v8002 = vunpack.c.h.b16 %v7819
      %v8003 = vunpack.c.l.b16 %v7820
      %v8004 = vunpack.c.l.b16 %v7821
      %v8005 = vunpack.c.h.b16 %v7821
      %v8006 = vunpack.c.l.b16 %v7822
      %v8007 = vunpack.c.l.b16 %v7823
      %v8008 = vunpack.c.h.b16 %v7823
      %v8009 = vunpack.c.l.b16 %v7824
      %v8010 = vunpack.c.l.b16 %v7825
      %v8011 = vunpack.c.h.b16 %v7825
      %v8012 = vunpack.c.l.b16 %v7826
      %v8013 = vunpack.c.l.b16 %v7827
      %v8014 = vunpack.c.h.b16 %v7827
      %v8015 = vunpack.c.l.b16 %v7828
      %v8016 = vunpack.c.l.b16 %v7829
      %v8017 = vunpack.c.h.b16 %v7829
      %v8018 = vunpack.c.l.b16 %v7830
      %v8019 = vunpack.c.l.b16 %v7831
      %v8020 = vunpack.c.h.b16 %v7831
      %v8021 = vunpack.c.l.b16 %v7832
      %v8022 = vunpack.c.l.b16 %v7833
      %v8023 = vunpack.c.h.b16 %v7833
      %v8024 = vunpack.c.l.b16 %v7834
      %v8025 = vunpack.c.l.b16 %v7835
      %v8026 = vunpack.c.h.b16 %v7835
      %v8027 = vunpack.c.l.b16 %v7836
      %v8028 = vunpack.c.l.b16 %v7837
      %v8029 = vunpack.c.h.b16 %v7837
      %v8030 = vunpack.c.l.b16 %v7838
      %v8031 = vunpack.c.l.b16 %v7839
      %v8032 = vunpack.c.h.b16 %v7839
      %v8033 = vunpack.c.l.b16 %v7840
      %v8034 = vpack.c.b16 %v7941, %v7938
      %v8035 = vpack.c.b16 %v7942, %v7939
      %v8036 = vpack.c.b16 %v7943, %v7940
      %v8037 = vpack.c.b16 %v7947, %v7944
      %v8038 = vpack.c.b16 %v7948, %v7945
      %v8039 = vpack.c.b16 %v7949, %v7946
      %v8040 = vpack.c.b16 %v7953, %v7950
      %v8041 = vpack.c.b16 %v7954, %v7951
      %v8042 = vpack.c.b16 %v7955, %v7952
      %v8043 = vpack.c.b16 %v7959, %v7956
      %v8044 = vpack.c.b16 %v7960, %v7957
      %v8045 = vpack.c.b16 %v7961, %v7958
      %v8046 = vpack.c.b16 %v7965, %v7962
      %v8047 = vpack.c.b16 %v7966, %v7963
      %v8048 = vpack.c.b16 %v7967, %v7964
      %v8049 = vpack.c.b16 %v7971, %v7968
      %v8050 = vpack.c.b16 %v7972, %v7969
      %v8051 = vpack.c.b16 %v7973, %v7970
      %v8052 = vpack.c.b16 %v7977, %v7974
      %v8053 = vpack.c.b16 %v7978, %v7975
      %v8054 = vpack.c.b16 %v7979, %v7976
      %v8055 = vpack.c.b16 %v7983, %v7980
      %v8056 = vpack.c.b16 %v7984, %v7981
      %v8057 = vpack.c.b16 %v7985, %v7982
      %v8058 = vpack.c.b16 %v7989, %v7986
      %v8059 = vpack.c.b16 %v7990, %v7987
      %v8060 = vpack.c.b16 %v7991, %v7988
      %v8061 = vpack.c.b16 %v7995, %v7992
      %v8062 = vpack.c.b16 %v7996, %v7993
      %v8063 = vpack.c.b16 %v7997, %v7994
      %v8064 = vpack.c.b16 %v8001, %v7998
      %v8065 = vpack.c.b16 %v8002, %v7999
      %v8066 = vpack.c.b16 %v8003, %v8000
      %v8067 = vpack.c.b16 %v8007, %v8004
      %v8068 = vpack.c.b16 %v8008, %v8005
      %v8069 = vpack.c.b16 %v8009, %v8006
      %v8070 = vpack.c.b16 %v8013, %v8010
      %v8071 = vpack.c.b16 %v8014, %v8011
      %v8072 = vpack.c.b16 %v8015, %v8012
      %v8073 = vpack.c.b16 %v8019, %v8016
      %v8074 = vpack.c.b16 %v8020, %v8017
      %v8075 = vpack.c.b16 %v8021, %v8018
      %v8076 = vpack.c.b16 %v8025, %v8022
      %v8077 = vpack.c.b16 %v8026, %v8023
      %v8078 = vpack.c.b16 %v8027, %v8024
      %v8079 = vpack.c.b16 %v8031, %v8028
      %v8080 = vpack.c.b16 %v8032, %v8029
      %v8081 = vpack.c.b16 %v8033, %v8030
      %8130 = vmatprep.subr.bf16.mxu0 %v8035
      %8131 = vmatpush1.bf16.msra.mxu0 %v8034
      %8132 = vmatprep.subr.bf16.mxu0 %v8038
      %8133 = vmatpush1.bf16.msra.mxu0 %v8037
      %8134 = vmatprep.subr.bf16.mxu0 %v8041
      %8135 = vmatpush1.bf16.msra.mxu0 %v8040
      %8136 = vmatprep.subr.bf16.mxu0 %v8044
      %8137 = vmatpush1.bf16.msra.mxu0 %v8043
      %8138 = vmatprep.subr.bf16.mxu0 %v8047
      %8139 = vmatpush1.bf16.msra.mxu0 %v8046
      %8140 = vmatprep.subr.bf16.mxu0 %v8050
      %8141 = vmatpush1.bf16.msra.mxu0 %v8049
      %8142 = vmatprep.subr.bf16.mxu0 %v8053
      %8143 = vmatpush1.bf16.msra.mxu0 %v8052
      %8144 = vmatprep.subr.bf16.mxu0 %v8056
      %8145 = vmatpush1.bf16.msra.mxu0 %v8055
      %8146 = vmatprep.subr.bf16.mxu0 %v8059
      %8147 = vmatpush1.bf16.msra.mxu0 %v8058
      %8148 = vmatprep.subr.bf16.mxu0 %v8062
      %8149 = vmatpush1.bf16.msra.mxu0 %v8061
      %8150 = vmatprep.subr.bf16.mxu0 %v8065
      %8151 = vmatpush1.bf16.msra.mxu0 %v8064
      %8152 = vmatprep.subr.bf16.mxu0 %v8068
      %8153 = vmatpush1.bf16.msra.mxu0 %v8067
      %8154 = vmatprep.subr.bf16.mxu0 %v8071
      %8155 = vmatpush1.bf16.msra.mxu0 %v8070
      %8156 = vmatprep.subr.bf16.mxu0 %v8074
      %8157 = vmatpush1.bf16.msra.mxu0 %v8073
      %8158 = vmatprep.subr.bf16.mxu0 %v8077
      %8159 = vmatpush1.bf16.msra.mxu0 %v8076
      %8160 = vmatprep.subr.bf16.mxu0 %v8080
      %8161 = vmatpush1.bf16.msra.mxu0 %v8079
      %8162 = vmatprep.mubr.bf16.mxu0 %v7842
      %8163 = vmatmul.mubr.bf16.gmra.mrb[0].mxu0 %v7841
      %v8164 = vpop.f32.mrb[0].mxu0
      %v8165 = vadd.f32 %v7862, %v8164
      %v8166 = vpop.f32.mrb[0].mxu0
      %v8167 = vadd.f32 %v7866, %v8166
      %v8168 = vpop.f32.mrb[0].mxu0
      %v8169 = vadd.f32 %v7862, %v8168
      %v8170 = vpop.f32.mrb[0].mxu0
      %v8171 = vadd.f32 %v7866, %v8170
      %8172 = vmatprep.mubr.bf16.mxu0 %v7844
      %8173 = vmatmul.mubr.bf16.gmra.mrb[0].mxu0 %v7843
      %v8174 = vpop.f32.mrb[0].mxu0
      %v8175 = vadd.f32 %v7862, %v8174
      %v8176 = vpop.f32.mrb[0].mxu0
      %v8177 = vadd.f32 %v7866, %v8176
      %v8178 = vpop.f32.mrb[0].mxu0
      %v8179 = vadd.f32 %v7862, %v8178
      %v8180 = vpop.f32.mrb[0].mxu0
      %v8181 = vadd.f32 %v7866, %v8180
      %8182 = vmatprep.mubr.bf16.mxu0 %v7846
      %8183 = vmatmul.mubr.bf16.gmra.mrb[0].mxu0 %v7845
      %v8184 = vpop.f32.mrb[0].mxu0
      %v8185 = vadd.f32 %v7862, %v8184
      %v8186 = vpop.f32.mrb[0].mxu0
      %v8187 = vadd.f32 %v7866, %v8186
      %v8188 = vpop.f32.mrb[0].mxu0
      %v8189 = vadd.f32 %v7862, %v8188
      %v8190 = vpop.f32.mrb[0].mxu0
      %v8191 = vadd.f32 %v7866, %v8190
      %8192 = vmatprep.mubr.bf16.mxu0 %v7848
      %8193 = vmatmul.mubr.bf16.gmra.mrb[0].mxu0 %v7847
      %v8194 = vpop.f32.mrb[0].mxu0
      %v8195 = vadd.f32 %v7862, %v8194
      %v8196 = vpop.f32.mrb[0].mxu0
      %v8197 = vadd.f32 %v7866, %v8196
      %v8198 = vpop.f32.mrb[0].mxu0
      %v8199 = vadd.f32 %v7862, %v8198
      %v8200 = vpop.f32.mrb[0].mxu0
      %v8201 = vadd.f32 %v7866, %v8200
      %8202 = vmatprep.mubr.bf16.mxu0 %v7850
      %8203 = vmatmul.mubr.bf16.gmra.mrb[0].mxu0 %v7849
      %v8204 = vpop.f32.mrb[0].mxu0
      %v8205 = vadd.f32 %v7862, %v8204
      %v8206 = vpop.f32.mrb[0].mxu0
      %v8207 = vadd.f32 %v7866, %v8206
      %v8208 = vpop.f32.mrb[0].mxu0
      %v8209 = vadd.f32 %v7862, %v8208
      %v8210 = vpop.f32.mrb[0].mxu0
      %v8211 = vadd.f32 %v7866, %v8210
      %8212 = vmatprep.mubr.bf16.mxu0 %v7852
      %8213 = vmatmul.mubr.bf16.gmra.mrb[0].mxu0 %v7851
      %v8214 = vpop.f32.mrb[0].mxu0
      %v8215 = vadd.f32 %v7862, %v8214
      %v8216 = vpop.f32.mrb[0].mxu0
      %v8217 = vadd.f32 %v7866, %v8216
      %v8218 = vpop.f32.mrb[0].mxu0
      %v8219 = vadd.f32 %v7862, %v8218
      %v8220 = vpop.f32.mrb[0].mxu0
      %v8221 = vadd.f32 %v7866, %v8220
      %8222 = vmatprep.mubr.bf16.mxu0 %v7854
      %8223 = vmatmul.mubr.bf16.gmra.mrb[0].mxu0 %v7853
      %v8224 = vpop.f32.mrb[0].mxu0
      %v8225 = vadd.f32 %v7862, %v8224
      %v8226 = vpop.f32.mrb[0].mxu0
      %v8227 = vadd.f32 %v7866, %v8226
      %v8228 = vpop.f32.mrb[0].mxu0
      %v8229 = vadd.f32 %v7862, %v8228
      %v8230 = vpop.f32.mrb[0].mxu0
      %v8231 = vadd.f32 %v7866, %v8230
      %8232 = vmatprep.mubr.bf16.mxu0 %v7856
      %8233 = vmatmul.mubr.bf16.gmra.mrb[0].mxu0 %v7855
      %v8234 = vpop.f32.mrb[0].mxu0
      %v8235 = vadd.f32 %v7862, %v8234
      %v8236 = vpop.f32.mrb[0].mxu0
      %v8237 = vadd.f32 %v7866, %v8236
      %v8238 = vpop.f32.mrb[0].mxu0
      %v8239 = vadd.f32 %v7862, %v8238
      %v8240 = vpop.f32.mrb[0].mxu0
      %v8241 = vadd.f32 %v7866, %v8240
      %8242 = vdwg.mxu0
      %8243 = vmatprep.subr.bf16.mxu0 0
      %8244 = vmatpush1.bf16.msra.mxu0 %v8036
      %8245 = vmatprep.subr.bf16.mxu0 0
      %8246 = vmatpush1.bf16.msra.mxu0 %v8039
      %8247 = vmatprep.subr.bf16.mxu0 0
      %8248 = vmatpush1.bf16.msra.mxu0 %v8042
      %8249 = vmatprep.subr.bf16.mxu0 0
      %8250 = vmatpush1.bf16.msra.mxu0 %v8045
      %8251 = vmatprep.subr.bf16.mxu0 0
      %8252 = vmatpush1.bf16.msra.mxu0 %v8048
      %8253 = vmatprep.subr.bf16.mxu0 0
      %8254 = vmatpush1.bf16.msra.mxu0 %v8051
      %8255 = vmatprep.subr.bf16.mxu0 0
      %8256 = vmatpush1.bf16.msra.mxu0 %v8054
      %8257 = vmatprep.subr.bf16.mxu0 0
      %8258 = vmatpush1.bf16.msra.mxu0 %v8057
      %8259 = vmatprep.subr.bf16.mxu0 0
      %8260 = vmatpush1.bf16.msra.mxu0 %v8060
      %8261 = vmatprep.subr.bf16.mxu0 0
      %8262 = vmatpush1.bf16.msra.mxu0 %v8063
      %8263 = vmatprep.subr.bf16.mxu0 0
      %8264 = vmatpush1.bf16.msra.mxu0 %v8066
      %8265 = vmatprep.subr.bf16.mxu0 0
      %8266 = vmatpush1.bf16.msra.mxu0 %v8069
      %8267 = vmatprep.subr.bf16.mxu0 0
      %8268 = vmatpush1.bf16.msra.mxu0 %v8072
      %8269 = vmatprep.subr.bf16.mxu0 0
      %8270 = vmatpush1.bf16.msra.mxu0 %v8075
      %8271 = vmatprep.subr.bf16.mxu0 0
      %8272 = vmatpush1.bf16.msra.mxu0 %v8078
      %8273 = vmatprep.subr.bf16.mxu0 0
      %8274 = vmatpush1.bf16.msra.mxu0 %v8081
      %8275 = vmatprep.mubr.bf16.mxu0 %v7842
      %8276 = vmatmul.mubr.bf16.gmra.mrb[0].mxu0 %v7841
      %v8277 = vpop.f32.mrb[0].mxu0
      %v8278 = vadd.f32 %v7870, %v8277
      %v8279 = vpop.f32.mrb[0].mxu0
      %v8280 = vpop.f32.mrb[0].mxu0
      %v8281 = vadd.f32 %v7870, %v8280
      %v8282 = vpop.f32.mrb[0].mxu0
      %8283 = vmatprep.mubr.bf16.mxu0 %v7844
      %8284 = vmatmul.mubr.bf16.gmra.mrb[0].mxu0 %v7843
      %v8285 = vpop.f32.mrb[0].mxu0
      %v8286 = vadd.f32 %v7870, %v8285
      %v8287 = vpop.f32.mrb[0].mxu0
      %v8288 = vpop.f32.mrb[0].mxu0
      %v8289 = vadd.f32 %v7870, %v8288
      %v8290 = vpop.f32.mrb[0].mxu0
      %8291 = vmatprep.mubr.bf16.mxu0 %v7846
      %8292 = vmatmul.mubr.bf16.gmra.mrb[0].mxu0 %v7845
      %v8293 = vpop.f32.mrb[0].mxu0
      %v8294 = vadd.f32 %v7870, %v8293
      %v8295 = vpop.f32.mrb[0].mxu0
      %v8296 = vpop.f32.mrb[0].mxu0
      %v8297 = vadd.f32 %v7870, %v8296
      %v8298 = vpop.f32.mrb[0].mxu0
      %8299 = vmatprep.mubr.bf16.mxu0 %v7848
      %8300 = vmatmul.mubr.bf16.gmra.mrb[0].mxu0 %v7847
      %v8301 = vpop.f32.mrb[0].mxu0
      %v8302 = vadd.f32 %v7870, %v8301
      %v8303 = vpop.f32.mrb[0].mxu0
      %v8304 = vpop.f32.mrb[0].mxu0
      %v8305 = vadd.f32 %v7870, %v8304
      %v8306 = vpop.f32.mrb[0].mxu0
      %8307 = vmatprep.mubr.bf16.mxu0 %v7850
      %8308 = vmatmul.mubr.bf16.gmra.mrb[0].mxu0 %v7849
      %v8309 = vpop.f32.mrb[0].mxu0
      %v8310 = vadd.f32 %v7870, %v8309
      %v8311 = vpop.f32.mrb[0].mxu0
      %v8312 = vpop.f32.mrb[0].mxu0
      %v8313 = vadd.f32 %v7870, %v8312
      %v8314 = vpop.f32.mrb[0].mxu0
      %8315 = vmatprep.mubr.bf16.mxu0 %v7852
      %8316 = vmatmul.mubr.bf16.gmra.mrb[0].mxu0 %v7851
      %v8317 = vpop.f32.mrb[0].mxu0
      %v8318 = vadd.f32 %v7870, %v8317
      %v8319 = vpop.f32.mrb[0].mxu0
      %v8320 = vpop.f32.mrb[0].mxu0
      %v8321 = vadd.f32 %v7870, %v8320
      %v8322 = vpop.f32.mrb[0].mxu0
      %8323 = vmatprep.mubr.bf16.mxu0 %v7854
      %8324 = vmatmul.mubr.bf16.gmra.mrb[0].mxu0 %v7853
      %v8325 = vpop.f32.mrb[0].mxu0
      %v8326 = vadd.f32 %v7870, %v8325
      %v8327 = vpop.f32.mrb[0].mxu0
      %v8328 = vpop.f32.mrb[0].mxu0
      %v8329 = vadd.f32 %v7870, %v8328
      %v8330 = vpop.f32.mrb[0].mxu0
      %8331 = vmatprep.mubr.bf16.mxu0 %v7856
      %8332 = vmatmul.mubr.bf16.gmra.mrb[0].mxu0 %v7855
      %v8333 = vpop.f32.mrb[0].mxu0
      %v8334 = vadd.f32 %v7870, %v8333
      %v8335 = vpop.f32.mrb[0].mxu0
      %v8336 = vpop.f32.mrb[0].mxu0
      %v8337 = vadd.f32 %v7870, %v8336
      %v8338 = vpop.f32.mrb[0].mxu0
      %8339 = vdwg.mxu0
      %v8340 = vmax.f32 %v8278, 0.0
      %v8341 = vmax.f32 %v8281, 0.0
      %v8342 = vmax.f32 %v8286, 0.0
      %v8343 = vmax.f32 %v8289, 0.0
      %v8344 = vmax.f32 %v8294, 0.0
      %v8345 = vmax.f32 %v8297, 0.0
      %v8346 = vmax.f32 %v8302, 0.0
      %v8347 = vmax.f32 %v8305, 0.0
      %v8348 = vmax.f32 %v8310, 0.0
      %v8349 = vmax.f32 %v8313, 0.0
      %v8350 = vmax.f32 %v8318, 0.0
      %v8351 = vmax.f32 %v8321, 0.0
      %v8352 = vmax.f32 %v8326, 0.0
      %v8353 = vmax.f32 %v8329, 0.0
      %v8354 = vmax.f32 %v8334, 0.0
      %v8355 = vmax.f32 %v8337, 0.0
      %v8356 = vld [vmem:[%s4] sm:$0xf]
      %v8357 = vld [vmem:[%s4 + $0x4] sm:$0xf]
      %v8358 = vld [vmem:[%s4 + $0x8] sm:$0xf]
      %v8359 = vld [vmem:[%s4 + $0xc] sm:$0xf]
      %v8360 = vld [vmem:[%s4 + $0x10] sm:$0xf]
      %v8361 = vld [vmem:[%s4 + $0x14] sm:$0xf]
      %v8362 = vld [vmem:[%s4 + $0x18] sm:$0xf]
      %v8363 = vld [vmem:[%s4 + $0x1c] sm:$0xf]
      %v8364 = vld [vmem:[%s4 + $0x20] sm:$0xf]
      %v8365 = vld [vmem:[%s4 + $0x24] sm:$0xf]
      %v8366 = vld [vmem:[%s4 + $0x28] sm:$0xf]
      %v8367 = vld [vmem:[%s4 + $0x2c] sm:$0xf]
      %v8368 = vld [vmem:[%s4 + $0x30] sm:$0xf]
      %v8369 = vld [vmem:[%s4 + $0x34] sm:$0xf]
      %v8370 = vld [vmem:[%s4 + $0x38] sm:$0xf]
      %v8371 = vld [vmem:[%s4 + $0x3c] sm:$0xf]
      %v8372 = vld [vmem:[%s4 + $0x40] sm:$0xf]
      %v8373 = vld [vmem:[%s4 + $0x44] sm:$0xf]
      %v8374 = vld [vmem:[%s4 + $0x48] sm:$0xf]
      %v8375 = vld [vmem:[%s4 + $0x4c] sm:$0xf]
      %v8376 = vld [vmem:[%s4 + $0x50] sm:$0xf]
      %v8377 = vld [vmem:[%s4 + $0x54] sm:$0xf]
      %v8378 = vld [vmem:[%s4 + $0x58] sm:$0xf]
      %v8379 = vld [vmem:[%s4 + $0x5c] sm:$0xf]
      %v8380 = vld [vmem:[%s4 + $0x60] sm:$0xf]
      %v8381 = vld [vmem:[%s4 + $0x64] sm:$0xf]
      %v8382 = vld [vmem:[%s4 + $0x68] sm:$0xf]
      %v8383 = vld [vmem:[%s4 + $0x6c] sm:$0xf]
      %v8384 = vld [vmem:[%s4 + $0x70] sm:$0xf]
      %v8385 = vld [vmem:[%s4 + $0x74] sm:$0xf]
      %v8386 = vld [vmem:[%s4 + $0x78] sm:$0xf]
      %v8387 = vld [vmem:[%s4 + $0x7c] sm:$0xf]
      %v8388 = vpack.c.bf16 %v8169, %v8165
      %v8389 = vpack.c.bf16 %v8171, %v8167
      %v8390 = vpack.c.bf16 %v8179, %v8175
      %v8391 = vpack.c.bf16 %v8181, %v8177
      %v8392 = vpack.c.bf16 %v8189, %v8185
      %v8393 = vpack.c.bf16 %v8191, %v8187
      %v8394 = vpack.c.bf16 %v8199, %v8195
      %v8395 = vpack.c.bf16 %v8201, %v8197
      %v8396 = vpack.c.bf16 %v8209, %v8205
      %v8397 = vpack.c.bf16 %v8211, %v8207
      %v8398 = vpack.c.bf16 %v8219, %v8215
      %v8399 = vpack.c.bf16 %v8221, %v8217
      %v8400 = vpack.c.bf16 %v8229, %v8225
      %v8401 = vpack.c.bf16 %v8231, %v8227
      %v8402 = vpack.c.bf16 %v8239, %v8235
      %v8403 = vpack.c.bf16 %v8241, %v8237
      %v8436 = vunpack.c.l.b16 %v8356
      %v8437 = vunpack.c.l.b16 %v8357
      %v8438 = vunpack.c.l.b16 %v8358
      %v8439 = vunpack.c.l.b16 %v8359
      %v8440 = vunpack.c.l.b16 %v8360
      %v8441 = vunpack.c.l.b16 %v8361
      %v8442 = vunpack.c.l.b16 %v8362
      %v8443 = vunpack.c.l.b16 %v8363
      %v8444 = vunpack.c.l.b16 %v8364
      %v8445 = vunpack.c.l.b16 %v8365
      %v8446 = vunpack.c.l.b16 %v8366
      %v8447 = vunpack.c.l.b16 %v8367
      %v8448 = vunpack.c.l.b16 %v8368
      %v8449 = vunpack.c.l.b16 %v8369
      %v8450 = vunpack.c.l.b16 %v8370
      %v8451 = vunpack.c.l.b16 %v8371
      %v8452 = vunpack.c.l.b16 %v8372
      %v8453 = vunpack.c.l.b16 %v8373
      %v8454 = vunpack.c.l.b16 %v8374
      %v8455 = vunpack.c.l.b16 %v8375
      %v8456 = vunpack.c.l.b16 %v8376
      %v8457 = vunpack.c.l.b16 %v8377
      %v8458 = vunpack.c.l.b16 %v8378
      %v8459 = vunpack.c.l.b16 %v8379
      %v8460 = vunpack.c.l.b16 %v8380
      %v8461 = vunpack.c.l.b16 %v8381
      %v8462 = vunpack.c.l.b16 %v8382
      %v8463 = vunpack.c.l.b16 %v8383
      %v8464 = vunpack.c.l.b16 %v8384
      %v8465 = vunpack.c.l.b16 %v8385
      %v8466 = vunpack.c.l.b16 %v8386
      %v8467 = vunpack.c.l.b16 %v8387
      %v8468 = vpack.c.b16 %v8437, %v8436
      %v8469 = vpack.c.b16 %v8439, %v8438
      %v8470 = vpack.c.b16 %v8441, %v8440
      %v8471 = vpack.c.b16 %v8443, %v8442
      %v8472 = vpack.c.b16 %v8445, %v8444
      %v8473 = vpack.c.b16 %v8447, %v8446
      %v8474 = vpack.c.b16 %v8449, %v8448
      %v8475 = vpack.c.b16 %v8451, %v8450
      %v8476 = vpack.c.b16 %v8453, %v8452
      %v8477 = vpack.c.b16 %v8455, %v8454
      %v8478 = vpack.c.b16 %v8457, %v8456
      %v8479 = vpack.c.b16 %v8459, %v8458
      %v8480 = vpack.c.b16 %v8461, %v8460
      %v8481 = vpack.c.b16 %v8463, %v8462
      %v8482 = vpack.c.b16 %v8465, %v8464
      %v8483 = vpack.c.b16 %v8467, %v8466
      %8500 = vmatprep.subr.bf16.mxu0 0
      %8501 = vmatpush1.bf16.msra.mxu0 %v8468
      %8502 = vmatprep.subr.bf16.mxu0 0
      %8503 = vmatpush1.bf16.msra.mxu0 %v8469
      %8504 = vmatprep.subr.bf16.mxu0 0
      %8505 = vmatpush1.bf16.msra.mxu0 %v8470
      %8506 = vmatprep.subr.bf16.mxu0 0
      %8507 = vmatpush1.bf16.msra.mxu0 %v8471
      %8508 = vmatprep.subr.bf16.mxu0 0
      %8509 = vmatpush1.bf16.msra.mxu0 %v8472
      %8510 = vmatprep.subr.bf16.mxu0 0
      %8511 = vmatpush1.bf16.msra.mxu0 %v8473
      %8512 = vmatprep.subr.bf16.mxu0 0
      %8513 = vmatpush1.bf16.msra.mxu0 %v8474
      %8514 = vmatprep.subr.bf16.mxu0 0
      %8515 = vmatpush1.bf16.msra.mxu0 %v8475
      %8516 = vmatprep.subr.bf16.mxu0 0
      %8517 = vmatpush1.bf16.msra.mxu0 %v8476
      %8518 = vmatprep.subr.bf16.mxu0 0
      %8519 = vmatpush1.bf16.msra.mxu0 %v8477
      %8520 = vmatprep.subr.bf16.mxu0 0
      %8521 = vmatpush1.bf16.msra.mxu0 %v8478
      %8522 = vmatprep.subr.bf16.mxu0 0
      %8523 = vmatpush1.bf16.msra.mxu0 %v8479
      %8524 = vmatprep.subr.bf16.mxu0 0
      %8525 = vmatpush1.bf16.msra.mxu0 %v8480
      %8526 = vmatprep.subr.bf16.mxu0 0
      %8527 = vmatpush1.bf16.msra.mxu0 %v8481
      %8528 = vmatprep.subr.bf16.mxu0 0
      %8529 = vmatpush1.bf16.msra.mxu0 %v8482
      %8530 = vmatprep.subr.bf16.mxu0 0
      %8531 = vmatpush1.bf16.msra.mxu0 %v8483
      %8532 = vmatprep.mubr.bf16.mxu0 %v8389
      %8533 = vmatmul.mubr.bf16.gmra.mrb[0].mxu0 %v8388
      %v8534 = vpop.f32.mrb[0].mxu0
      %v8535 = vadd.f32 %v5020, %v8534
      %v8536 = vpop.f32.mrb[0].mxu0
      %v8537 = vpop.f32.mrb[0].mxu0
      %v8538 = vadd.f32 %v5023, %v8537
      %v8539 = vpop.f32.mrb[0].mxu0
      %8540 = vmatprep.mubr.bf16.mxu0 %v8391
      %8541 = vmatmul.mubr.bf16.gmra.mrb[0].mxu0 %v8390
      %v8542 = vpop.f32.mrb[0].mxu0
      %v8543 = vadd.f32 %v5028, %v8542
      %v8544 = vpop.f32.mrb[0].mxu0
      %v8545 = vpop.f32.mrb[0].mxu0
      %v8546 = vadd.f32 %v5031, %v8545
      %v8547 = vpop.f32.mrb[0].mxu0
      %8548 = vmatprep.mubr.bf16.mxu0 %v8393
      %8549 = vmatmul.mubr.bf16.gmra.mrb[0].mxu0 %v8392
      %v8550 = vpop.f32.mrb[0].mxu0
      %v8551 = vadd.f32 %v5036, %v8550
      %v8552 = vpop.f32.mrb[0].mxu0
      %v8553 = vpop.f32.mrb[0].mxu0
      %v8554 = vadd.f32 %v5039, %v8553
      %v8555 = vpop.f32.mrb[0].mxu0
      %8556 = vmatprep.mubr.bf16.mxu0 %v8395
      %8557 = vmatmul.mubr.bf16.gmra.mrb[0].mxu0 %v8394
      %v8558 = vpop.f32.mrb[0].mxu0
      %v8559 = vadd.f32 %v5044, %v8558
      %v8560 = vpop.f32.mrb[0].mxu0
      %v8561 = vpop.f32.mrb[0].mxu0
      %v8562 = vadd.f32 %v5047, %v8561
      %v8563 = vpop.f32.mrb[0].mxu0
      %8564 = vmatprep.mubr.bf16.mxu0 %v8397
      %8565 = vmatmul.mubr.bf16.gmra.mrb[0].mxu0 %v8396
      %v8566 = vpop.f32.mrb[0].mxu0
      %v8567 = vadd.f32 %v5052, %v8566
      %v8568 = vpop.f32.mrb[0].mxu0
      %v8569 = vpop.f32.mrb[0].mxu0
      %v8570 = vadd.f32 %v5055, %v8569
      %v8571 = vpop.f32.mrb[0].mxu0
      %8572 = vmatprep.mubr.bf16.mxu0 %v8399
      %8573 = vmatmul.mubr.bf16.gmra.mrb[0].mxu0 %v8398
      %v8574 = vpop.f32.mrb[0].mxu0
      %v8575 = vadd.f32 %v5060, %v8574
      %v8576 = vpop.f32.mrb[0].mxu0
      %v8577 = vpop.f32.mrb[0].mxu0
      %v8578 = vadd.f32 %v5063, %v8577
      %v8579 = vpop.f32.mrb[0].mxu0
      %8580 = vmatprep.mubr.bf16.mxu0 %v8401
      %8581 = vmatmul.mubr.bf16.gmra.mrb[0].mxu0 %v8400
      %v8582 = vpop.f32.mrb[0].mxu0
      %v8583 = vadd.f32 %v5068, %v8582
      %v8584 = vpop.f32.mrb[0].mxu0
      %v8585 = vpop.f32.mrb[0].mxu0
      %v8586 = vadd.f32 %v5071, %v8585
      %v8587 = vpop.f32.mrb[0].mxu0
      %8588 = vmatprep.mubr.bf16.mxu0 %v8403
      %8589 = vmatmul.mubr.bf16.gmra.mrb[0].mxu0 %v8402
      %v8590 = vpop.f32.mrb[0].mxu0
      %v8591 = vadd.f32 %v5076, %v8590
      %v8592 = vpop.f32.mrb[0].mxu0
      %v8593 = vpop.f32.mrb[0].mxu0
      %v8594 = vadd.f32 %v5079, %v8593
      %v8595 = vpop.f32.mrb[0].mxu0
      %8596 = vdwg.mxu0
      %v8597 = vld [vmem:[%s8] sm:$0x1]
      %v8599 = vlaneseq
      %v8600 = vshrl.u32 %v8599, 7
      %v8601 = vsub.s32 0, %v8600
      %v8602 = vrot.slane %v8597, %v8601
      %v8604 = vadd.f32 %v8535, %v8602
      %v8605 = vadd.f32 %v8538, %v8602
      %v8606 = vadd.f32 %v8543, %v8602
      %v8607 = vadd.f32 %v8546, %v8602
      %v8608 = vadd.f32 %v8551, %v8602
      %v8609 = vadd.f32 %v8554, %v8602
      %v8610 = vadd.f32 %v8559, %v8602
      %v8611 = vadd.f32 %v8562, %v8602
      %v8612 = vadd.f32 %v8567, %v8602
      %v8613 = vadd.f32 %v8570, %v8602
      %v8614 = vadd.f32 %v8575, %v8602
      %v8615 = vadd.f32 %v8578, %v8602
      %v8616 = vadd.f32 %v8583, %v8602
      %v8617 = vadd.f32 %v8586, %v8602
      %v8618 = vadd.f32 %v8591, %v8602
      %v8619 = vadd.f32 %v8594, %v8602
      %v8620 = vmax.f32 %v8604, 0.0
      %v8621 = vmax.f32 %v8605, 0.0
      %v8622 = vmax.f32 %v8606, 0.0
      %v8623 = vmax.f32 %v8607, 0.0
      %v8624 = vmax.f32 %v8608, 0.0
      %v8625 = vmax.f32 %v8609, 0.0
      %v8626 = vmax.f32 %v8610, 0.0
      %v8627 = vmax.f32 %v8611, 0.0
      %v8628 = vmax.f32 %v8612, 0.0
      %v8629 = vmax.f32 %v8613, 0.0
      %v8630 = vmax.f32 %v8614, 0.0
      %v8631 = vmax.f32 %v8615, 0.0
      %v8632 = vmax.f32 %v8616, 0.0
      %v8633 = vmax.f32 %v8617, 0.0
      %v8634 = vmax.f32 %v8618, 0.0
      %v8635 = vmax.f32 %v8619, 0.0
      %v8636 = vld [vmem:[%s5] sm:$0xf]
      %v8637 = vld [vmem:[%s5 + $0x4] sm:$0xf]
      %v8638 = vld [vmem:[%s5 + $0x8] sm:$0xf]
      %v8639 = vld [vmem:[%s5 + $0xc] sm:$0xf]
      %v8640 = vld [vmem:[%s5 + $0x10] sm:$0xf]
      %v8641 = vld [vmem:[%s5 + $0x14] sm:$0xf]
      %v8642 = vld [vmem:[%s5 + $0x18] sm:$0xf]
      %v8643 = vld [vmem:[%s5 + $0x1c] sm:$0xf]
      %v8644 = vld [vmem:[%s5 + $0x20] sm:$0xf]
      %v8645 = vld [vmem:[%s5 + $0x24] sm:$0xf]
      %v8646 = vld [vmem:[%s5 + $0x28] sm:$0xf]
      %v8647 = vld [vmem:[%s5 + $0x2c] sm:$0xf]
      %v8648 = vld [vmem:[%s5 + $0x30] sm:$0xf]
      %v8649 = vld [vmem:[%s5 + $0x34] sm:$0xf]
      %v8650 = vld [vmem:[%s5 + $0x38] sm:$0xf]
      %v8651 = vld [vmem:[%s5 + $0x3c] sm:$0xf]
      %v8652 = vpack.c.bf16 %v8621, %v8620
      %v8653 = vpack.c.bf16 %v8623, %v8622
      %v8654 = vpack.c.bf16 %v8625, %v8624
      %v8655 = vpack.c.bf16 %v8627, %v8626
      %v8656 = vpack.c.bf16 %v8629, %v8628
      %v8657 = vpack.c.bf16 %v8631, %v8630
      %v8658 = vpack.c.bf16 %v8633, %v8632
      %v8659 = vpack.c.bf16 %v8635, %v8634
      %v8660 = vld [vmem:[%s4334] sm:$0x1]
      %v8662 = vlaneseq
      %v8663 = vshrl.u32 %v8662, 7
      %v8664 = vsub.s32 0, %v8663
      %v8665 = vrot.slane %v8660, %v8664
      %v8683 = vunpack.c.l.b16 %v8636
      %v8684 = vunpack.c.l.b16 %v8637
      %v8685 = vunpack.c.l.b16 %v8638
      %v8686 = vunpack.c.l.b16 %v8639
      %v8687 = vunpack.c.l.b16 %v8640
      %v8688 = vunpack.c.l.b16 %v8641
      %v8689 = vunpack.c.l.b16 %v8642
      %v8690 = vunpack.c.l.b16 %v8643
      %v8691 = vunpack.c.l.b16 %v8644
      %v8692 = vunpack.c.l.b16 %v8645
      %v8693 = vunpack.c.l.b16 %v8646
      %v8694 = vunpack.c.l.b16 %v8647
      %v8695 = vunpack.c.l.b16 %v8648
      %v8696 = vunpack.c.l.b16 %v8649
      %v8697 = vunpack.c.l.b16 %v8650
      %v8698 = vunpack.c.l.b16 %v8651
      %v8699 = vpack.c.b16 %v8684, %v8683
      %v8700 = vpack.c.b16 %v8686, %v8685
      %v8701 = vpack.c.b16 %v8688, %v8687
      %v8702 = vpack.c.b16 %v8690, %v8689
      %v8703 = vpack.c.b16 %v8692, %v8691
      %v8704 = vpack.c.b16 %v8694, %v8693
      %v8705 = vpack.c.b16 %v8696, %v8695
      %v8706 = vpack.c.b16 %v8698, %v8697
      %8715 = vmatprep.subr.bf16.mxu0 0
      %8716 = vmatpush1.bf16.msra.mxu0 %v8699
      %8717 = vmatprep.subr.bf16.mxu0 0
      %8718 = vmatpush1.bf16.msra.mxu0 %v8700
      %8719 = vmatprep.subr.bf16.mxu0 0
      %8720 = vmatpush1.bf16.msra.mxu0 %v8701
      %8721 = vmatprep.subr.bf16.mxu0 0
      %8722 = vmatpush1.bf16.msra.mxu0 %v8702
      %8723 = vmatprep.subr.bf16.mxu0 0
      %8724 = vmatpush1.bf16.msra.mxu0 %v8703
      %8725 = vmatprep.subr.bf16.mxu0 0
      %8726 = vmatpush1.bf16.msra.mxu0 %v8704
      %8727 = vmatprep.subr.bf16.mxu0 0
      %8728 = vmatpush1.bf16.msra.mxu0 %v8705
      %8729 = vmatprep.subr.bf16.mxu0 0
      %8730 = vmatpush1.bf16.msra.mxu0 %v8706
      %8731 = vmatprep.subr.bf16.mxu0 0
      %8732 = vmatpush1.bf16.msra.mxu0 0
      %8733 = vmatprep.subr.bf16.mxu0 0
      %8734 = vmatpush1.bf16.msra.mxu0 0
      %8735 = vmatprep.subr.bf16.mxu0 0
      %8736 = vmatpush1.bf16.msra.mxu0 0
      %8737 = vmatprep.subr.bf16.mxu0 0
      %8738 = vmatpush1.bf16.msra.mxu0 0
      %8739 = vmatprep.subr.bf16.mxu0 0
      %8740 = vmatpush1.bf16.msra.mxu0 0
      %8741 = vmatprep.subr.bf16.mxu0 0
      %8742 = vmatpush1.bf16.msra.mxu0 0
      %8743 = vmatprep.subr.bf16.mxu0 0
      %8744 = vmatpush1.bf16.msra.mxu0 0
      %8745 = vmatprep.subr.bf16.mxu0 0
      %8746 = vmatpush1.bf16.msra.mxu0 0
      %8747 = vmatprep.mubr.bf16.mxu0 0
      %8748 = vmatmul.mubr.bf16.gmra.mrb[0].mxu0 %v8652
      %v8749 = vpop.f32.mrb[0].mxu0
      %v8750 = vadd.f32 %v8665, %v8749
      %v8751 = vpop.f32.mrb[0].mxu0
      %v8752 = vpop.f32.mrb[0].mxu0
      %v8753 = vadd.f32 %v8665, %v8752
      %v8754 = vpop.f32.mrb[0].mxu0
      %8755 = vmatprep.mubr.bf16.mxu0 0
      %8756 = vmatmul.mubr.bf16.gmra.mrb[0].mxu0 %v8653
      %v8757 = vpop.f32.mrb[0].mxu0
      %v8758 = vadd.f32 %v8665, %v8757
      %v8759 = vpop.f32.mrb[0].mxu0
      %v8760 = vpop.f32.mrb[0].mxu0
      %v8761 = vadd.f32 %v8665, %v8760
      %v8762 = vpop.f32.mrb[0].mxu0
      %8763 = vmatprep.mubr.bf16.mxu0 0
      %8764 = vmatmul.mubr.bf16.gmra.mrb[0].mxu0 %v8654
      %v8765 = vpop.f32.mrb[0].mxu0
      %v8766 = vadd.f32 %v8665, %v8765
      %v8767 = vpop.f32.mrb[0].mxu0
      %v8768 = vpop.f32.mrb[0].mxu0
      %v8769 = vadd.f32 %v8665, %v8768
      %v8770 = vpop.f32.mrb[0].mxu0
      %8771 = vmatprep.mubr.bf16.mxu0 0
      %8772 = vmatmul.mubr.bf16.gmra.mrb[0].mxu0 %v8655
      %v8773 = vpop.f32.mrb[0].mxu0
      %v8774 = vadd.f32 %v8665, %v8773
      %v8775 = vpop.f32.mrb[0].mxu0
      %v8776 = vpop.f32.mrb[0].mxu0
      %v8777 = vadd.f32 %v8665, %v8776
      %v8778 = vpop.f32.mrb[0].mxu0
      %8779 = vmatprep.mubr.bf16.mxu0 0
      %8780 = vmatmul.mubr.bf16.gmra.mrb[0].mxu0 %v8656
      %v8781 = vpop.f32.mrb[0].mxu0
      %v8782 = vadd.f32 %v8665, %v8781
      %v8783 = vpop.f32.mrb[0].mxu0
      %v8784 = vpop.f32.mrb[0].mxu0
      %v8785 = vadd.f32 %v8665, %v8784
      %v8786 = vpop.f32.mrb[0].mxu0
      %8787 = vmatprep.mubr.bf16.mxu0 0
      %8788 = vmatmul.mubr.bf16.gmra.mrb[0].mxu0 %v8657
      %v8789 = vpop.f32.mrb[0].mxu0
      %v8790 = vadd.f32 %v8665, %v8789
      %v8791 = vpop.f32.mrb[0].mxu0
      %v8792 = vpop.f32.mrb[0].mxu0
      %v8793 = vadd.f32 %v8665, %v8792
      %v8794 = vpop.f32.mrb[0].mxu0
      %8795 = vmatprep.mubr.bf16.mxu0 0
      %8796 = vmatmul.mubr.bf16.gmra.mrb[0].mxu0 %v8658
      %v8797 = vpop.f32.mrb[0].mxu0
      %v8798 = vadd.f32 %v8665, %v8797
      %v8799 = vpop.f32.mrb[0].mxu0
      %v8800 = vpop.f32.mrb[0].mxu0
      %v8801 = vadd.f32 %v8665, %v8800
      %v8802 = vpop.f32.mrb[0].mxu0
      %8803 = vmatprep.mubr.bf16.mxu0 0
      %8804 = vmatmul.mubr.bf16.gmra.mrb[0].mxu0 %v8659
      %v8805 = vpop.f32.mrb[0].mxu0
      %v8806 = vadd.f32 %v8665, %v8805
      %v8807 = vpop.f32.mrb[0].mxu0
      %v8808 = vpop.f32.mrb[0].mxu0
      %v8809 = vadd.f32 %v8665, %v8808
      %v8810 = vpop.f32.mrb[0].mxu0
      %8811 = vdwg.mxu0
      %v8812 = vxor.u32 %v8750, 2147483648
      %v8813 = vxor.u32 %v8753, 2147483648
      %v8814 = vxor.u32 %v8758, 2147483648
      %v8815 = vxor.u32 %v8761, 2147483648
      %v8816 = vxor.u32 %v8766, 2147483648
      %v8817 = vxor.u32 %v8769, 2147483648
      %v8818 = vxor.u32 %v8774, 2147483648
      %v8819 = vxor.u32 %v8777, 2147483648
      %v8820 = vxor.u32 %v8782, 2147483648
      %v8821 = vxor.u32 %v8785, 2147483648
      %v8822 = vxor.u32 %v8790, 2147483648
      %v8823 = vxor.u32 %v8793, 2147483648
      %v8824 = vxor.u32 %v8798, 2147483648
      %v8825 = vxor.u32 %v8801, 2147483648
      %v8826 = vxor.u32 %v8806, 2147483648
      %v8827 = vxor.u32 %v8809, 2147483648
      %v8828 = vmul.f32 %v8812, 1.442695
      %v8829 = vpow.pop %v8828
      %v8830 = vmul.f32 %v8813, 1.442695
      %v8831 = vpow.pop %v8830
      %v8832 = vmul.f32 %v8814, 1.442695
      %v8833 = vpow.pop %v8832
      %v8834 = vmul.f32 %v8815, 1.442695
      %v8835 = vpow.pop %v8834
      %v8836 = vmul.f32 %v8816, 1.442695
      %v8837 = vpow.pop %v8836
      %v8838 = vmul.f32 %v8817, 1.442695
      %v8839 = vpow.pop %v8838
      %v8840 = vmul.f32 %v8818, 1.442695
      %v8841 = vpow.pop %v8840
      %v8842 = vmul.f32 %v8819, 1.442695
      %v8843 = vpow.pop %v8842
      %v8844 = vmul.f32 %v8820, 1.442695
      %v8845 = vpow.pop %v8844
      %v8846 = vmul.f32 %v8821, 1.442695
      %v8847 = vpow.pop %v8846
      %v8848 = vmul.f32 %v8822, 1.442695
      %v8849 = vpow.pop %v8848
      %v8850 = vmul.f32 %v8823, 1.442695
      %v8851 = vpow.pop %v8850
      %v8852 = vmul.f32 %v8824, 1.442695
      %v8853 = vpow.pop %v8852
      %v8854 = vmul.f32 %v8825, 1.442695
      %v8855 = vpow.pop %v8854
      %v8856 = vmul.f32 %v8826, 1.442695
      %v8857 = vpow.pop %v8856
      %v8858 = vmul.f32 %v8827, 1.442695
      %v8859 = vpow.pop %v8858
      %v8860 = vadd.f32 %v8829, 1.0
      %v8861 = vadd.f32 %v8831, 1.0
      %v8862 = vadd.f32 %v8833, 1.0
      %v8863 = vadd.f32 %v8835, 1.0
      %v8864 = vadd.f32 %v8837, 1.0
      %v8865 = vadd.f32 %v8839, 1.0
      %v8866 = vadd.f32 %v8841, 1.0
      %v8867 = vadd.f32 %v8843, 1.0
      %v8868 = vadd.f32 %v8845, 1.0
      %v8869 = vadd.f32 %v8847, 1.0
      %v8870 = vadd.f32 %v8849, 1.0
      %v8871 = vadd.f32 %v8851, 1.0
      %v8872 = vadd.f32 %v8853, 1.0
      %v8873 = vadd.f32 %v8855, 1.0
      %v8874 = vadd.f32 %v8857, 1.0
      %v8875 = vadd.f32 %v8859, 1.0
      %v8876 = vrcp.pop %v8860
      %v8877 = vmul.f32 1.0, %v8876
      %v8878 = vrcp.pop %v8861
      %v8879 = vmul.f32 1.0, %v8878
      %v8880 = vrcp.pop %v8862
      %v8881 = vmul.f32 1.0, %v8880
      %v8882 = vrcp.pop %v8863
      %v8883 = vmul.f32 1.0, %v8882
      %v8884 = vrcp.pop %v8864
      %v8885 = vmul.f32 1.0, %v8884
      %v8886 = vrcp.pop %v8865
      %v8887 = vmul.f32 1.0, %v8886
      %v8888 = vrcp.pop %v8866
      %v8889 = vmul.f32 1.0, %v8888
      %v8890 = vrcp.pop %v8867
      %v8891 = vmul.f32 1.0, %v8890
      %v8892 = vrcp.pop %v8868
      %v8893 = vmul.f32 1.0, %v8892
      %v8894 = vrcp.pop %v8869
      %v8895 = vmul.f32 1.0, %v8894
      %v8896 = vrcp.pop %v8870
      %v8897 = vmul.f32 1.0, %v8896
      %v8898 = vrcp.pop %v8871
      %v8899 = vmul.f32 1.0, %v8898
      %v8900 = vrcp.pop %v8872
      %v8901 = vmul.f32 1.0, %v8900
      %v8902 = vrcp.pop %v8873
      %v8903 = vmul.f32 1.0, %v8902
      %v8904 = vrcp.pop %v8874
      %v8905 = vmul.f32 1.0, %v8904
      %v8906 = vrcp.pop %v8875
      %v8907 = vmul.f32 1.0, %v8906
      %v8908 = vsel %vm4583, %v8877, %v8340
      %v8909 = vsel %vm4583, %v8879, %v8341
      %v8910 = vsel %vm4583, %v8881, %v8342
      %v8911 = vsel %vm4583, %v8883, %v8343
      %v8912 = vsel %vm4583, %v8885, %v8344
      %v8913 = vsel %vm4583, %v8887, %v8345
      %v8914 = vsel %vm4583, %v8889, %v8346
      %v8915 = vsel %vm4583, %v8891, %v8347
      %v8916 = vsel %vm4583, %v8893, %v8348
      %v8917 = vsel %vm4583, %v8895, %v8349
      %v8918 = vsel %vm4583, %v8897, %v8350
      %v8919 = vsel %vm4583, %v8899, %v8351
      %v8920 = vsel %vm4583, %v8901, %v8352
      %v8921 = vsel %vm4583, %v8903, %v8353
      %v8922 = vsel %vm4583, %v8905, %v8354
      %v8923 = vsel %vm4583, %v8907, %v8355
      %v8924 = vpack.c.bf16 %v8909, %v8908
      %v8925 = vpack.c.bf16 %v8911, %v8910
      %v8926 = vpack.c.bf16 %v8913, %v8912
      %v8927 = vpack.c.bf16 %v8915, %v8914
      %v8928 = vpack.c.bf16 %v8917, %v8916
      %v8929 = vpack.c.bf16 %v8919, %v8918
      %v8930 = vpack.c.bf16 %v8921, %v8920
      %v8931 = vpack.c.bf16 %v8923, %v8922
      %v8940 = vunpack.c.l.b16 %v8924
      %v8941 = vunpack.c.h.b16 %v8924
      %v8942 = vunpack.c.l.b16 %v8925
      %v8943 = vunpack.c.h.b16 %v8925
      %v8944 = vunpack.c.l.b16 %v8926
      %v8945 = vunpack.c.h.b16 %v8926
      %v8946 = vunpack.c.l.b16 %v8927
      %v8947 = vunpack.c.h.b16 %v8927
      %v8948 = vunpack.c.l.b16 %v8928
      %v8949 = vunpack.c.h.b16 %v8928
      %v8950 = vunpack.c.l.b16 %v8929
      %v8951 = vunpack.c.h.b16 %v8929
      %v8952 = vunpack.c.l.b16 %v8930
      %v8953 = vunpack.c.h.b16 %v8930
      %v8954 = vunpack.c.l.b16 %v8931
      %v8955 = vunpack.c.h.b16 %v8931
      %v8956 = vpack.c.b16 %v8940, %v8940
      %v8957 = vpack.c.b16 %v8941, %v8941
      %v8958 = vpack.c.b16 %v8942, %v8942
      %v8959 = vpack.c.b16 %v8943, %v8943
      %v8960 = vpack.c.b16 %v8944, %v8944
      %v8961 = vpack.c.b16 %v8945, %v8945
      %v8962 = vpack.c.b16 %v8946, %v8946
      %v8963 = vpack.c.b16 %v8947, %v8947
      %v8964 = vpack.c.b16 %v8948, %v8948
      %v8965 = vpack.c.b16 %v8949, %v8949
      %v8966 = vpack.c.b16 %v8950, %v8950
      %v8967 = vpack.c.b16 %v8951, %v8951
      %v8968 = vpack.c.b16 %v8952, %v8952
      %v8969 = vpack.c.b16 %v8953, %v8953
      %v8970 = vpack.c.b16 %v8954, %v8954
      %v8971 = vpack.c.b16 %v8955, %v8955
      %8988 = vst [vmem:[%s334 + $0x40] sm:$0xf] %v8956
      %8989 = vst [vmem:[%s334 + $0x44] sm:$0xf] %v8957
      %8990 = vst [vmem:[%s334 + $0x48] sm:$0xf] %v8958
      %8991 = vst [vmem:[%s334 + $0x4c] sm:$0xf] %v8959
      %8992 = vst [vmem:[%s334 + $0x50] sm:$0xf] %v8960
      %8993 = vst [vmem:[%s334 + $0x54] sm:$0xf] %v8961
      %8994 = vst [vmem:[%s334 + $0x58] sm:$0xf] %v8962
      %8995 = vst [vmem:[%s334 + $0x5c] sm:$0xf] %v8963
      %8996 = vst [vmem:[%s334 + $0x60] sm:$0xf] %v8964
      %8997 = vst [vmem:[%s334 + $0x64] sm:$0xf] %v8965
      %8998 = vst [vmem:[%s334 + $0x68] sm:$0xf] %v8966
      %8999 = vst [vmem:[%s334 + $0x6c] sm:$0xf] %v8967
      %9000 = vst [vmem:[%s334 + $0x70] sm:$0xf] %v8968
      %9001 = vst [vmem:[%s334 + $0x74] sm:$0xf] %v8969
      %9002 = vst [vmem:[%s334 + $0x78] sm:$0xf] %v8970
      %9003 = vst [vmem:[%s334 + $0x7c] sm:$0xf] %v8971
      %s9004 = smul.u32 32, %s20
      %p9005 = scmp.lt.s32.totalorder %s9004, 127
      %s9006 = scalar_select %p9005, %s9004, 127
      %s9007 = smul.addr %s9006, 4
      %s9008 = scalar_lea.vmem %s9, %s9007
      // Predicated region
      $region57: #{mlpnet_forward.1} parent=55 // pred_check
        %p9009 = pneg %p232
      $region58: #{mlpnet_forward.1} parent=55 // pred_check_branch
        %9011 = sbr.rel (%p9009) target = $region60
      $region59: #{mlpnet_forward.1} parent=55 // pred_region
        %s9012 = smul.u32 32, %s20
      $region60: #{mlpnet_forward.1} parent=55 // pred_fallthru
        _
    $region56: #{mlpnet_forward.1} parent=5 // pred_fallthru
      _
    %p9013 = scmp.le.s32.totalorder 2, %s15
    // Predicated region
    $region61: #{mlpnet_forward.1} parent=5 // pred_check
      %p9014 = pneg %p9013
    $region62: #{mlpnet_forward.1} parent=5 // pred_check_branch
      %9016 = sbr.rel (%p9014) target = $region64
    $region63: #{mlpnet_forward.1} parent=5 // pred_region
      %s9017 = ssub.s32 %s15, 2
      // Predicated region
      $region65: #{mlpnet_forward.1} parent=63 // pred_check
        %p9018 = pneg %p238
      $region66: #{mlpnet_forward.1} parent=63 // pred_check_branch
        %9020 = sbr.rel (%p9018) target = $region68
      $region67: #{mlpnet_forward.1} parent=63 // pred_region
        %s9021 = smul.u32 32, %s21
        %p9022 = scmp.lt.s32.totalorder %s9021, 127
        %s9023 = scalar_select %p9022, %s9021, 127
        %s9024 = smul.addr %s9023, 4
        %s9025 = scalar_lea.vmem %s9, %s9024
      $region68: #{mlpnet_forward.1} parent=63 // pred_fallthru
        _
    $region64: #{mlpnet_forward.1} parent=5 // pred_fallthru
      _
  $region6: #{mlpnet_forward.1} parent=0 // loop_footer
    %s19 = sadd.s32 1, %s15
  $region7: #{mlpnet_forward.1} parent=0 // loop_footer_branch
    %14 = sbr.rel target = $region3
  $region8: #{mlpnet_forward.1} parent=0 // loop_exit
    _

</llo_original>
